<compile_context>
chip_gen: v7x
topology: tpu7x:2x2x1
jax: 0.10.0
libtpu: 0.0.40
codegen_flags: <defaults>
</compile_context>

<pallas_src>
import jax
import jax.numpy as jnp
from jax import lax
from jax.experimental import pallas as pl
from jax.experimental.pallas import tpu as pltpu

L_IN = 164  # Linear(64*40, 128) forces: 164 -> pool 82 -> dilated conv 80 -> pool 40

WEIGHT_ORDER = ("w1", "b1", "w2", "b2", "wf1", "bf1", "wf2", "bf2",
                "ws1", "bs1", "ws2", "bs2", "wd1", "bd1", "wd2", "bd2",
                "wt1", "bt1", "wt2", "bt2")


# ------------------------------ fused Pallas kernel ------------------------------

def fused_autoencoder_kernel(
        x_ref,                                             # (41, 4)  = x reshaped
        w1_ref, b1_ref, w2_ref, b2_ref,                    # conv1 / conv2 (phase-folded)
        wf1_ref, bf1_ref, wf2_ref, bf2_ref,                # encoder linears
        ws1_ref, bs1_ref, ws2_ref, bs2_ref,                # sigm head
        wd1_ref, bd1_ref, wd2_ref, bd2_ref,                # decoder linears
        wt1_ref, bt1_ref, wt2_ref, bt2_ref,                # conv-transpose layers
        dec_ref, sig_ref,                                  # outputs: (42, 4), (1, 1)
        q8_s, z_s, flat_s, d3p_s):                         # VMEM scratch
    f32 = jnp.float32

    # ---------------- Conv1d(1->32,k5,p2) + ReLU + MaxPool(2), phase folded ----------------
    # q8_s[t, j] = x_pad[4t + j] for j = 0..7 (x_pad = zero-pad(x, 2, 2)), t = 0..40
    q8_s[0:1, 0:2] = jnp.zeros((1, 2), f32)
    q8_s[1:41, 0:2] = x_ref[0:40, 2:4]
    q8_s[0:41, 2:6] = x_ref[...]
    q8_s[0:40, 6:8] = x_ref[1:41, 0:2]
    q8_s[40:41, 6:8] = jnp.zeros((1, 2), f32)

    # One matmul gives conv1 at all 4 length-phases: y1[t, 32r + c] = conv1(pos 4t+r)[c]
    y1 = jnp.dot(q8_s[...], w1_ref[...], preferred_element_type=f32)      # (41, 128)
    b1 = b1_ref[...]
    r0 = jnp.maximum(y1[:, 0:32] + b1, 0.0)
    r1 = jnp.maximum(y1[:, 32:64] + b1, 0.0)
    r2 = jnp.maximum(y1[:, 64:96] + b1, 0.0)
    r3 = jnp.maximum(y1[:, 96:128] + b1, 0.0)
    ph0 = jnp.maximum(r0, r1)          # pooled p1[2t]    (41, 32)
    ph1 = jnp.maximum(r2, r3)          # pooled p1[2t+1]  (41, 32)

    # ------------- Conv1d(32->64,k3,p1,dil2) + ReLU + MaxPool(2), phase folded -------------
    # z_s[m, 32a + ci] = p1_padded[2m + a][ci] for a = 0..5, m = 0..39
    z_s[0:1, 0:32] = jnp.zeros((1, 32), f32)
    z_s[1:40, 0:32] = ph1[0:39, :]
    z_s[:, 32:64] = ph0[0:40, :]
    z_s[:, 64:96] = ph1[0:40, :]
    z_s[:, 96:128] = ph0[1:41, :]
    z_s[:, 128:160] = ph1[1:41, :]
    z_s[0:39, 160:192] = ph0[2:41, :]
    z_s[39:40, 160:192] = jnp.zeros((1, 32), f32)

    y2 = jnp.dot(z_s[...], w2_ref[...], preferred_element_type=f32)       # (40, 128)
    b2 = b2_ref[...]
    p2 = jnp.maximum(jnp.maximum(y2[:, 0:64] + b2, 0.0),
                     jnp.maximum(y2[:, 64:128] + b2, 0.0))                # (40, 64)

    # --------------------- Flatten + Linear(2560,128) + ReLU + Linear(128,64) ---------------------
    for l in range(40):                                    # (L, C)-ordered flatten into lanes
        flat_s[0:1, 64 * l:64 * (l + 1)] = p2[l:l + 1, :]
    flat = flat_s[...].astype(jnp.bfloat16)                               # (1, 2560)
    h = jnp.maximum(jnp.dot(flat, wf1_ref[...], preferred_element_type=f32)
                    + bf1_ref[...], 0.0)                                  # (1, 128)
    enc = jnp.dot(h, wf2_ref[...], preferred_element_type=f32) + bf2_ref[...]   # (1, 64)

    # --------------------------------------- sigm head ---------------------------------------
    s1 = jnp.tanh(jnp.dot(enc, ws1_ref[...], preferred_element_type=f32) + bs1_ref[...])
    s2 = jnp.dot(s1, ws2_ref[...], preferred_element_type=f32) + bs2_ref[...]
    sig_ref[...] = pl.reciprocal(1.0 + jnp.exp(-s2), approx=True)         # sigmoid, (1, 1)

    # ---------------------------------------- decoder ----------------------------------------
    d1 = jnp.maximum(jnp.dot(enc, wd1_ref[...], preferred_element_type=f32)
                     + bd1_ref[...], 0.0)                                 # (1, 64)
    d2 = jnp.maximum(jnp.dot(d1.astype(jnp.bfloat16), wd2_ref[...],
                             preferred_element_type=f32) + bd2_ref[...], 0.0)   # (1, 2560)

    # Unflatten to channels-last with a zero row on each side (ConvT boundary handling).
    d3p_s[0:1, :] = jnp.zeros((1, 64), f32)
    d3p_s[41:42, :] = jnp.zeros((1, 64), f32)
    for l in range(40):
        d3p_s[l + 1:l + 2, :] = d2[0:1, 64 * l:64 * (l + 1)]

    # ConvTranspose1d(64->32, k3, s2, output_padding=1) + ReLU, split into even/odd outputs.
    hi = d3p_s[1:42, :]                                                   # rows m+1  (41, 64)
    lo = d3p_s[0:41, :]                                                   # rows m    (41, 64)
    acat = jnp.dot(hi, wt1_ref[...], preferred_element_type=f32)          # taps 0,1,(2) (41, 96)
    a2s = jnp.dot(lo, wt1_ref[:, 64:96], preferred_element_type=f32)      # shifted tap 2 (41, 32)
    bt1 = bt1_ref[...]
    oe = jnp.maximum(bt1 + acat[:, 0:32] + a2s, 0.0)                      # u1[2t]    (41, 32)
    oo = jnp.maximum(bt1 + acat[:, 32:64], 0.0)                           # u1[2t+1]  (41, 32)

    # ConvTranspose1d(32->1, k3, s2, output_padding=1): per-tap dots, 4-phase output assembly.
    e_taps = jnp.dot(oe, wt2_ref[...], preferred_element_type=f32)        # (41, 3)
    o_taps = jnp.dot(oo, wt2_ref[...], preferred_element_type=f32)        # (41, 3)
    bt2 = bt2_ref[...]                                                    # (1, 1)

    # dec_ref[t, p] = decoded[4t + p]  (positions 166/167 are padding, sliced off in wrapper)
    dec_ref[0:1, 0:1] = bt2 + e_taps[0:1, 0:1]
    dec_ref[1:41, 0:1] = bt2 + e_taps[1:41, 0:1] + o_taps[0:40, 2:3]
    dec_ref[41:42, 0:1] = bt2 + o_taps[40:41, 2:3]
    dec_ref[0:41, 1:2] = bt2 + e_taps[:, 1:2]
    dec_ref[41:42, 1:2] = bt2
    dec_ref[0:41, 2:3] = bt2 + o_taps[:, 0:1] + e_taps[:, 2:3]
    dec_ref[0:41, 3:4] = bt2 + o_taps[:, 1:2]
    dec_ref[41:42, 2:4] = jnp.zeros((1, 2), f32)


# ------------------------------------ pallas_call wrapper ------------------------------------

def autoencoder_forward(x, p):
    B = x.shape[0]
    xr = x.reshape(B, 41, 4)                               # 4-phase view of the input
    weights = [p[k] for k in WEIGHT_ORDER]

    in_specs = [pl.BlockSpec((None, 41, 4), lambda b: (b, 0, 0))]
    in_specs += [pl.BlockSpec(w.shape, lambda b: (0, 0)) for w in weights]  # VMEM-resident

    out_dec, out_sig = pl.pallas_call(
        fused_autoencoder_kernel,
        out_shape=(jax.ShapeDtypeStruct((B, 42, 4), jnp.float32),
                   jax.ShapeDtypeStruct((B, 1, 1), jnp.float32)),
        grid=(B,),
        in_specs=in_specs,
        out_specs=(pl.BlockSpec((None, 42, 4), lambda b: (b, 0, 0)),
                   pl.BlockSpec((None, 1, 1), lambda b: (b, 0, 0))),
        scratch_shapes=[
            pltpu.VMEM((41, 8), jnp.float32),     # conv1 phase-im2col
            pltpu.VMEM((40, 192), jnp.float32),   # conv2 phase-im2col
            pltpu.VMEM((1, 2560), jnp.float32),   # flatten
            pltpu.VMEM((42, 64), jnp.float32),    # unflatten (+ConvT boundary rows)
        ],
        compiler_params=pltpu.CompilerParams(dimension_semantics=("parallel",)),
    )(xr, *weights)

    decoded = out_dec.reshape(B, 168)[:, :166]             # de-phase: index 4t+p
    sigm = out_sig.reshape(B, 1)
    return decoded, sigm


# ----------------------------------------- parameters -----------------------------------------

def init_torch_params(key):
    """Deterministic synthetic parameters in the original PyTorch shapes."""
    keys = jax.random.split(key, 20)

    def u(k, shape, scale):
        return scale * jax.random.uniform(k, shape, jnp.float32, -1.0, 1.0)

    tp = {}
    tp["W_c1"] = u(keys[0], (32, 1, 5), 0.3);        tp["b_c1"] = u(keys[1], (32,), 0.1)
    tp["W_c2"] = u(keys[2], (64, 32, 3), 0.1);       tp["b_c2"] = u(keys[3], (64,), 0.1)
    tp["W_f1"] = u(keys[4], (128, 64 * 40), 0.02);   tp["b_f1"] = u(keys[5], (128,), 0.1)
    tp["W_f2"] = u(keys[6], (64, 128), 0.1);         tp["b_f2"] = u(keys[7], (64,), 0.1)
    tp["W_s1"] = u(keys[8], (8, 64), 0.1);           tp["b_s1"] = u(keys[9], (8,), 0.1)
    tp["W_s2"] = u(keys[10], (1, 8), 0.3);           tp["b_s2"] = u(keys[11], (1,), 0.1)
    tp["W_d1"] = u(keys[12], (64, 64), 0.1);         tp["b_d1"] = u(keys[13], (64,), 0.1)
    tp["W_d2"] = u(keys[14], (64 * 40, 64), 0.1);    tp["b_d2"] = u(keys[15], (64 * 40,), 0.1)
    tp["W_t1"] = u(keys[16], (64, 32, 3), 0.1);      tp["b_t1"] = u(keys[17], (32,), 0.1)
    tp["W_t2"] = u(keys[18], (32, 1, 3), 0.3);       tp["b_t2"] = u(keys[19], (1,), 0.1)
    return tp


def to_kernel_params(tp):
    """Repack PyTorch-shaped params into the fused kernel's phase-folded layouts."""
    f32, bf16 = jnp.float32, jnp.bfloat16
    p = {}

    # Conv1 folded with the 4 pooling phases -> (8, 128); column block r = conv1 at pos 4t+r.
    w1 = jnp.transpose(tp["W_c1"], (2, 1, 0)).reshape(5, 32)      # [k, c]
    wbig1 = jnp.zeros((8, 128), f32)
    for r in range(4):
        wbig1 = wbig1.at[r:r + 5, 32 * r:32 * r + 32].set(w1)
    p["w1"] = wbig1
    p["b1"] = tp["b_c1"][None, :]

    # Conv2 folded with even/odd output phases -> (192, 128).
    w2 = jnp.transpose(tp["W_c2"], (2, 1, 0))                     # (3, 32, 64) [k, ci, co]
    w2big = jnp.zeros((192, 128), f32)
    for s in range(2):
        for k in range(3):
            a = s + 2 * k
            w2big = w2big.at[32 * a:32 * a + 32, 64 * s:64 * s + 64].set(w2[k])
    p["w2"] = w2big
    p["b2"] = tp["b_c2"][None, :]

    # Linear(2560,128): PyTorch flattens (C=64, L=40); kernel flattens (L, C) -> permute rows.
    p["wf1"] = jnp.transpose(tp["W_f1"].reshape(128, 64, 40), (2, 1, 0)).reshape(2560, 128).astype(bf16)
    p["bf1"] = tp["b_f1"][None, :]
    p["wf2"] = tp["W_f2"].T;   p["bf2"] = tp["b_f2"][None, :]
    p["ws1"] = tp["W_s1"].T;   p["bs1"] = tp["b_s1"][None, :]
    p["ws2"] = tp["W_s2"].T;   p["bs2"] = tp["b_s2"][None, :]
    p["wd1"] = tp["W_d1"].T;   p["bd1"] = tp["b_d1"][None, :]

    # Linear(64,2560): pre-permute so the kernel's output row is already in (L, C) order.
    p["wd2"] = jnp.transpose(tp["W_d2"].reshape(64, 40, 64), (1, 0, 2)).reshape(2560, 64).T.astype(bf16)
    p["bd2"] = tp["b_d2"].reshape(64, 40).T.reshape(1, 2560)

    # ConvTranspose1: taps concatenated along the output axis -> (64, 96).
    p["wt1"] = jnp.transpose(tp["W_t1"], (0, 2, 1)).reshape(64, 96)
    p["bt1"] = tp["b_t1"][None, :]
    # ConvTranspose2: (32, 3), column k = tap k.
    p["wt2"] = tp["W_t2"][:, 0, :]
    p["bt2"] = tp["b_t2"].reshape(1, 1)
    return p


# ------------------------- pure-JAX reference (PyTorch NCL semantics) -------------------------

def reference_forward(x, tp):
    dn = ("NCH", "OIH", "NCH")
    B = x.shape[0]
    f32 = jnp.float32
    # The kernel stores the two large Linear weights in bf16; use the same rounded values
    # here so the check isolates implementation correctness.
    wf1q = tp["W_f1"].astype(jnp.bfloat16).astype(f32)
    wd2q = tp["W_d2"].astype(jnp.bfloat16).astype(f32)

    xc = x[:, None, :]
    y = lax.conv_general_dilated(xc, tp["W_c1"], (1,), [(2, 2)], dimension_numbers=dn)
    y = jnp.maximum(y + tp["b_c1"][None, :, None], 0.0)
    y = jnp.maximum(y[:, :, 0::2], y[:, :, 1::2])
    y = lax.conv_general_dilated(y, tp["W_c2"], (1,), [(1, 1)], rhs_dilation=(2,),
                                 dimension_numbers=dn)
    y = jnp.maximum(y + tp["b_c2"][None, :, None], 0.0)
    y = jnp.maximum(y[:, :, 0::2], y[:, :, 1::2])
    flat = y.reshape(B, 64 * 40)
    h = jnp.maximum(flat @ wf1q.T + tp["b_f1"], 0.0)
    enc = h @ tp["W_f2"].T + tp["b_f2"]
    s = jnp.tanh(enc @ tp["W_s1"].T + tp["b_s1"])
    sigm = jax.nn.sigmoid(s @ tp["W_s2"].T + tp["b_s2"])
    d = jnp.maximum(enc @ tp["W_d1"].T + tp["b_d1"], 0.0)
    d = jnp.maximum(d @ wd2q.T + tp["b_d2"], 0.0)
    d = d.reshape(B, 64, 40)
    # ConvTranspose1d(s=2, p=0, op=1) == zero-inserted conv with flipped kernel, pad (2, 3)
    w1f = jnp.flip(jnp.transpose(tp["W_t1"], (1, 0, 2)), axis=2)
    d = lax.conv_general_dilated(d, w1f, (1,), [(2, 3)], lhs_dilation=(2,),
                                 dimension_numbers=dn)
    d = jnp.maximum(d + tp["b_t1"][None, :, None], 0.0)
    w2f = jnp.flip(jnp.transpose(tp["W_t2"], (1, 0, 2)), axis=2)
    d = lax.conv_general_dilated(d, w2f, (1,), [(2, 3)], lhs_dilation=(2,),
                                 dimension_numbers=dn)
    d = d + tp["b_t2"][None, :, None]
    return d[:, 0, :], sigm


# --------------------------------------------- main ---------------------------------------------

if __name__ == "__main__":
    key = jax.random.PRNGKey(0)
    kp, kx = jax.random.split(key)
    tp = init_torch_params(kp)
    p = to_kernel_params(tp)
    x = jax.random.normal(kx, (2, L_IN), jnp.float32)

    fwd = jax.jit(autoencoder_forward)
    decoded, sigm = jax.block_until_ready(fwd(x, p))

    assert decoded.shape == (2, 166), decoded.shape
    assert sigm.shape == (2, 1), sigm.shape

    ref_dec, ref_sig = reference_forward(x, tp)
    err_d = float(jnp.max(jnp.abs(decoded - ref_dec)))
    err_s = float(jnp.max(jnp.abs(sigm - ref_sig)))
    tol_d = 2e-2 * (1.0 + float(jnp.max(jnp.abs(ref_dec))))
    tol_s = 2e-2
    if err_d > tol_d or err_s > tol_s:
        raise AssertionError(f"mismatch: decoded err={err_d} (tol {tol_d}), sigm err={err_s}")

    print("KERNEL_OK")
</pallas_src>

<mosaic_0001>
module attributes {stable_mosaic.version = 11 : i64} {
  func.func @fused_autoencoder_kernel(%arg0: i32, %arg1: memref<1x41x4xf32, #tpu.memory_space<vmem>>, %arg2: memref<8x128xf32, #tpu.memory_space<vmem>>, %arg3: memref<1x32xf32, #tpu.memory_space<vmem>>, %arg4: memref<192x128xf32, #tpu.memory_space<vmem>>, %arg5: memref<1x64xf32, #tpu.memory_space<vmem>>, %arg6: memref<2560x128xbf16, #tpu.memory_space<vmem>>, %arg7: memref<1x128xf32, #tpu.memory_space<vmem>>, %arg8: memref<128x64xf32, #tpu.memory_space<vmem>>, %arg9: memref<1x64xf32, #tpu.memory_space<vmem>>, %arg10: memref<64x8xf32, #tpu.memory_space<vmem>>, %arg11: memref<1x8xf32, #tpu.memory_space<vmem>>, %arg12: memref<8x1xf32, #tpu.memory_space<vmem>>, %arg13: memref<1x1xf32, #tpu.memory_space<vmem>>, %arg14: memref<64x64xf32, #tpu.memory_space<vmem>>, %arg15: memref<1x64xf32, #tpu.memory_space<vmem>>, %arg16: memref<64x2560xbf16, #tpu.memory_space<vmem>>, %arg17: memref<1x2560xf32, #tpu.memory_space<vmem>>, %arg18: memref<64x96xf32, #tpu.memory_space<vmem>>, %arg19: memref<1x32xf32, #tpu.memory_space<vmem>>, %arg20: memref<32x3xf32, #tpu.memory_space<vmem>>, %arg21: memref<1x1xf32, #tpu.memory_space<vmem>>, %arg22: memref<1x42x4xf32, #tpu.memory_space<vmem>>, %arg23: memref<1x1x1xf32, #tpu.memory_space<vmem>>, %arg24: memref<41x8xf32, #tpu.memory_space<vmem>>, %arg25: memref<40x192xf32, #tpu.memory_space<vmem>>, %arg26: memref<1x2560xf32, #tpu.memory_space<vmem>>, %arg27: memref<42x64xf32, #tpu.memory_space<vmem>>) attributes {dimension_semantics = [#tpu.dimension_semantics<parallel>], iteration_bounds = array<i64: 2>, scalar_prefetch = 0 : i64, scratch_operands = 4 : i64, tpu.core_type = #tpu.core_type<tc>, window_params = [{transform_indices = @transform_0, window_bounds = array<i64: 1, 41, 4>}, {pipeline_mode = #tpu.pipeline_mode<synchronous>, transform_indices = @transform_1, window_bounds = array<i64: 8, 128>}, {pipeline_mode = #tpu.pipeline_mode<synchronous>, transform_indices = @transform_2, window_bounds = array<i64: 1, 32>}, {pipeline_mode = #tpu.pipeline_mode<synchronous>, transform_indices = @transform_3, window_bounds = array<i64: 192, 128>}, {pipeline_mode = #tpu.pipeline_mode<synchronous>, transform_indices = @transform_4, window_bounds = array<i64: 1, 64>}, {pipeline_mode = #tpu.pipeline_mode<synchronous>, transform_indices = @transform_5, window_bounds = array<i64: 2560, 128>}, {pipeline_mode = #tpu.pipeline_mode<synchronous>, transform_indices = @transform_6, window_bounds = array<i64: 1, 128>}, {pipeline_mode = #tpu.pipeline_mode<synchronous>, transform_indices = @transform_7, window_bounds = array<i64: 128, 64>}, {pipeline_mode = #tpu.pipeline_mode<synchronous>, transform_indices = @transform_8, window_bounds = array<i64: 1, 64>}, {pipeline_mode = #tpu.pipeline_mode<synchronous>, transform_indices = @transform_9, window_bounds = array<i64: 64, 8>}, {pipeline_mode = #tpu.pipeline_mode<synchronous>, transform_indices = @transform_10, window_bounds = array<i64: 1, 8>}, {pipeline_mode = #tpu.pipeline_mode<synchronous>, transform_indices = @transform_11, window_bounds = array<i64: 8, 1>}, {pipeline_mode = #tpu.pipeline_mode<synchronous>, transform_indices = @transform_12, window_bounds = array<i64: 1, 1>}, {pipeline_mode = #tpu.pipeline_mode<synchronous>, transform_indices = @transform_13, window_bounds = array<i64: 64, 64>}, {pipeline_mode = #tpu.pipeline_mode<synchronous>, transform_indices = @transform_14, window_bounds = array<i64: 1, 64>}, {pipeline_mode = #tpu.pipeline_mode<synchronous>, transform_indices = @transform_15, window_bounds = array<i64: 64, 2560>}, {pipeline_mode = #tpu.pipeline_mode<synchronous>, transform_indices = @transform_16, window_bounds = array<i64: 1, 2560>}, {pipeline_mode = #tpu.pipeline_mode<synchronous>, transform_indices = @transform_17, window_bounds = array<i64: 64, 96>}, {pipeline_mode = #tpu.pipeline_mode<synchronous>, transform_indices = @transform_18, window_bounds = array<i64: 1, 32>}, {pipeline_mode = #tpu.pipeline_mode<synchronous>, transform_indices = @transform_19, window_bounds = array<i64: 32, 3>}, {pipeline_mode = #tpu.pipeline_mode<synchronous>, transform_indices = @transform_20, window_bounds = array<i64: 1, 1>}, {transform_indices = @transform_21, window_bounds = array<i64: 1, 42, 4>}, {transform_indices = @transform_22, window_bounds = array<i64: 1, 1, 1>}]} {
    %cst = arith.constant 0.000000e+00 : f32
    %0 = vector.broadcast %cst : f32 to vector<1x2xf32>
    %c0 = arith.constant 0 : index
    %c0_0 = arith.constant 0 : index
    %1 = vector.load %arg24[%c0, %c0_0] : memref<41x8xf32, #tpu.memory_space<vmem>>, vector<1x2xf32>
    tpu.vector_store %arg24[%c0, %c0_0], %0 {strides = array<i32>} : memref<41x8xf32, #tpu.memory_space<vmem>>, vector<1x2xf32>,
    %c0_1 = arith.constant 0 : index
    %c0_2 = arith.constant 0 : index
    %c2 = arith.constant 2 : index
    %2 = vector.load %arg1[%c0_1, %c0_2, %c2] : memref<1x41x4xf32, #tpu.memory_space<vmem>>, vector<1x40x2xf32>
    %3 = vector.shape_cast %2 : vector<1x40x2xf32> to vector<40x2xf32>
    %c1 = arith.constant 1 : index
    %c0_3 = arith.constant 0 : index
    %4 = vector.load %arg24[%c1, %c0_3] : memref<41x8xf32, #tpu.memory_space<vmem>>, vector<40x2xf32>
    tpu.vector_store %arg24[%c1, %c0_3], %3 {strides = array<i32>} : memref<41x8xf32, #tpu.memory_space<vmem>>, vector<40x2xf32>,
    %c0_4 = arith.constant 0 : index
    %c0_5 = arith.constant 0 : index
    %c0_6 = arith.constant 0 : index
    %5 = vector.load %arg1[%c0_4, %c0_5, %c0_6] : memref<1x41x4xf32, #tpu.memory_space<vmem>>, vector<1x41x4xf32>
    %6 = vector.shape_cast %5 : vector<1x41x4xf32> to vector<41x4xf32>
    %c0_7 = arith.constant 0 : index
    %c2_8 = arith.constant 2 : index
    %7 = vector.load %arg24[%c0_7, %c2_8] : memref<41x8xf32, #tpu.memory_space<vmem>>, vector<41x4xf32>
    tpu.vector_store %arg24[%c0_7, %c2_8], %6 {strides = array<i32>} : memref<41x8xf32, #tpu.memory_space<vmem>>, vector<41x4xf32>,
    %c0_9 = arith.constant 0 : index
    %c1_10 = arith.constant 1 : index
    %c0_11 = arith.constant 0 : index
    %8 = vector.load %arg1[%c0_9, %c1_10, %c0_11] : memref<1x41x4xf32, #tpu.memory_space<vmem>>, vector<1x40x2xf32>
    %9 = vector.shape_cast %8 : vector<1x40x2xf32> to vector<40x2xf32>
    %c0_12 = arith.constant 0 : index
    %c6 = arith.constant 6 : index
    %10 = vector.load %arg24[%c0_12, %c6] : memref<41x8xf32, #tpu.memory_space<vmem>>, vector<40x2xf32>
    tpu.vector_store %arg24[%c0_12, %c6], %9 {strides = array<i32>} : memref<41x8xf32, #tpu.memory_space<vmem>>, vector<40x2xf32>,
    %cst_13 = arith.constant 0.000000e+00 : f32
    %11 = vector.broadcast %cst_13 : f32 to vector<1x2xf32>
    %c40 = arith.constant 40 : index
    %c6_14 = arith.constant 6 : index
    %12 = vector.load %arg24[%c40, %c6_14] : memref<41x8xf32, #tpu.memory_space<vmem>>, vector<1x2xf32>
    tpu.vector_store %arg24[%c40, %c6_14], %11 {strides = array<i32>} : memref<41x8xf32, #tpu.memory_space<vmem>>, vector<1x2xf32>,
    %c0_15 = arith.constant 0 : index
    %c0_16 = arith.constant 0 : index
    %13 = vector.load %arg24[%c0_15, %c0_16] : memref<41x8xf32, #tpu.memory_space<vmem>>, vector<41x8xf32>
    %c0_17 = arith.constant 0 : index
    %c0_18 = arith.constant 0 : index
    %14 = vector.load %arg2[%c0_17, %c0_18] : memref<8x128xf32, #tpu.memory_space<vmem>>, vector<8x128xf32>
    %cst_19 = arith.constant dense<0.000000e+00> : vector<41x128xf32>
    %15 = tpu.matmul %13, %14, %cst_19 {dimension_numbers = #tpu.dot_dimension_numbers<[1], [0], [0], [1], [0, 0, 1, 1], [], []>} : vector<41x8xf32>, vector<8x128xf32>, vector<41x128xf32> -> vector<41x128xf32>
    %c0_20 = arith.constant 0 : index
    %c0_21 = arith.constant 0 : index
    %16 = vector.load %arg3[%c0_20, %c0_21] : memref<1x32xf32, #tpu.memory_space<vmem>>, vector<1x32xf32>
    %17 = vector.extract_strided_slice %15 {offsets = [0, 0], sizes = [41, 32], strides = [1, 1]} : vector<41x128xf32> to vector<41x32xf32>
    %18 = vector.broadcast %16 : vector<1x32xf32> to vector<41x32xf32>
    %19 = arith.addf %17, %18 : vector<41x32xf32>
    %cst_22 = arith.constant 0.000000e+00 : f32
    %20 = vector.broadcast %cst_22 : f32 to vector<41x32xf32>
    %21 = arith.maximumf %19, %20 : vector<41x32xf32>
    %22 = vector.extract_strided_slice %15 {offsets = [0, 32], sizes = [41, 32], strides = [1, 1]} : vector<41x128xf32> to vector<41x32xf32>
    %23 = vector.broadcast %16 : vector<1x32xf32> to vector<41x32xf32>
    %24 = arith.addf %22, %23 : vector<41x32xf32>
    %cst_23 = arith.constant 0.000000e+00 : f32
    %25 = vector.broadcast %cst_23 : f32 to vector<41x32xf32>
    %26 = arith.maximumf %24, %25 : vector<41x32xf32>
    %27 = vector.extract_strided_slice %15 {offsets = [0, 64], sizes = [41, 32], strides = [1, 1]} : vector<41x128xf32> to vector<41x32xf32>
    %28 = vector.broadcast %16 : vector<1x32xf32> to vector<41x32xf32>
    %29 = arith.addf %27, %28 : vector<41x32xf32>
    %cst_24 = arith.constant 0.000000e+00 : f32
    %30 = vector.broadcast %cst_24 : f32 to vector<41x32xf32>
    %31 = arith.maximumf %29, %30 : vector<41x32xf32>
    %32 = vector.extract_strided_slice %15 {offsets = [0, 96], sizes = [41, 32], strides = [1, 1]} : vector<41x128xf32> to vector<41x32xf32>
    %33 = vector.broadcast %16 : vector<1x32xf32> to vector<41x32xf32>
    %34 = arith.addf %32, %33 : vector<41x32xf32>
    %cst_25 = arith.constant 0.000000e+00 : f32
    %35 = vector.broadcast %cst_25 : f32 to vector<41x32xf32>
    %36 = arith.maximumf %34, %35 : vector<41x32xf32>
    %37 = arith.maximumf %21, %26 : vector<41x32xf32>
    %38 = arith.maximumf %31, %36 : vector<41x32xf32>
    %cst_26 = arith.constant 0.000000e+00 : f32
    %39 = vector.broadcast %cst_26 : f32 to vector<1x32xf32>
    %c0_27 = arith.constant 0 : index
    %c0_28 = arith.constant 0 : index
    %40 = vector.load %arg25[%c0_27, %c0_28] : memref<40x192xf32, #tpu.memory_space<vmem>>, vector<1x32xf32>
    tpu.vector_store %arg25[%c0_27, %c0_28], %39 {strides = array<i32>} : memref<40x192xf32, #tpu.memory_space<vmem>>, vector<1x32xf32>,
    %41 = vector.extract_strided_slice %38 {offsets = [0, 0], sizes = [39, 32], strides = [1, 1]} : vector<41x32xf32> to vector<39x32xf32>
    %c1_29 = arith.constant 1 : index
    %c0_30 = arith.constant 0 : index
    %42 = vector.load %arg25[%c1_29, %c0_30] : memref<40x192xf32, #tpu.memory_space<vmem>>, vector<39x32xf32>
    tpu.vector_store %arg25[%c1_29, %c0_30], %41 {strides = array<i32>} : memref<40x192xf32, #tpu.memory_space<vmem>>, vector<39x32xf32>,
    %43 = vector.extract_strided_slice %37 {offsets = [0, 0], sizes = [40, 32], strides = [1, 1]} : vector<41x32xf32> to vector<40x32xf32>
    %c0_31 = arith.constant 0 : index
    %c32 = arith.constant 32 : index
    %44 = vector.load %arg25[%c0_31, %c32] : memref<40x192xf32, #tpu.memory_space<vmem>>, vector<40x32xf32>
    tpu.vector_store %arg25[%c0_31, %c32], %43 {strides = array<i32>} : memref<40x192xf32, #tpu.memory_space<vmem>>, vector<40x32xf32>,
    %45 = vector.extract_strided_slice %38 {offsets = [0, 0], sizes = [40, 32], strides = [1, 1]} : vector<41x32xf32> to vector<40x32xf32>
    %c0_32 = arith.constant 0 : index
    %c64 = arith.constant 64 : index
    %46 = vector.load %arg25[%c0_32, %c64] : memref<40x192xf32, #tpu.memory_space<vmem>>, vector<40x32xf32>
    tpu.vector_store %arg25[%c0_32, %c64], %45 {strides = array<i32>} : memref<40x192xf32, #tpu.memory_space<vmem>>, vector<40x32xf32>,
    %47 = vector.extract_strided_slice %37 {offsets = [1, 0], sizes = [40, 32], strides = [1, 1]} : vector<41x32xf32> to vector<40x32xf32>
    %c0_33 = arith.constant 0 : index
    %c96 = arith.constant 96 : index
    %48 = vector.load %arg25[%c0_33, %c96] : memref<40x192xf32, #tpu.memory_space<vmem>>, vector<40x32xf32>
    tpu.vector_store %arg25[%c0_33, %c96], %47 {strides = array<i32>} : memref<40x192xf32, #tpu.memory_space<vmem>>, vector<40x32xf32>,
    %49 = vector.extract_strided_slice %38 {offsets = [1, 0], sizes = [40, 32], strides = [1, 1]} : vector<41x32xf32> to vector<40x32xf32>
    %c0_34 = arith.constant 0 : index
    %c128 = arith.constant 128 : index
    %50 = vector.load %arg25[%c0_34, %c128] : memref<40x192xf32, #tpu.memory_space<vmem>>, vector<40x32xf32>
    tpu.vector_store %arg25[%c0_34, %c128], %49 {strides = array<i32>} : memref<40x192xf32, #tpu.memory_space<vmem>>, vector<40x32xf32>,
    %51 = vector.extract_strided_slice %37 {offsets = [2, 0], sizes = [39, 32], strides = [1, 1]} : vector<41x32xf32> to vector<39x32xf32>
    %c0_35 = arith.constant 0 : index
    %c160 = arith.constant 160 : index
    %52 = vector.load %arg25[%c0_35, %c160] : memref<40x192xf32, #tpu.memory_space<vmem>>, vector<39x32xf32>
    tpu.vector_store %arg25[%c0_35, %c160], %51 {strides = array<i32>} : memref<40x192xf32, #tpu.memory_space<vmem>>, vector<39x32xf32>,
    %cst_36 = arith.constant 0.000000e+00 : f32
    %53 = vector.broadcast %cst_36 : f32 to vector<1x32xf32>
    %c39 = arith.constant 39 : index
    %c160_37 = arith.constant 160 : index
    %54 = vector.load %arg25[%c39, %c160_37] : memref<40x192xf32, #tpu.memory_space<vmem>>, vector<1x32xf32>
    tpu.vector_store %arg25[%c39, %c160_37], %53 {strides = array<i32>} : memref<40x192xf32, #tpu.memory_space<vmem>>, vector<1x32xf32>,
    %c0_38 = arith.constant 0 : index
    %c0_39 = arith.constant 0 : index
    %55 = vector.load %arg25[%c0_38, %c0_39] : memref<40x192xf32, #tpu.memory_space<vmem>>, vector<40x192xf32>
    %c0_40 = arith.constant 0 : index
    %c0_41 = arith.constant 0 : index
    %56 = vector.load %arg4[%c0_40, %c0_41] : memref<192x128xf32, #tpu.memory_space<vmem>>, vector<192x128xf32>
    %cst_42 = arith.constant dense<0.000000e+00> : vector<40x128xf32>
    %57 = tpu.matmul %55, %56, %cst_42 {dimension_numbers = #tpu.dot_dimension_numbers<[1], [0], [0], [1], [0, 0, 1, 1], [], []>} : vector<40x192xf32>, vector<192x128xf32>, vector<40x128xf32> -> vector<40x128xf32>
    %c0_43 = arith.constant 0 : index
    %c0_44 = arith.constant 0 : index
    %58 = vector.load %arg5[%c0_43, %c0_44] : memref<1x64xf32, #tpu.memory_space<vmem>>, vector<1x64xf32>
    %59 = vector.extract_strided_slice %57 {offsets = [0, 0], sizes = [40, 64], strides = [1, 1]} : vector<40x128xf32> to vector<40x64xf32>
    %60 = vector.broadcast %58 : vector<1x64xf32> to vector<40x64xf32>
    %61 = arith.addf %59, %60 : vector<40x64xf32>
    %cst_45 = arith.constant 0.000000e+00 : f32
    %62 = vector.broadcast %cst_45 : f32 to vector<40x64xf32>
    %63 = arith.maximumf %61, %62 : vector<40x64xf32>
    %64 = vector.extract_strided_slice %57 {offsets = [0, 64], sizes = [40, 64], strides = [1, 1]} : vector<40x128xf32> to vector<40x64xf32>
    %65 = vector.broadcast %58 : vector<1x64xf32> to vector<40x64xf32>
    %66 = arith.addf %64, %65 : vector<40x64xf32>
    %cst_46 = arith.constant 0.000000e+00 : f32
    %67 = vector.broadcast %cst_46 : f32 to vector<40x64xf32>
    %68 = arith.maximumf %66, %67 : vector<40x64xf32>
    %69 = arith.maximumf %63, %68 : vector<40x64xf32>
    %70 = vector.extract_strided_slice %69 {offsets = [0, 0], sizes = [1, 64], strides = [1, 1]} : vector<40x64xf32> to vector<1x64xf32>
    %c0_47 = arith.constant 0 : index
    %c0_48 = arith.constant 0 : index
    %71 = vector.load %arg26[%c0_47, %c0_48] : memref<1x2560xf32, #tpu.memory_space<vmem>>, vector<1x64xf32>
    tpu.vector_store %arg26[%c0_47, %c0_48], %70 {strides = array<i32>} : memref<1x2560xf32, #tpu.memory_space<vmem>>, vector<1x64xf32>,
    %72 = vector.extract_strided_slice %69 {offsets = [1, 0], sizes = [1, 64], strides = [1, 1]} : vector<40x64xf32> to vector<1x64xf32>
    %c0_49 = arith.constant 0 : index
    %c64_50 = arith.constant 64 : index
    %73 = vector.load %arg26[%c0_49, %c64_50] : memref<1x2560xf32, #tpu.memory_space<vmem>>, vector<1x64xf32>
    tpu.vector_store %arg26[%c0_49, %c64_50], %72 {strides = array<i32>} : memref<1x2560xf32, #tpu.memory_space<vmem>>, vector<1x64xf32>,
    %74 = vector.extract_strided_slice %69 {offsets = [2, 0], sizes = [1, 64], strides = [1, 1]} : vector<40x64xf32> to vector<1x64xf32>
    %c0_51 = arith.constant 0 : index
    %c128_52 = arith.constant 128 : index
    %75 = vector.load %arg26[%c0_51, %c128_52] : memref<1x2560xf32, #tpu.memory_space<vmem>>, vector<1x64xf32>
    tpu.vector_store %arg26[%c0_51, %c128_52], %74 {strides = array<i32>} : memref<1x2560xf32, #tpu.memory_space<vmem>>, vector<1x64xf32>,
    %76 = vector.extract_strided_slice %69 {offsets = [3, 0], sizes = [1, 64], strides = [1, 1]} : vector<40x64xf32> to vector<1x64xf32>
    %c0_53 = arith.constant 0 : index
    %c192 = arith.constant 192 : index
    %77 = vector.load %arg26[%c0_53, %c192] : memref<1x2560xf32, #tpu.memory_space<vmem>>, vector<1x64xf32>
    tpu.vector_store %arg26[%c0_53, %c192], %76 {strides = array<i32>} : memref<1x2560xf32, #tpu.memory_space<vmem>>, vector<1x64xf32>,
    %78 = vector.extract_strided_slice %69 {offsets = [4, 0], sizes = [1, 64], strides = [1, 1]} : vector<40x64xf32> to vector<1x64xf32>
    %c0_54 = arith.constant 0 : index
    %c256 = arith.constant 256 : index
    %79 = vector.load %arg26[%c0_54, %c256] : memref<1x2560xf32, #tpu.memory_space<vmem>>, vector<1x64xf32>
    tpu.vector_store %arg26[%c0_54, %c256], %78 {strides = array<i32>} : memref<1x2560xf32, #tpu.memory_space<vmem>>, vector<1x64xf32>,
    %80 = vector.extract_strided_slice %69 {offsets = [5, 0], sizes = [1, 64], strides = [1, 1]} : vector<40x64xf32> to vector<1x64xf32>
    %c0_55 = arith.constant 0 : index
    %c320 = arith.constant 320 : index
    %81 = vector.load %arg26[%c0_55, %c320] : memref<1x2560xf32, #tpu.memory_space<vmem>>, vector<1x64xf32>
    tpu.vector_store %arg26[%c0_55, %c320], %80 {strides = array<i32>} : memref<1x2560xf32, #tpu.memory_space<vmem>>, vector<1x64xf32>,
    %82 = vector.extract_strided_slice %69 {offsets = [6, 0], sizes = [1, 64], strides = [1, 1]} : vector<40x64xf32> to vector<1x64xf32>
    %c0_56 = arith.constant 0 : index
    %c384 = arith.constant 384 : index
    %83 = vector.load %arg26[%c0_56, %c384] : memref<1x2560xf32, #tpu.memory_space<vmem>>, vector<1x64xf32>
    tpu.vector_store %arg26[%c0_56, %c384], %82 {strides = array<i32>} : memref<1x2560xf32, #tpu.memory_space<vmem>>, vector<1x64xf32>,
    %84 = vector.extract_strided_slice %69 {offsets = [7, 0], sizes = [1, 64], strides = [1, 1]} : vector<40x64xf32> to vector<1x64xf32>
    %c0_57 = arith.constant 0 : index
    %c448 = arith.constant 448 : index
    %85 = vector.load %arg26[%c0_57, %c448] : memref<1x2560xf32, #tpu.memory_space<vmem>>, vector<1x64xf32>
    tpu.vector_store %arg26[%c0_57, %c448], %84 {strides = array<i32>} : memref<1x2560xf32, #tpu.memory_space<vmem>>, vector<1x64xf32>,
    %86 = vector.extract_strided_slice %69 {offsets = [8, 0], sizes = [1, 64], strides = [1, 1]} : vector<40x64xf32> to vector<1x64xf32>
    %c0_58 = arith.constant 0 : index
    %c512 = arith.constant 512 : index
    %87 = vector.load %arg26[%c0_58, %c512] : memref<1x2560xf32, #tpu.memory_space<vmem>>, vector<1x64xf32>
    tpu.vector_store %arg26[%c0_58, %c512], %86 {strides = array<i32>} : memref<1x2560xf32, #tpu.memory_space<vmem>>, vector<1x64xf32>,
    %88 = vector.extract_strided_slice %69 {offsets = [9, 0], sizes = [1, 64], strides = [1, 1]} : vector<40x64xf32> to vector<1x64xf32>
    %c0_59 = arith.constant 0 : index
    %c576 = arith.constant 576 : index
    %89 = vector.load %arg26[%c0_59, %c576] : memref<1x2560xf32, #tpu.memory_space<vmem>>, vector<1x64xf32>
    tpu.vector_store %arg26[%c0_59, %c576], %88 {strides = array<i32>} : memref<1x2560xf32, #tpu.memory_space<vmem>>, vector<1x64xf32>,
    %90 = vector.extract_strided_slice %69 {offsets = [10, 0], sizes = [1, 64], strides = [1, 1]} : vector<40x64xf32> to vector<1x64xf32>
    %c0_60 = arith.constant 0 : index
    %c640 = arith.constant 640 : index
    %91 = vector.load %arg26[%c0_60, %c640] : memref<1x2560xf32, #tpu.memory_space<vmem>>, vector<1x64xf32>
    tpu.vector_store %arg26[%c0_60, %c640], %90 {strides = array<i32>} : memref<1x2560xf32, #tpu.memory_space<vmem>>, vector<1x64xf32>,
    %92 = vector.extract_strided_slice %69 {offsets = [11, 0], sizes = [1, 64], strides = [1, 1]} : vector<40x64xf32> to vector<1x64xf32>
    %c0_61 = arith.constant 0 : index
    %c704 = arith.constant 704 : index
    %93 = vector.load %arg26[%c0_61, %c704] : memref<1x2560xf32, #tpu.memory_space<vmem>>, vector<1x64xf32>
    tpu.vector_store %arg26[%c0_61, %c704], %92 {strides = array<i32>} : memref<1x2560xf32, #tpu.memory_space<vmem>>, vector<1x64xf32>,
    %94 = vector.extract_strided_slice %69 {offsets = [12, 0], sizes = [1, 64], strides = [1, 1]} : vector<40x64xf32> to vector<1x64xf32>
    %c0_62 = arith.constant 0 : index
    %c768 = arith.constant 768 : index
    %95 = vector.load %arg26[%c0_62, %c768] : memref<1x2560xf32, #tpu.memory_space<vmem>>, vector<1x64xf32>
    tpu.vector_store %arg26[%c0_62, %c768], %94 {strides = array<i32>} : memref<1x2560xf32, #tpu.memory_space<vmem>>, vector<1x64xf32>,
    %96 = vector.extract_strided_slice %69 {offsets = [13, 0], sizes = [1, 64], strides = [1, 1]} : vector<40x64xf32> to vector<1x64xf32>
    %c0_63 = arith.constant 0 : index
    %c832 = arith.constant 832 : index
    %97 = vector.load %arg26[%c0_63, %c832] : memref<1x2560xf32, #tpu.memory_space<vmem>>, vector<1x64xf32>
    tpu.vector_store %arg26[%c0_63, %c832], %96 {strides = array<i32>} : memref<1x2560xf32, #tpu.memory_space<vmem>>, vector<1x64xf32>,
    %98 = vector.extract_strided_slice %69 {offsets = [14, 0], sizes = [1, 64], strides = [1, 1]} : vector<40x64xf32> to vector<1x64xf32>
    %c0_64 = arith.constant 0 : index
    %c896 = arith.constant 896 : index
    %99 = vector.load %arg26[%c0_64, %c896] : memref<1x2560xf32, #tpu.memory_space<vmem>>, vector<1x64xf32>
    tpu.vector_store %arg26[%c0_64, %c896], %98 {strides = array<i32>} : memref<1x2560xf32, #tpu.memory_space<vmem>>, vector<1x64xf32>,
    %100 = vector.extract_strided_slice %69 {offsets = [15, 0], sizes = [1, 64], strides = [1, 1]} : vector<40x64xf32> to vector<1x64xf32>
    %c0_65 = arith.constant 0 : index
    %c960 = arith.constant 960 : index
    %101 = vector.load %arg26[%c0_65, %c960] : memref<1x2560xf32, #tpu.memory_space<vmem>>, vector<1x64xf32>
    tpu.vector_store %arg26[%c0_65, %c960], %100 {strides = array<i32>} : memref<1x2560xf32, #tpu.memory_space<vmem>>, vector<1x64xf32>,
    %102 = vector.extract_strided_slice %69 {offsets = [16, 0], sizes = [1, 64], strides = [1, 1]} : vector<40x64xf32> to vector<1x64xf32>
    %c0_66 = arith.constant 0 : index
    %c1024 = arith.constant 1024 : index
    %103 = vector.load %arg26[%c0_66, %c1024] : memref<1x2560xf32, #tpu.memory_space<vmem>>, vector<1x64xf32>
    tpu.vector_store %arg26[%c0_66, %c1024], %102 {strides = array<i32>} : memref<1x2560xf32, #tpu.memory_space<vmem>>, vector<1x64xf32>,
    %104 = vector.extract_strided_slice %69 {offsets = [17, 0], sizes = [1, 64], strides = [1, 1]} : vector<40x64xf32> to vector<1x64xf32>
    %c0_67 = arith.constant 0 : index
    %c1088 = arith.constant 1088 : index
    %105 = vector.load %arg26[%c0_67, %c1088] : memref<1x2560xf32, #tpu.memory_space<vmem>>, vector<1x64xf32>
    tpu.vector_store %arg26[%c0_67, %c1088], %104 {strides = array<i32>} : memref<1x2560xf32, #tpu.memory_space<vmem>>, vector<1x64xf32>,
    %106 = vector.extract_strided_slice %69 {offsets = [18, 0], sizes = [1, 64], strides = [1, 1]} : vector<40x64xf32> to vector<1x64xf32>
    %c0_68 = arith.constant 0 : index
    %c1152 = arith.constant 1152 : index
    %107 = vector.load %arg26[%c0_68, %c1152] : memref<1x2560xf32, #tpu.memory_space<vmem>>, vector<1x64xf32>
    tpu.vector_store %arg26[%c0_68, %c1152], %106 {strides = array<i32>} : memref<1x2560xf32, #tpu.memory_space<vmem>>, vector<1x64xf32>,
    %108 = vector.extract_strided_slice %69 {offsets = [19, 0], sizes = [1, 64], strides = [1, 1]} : vector<40x64xf32> to vector<1x64xf32>
    %c0_69 = arith.constant 0 : index
    %c1216 = arith.constant 1216 : index
    %109 = vector.load %arg26[%c0_69, %c1216] : memref<1x2560xf32, #tpu.memory_space<vmem>>, vector<1x64xf32>
    tpu.vector_store %arg26[%c0_69, %c1216], %108 {strides = array<i32>} : memref<1x2560xf32, #tpu.memory_space<vmem>>, vector<1x64xf32>,
    %110 = vector.extract_strided_slice %69 {offsets = [20, 0], sizes = [1, 64], strides = [1, 1]} : vector<40x64xf32> to vector<1x64xf32>
    %c0_70 = arith.constant 0 : index
    %c1280 = arith.constant 1280 : index
    %111 = vector.load %arg26[%c0_70, %c1280] : memref<1x2560xf32, #tpu.memory_space<vmem>>, vector<1x64xf32>
    tpu.vector_store %arg26[%c0_70, %c1280], %110 {strides = array<i32>} : memref<1x2560xf32, #tpu.memory_space<vmem>>, vector<1x64xf32>,
    %112 = vector.extract_strided_slice %69 {offsets = [21, 0], sizes = [1, 64], strides = [1, 1]} : vector<40x64xf32> to vector<1x64xf32>
    %c0_71 = arith.constant 0 : index
    %c1344 = arith.constant 1344 : index
    %113 = vector.load %arg26[%c0_71, %c1344] : memref<1x2560xf32, #tpu.memory_space<vmem>>, vector<1x64xf32>
    tpu.vector_store %arg26[%c0_71, %c1344], %112 {strides = array<i32>} : memref<1x2560xf32, #tpu.memory_space<vmem>>, vector<1x64xf32>,
    %114 = vector.extract_strided_slice %69 {offsets = [22, 0], sizes = [1, 64], strides = [1, 1]} : vector<40x64xf32> to vector<1x64xf32>
    %c0_72 = arith.constant 0 : index
    %c1408 = arith.constant 1408 : index
    %115 = vector.load %arg26[%c0_72, %c1408] : memref<1x2560xf32, #tpu.memory_space<vmem>>, vector<1x64xf32>
    tpu.vector_store %arg26[%c0_72, %c1408], %114 {strides = array<i32>} : memref<1x2560xf32, #tpu.memory_space<vmem>>, vector<1x64xf32>,
    %116 = vector.extract_strided_slice %69 {offsets = [23, 0], sizes = [1, 64], strides = [1, 1]} : vector<40x64xf32> to vector<1x64xf32>
    %c0_73 = arith.constant 0 : index
    %c1472 = arith.constant 1472 : index
    %117 = vector.load %arg26[%c0_73, %c1472] : memref<1x2560xf32, #tpu.memory_space<vmem>>, vector<1x64xf32>
    tpu.vector_store %arg26[%c0_73, %c1472], %116 {strides = array<i32>} : memref<1x2560xf32, #tpu.memory_space<vmem>>, vector<1x64xf32>,
    %118 = vector.extract_strided_slice %69 {offsets = [24, 0], sizes = [1, 64], strides = [1, 1]} : vector<40x64xf32> to vector<1x64xf32>
    %c0_74 = arith.constant 0 : index
    %c1536 = arith.constant 1536 : index
    %119 = vector.load %arg26[%c0_74, %c1536] : memref<1x2560xf32, #tpu.memory_space<vmem>>, vector<1x64xf32>
    tpu.vector_store %arg26[%c0_74, %c1536], %118 {strides = array<i32>} : memref<1x2560xf32, #tpu.memory_space<vmem>>, vector<1x64xf32>,
    %120 = vector.extract_strided_slice %69 {offsets = [25, 0], sizes = [1, 64], strides = [1, 1]} : vector<40x64xf32> to vector<1x64xf32>
    %c0_75 = arith.constant 0 : index
    %c1600 = arith.constant 1600 : index
    %121 = vector.load %arg26[%c0_75, %c1600] : memref<1x2560xf32, #tpu.memory_space<vmem>>, vector<1x64xf32>
    tpu.vector_store %arg26[%c0_75, %c1600], %120 {strides = array<i32>} : memref<1x2560xf32, #tpu.memory_space<vmem>>, vector<1x64xf32>,
    %122 = vector.extract_strided_slice %69 {offsets = [26, 0], sizes = [1, 64], strides = [1, 1]} : vector<40x64xf32> to vector<1x64xf32>
    %c0_76 = arith.constant 0 : index
    %c1664 = arith.constant 1664 : index
    %123 = vector.load %arg26[%c0_76, %c1664] : memref<1x2560xf32, #tpu.memory_space<vmem>>, vector<1x64xf32>
    tpu.vector_store %arg26[%c0_76, %c1664], %122 {strides = array<i32>} : memref<1x2560xf32, #tpu.memory_space<vmem>>, vector<1x64xf32>,
    %124 = vector.extract_strided_slice %69 {offsets = [27, 0], sizes = [1, 64], strides = [1, 1]} : vector<40x64xf32> to vector<1x64xf32>
    %c0_77 = arith.constant 0 : index
    %c1728 = arith.constant 1728 : index
    %125 = vector.load %arg26[%c0_77, %c1728] : memref<1x2560xf32, #tpu.memory_space<vmem>>, vector<1x64xf32>
    tpu.vector_store %arg26[%c0_77, %c1728], %124 {strides = array<i32>} : memref<1x2560xf32, #tpu.memory_space<vmem>>, vector<1x64xf32>,
    %126 = vector.extract_strided_slice %69 {offsets = [28, 0], sizes = [1, 64], strides = [1, 1]} : vector<40x64xf32> to vector<1x64xf32>
    %c0_78 = arith.constant 0 : index
    %c1792 = arith.constant 1792 : index
    %127 = vector.load %arg26[%c0_78, %c1792] : memref<1x2560xf32, #tpu.memory_space<vmem>>, vector<1x64xf32>
    tpu.vector_store %arg26[%c0_78, %c1792], %126 {strides = array<i32>} : memref<1x2560xf32, #tpu.memory_space<vmem>>, vector<1x64xf32>,
    %128 = vector.extract_strided_slice %69 {offsets = [29, 0], sizes = [1, 64], strides = [1, 1]} : vector<40x64xf32> to vector<1x64xf32>
    %c0_79 = arith.constant 0 : index
    %c1856 = arith.constant 1856 : index
    %129 = vector.load %arg26[%c0_79, %c1856] : memref<1x2560xf32, #tpu.memory_space<vmem>>, vector<1x64xf32>
    tpu.vector_store %arg26[%c0_79, %c1856], %128 {strides = array<i32>} : memref<1x2560xf32, #tpu.memory_space<vmem>>, vector<1x64xf32>,
    %130 = vector.extract_strided_slice %69 {offsets = [30, 0], sizes = [1, 64], strides = [1, 1]} : vector<40x64xf32> to vector<1x64xf32>
    %c0_80 = arith.constant 0 : index
    %c1920 = arith.constant 1920 : index
    %131 = vector.load %arg26[%c0_80, %c1920] : memref<1x2560xf32, #tpu.memory_space<vmem>>, vector<1x64xf32>
    tpu.vector_store %arg26[%c0_80, %c1920], %130 {strides = array<i32>} : memref<1x2560xf32, #tpu.memory_space<vmem>>, vector<1x64xf32>,
    %132 = vector.extract_strided_slice %69 {offsets = [31, 0], sizes = [1, 64], strides = [1, 1]} : vector<40x64xf32> to vector<1x64xf32>
    %c0_81 = arith.constant 0 : index
    %c1984 = arith.constant 1984 : index
    %133 = vector.load %arg26[%c0_81, %c1984] : memref<1x2560xf32, #tpu.memory_space<vmem>>, vector<1x64xf32>
    tpu.vector_store %arg26[%c0_81, %c1984], %132 {strides = array<i32>} : memref<1x2560xf32, #tpu.memory_space<vmem>>, vector<1x64xf32>,
    %134 = vector.extract_strided_slice %69 {offsets = [32, 0], sizes = [1, 64], strides = [1, 1]} : vector<40x64xf32> to vector<1x64xf32>
    %c0_82 = arith.constant 0 : index
    %c2048 = arith.constant 2048 : index
    %135 = vector.load %arg26[%c0_82, %c2048] : memref<1x2560xf32, #tpu.memory_space<vmem>>, vector<1x64xf32>
    tpu.vector_store %arg26[%c0_82, %c2048], %134 {strides = array<i32>} : memref<1x2560xf32, #tpu.memory_space<vmem>>, vector<1x64xf32>,
    %136 = vector.extract_strided_slice %69 {offsets = [33, 0], sizes = [1, 64], strides = [1, 1]} : vector<40x64xf32> to vector<1x64xf32>
    %c0_83 = arith.constant 0 : index
    %c2112 = arith.constant 2112 : index
    %137 = vector.load %arg26[%c0_83, %c2112] : memref<1x2560xf32, #tpu.memory_space<vmem>>, vector<1x64xf32>
    tpu.vector_store %arg26[%c0_83, %c2112], %136 {strides = array<i32>} : memref<1x2560xf32, #tpu.memory_space<vmem>>, vector<1x64xf32>,
    %138 = vector.extract_strided_slice %69 {offsets = [34, 0], sizes = [1, 64], strides = [1, 1]} : vector<40x64xf32> to vector<1x64xf32>
    %c0_84 = arith.constant 0 : index
    %c2176 = arith.constant 2176 : index
    %139 = vector.load %arg26[%c0_84, %c2176] : memref<1x2560xf32, #tpu.memory_space<vmem>>, vector<1x64xf32>
    tpu.vector_store %arg26[%c0_84, %c2176], %138 {strides = array<i32>} : memref<1x2560xf32, #tpu.memory_space<vmem>>, vector<1x64xf32>,
    %140 = vector.extract_strided_slice %69 {offsets = [35, 0], sizes = [1, 64], strides = [1, 1]} : vector<40x64xf32> to vector<1x64xf32>
    %c0_85 = arith.constant 0 : index
    %c2240 = arith.constant 2240 : index
    %141 = vector.load %arg26[%c0_85, %c2240] : memref<1x2560xf32, #tpu.memory_space<vmem>>, vector<1x64xf32>
    tpu.vector_store %arg26[%c0_85, %c2240], %140 {strides = array<i32>} : memref<1x2560xf32, #tpu.memory_space<vmem>>, vector<1x64xf32>,
    %142 = vector.extract_strided_slice %69 {offsets = [36, 0], sizes = [1, 64], strides = [1, 1]} : vector<40x64xf32> to vector<1x64xf32>
    %c0_86 = arith.constant 0 : index
    %c2304 = arith.constant 2304 : index
    %143 = vector.load %arg26[%c0_86, %c2304] : memref<1x2560xf32, #tpu.memory_space<vmem>>, vector<1x64xf32>
    tpu.vector_store %arg26[%c0_86, %c2304], %142 {strides = array<i32>} : memref<1x2560xf32, #tpu.memory_space<vmem>>, vector<1x64xf32>,
    %144 = vector.extract_strided_slice %69 {offsets = [37, 0], sizes = [1, 64], strides = [1, 1]} : vector<40x64xf32> to vector<1x64xf32>
    %c0_87 = arith.constant 0 : index
    %c2368 = arith.constant 2368 : index
    %145 = vector.load %arg26[%c0_87, %c2368] : memref<1x2560xf32, #tpu.memory_space<vmem>>, vector<1x64xf32>
    tpu.vector_store %arg26[%c0_87, %c2368], %144 {strides = array<i32>} : memref<1x2560xf32, #tpu.memory_space<vmem>>, vector<1x64xf32>,
    %146 = vector.extract_strided_slice %69 {offsets = [38, 0], sizes = [1, 64], strides = [1, 1]} : vector<40x64xf32> to vector<1x64xf32>
    %c0_88 = arith.constant 0 : index
    %c2432 = arith.constant 2432 : index
    %147 = vector.load %arg26[%c0_88, %c2432] : memref<1x2560xf32, #tpu.memory_space<vmem>>, vector<1x64xf32>
    tpu.vector_store %arg26[%c0_88, %c2432], %146 {strides = array<i32>} : memref<1x2560xf32, #tpu.memory_space<vmem>>, vector<1x64xf32>,
    %148 = vector.extract_strided_slice %69 {offsets = [39, 0], sizes = [1, 64], strides = [1, 1]} : vector<40x64xf32> to vector<1x64xf32>
    %c0_89 = arith.constant 0 : index
    %c2496 = arith.constant 2496 : index
    %149 = vector.load %arg26[%c0_89, %c2496] : memref<1x2560xf32, #tpu.memory_space<vmem>>, vector<1x64xf32>
    tpu.vector_store %arg26[%c0_89, %c2496], %148 {strides = array<i32>} : memref<1x2560xf32, #tpu.memory_space<vmem>>, vector<1x64xf32>,
    %c0_90 = arith.constant 0 : index
    %c0_91 = arith.constant 0 : index
    %150 = vector.load %arg26[%c0_90, %c0_91] : memref<1x2560xf32, #tpu.memory_space<vmem>>, vector<1x2560xf32>
    %151 = arith.truncf %150 : vector<1x2560xf32> to vector<1x2560xbf16>
    %c0_92 = arith.constant 0 : index
    %c0_93 = arith.constant 0 : index
    %152 = vector.load %arg6[%c0_92, %c0_93] : memref<2560x128xbf16, #tpu.memory_space<vmem>>, vector<2560x128xbf16>
    %cst_94 = arith.constant dense<0.000000e+00> : vector<1x128xf32>
    %153 = tpu.matmul %151, %152, %cst_94 {dimension_numbers = #tpu.dot_dimension_numbers<[1], [0], [0], [1], [0, 0, 1, 1], [], []>} : vector<1x2560xbf16>, vector<2560x128xbf16>, vector<1x128xf32> -> vector<1x128xf32>
    %c0_95 = arith.constant 0 : index
    %c0_96 = arith.constant 0 : index
    %154 = vector.load %arg7[%c0_95, %c0_96] : memref<1x128xf32, #tpu.memory_space<vmem>>, vector<1x128xf32>
    %155 = arith.addf %153, %154 : vector<1x128xf32>
    %cst_97 = arith.constant 0.000000e+00 : f32
    %156 = vector.broadcast %cst_97 : f32 to vector<1x128xf32>
    %157 = arith.maximumf %155, %156 : vector<1x128xf32>
    %c0_98 = arith.constant 0 : index
    %c0_99 = arith.constant 0 : index
    %158 = vector.load %arg8[%c0_98, %c0_99] : memref<128x64xf32, #tpu.memory_space<vmem>>, vector<128x64xf32>
    %cst_100 = arith.constant dense<0.000000e+00> : vector<1x64xf32>
    %159 = tpu.matmul %157, %158, %cst_100 {dimension_numbers = #tpu.dot_dimension_numbers<[1], [0], [0], [1], [0, 0, 1, 1], [], []>} : vector<1x128xf32>, vector<128x64xf32>, vector<1x64xf32> -> vector<1x64xf32>
    %c0_101 = arith.constant 0 : index
    %c0_102 = arith.constant 0 : index
    %160 = vector.load %arg9[%c0_101, %c0_102] : memref<1x64xf32, #tpu.memory_space<vmem>>, vector<1x64xf32>
    %161 = arith.addf %159, %160 : vector<1x64xf32>
    %c0_103 = arith.constant 0 : index
    %c0_104 = arith.constant 0 : index
    %162 = vector.load %arg10[%c0_103, %c0_104] : memref<64x8xf32, #tpu.memory_space<vmem>>, vector<64x8xf32>
    %cst_105 = arith.constant dense<0.000000e+00> : vector<1x8xf32>
    %163 = tpu.matmul %161, %162, %cst_105 {dimension_numbers = #tpu.dot_dimension_numbers<[1], [0], [0], [1], [0, 0, 1, 1], [], []>} : vector<1x64xf32>, vector<64x8xf32>, vector<1x8xf32> -> vector<1x8xf32>
    %c0_106 = arith.constant 0 : index
    %c0_107 = arith.constant 0 : index
    %164 = vector.load %arg11[%c0_106, %c0_107] : memref<1x8xf32, #tpu.memory_space<vmem>>, vector<1x8xf32>
    %165 = arith.addf %163, %164 : vector<1x8xf32>
    %166 = math.tanh %165 : vector<1x8xf32>
    %c0_108 = arith.constant 0 : index
    %c0_109 = arith.constant 0 : index
    %167 = vector.load %arg12[%c0_108, %c0_109] : memref<8x1xf32, #tpu.memory_space<vmem>>, vector<8x1xf32>
    %cst_110 = arith.constant dense<0.000000e+00> : vector<1x1xf32>
    %168 = tpu.matmul %166, %167, %cst_110 {dimension_numbers = #tpu.dot_dimension_numbers<[1], [0], [0], [1], [0, 0, 1, 1], [], []>} : vector<1x8xf32>, vector<8x1xf32>, vector<1x1xf32> -> vector<1x1xf32>
    %c0_111 = arith.constant 0 : index
    %c0_112 = arith.constant 0 : index
    %169 = vector.load %arg13[%c0_111, %c0_112] : memref<1x1xf32, #tpu.memory_space<vmem>>, vector<1x1xf32>
    %170 = arith.addf %168, %169 : vector<1x1xf32>
    %cst_113 = arith.constant 0.000000e+00 : f32
    %171 = vector.broadcast %cst_113 : f32 to vector<1x1xf32>
    %172 = arith.subf %171, %170 : vector<1x1xf32>
    %173 = math.exp %172 : vector<1x1xf32>
    %cst_114 = arith.constant 1.000000e+00 : f32
    %174 = vector.broadcast %cst_114 : f32 to vector<1x1xf32>
    %175 = arith.addf %174, %173 : vector<1x1xf32>
    %176 = tpu.reciprocal %175 {approx = true} : vector<1x1xf32> -> vector<1x1xf32>
    %c0_115 = arith.constant 0 : index
    %c0_116 = arith.constant 0 : index
    %c0_117 = arith.constant 0 : index
    %177 = vector.load %arg23[%c0_115, %c0_116, %c0_117] : memref<1x1x1xf32, #tpu.memory_space<vmem>>, vector<1x1x1xf32>
    %178 = vector.shape_cast %177 : vector<1x1x1xf32> to vector<1x1xf32>
    %179 = vector.shape_cast %176 : vector<1x1xf32> to vector<1x1x1xf32>
    tpu.vector_store %arg23[%c0_115, %c0_116, %c0_117], %179 {strides = array<i32>} : memref<1x1x1xf32, #tpu.memory_space<vmem>>, vector<1x1x1xf32>,
    %c0_118 = arith.constant 0 : index
    %c0_119 = arith.constant 0 : index
    %180 = vector.load %arg14[%c0_118, %c0_119] : memref<64x64xf32, #tpu.memory_space<vmem>>, vector<64x64xf32>
    %cst_120 = arith.constant dense<0.000000e+00> : vector<1x64xf32>
    %181 = tpu.matmul %161, %180, %cst_120 {dimension_numbers = #tpu.dot_dimension_numbers<[1], [0], [0], [1], [0, 0, 1, 1], [], []>} : vector<1x64xf32>, vector<64x64xf32>, vector<1x64xf32> -> vector<1x64xf32>
    %c0_121 = arith.constant 0 : index
    %c0_122 = arith.constant 0 : index
    %182 = vector.load %arg15[%c0_121, %c0_122] : memref<1x64xf32, #tpu.memory_space<vmem>>, vector<1x64xf32>
    %183 = arith.addf %181, %182 : vector<1x64xf32>
    %cst_123 = arith.constant 0.000000e+00 : f32
    %184 = vector.broadcast %cst_123 : f32 to vector<1x64xf32>
    %185 = arith.maximumf %183, %184 : vector<1x64xf32>
    %186 = arith.truncf %185 : vector<1x64xf32> to vector<1x64xbf16>
    %c0_124 = arith.constant 0 : index
    %c0_125 = arith.constant 0 : index
    %187 = vector.load %arg16[%c0_124, %c0_125] : memref<64x2560xbf16, #tpu.memory_space<vmem>>, vector<64x2560xbf16>
    %cst_126 = arith.constant dense<0.000000e+00> : vector<1x2560xf32>
    %188 = tpu.matmul %186, %187, %cst_126 {dimension_numbers = #tpu.dot_dimension_numbers<[1], [0], [0], [1], [0, 0, 1, 1], [], []>} : vector<1x64xbf16>, vector<64x2560xbf16>, vector<1x2560xf32> -> vector<1x2560xf32>
    %c0_127 = arith.constant 0 : index
    %c0_128 = arith.constant 0 : index
    %189 = vector.load %arg17[%c0_127, %c0_128] : memref<1x2560xf32, #tpu.memory_space<vmem>>, vector<1x2560xf32>
    %190 = arith.addf %188, %189 : vector<1x2560xf32>
    %cst_129 = arith.constant 0.000000e+00 : f32
    %191 = vector.broadcast %cst_129 : f32 to vector<1x2560xf32>
    %192 = arith.maximumf %190, %191 : vector<1x2560xf32>
    %cst_130 = arith.constant 0.000000e+00 : f32
    %193 = vector.broadcast %cst_130 : f32 to vector<1x64xf32>
    %c0_131 = arith.constant 0 : index
    %c0_132 = arith.constant 0 : index
    %194 = vector.load %arg27[%c0_131, %c0_132] : memref<42x64xf32, #tpu.memory_space<vmem>>, vector<1x64xf32>
    tpu.vector_store %arg27[%c0_131, %c0_132], %193 {strides = array<i32>} : memref<42x64xf32, #tpu.memory_space<vmem>>, vector<1x64xf32>,
    %cst_133 = arith.constant 0.000000e+00 : f32
    %195 = vector.broadcast %cst_133 : f32 to vector<1x64xf32>
    %c41 = arith.constant 41 : index
    %c0_134 = arith.constant 0 : index
    %196 = vector.load %arg27[%c41, %c0_134] : memref<42x64xf32, #tpu.memory_space<vmem>>, vector<1x64xf32>
    tpu.vector_store %arg27[%c41, %c0_134], %195 {strides = array<i32>} : memref<42x64xf32, #tpu.memory_space<vmem>>, vector<1x64xf32>,
    %197 = vector.extract_strided_slice %192 {offsets = [0, 0], sizes = [1, 64], strides = [1, 1]} : vector<1x2560xf32> to vector<1x64xf32>
    %c1_135 = arith.constant 1 : index
    %c0_136 = arith.constant 0 : index
    %198 = vector.load %arg27[%c1_135, %c0_136] : memref<42x64xf32, #tpu.memory_space<vmem>>, vector<1x64xf32>
    tpu.vector_store %arg27[%c1_135, %c0_136], %197 {strides = array<i32>} : memref<42x64xf32, #tpu.memory_space<vmem>>, vector<1x64xf32>,
    %199 = vector.extract_strided_slice %192 {offsets = [0, 64], sizes = [1, 64], strides = [1, 1]} : vector<1x2560xf32> to vector<1x64xf32>
    %c2_137 = arith.constant 2 : index
    %c0_138 = arith.constant 0 : index
    %200 = vector.load %arg27[%c2_137, %c0_138] : memref<42x64xf32, #tpu.memory_space<vmem>>, vector<1x64xf32>
    tpu.vector_store %arg27[%c2_137, %c0_138], %199 {strides = array<i32>} : memref<42x64xf32, #tpu.memory_space<vmem>>, vector<1x64xf32>,
    %201 = vector.extract_strided_slice %192 {offsets = [0, 128], sizes = [1, 64], strides = [1, 1]} : vector<1x2560xf32> to vector<1x64xf32>
    %c3 = arith.constant 3 : index
    %c0_139 = arith.constant 0 : index
    %202 = vector.load %arg27[%c3, %c0_139] : memref<42x64xf32, #tpu.memory_space<vmem>>, vector<1x64xf32>
    tpu.vector_store %arg27[%c3, %c0_139], %201 {strides = array<i32>} : memref<42x64xf32, #tpu.memory_space<vmem>>, vector<1x64xf32>,
    %203 = vector.extract_strided_slice %192 {offsets = [0, 192], sizes = [1, 64], strides = [1, 1]} : vector<1x2560xf32> to vector<1x64xf32>
    %c4 = arith.constant 4 : index
    %c0_140 = arith.constant 0 : index
    %204 = vector.load %arg27[%c4, %c0_140] : memref<42x64xf32, #tpu.memory_space<vmem>>, vector<1x64xf32>
    tpu.vector_store %arg27[%c4, %c0_140], %203 {strides = array<i32>} : memref<42x64xf32, #tpu.memory_space<vmem>>, vector<1x64xf32>,
    %205 = vector.extract_strided_slice %192 {offsets = [0, 256], sizes = [1, 64], strides = [1, 1]} : vector<1x2560xf32> to vector<1x64xf32>
    %c5 = arith.constant 5 : index
    %c0_141 = arith.constant 0 : index
    %206 = vector.load %arg27[%c5, %c0_141] : memref<42x64xf32, #tpu.memory_space<vmem>>, vector<1x64xf32>
    tpu.vector_store %arg27[%c5, %c0_141], %205 {strides = array<i32>} : memref<42x64xf32, #tpu.memory_space<vmem>>, vector<1x64xf32>,
    %207 = vector.extract_strided_slice %192 {offsets = [0, 320], sizes = [1, 64], strides = [1, 1]} : vector<1x2560xf32> to vector<1x64xf32>
    %c6_142 = arith.constant 6 : index
    %c0_143 = arith.constant 0 : index
    %208 = vector.load %arg27[%c6_142, %c0_143] : memref<42x64xf32, #tpu.memory_space<vmem>>, vector<1x64xf32>
    tpu.vector_store %arg27[%c6_142, %c0_143], %207 {strides = array<i32>} : memref<42x64xf32, #tpu.memory_space<vmem>>, vector<1x64xf32>,
    %209 = vector.extract_strided_slice %192 {offsets = [0, 384], sizes = [1, 64], strides = [1, 1]} : vector<1x2560xf32> to vector<1x64xf32>
    %c7 = arith.constant 7 : index
    %c0_144 = arith.constant 0 : index
    %210 = vector.load %arg27[%c7, %c0_144] : memref<42x64xf32, #tpu.memory_space<vmem>>, vector<1x64xf32>
    tpu.vector_store %arg27[%c7, %c0_144], %209 {strides = array<i32>} : memref<42x64xf32, #tpu.memory_space<vmem>>, vector<1x64xf32>,
    %211 = vector.extract_strided_slice %192 {offsets = [0, 448], sizes = [1, 64], strides = [1, 1]} : vector<1x2560xf32> to vector<1x64xf32>
    %c8 = arith.constant 8 : index
    %c0_145 = arith.constant 0 : index
    %212 = vector.load %arg27[%c8, %c0_145] : memref<42x64xf32, #tpu.memory_space<vmem>>, vector<1x64xf32>
    tpu.vector_store %arg27[%c8, %c0_145], %211 {strides = array<i32>} : memref<42x64xf32, #tpu.memory_space<vmem>>, vector<1x64xf32>,
    %213 = vector.extract_strided_slice %192 {offsets = [0, 512], sizes = [1, 64], strides = [1, 1]} : vector<1x2560xf32> to vector<1x64xf32>
    %c9 = arith.constant 9 : index
    %c0_146 = arith.constant 0 : index
    %214 = vector.load %arg27[%c9, %c0_146] : memref<42x64xf32, #tpu.memory_space<vmem>>, vector<1x64xf32>
    tpu.vector_store %arg27[%c9, %c0_146], %213 {strides = array<i32>} : memref<42x64xf32, #tpu.memory_space<vmem>>, vector<1x64xf32>,
    %215 = vector.extract_strided_slice %192 {offsets = [0, 576], sizes = [1, 64], strides = [1, 1]} : vector<1x2560xf32> to vector<1x64xf32>
    %c10 = arith.constant 10 : index
    %c0_147 = arith.constant 0 : index
    %216 = vector.load %arg27[%c10, %c0_147] : memref<42x64xf32, #tpu.memory_space<vmem>>, vector<1x64xf32>
    tpu.vector_store %arg27[%c10, %c0_147], %215 {strides = array<i32>} : memref<42x64xf32, #tpu.memory_space<vmem>>, vector<1x64xf32>,
    %217 = vector.extract_strided_slice %192 {offsets = [0, 640], sizes = [1, 64], strides = [1, 1]} : vector<1x2560xf32> to vector<1x64xf32>
    %c11 = arith.constant 11 : index
    %c0_148 = arith.constant 0 : index
    %218 = vector.load %arg27[%c11, %c0_148] : memref<42x64xf32, #tpu.memory_space<vmem>>, vector<1x64xf32>
    tpu.vector_store %arg27[%c11, %c0_148], %217 {strides = array<i32>} : memref<42x64xf32, #tpu.memory_space<vmem>>, vector<1x64xf32>,
    %219 = vector.extract_strided_slice %192 {offsets = [0, 704], sizes = [1, 64], strides = [1, 1]} : vector<1x2560xf32> to vector<1x64xf32>
    %c12 = arith.constant 12 : index
    %c0_149 = arith.constant 0 : index
    %220 = vector.load %arg27[%c12, %c0_149] : memref<42x64xf32, #tpu.memory_space<vmem>>, vector<1x64xf32>
    tpu.vector_store %arg27[%c12, %c0_149], %219 {strides = array<i32>} : memref<42x64xf32, #tpu.memory_space<vmem>>, vector<1x64xf32>,
    %221 = vector.extract_strided_slice %192 {offsets = [0, 768], sizes = [1, 64], strides = [1, 1]} : vector<1x2560xf32> to vector<1x64xf32>
    %c13 = arith.constant 13 : index
    %c0_150 = arith.constant 0 : index
    %222 = vector.load %arg27[%c13, %c0_150] : memref<42x64xf32, #tpu.memory_space<vmem>>, vector<1x64xf32>
    tpu.vector_store %arg27[%c13, %c0_150], %221 {strides = array<i32>} : memref<42x64xf32, #tpu.memory_space<vmem>>, vector<1x64xf32>,
    %223 = vector.extract_strided_slice %192 {offsets = [0, 832], sizes = [1, 64], strides = [1, 1]} : vector<1x2560xf32> to vector<1x64xf32>
    %c14 = arith.constant 14 : index
    %c0_151 = arith.constant 0 : index
    %224 = vector.load %arg27[%c14, %c0_151] : memref<42x64xf32, #tpu.memory_space<vmem>>, vector<1x64xf32>
    tpu.vector_store %arg27[%c14, %c0_151], %223 {strides = array<i32>} : memref<42x64xf32, #tpu.memory_space<vmem>>, vector<1x64xf32>,
    %225 = vector.extract_strided_slice %192 {offsets = [0, 896], sizes = [1, 64], strides = [1, 1]} : vector<1x2560xf32> to vector<1x64xf32>
    %c15 = arith.constant 15 : index
    %c0_152 = arith.constant 0 : index
    %226 = vector.load %arg27[%c15, %c0_152] : memref<42x64xf32, #tpu.memory_space<vmem>>, vector<1x64xf32>
    tpu.vector_store %arg27[%c15, %c0_152], %225 {strides = array<i32>} : memref<42x64xf32, #tpu.memory_space<vmem>>, vector<1x64xf32>,
    %227 = vector.extract_strided_slice %192 {offsets = [0, 960], sizes = [1, 64], strides = [1, 1]} : vector<1x2560xf32> to vector<1x64xf32>
    %c16 = arith.constant 16 : index
    %c0_153 = arith.constant 0 : index
    %228 = vector.load %arg27[%c16, %c0_153] : memref<42x64xf32, #tpu.memory_space<vmem>>, vector<1x64xf32>
    tpu.vector_store %arg27[%c16, %c0_153], %227 {strides = array<i32>} : memref<42x64xf32, #tpu.memory_space<vmem>>, vector<1x64xf32>,
    %229 = vector.extract_strided_slice %192 {offsets = [0, 1024], sizes = [1, 64], strides = [1, 1]} : vector<1x2560xf32> to vector<1x64xf32>
    %c17 = arith.constant 17 : index
    %c0_154 = arith.constant 0 : index
    %230 = vector.load %arg27[%c17, %c0_154] : memref<42x64xf32, #tpu.memory_space<vmem>>, vector<1x64xf32>
    tpu.vector_store %arg27[%c17, %c0_154], %229 {strides = array<i32>} : memref<42x64xf32, #tpu.memory_space<vmem>>, vector<1x64xf32>,
    %231 = vector.extract_strided_slice %192 {offsets = [0, 1088], sizes = [1, 64], strides = [1, 1]} : vector<1x2560xf32> to vector<1x64xf32>
    %c18 = arith.constant 18 : index
    %c0_155 = arith.constant 0 : index
    %232 = vector.load %arg27[%c18, %c0_155] : memref<42x64xf32, #tpu.memory_space<vmem>>, vector<1x64xf32>
    tpu.vector_store %arg27[%c18, %c0_155], %231 {strides = array<i32>} : memref<42x64xf32, #tpu.memory_space<vmem>>, vector<1x64xf32>,
    %233 = vector.extract_strided_slice %192 {offsets = [0, 1152], sizes = [1, 64], strides = [1, 1]} : vector<1x2560xf32> to vector<1x64xf32>
    %c19 = arith.constant 19 : index
    %c0_156 = arith.constant 0 : index
    %234 = vector.load %arg27[%c19, %c0_156] : memref<42x64xf32, #tpu.memory_space<vmem>>, vector<1x64xf32>
    tpu.vector_store %arg27[%c19, %c0_156], %233 {strides = array<i32>} : memref<42x64xf32, #tpu.memory_space<vmem>>, vector<1x64xf32>,
    %235 = vector.extract_strided_slice %192 {offsets = [0, 1216], sizes = [1, 64], strides = [1, 1]} : vector<1x2560xf32> to vector<1x64xf32>
    %c20 = arith.constant 20 : index
    %c0_157 = arith.constant 0 : index
    %236 = vector.load %arg27[%c20, %c0_157] : memref<42x64xf32, #tpu.memory_space<vmem>>, vector<1x64xf32>
    tpu.vector_store %arg27[%c20, %c0_157], %235 {strides = array<i32>} : memref<42x64xf32, #tpu.memory_space<vmem>>, vector<1x64xf32>,
    %237 = vector.extract_strided_slice %192 {offsets = [0, 1280], sizes = [1, 64], strides = [1, 1]} : vector<1x2560xf32> to vector<1x64xf32>
    %c21 = arith.constant 21 : index
    %c0_158 = arith.constant 0 : index
    %238 = vector.load %arg27[%c21, %c0_158] : memref<42x64xf32, #tpu.memory_space<vmem>>, vector<1x64xf32>
    tpu.vector_store %arg27[%c21, %c0_158], %237 {strides = array<i32>} : memref<42x64xf32, #tpu.memory_space<vmem>>, vector<1x64xf32>,
    %239 = vector.extract_strided_slice %192 {offsets = [0, 1344], sizes = [1, 64], strides = [1, 1]} : vector<1x2560xf32> to vector<1x64xf32>
    %c22 = arith.constant 22 : index
    %c0_159 = arith.constant 0 : index
    %240 = vector.load %arg27[%c22, %c0_159] : memref<42x64xf32, #tpu.memory_space<vmem>>, vector<1x64xf32>
    tpu.vector_store %arg27[%c22, %c0_159], %239 {strides = array<i32>} : memref<42x64xf32, #tpu.memory_space<vmem>>, vector<1x64xf32>,
    %241 = vector.extract_strided_slice %192 {offsets = [0, 1408], sizes = [1, 64], strides = [1, 1]} : vector<1x2560xf32> to vector<1x64xf32>
    %c23 = arith.constant 23 : index
    %c0_160 = arith.constant 0 : index
    %242 = vector.load %arg27[%c23, %c0_160] : memref<42x64xf32, #tpu.memory_space<vmem>>, vector<1x64xf32>
    tpu.vector_store %arg27[%c23, %c0_160], %241 {strides = array<i32>} : memref<42x64xf32, #tpu.memory_space<vmem>>, vector<1x64xf32>,
    %243 = vector.extract_strided_slice %192 {offsets = [0, 1472], sizes = [1, 64], strides = [1, 1]} : vector<1x2560xf32> to vector<1x64xf32>
    %c24 = arith.constant 24 : index
    %c0_161 = arith.constant 0 : index
    %244 = vector.load %arg27[%c24, %c0_161] : memref<42x64xf32, #tpu.memory_space<vmem>>, vector<1x64xf32>
    tpu.vector_store %arg27[%c24, %c0_161], %243 {strides = array<i32>} : memref<42x64xf32, #tpu.memory_space<vmem>>, vector<1x64xf32>,
    %245 = vector.extract_strided_slice %192 {offsets = [0, 1536], sizes = [1, 64], strides = [1, 1]} : vector<1x2560xf32> to vector<1x64xf32>
    %c25 = arith.constant 25 : index
    %c0_162 = arith.constant 0 : index
    %246 = vector.load %arg27[%c25, %c0_162] : memref<42x64xf32, #tpu.memory_space<vmem>>, vector<1x64xf32>
    tpu.vector_store %arg27[%c25, %c0_162], %245 {strides = array<i32>} : memref<42x64xf32, #tpu.memory_space<vmem>>, vector<1x64xf32>,
    %247 = vector.extract_strided_slice %192 {offsets = [0, 1600], sizes = [1, 64], strides = [1, 1]} : vector<1x2560xf32> to vector<1x64xf32>
    %c26 = arith.constant 26 : index
    %c0_163 = arith.constant 0 : index
    %248 = vector.load %arg27[%c26, %c0_163] : memref<42x64xf32, #tpu.memory_space<vmem>>, vector<1x64xf32>
    tpu.vector_store %arg27[%c26, %c0_163], %247 {strides = array<i32>} : memref<42x64xf32, #tpu.memory_space<vmem>>, vector<1x64xf32>,
    %249 = vector.extract_strided_slice %192 {offsets = [0, 1664], sizes = [1, 64], strides = [1, 1]} : vector<1x2560xf32> to vector<1x64xf32>
    %c27 = arith.constant 27 : index
    %c0_164 = arith.constant 0 : index
    %250 = vector.load %arg27[%c27, %c0_164] : memref<42x64xf32, #tpu.memory_space<vmem>>, vector<1x64xf32>
    tpu.vector_store %arg27[%c27, %c0_164], %249 {strides = array<i32>} : memref<42x64xf32, #tpu.memory_space<vmem>>, vector<1x64xf32>,
    %251 = vector.extract_strided_slice %192 {offsets = [0, 1728], sizes = [1, 64], strides = [1, 1]} : vector<1x2560xf32> to vector<1x64xf32>
    %c28 = arith.constant 28 : index
    %c0_165 = arith.constant 0 : index
    %252 = vector.load %arg27[%c28, %c0_165] : memref<42x64xf32, #tpu.memory_space<vmem>>, vector<1x64xf32>
    tpu.vector_store %arg27[%c28, %c0_165], %251 {strides = array<i32>} : memref<42x64xf32, #tpu.memory_space<vmem>>, vector<1x64xf32>,
    %253 = vector.extract_strided_slice %192 {offsets = [0, 1792], sizes = [1, 64], strides = [1, 1]} : vector<1x2560xf32> to vector<1x64xf32>
    %c29 = arith.constant 29 : index
    %c0_166 = arith.constant 0 : index
    %254 = vector.load %arg27[%c29, %c0_166] : memref<42x64xf32, #tpu.memory_space<vmem>>, vector<1x64xf32>
    tpu.vector_store %arg27[%c29, %c0_166], %253 {strides = array<i32>} : memref<42x64xf32, #tpu.memory_space<vmem>>, vector<1x64xf32>,
    %255 = vector.extract_strided_slice %192 {offsets = [0, 1856], sizes = [1, 64], strides = [1, 1]} : vector<1x2560xf32> to vector<1x64xf32>
    %c30 = arith.constant 30 : index
    %c0_167 = arith.constant 0 : index
    %256 = vector.load %arg27[%c30, %c0_167] : memref<42x64xf32, #tpu.memory_space<vmem>>, vector<1x64xf32>
    tpu.vector_store %arg27[%c30, %c0_167], %255 {strides = array<i32>} : memref<42x64xf32, #tpu.memory_space<vmem>>, vector<1x64xf32>,
    %257 = vector.extract_strided_slice %192 {offsets = [0, 1920], sizes = [1, 64], strides = [1, 1]} : vector<1x2560xf32> to vector<1x64xf32>
    %c31 = arith.constant 31 : index
    %c0_168 = arith.constant 0 : index
    %258 = vector.load %arg27[%c31, %c0_168] : memref<42x64xf32, #tpu.memory_space<vmem>>, vector<1x64xf32>
    tpu.vector_store %arg27[%c31, %c0_168], %257 {strides = array<i32>} : memref<42x64xf32, #tpu.memory_space<vmem>>, vector<1x64xf32>,
    %259 = vector.extract_strided_slice %192 {offsets = [0, 1984], sizes = [1, 64], strides = [1, 1]} : vector<1x2560xf32> to vector<1x64xf32>
    %c32_169 = arith.constant 32 : index
    %c0_170 = arith.constant 0 : index
    %260 = vector.load %arg27[%c32_169, %c0_170] : memref<42x64xf32, #tpu.memory_space<vmem>>, vector<1x64xf32>
    tpu.vector_store %arg27[%c32_169, %c0_170], %259 {strides = array<i32>} : memref<42x64xf32, #tpu.memory_space<vmem>>, vector<1x64xf32>,
    %261 = vector.extract_strided_slice %192 {offsets = [0, 2048], sizes = [1, 64], strides = [1, 1]} : vector<1x2560xf32> to vector<1x64xf32>
    %c33 = arith.constant 33 : index
    %c0_171 = arith.constant 0 : index
    %262 = vector.load %arg27[%c33, %c0_171] : memref<42x64xf32, #tpu.memory_space<vmem>>, vector<1x64xf32>
    tpu.vector_store %arg27[%c33, %c0_171], %261 {strides = array<i32>} : memref<42x64xf32, #tpu.memory_space<vmem>>, vector<1x64xf32>,
    %263 = vector.extract_strided_slice %192 {offsets = [0, 2112], sizes = [1, 64], strides = [1, 1]} : vector<1x2560xf32> to vector<1x64xf32>
    %c34 = arith.constant 34 : index
    %c0_172 = arith.constant 0 : index
    %264 = vector.load %arg27[%c34, %c0_172] : memref<42x64xf32, #tpu.memory_space<vmem>>, vector<1x64xf32>
    tpu.vector_store %arg27[%c34, %c0_172], %263 {strides = array<i32>} : memref<42x64xf32, #tpu.memory_space<vmem>>, vector<1x64xf32>,
    %265 = vector.extract_strided_slice %192 {offsets = [0, 2176], sizes = [1, 64], strides = [1, 1]} : vector<1x2560xf32> to vector<1x64xf32>
    %c35 = arith.constant 35 : index
    %c0_173 = arith.constant 0 : index
    %266 = vector.load %arg27[%c35, %c0_173] : memref<42x64xf32, #tpu.memory_space<vmem>>, vector<1x64xf32>
    tpu.vector_store %arg27[%c35, %c0_173], %265 {strides = array<i32>} : memref<42x64xf32, #tpu.memory_space<vmem>>, vector<1x64xf32>,
    %267 = vector.extract_strided_slice %192 {offsets = [0, 2240], sizes = [1, 64], strides = [1, 1]} : vector<1x2560xf32> to vector<1x64xf32>
    %c36 = arith.constant 36 : index
    %c0_174 = arith.constant 0 : index
    %268 = vector.load %arg27[%c36, %c0_174] : memref<42x64xf32, #tpu.memory_space<vmem>>, vector<1x64xf32>
    tpu.vector_store %arg27[%c36, %c0_174], %267 {strides = array<i32>} : memref<42x64xf32, #tpu.memory_space<vmem>>, vector<1x64xf32>,
    %269 = vector.extract_strided_slice %192 {offsets = [0, 2304], sizes = [1, 64], strides = [1, 1]} : vector<1x2560xf32> to vector<1x64xf32>
    %c37 = arith.constant 37 : index
    %c0_175 = arith.constant 0 : index
    %270 = vector.load %arg27[%c37, %c0_175] : memref<42x64xf32, #tpu.memory_space<vmem>>, vector<1x64xf32>
    tpu.vector_store %arg27[%c37, %c0_175], %269 {strides = array<i32>} : memref<42x64xf32, #tpu.memory_space<vmem>>, vector<1x64xf32>,
    %271 = vector.extract_strided_slice %192 {offsets = [0, 2368], sizes = [1, 64], strides = [1, 1]} : vector<1x2560xf32> to vector<1x64xf32>
    %c38 = arith.constant 38 : index
    %c0_176 = arith.constant 0 : index
    %272 = vector.load %arg27[%c38, %c0_176] : memref<42x64xf32, #tpu.memory_space<vmem>>, vector<1x64xf32>
    tpu.vector_store %arg27[%c38, %c0_176], %271 {strides = array<i32>} : memref<42x64xf32, #tpu.memory_space<vmem>>, vector<1x64xf32>,
    %273 = vector.extract_strided_slice %192 {offsets = [0, 2432], sizes = [1, 64], strides = [1, 1]} : vector<1x2560xf32> to vector<1x64xf32>
    %c39_177 = arith.constant 39 : index
    %c0_178 = arith.constant 0 : index
    %274 = vector.load %arg27[%c39_177, %c0_178] : memref<42x64xf32, #tpu.memory_space<vmem>>, vector<1x64xf32>
    tpu.vector_store %arg27[%c39_177, %c0_178], %273 {strides = array<i32>} : memref<42x64xf32, #tpu.memory_space<vmem>>, vector<1x64xf32>,
    %275 = vector.extract_strided_slice %192 {offsets = [0, 2496], sizes = [1, 64], strides = [1, 1]} : vector<1x2560xf32> to vector<1x64xf32>
    %c40_179 = arith.constant 40 : index
    %c0_180 = arith.constant 0 : index
    %276 = vector.load %arg27[%c40_179, %c0_180] : memref<42x64xf32, #tpu.memory_space<vmem>>, vector<1x64xf32>
    tpu.vector_store %arg27[%c40_179, %c0_180], %275 {strides = array<i32>} : memref<42x64xf32, #tpu.memory_space<vmem>>, vector<1x64xf32>,
    %c1_181 = arith.constant 1 : index
    %c0_182 = arith.constant 0 : index
    %277 = vector.load %arg27[%c1_181, %c0_182] : memref<42x64xf32, #tpu.memory_space<vmem>>, vector<41x64xf32>
    %c0_183 = arith.constant 0 : index
    %c0_184 = arith.constant 0 : index
    %278 = vector.load %arg27[%c0_183, %c0_184] : memref<42x64xf32, #tpu.memory_space<vmem>>, vector<41x64xf32>
    %c0_185 = arith.constant 0 : index
    %c0_186 = arith.constant 0 : index
    %279 = vector.load %arg18[%c0_185, %c0_186] : memref<64x96xf32, #tpu.memory_space<vmem>>, vector<64x96xf32>
    %cst_187 = arith.constant dense<0.000000e+00> : vector<41x96xf32>
    %280 = tpu.matmul %277, %279, %cst_187 {dimension_numbers = #tpu.dot_dimension_numbers<[1], [0], [0], [1], [0, 0, 1, 1], [], []>} : vector<41x64xf32>, vector<64x96xf32>, vector<41x96xf32> -> vector<41x96xf32>
    %c0_188 = arith.constant 0 : index
    %c64_189 = arith.constant 64 : index
    %281 = vector.load %arg18[%c0_188, %c64_189] : memref<64x96xf32, #tpu.memory_space<vmem>>, vector<64x32xf32>
    %cst_190 = arith.constant dense<0.000000e+00> : vector<41x32xf32>
    %282 = tpu.matmul %278, %281, %cst_190 {dimension_numbers = #tpu.dot_dimension_numbers<[1], [0], [0], [1], [0, 0, 1, 1], [], []>} : vector<41x64xf32>, vector<64x32xf32>, vector<41x32xf32> -> vector<41x32xf32>
    %c0_191 = arith.constant 0 : index
    %c0_192 = arith.constant 0 : index
    %283 = vector.load %arg19[%c0_191, %c0_192] : memref<1x32xf32, #tpu.memory_space<vmem>>, vector<1x32xf32>
    %284 = vector.extract_strided_slice %280 {offsets = [0, 0], sizes = [41, 32], strides = [1, 1]} : vector<41x96xf32> to vector<41x32xf32>
    %285 = vector.broadcast %283 : vector<1x32xf32> to vector<41x32xf32>
    %286 = arith.addf %285, %284 : vector<41x32xf32>
    %287 = arith.addf %286, %282 : vector<41x32xf32>
    %cst_193 = arith.constant 0.000000e+00 : f32
    %288 = vector.broadcast %cst_193 : f32 to vector<41x32xf32>
    %289 = arith.maximumf %287, %288 : vector<41x32xf32>
    %290 = vector.extract_strided_slice %280 {offsets = [0, 32], sizes = [41, 32], strides = [1, 1]} : vector<41x96xf32> to vector<41x32xf32>
    %291 = vector.broadcast %283 : vector<1x32xf32> to vector<41x32xf32>
    %292 = arith.addf %291, %290 : vector<41x32xf32>
    %cst_194 = arith.constant 0.000000e+00 : f32
    %293 = vector.broadcast %cst_194 : f32 to vector<41x32xf32>
    %294 = arith.maximumf %292, %293 : vector<41x32xf32>
    %c0_195 = arith.constant 0 : index
    %c0_196 = arith.constant 0 : index
    %295 = vector.load %arg20[%c0_195, %c0_196] : memref<32x3xf32, #tpu.memory_space<vmem>>, vector<32x3xf32>
    %cst_197 = arith.constant dense<0.000000e+00> : vector<41x3xf32>
    %296 = tpu.matmul %289, %295, %cst_197 {dimension_numbers = #tpu.dot_dimension_numbers<[1], [0], [0], [1], [0, 0, 1, 1], [], []>} : vector<41x32xf32>, vector<32x3xf32>, vector<41x3xf32> -> vector<41x3xf32>
    %c0_198 = arith.constant 0 : index
    %c0_199 = arith.constant 0 : index
    %297 = vector.load %arg20[%c0_198, %c0_199] : memref<32x3xf32, #tpu.memory_space<vmem>>, vector<32x3xf32>
    %cst_200 = arith.constant dense<0.000000e+00> : vector<41x3xf32>
    %298 = tpu.matmul %294, %297, %cst_200 {dimension_numbers = #tpu.dot_dimension_numbers<[1], [0], [0], [1], [0, 0, 1, 1], [], []>} : vector<41x32xf32>, vector<32x3xf32>, vector<41x3xf32> -> vector<41x3xf32>
    %c0_201 = arith.constant 0 : index
    %c0_202 = arith.constant 0 : index
    %299 = vector.load %arg21[%c0_201, %c0_202] : memref<1x1xf32, #tpu.memory_space<vmem>>, vector<1x1xf32>
    %300 = vector.extract_strided_slice %296 {offsets = [0, 0], sizes = [1, 1], strides = [1, 1]} : vector<41x3xf32> to vector<1x1xf32>
    %301 = arith.addf %299, %300 : vector<1x1xf32>
    %c0_203 = arith.constant 0 : index
    %c0_204 = arith.constant 0 : index
    %c0_205 = arith.constant 0 : index
    %302 = vector.load %arg22[%c0_203, %c0_204, %c0_205] : memref<1x42x4xf32, #tpu.memory_space<vmem>>, vector<1x1x1xf32>
    %303 = vector.shape_cast %302 : vector<1x1x1xf32> to vector<1x1xf32>
    %304 = vector.shape_cast %301 : vector<1x1xf32> to vector<1x1x1xf32>
    tpu.vector_store %arg22[%c0_203, %c0_204, %c0_205], %304 {strides = array<i32>} : memref<1x42x4xf32, #tpu.memory_space<vmem>>, vector<1x1x1xf32>,
    %305 = vector.extract_strided_slice %296 {offsets = [1, 0], sizes = [40, 1], strides = [1, 1]} : vector<41x3xf32> to vector<40x1xf32>
    %306 = vector.broadcast %299 : vector<1x1xf32> to vector<40x1xf32>
    %307 = arith.addf %306, %305 : vector<40x1xf32>
    %308 = vector.extract_strided_slice %298 {offsets = [0, 2], sizes = [40, 1], strides = [1, 1]} : vector<41x3xf32> to vector<40x1xf32>
    %309 = arith.addf %307, %308 : vector<40x1xf32>
    %c0_206 = arith.constant 0 : index
    %c1_207 = arith.constant 1 : index
    %c0_208 = arith.constant 0 : index
    %310 = vector.load %arg22[%c0_206, %c1_207, %c0_208] : memref<1x42x4xf32, #tpu.memory_space<vmem>>, vector<1x40x1xf32>
    %311 = vector.shape_cast %310 : vector<1x40x1xf32> to vector<40x1xf32>
    %312 = vector.shape_cast %309 : vector<40x1xf32> to vector<1x40x1xf32>
    tpu.vector_store %arg22[%c0_206, %c1_207, %c0_208], %312 {strides = array<i32>} : memref<1x42x4xf32, #tpu.memory_space<vmem>>, vector<1x40x1xf32>,
    %313 = vector.extract_strided_slice %298 {offsets = [40, 2], sizes = [1, 1], strides = [1, 1]} : vector<41x3xf32> to vector<1x1xf32>
    %314 = arith.addf %299, %313 : vector<1x1xf32>
    %c0_209 = arith.constant 0 : index
    %c41_210 = arith.constant 41 : index
    %c0_211 = arith.constant 0 : index
    %315 = vector.load %arg22[%c0_209, %c41_210, %c0_211] : memref<1x42x4xf32, #tpu.memory_space<vmem>>, vector<1x1x1xf32>
    %316 = vector.shape_cast %315 : vector<1x1x1xf32> to vector<1x1xf32>
    %317 = vector.shape_cast %314 : vector<1x1xf32> to vector<1x1x1xf32>
    tpu.vector_store %arg22[%c0_209, %c41_210, %c0_211], %317 {strides = array<i32>} : memref<1x42x4xf32, #tpu.memory_space<vmem>>, vector<1x1x1xf32>,
    %318 = vector.extract_strided_slice %296 {offsets = [0, 1], sizes = [41, 1], strides = [1, 1]} : vector<41x3xf32> to vector<41x1xf32>
    %319 = vector.broadcast %299 : vector<1x1xf32> to vector<41x1xf32>
    %320 = arith.addf %319, %318 : vector<41x1xf32>
    %c0_212 = arith.constant 0 : index
    %c0_213 = arith.constant 0 : index
    %c1_214 = arith.constant 1 : index
    %321 = vector.load %arg22[%c0_212, %c0_213, %c1_214] : memref<1x42x4xf32, #tpu.memory_space<vmem>>, vector<1x41x1xf32>
    %322 = vector.shape_cast %321 : vector<1x41x1xf32> to vector<41x1xf32>
    %323 = vector.shape_cast %320 : vector<41x1xf32> to vector<1x41x1xf32>
    tpu.vector_store %arg22[%c0_212, %c0_213, %c1_214], %323 {strides = array<i32>} : memref<1x42x4xf32, #tpu.memory_space<vmem>>, vector<1x41x1xf32>,
    %c0_215 = arith.constant 0 : index
    %c41_216 = arith.constant 41 : index
    %c1_217 = arith.constant 1 : index
    %324 = vector.load %arg22[%c0_215, %c41_216, %c1_217] : memref<1x42x4xf32, #tpu.memory_space<vmem>>, vector<1x1x1xf32>
    %325 = vector.shape_cast %324 : vector<1x1x1xf32> to vector<1x1xf32>
    %326 = vector.shape_cast %299 : vector<1x1xf32> to vector<1x1x1xf32>
    tpu.vector_store %arg22[%c0_215, %c41_216, %c1_217], %326 {strides = array<i32>} : memref<1x42x4xf32, #tpu.memory_space<vmem>>, vector<1x1x1xf32>,
    %327 = vector.extract_strided_slice %298 {offsets = [0, 0], sizes = [41, 1], strides = [1, 1]} : vector<41x3xf32> to vector<41x1xf32>
    %328 = vector.broadcast %299 : vector<1x1xf32> to vector<41x1xf32>
    %329 = arith.addf %328, %327 : vector<41x1xf32>
    %330 = vector.extract_strided_slice %296 {offsets = [0, 2], sizes = [41, 1], strides = [1, 1]} : vector<41x3xf32> to vector<41x1xf32>
    %331 = arith.addf %329, %330 : vector<41x1xf32>
    %c0_218 = arith.constant 0 : index
    %c0_219 = arith.constant 0 : index
    %c2_220 = arith.constant 2 : index
    %332 = vector.load %arg22[%c0_218, %c0_219, %c2_220] : memref<1x42x4xf32, #tpu.memory_space<vmem>>, vector<1x41x1xf32>
    %333 = vector.shape_cast %332 : vector<1x41x1xf32> to vector<41x1xf32>
    %334 = vector.shape_cast %331 : vector<41x1xf32> to vector<1x41x1xf32>
    tpu.vector_store %arg22[%c0_218, %c0_219, %c2_220], %334 {strides = array<i32>} : memref<1x42x4xf32, #tpu.memory_space<vmem>>, vector<1x41x1xf32>,
    %335 = vector.extract_strided_slice %298 {offsets = [0, 1], sizes = [41, 1], strides = [1, 1]} : vector<41x3xf32> to vector<41x1xf32>
    %336 = vector.broadcast %299 : vector<1x1xf32> to vector<41x1xf32>
    %337 = arith.addf %336, %335 : vector<41x1xf32>
    %c0_221 = arith.constant 0 : index
    %c0_222 = arith.constant 0 : index
    %c3_223 = arith.constant 3 : index
    %338 = vector.load %arg22[%c0_221, %c0_222, %c3_223] : memref<1x42x4xf32, #tpu.memory_space<vmem>>, vector<1x41x1xf32>
    %339 = vector.shape_cast %338 : vector<1x41x1xf32> to vector<41x1xf32>
    %340 = vector.shape_cast %337 : vector<41x1xf32> to vector<1x41x1xf32>
    tpu.vector_store %arg22[%c0_221, %c0_222, %c3_223], %340 {strides = array<i32>} : memref<1x42x4xf32, #tpu.memory_space<vmem>>, vector<1x41x1xf32>,
    %cst_224 = arith.constant 0.000000e+00 : f32
    %341 = vector.broadcast %cst_224 : f32 to vector<1x2xf32>
    %c0_225 = arith.constant 0 : index
    %c41_226 = arith.constant 41 : index
    %c2_227 = arith.constant 2 : index
    %342 = vector.load %arg22[%c0_225, %c41_226, %c2_227] : memref<1x42x4xf32, #tpu.memory_space<vmem>>, vector<1x1x2xf32>
    %343 = vector.shape_cast %342 : vector<1x1x2xf32> to vector<1x2xf32>
    %344 = vector.shape_cast %341 : vector<1x2xf32> to vector<1x1x2xf32>
    tpu.vector_store %arg22[%c0_225, %c41_226, %c2_227], %344 {strides = array<i32>} : memref<1x42x4xf32, #tpu.memory_space<vmem>>, vector<1x1x2xf32>,
    return
  }
  func.func @transform_0(%arg0: i32) -> (i32, i32, i32) {
    %c0_i32 = arith.constant 0 : i32
    %c0_i32_0 = arith.constant 0 : i32
    %c0_i32_1 = arith.constant 0 : i32
    return %arg0, %c0_i32, %c0_i32_0 : i32, i32, i32
  }
  func.func @transform_1(%arg0: i32) -> (i32, i32) {
    %c0_i32 = arith.constant 0 : i32
    %c0_i32_0 = arith.constant 0 : i32
    %c0_i32_1 = arith.constant 0 : i32
    return %c0_i32, %c0_i32_0 : i32, i32
  }
  func.func @transform_2(%arg0: i32) -> (i32, i32) {
    %c0_i32 = arith.constant 0 : i32
    %c0_i32_0 = arith.constant 0 : i32
    %c0_i32_1 = arith.constant 0 : i32
    return %c0_i32, %c0_i32_0 : i32, i32
  }
  func.func @transform_3(%arg0: i32) -> (i32, i32) {
    %c0_i32 = arith.constant 0 : i32
    %c0_i32_0 = arith.constant 0 : i32
    %c0_i32_1 = arith.constant 0 : i32
    return %c0_i32, %c0_i32_0 : i32, i32
  }
  func.func @transform_4(%arg0: i32) -> (i32, i32) {
    %c0_i32 = arith.constant 0 : i32
    %c0_i32_0 = arith.constant 0 : i32
    %c0_i32_1 = arith.constant 0 : i32
    return %c0_i32, %c0_i32_0 : i32, i32
  }
  func.func @transform_5(%arg0: i32) -> (i32, i32) {
    %c0_i32 = arith.constant 0 : i32
    %c0_i32_0 = arith.constant 0 : i32
    %c0_i32_1 = arith.constant 0 : i32
    return %c0_i32, %c0_i32_0 : i32, i32
  }
  func.func @transform_6(%arg0: i32) -> (i32, i32) {
    %c0_i32 = arith.constant 0 : i32
    %c0_i32_0 = arith.constant 0 : i32
    %c0_i32_1 = arith.constant 0 : i32
    return %c0_i32, %c0_i32_0 : i32, i32
  }
  func.func @transform_7(%arg0: i32) -> (i32, i32) {
    %c0_i32 = arith.constant 0 : i32
    %c0_i32_0 = arith.constant 0 : i32
    %c0_i32_1 = arith.constant 0 : i32
    return %c0_i32, %c0_i32_0 : i32, i32
  }
  func.func @transform_8(%arg0: i32) -> (i32, i32) {
    %c0_i32 = arith.constant 0 : i32
    %c0_i32_0 = arith.constant 0 : i32
    %c0_i32_1 = arith.constant 0 : i32
    return %c0_i32, %c0_i32_0 : i32, i32
  }
  func.func @transform_9(%arg0: i32) -> (i32, i32) {
    %c0_i32 = arith.constant 0 : i32
    %c0_i32_0 = arith.constant 0 : i32
    %c0_i32_1 = arith.constant 0 : i32
    return %c0_i32, %c0_i32_0 : i32, i32
  }
  func.func @transform_10(%arg0: i32) -> (i32, i32) {
    %c0_i32 = arith.constant 0 : i32
    %c0_i32_0 = arith.constant 0 : i32
    %c0_i32_1 = arith.constant 0 : i32
    return %c0_i32, %c0_i32_0 : i32, i32
  }
  func.func @transform_11(%arg0: i32) -> (i32, i32) {
    %c0_i32 = arith.constant 0 : i32
    %c0_i32_0 = arith.constant 0 : i32
    %c0_i32_1 = arith.constant 0 : i32
    return %c0_i32, %c0_i32_0 : i32, i32
  }
  func.func @transform_12(%arg0: i32) -> (i32, i32) {
    %c0_i32 = arith.constant 0 : i32
    %c0_i32_0 = arith.constant 0 : i32
    %c0_i32_1 = arith.constant 0 : i32
    return %c0_i32, %c0_i32_0 : i32, i32
  }
  func.func @transform_13(%arg0: i32) -> (i32, i32) {
    %c0_i32 = arith.constant 0 : i32
    %c0_i32_0 = arith.constant 0 : i32
    %c0_i32_1 = arith.constant 0 : i32
    return %c0_i32, %c0_i32_0 : i32, i32
  }
  func.func @transform_14(%arg0: i32) -> (i32, i32) {
    %c0_i32 = arith.constant 0 : i32
    %c0_i32_0 = arith.constant 0 : i32
    %c0_i32_1 = arith.constant 0 : i32
    return %c0_i32, %c0_i32_0 : i32, i32
  }
  func.func @transform_15(%arg0: i32) -> (i32, i32) {
    %c0_i32 = arith.constant 0 : i32
    %c0_i32_0 = arith.constant 0 : i32
    %c0_i32_1 = arith.constant 0 : i32
    return %c0_i32, %c0_i32_0 : i32, i32
  }
  func.func @transform_16(%arg0: i32) -> (i32, i32) {
    %c0_i32 = arith.constant 0 : i32
    %c0_i32_0 = arith.constant 0 : i32
    %c0_i32_1 = arith.constant 0 : i32
    return %c0_i32, %c0_i32_0 : i32, i32
  }
  func.func @transform_17(%arg0: i32) -> (i32, i32) {
    %c0_i32 = arith.constant 0 : i32
    %c0_i32_0 = arith.constant 0 : i32
    %c0_i32_1 = arith.constant 0 : i32
    return %c0_i32, %c0_i32_0 : i32, i32
  }
  func.func @transform_18(%arg0: i32) -> (i32, i32) {
    %c0_i32 = arith.constant 0 : i32
    %c0_i32_0 = arith.constant 0 : i32
    %c0_i32_1 = arith.constant 0 : i32
    return %c0_i32, %c0_i32_0 : i32, i32
  }
  func.func @transform_19(%arg0: i32) -> (i32, i32) {
    %c0_i32 = arith.constant 0 : i32
    %c0_i32_0 = arith.constant 0 : i32
    %c0_i32_1 = arith.constant 0 : i32
    return %c0_i32, %c0_i32_0 : i32, i32
  }
  func.func @transform_20(%arg0: i32) -> (i32, i32) {
    %c0_i32 = arith.constant 0 : i32
    %c0_i32_0 = arith.constant 0 : i32
    %c0_i32_1 = arith.constant 0 : i32
    return %c0_i32, %c0_i32_0 : i32, i32
  }
  func.func @transform_21(%arg0: i32) -> (i32, i32, i32) {
    %c0_i32 = arith.constant 0 : i32
    %c0_i32_0 = arith.constant 0 : i32
    %c0_i32_1 = arith.constant 0 : i32
    return %arg0, %c0_i32, %c0_i32_0 : i32, i32, i32
  }
  func.func @transform_22(%arg0: i32) -> (i32, i32, i32) {
    %c0_i32 = arith.constant 0 : i32
    %c0_i32_0 = arith.constant 0 : i32
    %c0_i32_1 = arith.constant 0 : i32
    return %arg0, %c0_i32, %c0_i32_0 : i32, i32, i32
  }
}

</mosaic_0001>

<llo_original>
// kernel: autoencoder_forward.1
$region0: #{autoencoder_forward.1}
  #allocation0 [shape = 'u32[]', space=smem, size = 0x4, offset = 0x4, fixed_abs, tag = 'smem constant byte address 0x4 - core index']
  #allocation1 [shape = 'u32[144,128]{1,0:T(1,128)}', space=vmem, size = 0x12000, scoped, tag = 'internal scratch']
  #allocation2 [shape = 'f32[41,8]{1,0:T(8,128)}', space=vmem, size = 0x6000, scoped, tag = 'scratch operand']
  #allocation3 [shape = 'f32[40,192]{1,0:T(8,128)}', space=vmem, size = 0xa000, scoped, tag = 'scratch operand']
  #allocation4 [shape = 'f32[1,2560]{1,0:T(1,128)}', space=vmem, size = 0x2800, scoped, tag = 'scratch operand']
  #allocation5 [shape = 'f32[42,64]{1,0:T(8,128)}', space=vmem, size = 0x6000, scoped, tag = 'scratch operand']
  #allocation6 [shape = 'f32[1,1]{1,0:T(1,128)S(1)}', space=vmem, size = 0x200, scoped, tag = 'scoped memory for autoencoder_forward.1']
  #allocation7 [shape = 'f32[1,1]{1,0:T(1,128)S(1)}', space=vmem, size = 0x200, scoped, tag = 'scoped memory for autoencoder_forward.1']
  %s0 = inlined_call_operand.vmem [shape: f32[2,41,4], index: 0, kind: input, shape index: {}]
  %s1 = inlined_call_operand.vmem [shape: f32[8,128], index: 1, kind: input, shape index: {}]
  %s2 = inlined_call_operand.hbm [shape: f32[1,32], index: 2, kind: input, shape index: {}]
  %s3 = inlined_call_operand.vmem [shape: f32[192,128], index: 3, kind: input, shape index: {}]
  %s4 = inlined_call_operand.hbm [shape: f32[1,64], index: 4, kind: input, shape index: {}]
  %s5 = inlined_call_operand.hbm [shape: bf16[2560,128], index: 5, kind: input, shape index: {}]
  %s6 = inlined_call_operand.vmem [shape: f32[1,128], index: 6, kind: input, shape index: {}]
  %s7 = inlined_call_operand.vmem [shape: f32[128,64], index: 7, kind: input, shape index: {}]
  %s8 = inlined_call_operand.vmem [shape: f32[1,64], index: 8, kind: input, shape index: {}]
  %s9 = inlined_call_operand.vmem [shape: f32[64,8], index: 9, kind: input, shape index: {}]
  %s10 = inlined_call_operand.vmem [shape: f32[1,8], index: 10, kind: input, shape index: {}]
  %s11 = inlined_call_operand.vmem [shape: f32[8,1], index: 11, kind: input, shape index: {}]
  %s12 = inlined_call_operand.<no memory space> [shape: f32[1,1], index: 12, kind: input, shape index: {}]
  %s13 = inlined_call_operand.vmem [shape: f32[64,64], index: 13, kind: input, shape index: {}]
  %s14 = inlined_call_operand.hbm [shape: f32[1,64], index: 14, kind: input, shape index: {}]
  %s15 = inlined_call_operand.hbm [shape: bf16[64,2560], index: 15, kind: input, shape index: {}]
  %s16 = inlined_call_operand.vmem [shape: f32[1,2560], index: 16, kind: input, shape index: {}]
  %s17 = inlined_call_operand.vmem [shape: f32[64,96], index: 17, kind: input, shape index: {}]
  %s18 = inlined_call_operand.vmem [shape: f32[1,32], index: 18, kind: input, shape index: {}]
  %s19 = inlined_call_operand.vmem [shape: f32[32,3], index: 19, kind: input, shape index: {}]
  %s20 = inlined_call_operand.<no memory space> [shape: f32[1,1], index: 20, kind: input, shape index: {}]
  %s21 = inlined_call_operand.vmem [shape: f32[2,42,4], index: 21, kind: output, shape index: {0}]
  %s22 = inlined_call_operand.vmem [shape: f32[2,1,1], index: 22, kind: output, shape index: {1}]
  %23 = xla_tuple %s21, %s22
  %s24 = sld [smem:[#allocation0]]
  $region145: #{autoencoder_forward.1} parent=0
    _
  %s26 = ssub.s32 1, %s24
  %s27 = scalar_select 0, %s26, %s24
  %v28 = vstv %s12
  %29 = vst [vmem:[#allocation6] sm:$0x1] %v28
  %v30 = vstv %s20
  %31 = vst [vmem:[#allocation7] sm:$0x1] %v30
  $region1: #{autoencoder_forward.1} parent=0
    #allocation8 [shape = 'u8[512]{0}', space=vmem, size = 0x400, scoped, tag = 'input window, operand 2, single buffered']
    #allocation9 [shape = 's32[2]{0}', space=sflag, size = 0x8, scoped, tag = 'scoped memory for autoencoder_forward.1']
    #allocation10 [shape = 'u8[512]{0}', space=vmem, size = 0x400, scoped, tag = 'input window, operand 4, single buffered']
    #allocation11 [shape = 's32[1]{0}', space=sflag, size = 0x4, scoped, tag = 'scoped memory for autoencoder_forward.1']
    #allocation12 [shape = 'u8[655360]{0}', space=vmem, size = 0xa0000, scoped, tag = 'input window, operand 5, single buffered']
    #allocation13 [shape = 'u8[512]{0}', space=vmem, size = 0x400, scoped, tag = 'input window, operand 14, single buffered']
    #allocation14 [shape = 's32[1]{0}', space=sflag, size = 0x4, scoped, tag = 'scoped memory for autoencoder_forward.1']
    #allocation15 [shape = 'u8[327680]{0}', space=vmem, size = 0x50000, scoped, tag = 'input window, operand 15, single buffered']
    %32 = vsyncpa [#allocation9], 0
    %33 = vsyncpa [#allocation11], 0
    %34 = vsyncpa [#allocation14], 0
    loop: start=0, step=1, limit=4
    $region2: #{autoencoder_forward.1} parent=1 // loop_pre_header
      _
    $region3: #{autoencoder_forward.1} parent=1 // loop_header
      %s36 = sphi 0, %s40
      %p37 = scmp.ge.s32.totalorder %s36, 4
      %s46 = sphi 0, %s48
      %s49 = sphi 0, %s46
      %s50 = sphi 0, %s49
      %s66 = sphi 0, %s50
      %s70 = sphi 0, %s70
      %s72 = sphi 0, %s70
      %s73 = sphi 0, %s72
      %s87 = sphi 0, %s73
      %s91 = sphi 0, %s91
      %s93 = sphi 0, %s91
      %s94 = sphi 0, %s93
      %s108 = sphi 0, %s94
      %s112 = sphi 0, %s112
      %s114 = sphi 0, %s112
      %s115 = sphi 0, %s114
      %s129 = sphi 0, %s115
      %s133 = sphi 0, %s133
      %s135 = sphi 0, %s133
      %s136 = sphi 0, %s135
      %s150 = sphi 0, %s136
      %s154 = sphi 0, %s154
      %s156 = sphi 0, %s154
      %s157 = sphi 0, %s156
      %s171 = sphi 0, %s157
      %s175 = sphi 0, %s175
      %s177 = sphi 0, %s175
      %s178 = sphi 0, %s177
      %s192 = sphi 0, %s178
      %s196 = sphi 0, %s196
      %s198 = sphi 0, %s196
      %s199 = sphi 0, %s198
      %s213 = sphi 0, %s199
      %s217 = sphi 0, %s217
      %s219 = sphi 0, %s217
      %s220 = sphi 0, %s219
      %s234 = sphi 0, %s220
      %s238 = sphi 0, %s238
      %s240 = sphi 0, %s238
      %s241 = sphi 0, %s240
      %s255 = sphi 0, %s241
      %s259 = sphi 0, %s259
      %s261 = sphi 0, %s259
      %s262 = sphi 0, %s261
      %s276 = sphi 0, %s262
      %s280 = sphi 0, %s280
      %s282 = sphi 0, %s280
      %s283 = sphi 0, %s282
      %s297 = sphi 0, %s283
      %s301 = sphi 0, %s301
      %s303 = sphi 0, %s301
      %s304 = sphi 0, %s303
      %s318 = sphi 0, %s304
      %s322 = sphi 0, %s322
      %s324 = sphi 0, %s322
      %s325 = sphi 0, %s324
      %s339 = sphi 0, %s325
      %s343 = sphi 0, %s343
      %s345 = sphi 0, %s343
      %s346 = sphi 0, %s345
      %s360 = sphi 0, %s346
      %s364 = sphi 0, %s364
      %s366 = sphi 0, %s364
      %s367 = sphi 0, %s366
      %s381 = sphi 0, %s367
      %s385 = sphi 0, %s385
      %s387 = sphi 0, %s385
      %s388 = sphi 0, %s387
      %s402 = sphi 0, %s388
      %s406 = sphi 0, %s406
      %s408 = sphi 0, %s406
      %s409 = sphi 0, %s408
      %s423 = sphi 0, %s409
      %s427 = sphi 0, %s427
      %s429 = sphi 0, %s427
      %s430 = sphi 0, %s429
      %s444 = sphi 0, %s430
      %s448 = sphi 0, %s448
      %s450 = sphi 0, %s448
      %s451 = sphi 0, %s450
      %s465 = sphi 0, %s451
      %s469 = sphi 0, %s469
      %s471 = sphi 0, %s469
      %s472 = sphi 0, %s471
      %s486 = sphi 0, %s472
      %s492 = sphi 0, %s494
      %s495 = sphi 0, %s492
      %s496 = sphi 0, %s495
      %s512 = sphi 0, %s496
      %s518 = sphi 0, %s520
      %s521 = sphi 0, %s518
      %s522 = sphi 0, %s521
      %s538 = sphi 0, %s522
    $region4: #{autoencoder_forward.1} parent=1 // loop_header_branch
      %39 = sbr.rel (%p37) target = $region8
    $region5: #{autoencoder_forward.1} parent=1 // loop_body
      %s41 = ssub.s32 %s36, 1
      %s42 = ssub.s32 %s36, 2
      %s43 = sadd.s32 %s36, 1
      %s44 = ssub.s32 %s36, %s43
      %p45 = scmp.eq.s32.totalorder %s44, 0
      %s47 = sadd.s32 %s46, 1
      %s48 = scalar_select %p45, %s46, %s47
      %p51 = pneg %p45
      %p52 = scmp.eq.s32.totalorder %s36, 1
      %p53 = por %p51, %p52
      %p54 = scmp.ne.s32.totalorder %s46, %s49
      %p55 = scmp.eq.s32.totalorder %s36, 0
      %p56 = por %p54, %p55
      %p57 = scmp.ne.s32.totalorder %s46, %s49
      %p58 = scmp.eq.s32.totalorder %s41, 1
      %p59 = por %p57, %p58
      %p60 = scmp.ne.s32.totalorder %s49, %s50
      %p61 = scmp.eq.s32.totalorder %s41, 0
      %p62 = por %p60, %p61
      %p63 = scmp.ne.s32.totalorder %s49, %s50
      %p64 = scmp.eq.s32.totalorder %s42, 1
      %p65 = por %p63, %p64
      %p67 = scmp.ne.s32.totalorder %s50, %s66
      %p68 = scmp.eq.s32.totalorder %s42, 0
      %p69 = por %p67, %p68
      %s71 = sadd.s32 %s70, 1
      %p74 = scmp.eq.s32.totalorder %s36, 1
      %p75 = scmp.ne.s32.totalorder %s70, %s72
      %p76 = scmp.eq.s32.totalorder %s36, 0
      %p77 = por %p75, %p76
      %p78 = scmp.ne.s32.totalorder %s70, %s72
      %p79 = scmp.eq.s32.totalorder %s41, 1
      %p80 = por %p78, %p79
      %p81 = scmp.ne.s32.totalorder %s72, %s73
      %p82 = scmp.eq.s32.totalorder %s41, 0
      %p83 = por %p81, %p82
      %p84 = scmp.ne.s32.totalorder %s72, %s73
      %p85 = scmp.eq.s32.totalorder %s42, 1
      %p86 = por %p84, %p85
      %p88 = scmp.ne.s32.totalorder %s73, %s87
      %p89 = scmp.eq.s32.totalorder %s42, 0
      %p90 = por %p88, %p89
      %s92 = sadd.s32 %s91, 1
      %p95 = scmp.eq.s32.totalorder %s36, 1
      %p96 = scmp.ne.s32.totalorder %s91, %s93
      %p97 = scmp.eq.s32.totalorder %s36, 0
      %p98 = por %p96, %p97
      %p99 = scmp.ne.s32.totalorder %s91, %s93
      %p100 = scmp.eq.s32.totalorder %s41, 1
      %p101 = por %p99, %p100
      %p102 = scmp.ne.s32.totalorder %s93, %s94
      %p103 = scmp.eq.s32.totalorder %s41, 0
      %p104 = por %p102, %p103
      %p105 = scmp.ne.s32.totalorder %s93, %s94
      %p106 = scmp.eq.s32.totalorder %s42, 1
      %p107 = por %p105, %p106
      %p109 = scmp.ne.s32.totalorder %s94, %s108
      %p110 = scmp.eq.s32.totalorder %s42, 0
      %p111 = por %p109, %p110
      %s113 = sadd.s32 %s112, 1
      %p116 = scmp.eq.s32.totalorder %s36, 1
      %p117 = scmp.ne.s32.totalorder %s112, %s114
      %p118 = scmp.eq.s32.totalorder %s36, 0
      %p119 = por %p117, %p118
      %p120 = scmp.ne.s32.totalorder %s112, %s114
      %p121 = scmp.eq.s32.totalorder %s41, 1
      %p122 = por %p120, %p121
      %p123 = scmp.ne.s32.totalorder %s114, %s115
      %p124 = scmp.eq.s32.totalorder %s41, 0
      %p125 = por %p123, %p124
      %p126 = scmp.ne.s32.totalorder %s114, %s115
      %p127 = scmp.eq.s32.totalorder %s42, 1
      %p128 = por %p126, %p127
      %p130 = scmp.ne.s32.totalorder %s115, %s129
      %p131 = scmp.eq.s32.totalorder %s42, 0
      %p132 = por %p130, %p131
      %s134 = sadd.s32 %s133, 1
      %p137 = scmp.eq.s32.totalorder %s36, 1
      %p138 = scmp.ne.s32.totalorder %s133, %s135
      %p139 = scmp.eq.s32.totalorder %s36, 0
      %p140 = por %p138, %p139
      %p141 = scmp.ne.s32.totalorder %s133, %s135
      %p142 = scmp.eq.s32.totalorder %s41, 1
      %p143 = por %p141, %p142
      %p144 = scmp.ne.s32.totalorder %s135, %s136
      %p145 = scmp.eq.s32.totalorder %s41, 0
      %p146 = por %p144, %p145
      %p147 = scmp.ne.s32.totalorder %s135, %s136
      %p148 = scmp.eq.s32.totalorder %s42, 1
      %p149 = por %p147, %p148
      %p151 = scmp.ne.s32.totalorder %s136, %s150
      %p152 = scmp.eq.s32.totalorder %s42, 0
      %p153 = por %p151, %p152
      %s155 = sadd.s32 %s154, 1
      %p158 = scmp.eq.s32.totalorder %s36, 1
      %p159 = scmp.ne.s32.totalorder %s154, %s156
      %p160 = scmp.eq.s32.totalorder %s36, 0
      %p161 = por %p159, %p160
      %p162 = scmp.ne.s32.totalorder %s154, %s156
      %p163 = scmp.eq.s32.totalorder %s41, 1
      %p164 = por %p162, %p163
      %p165 = scmp.ne.s32.totalorder %s156, %s157
      %p166 = scmp.eq.s32.totalorder %s41, 0
      %p167 = por %p165, %p166
      %p168 = scmp.ne.s32.totalorder %s156, %s157
      %p169 = scmp.eq.s32.totalorder %s42, 1
      %p170 = por %p168, %p169
      %p172 = scmp.ne.s32.totalorder %s157, %s171
      %p173 = scmp.eq.s32.totalorder %s42, 0
      %p174 = por %p172, %p173
      %s176 = sadd.s32 %s175, 1
      %p179 = scmp.eq.s32.totalorder %s36, 1
      %p180 = scmp.ne.s32.totalorder %s175, %s177
      %p181 = scmp.eq.s32.totalorder %s36, 0
      %p182 = por %p180, %p181
      %p183 = scmp.ne.s32.totalorder %s175, %s177
      %p184 = scmp.eq.s32.totalorder %s41, 1
      %p185 = por %p183, %p184
      %p186 = scmp.ne.s32.totalorder %s177, %s178
      %p187 = scmp.eq.s32.totalorder %s41, 0
      %p188 = por %p186, %p187
      %p189 = scmp.ne.s32.totalorder %s177, %s178
      %p190 = scmp.eq.s32.totalorder %s42, 1
      %p191 = por %p189, %p190
      %p193 = scmp.ne.s32.totalorder %s178, %s192
      %p194 = scmp.eq.s32.totalorder %s42, 0
      %p195 = por %p193, %p194
      %s197 = sadd.s32 %s196, 1
      %p200 = scmp.eq.s32.totalorder %s36, 1
      %p201 = scmp.ne.s32.totalorder %s196, %s198
      %p202 = scmp.eq.s32.totalorder %s36, 0
      %p203 = por %p201, %p202
      %p204 = scmp.ne.s32.totalorder %s196, %s198
      %p205 = scmp.eq.s32.totalorder %s41, 1
      %p206 = por %p204, %p205
      %p207 = scmp.ne.s32.totalorder %s198, %s199
      %p208 = scmp.eq.s32.totalorder %s41, 0
      %p209 = por %p207, %p208
      %p210 = scmp.ne.s32.totalorder %s198, %s199
      %p211 = scmp.eq.s32.totalorder %s42, 1
      %p212 = por %p210, %p211
      %p214 = scmp.ne.s32.totalorder %s199, %s213
      %p215 = scmp.eq.s32.totalorder %s42, 0
      %p216 = por %p214, %p215
      %s218 = sadd.s32 %s217, 1
      %p221 = scmp.eq.s32.totalorder %s36, 1
      %p222 = scmp.ne.s32.totalorder %s217, %s219
      %p223 = scmp.eq.s32.totalorder %s36, 0
      %p224 = por %p222, %p223
      %p225 = scmp.ne.s32.totalorder %s217, %s219
      %p226 = scmp.eq.s32.totalorder %s41, 1
      %p227 = por %p225, %p226
      %p228 = scmp.ne.s32.totalorder %s219, %s220
      %p229 = scmp.eq.s32.totalorder %s41, 0
      %p230 = por %p228, %p229
      %p231 = scmp.ne.s32.totalorder %s219, %s220
      %p232 = scmp.eq.s32.totalorder %s42, 1
      %p233 = por %p231, %p232
      %p235 = scmp.ne.s32.totalorder %s220, %s234
      %p236 = scmp.eq.s32.totalorder %s42, 0
      %p237 = por %p235, %p236
      %s239 = sadd.s32 %s238, 1
      %p242 = scmp.eq.s32.totalorder %s36, 1
      %p243 = scmp.ne.s32.totalorder %s238, %s240
      %p244 = scmp.eq.s32.totalorder %s36, 0
      %p245 = por %p243, %p244
      %p246 = scmp.ne.s32.totalorder %s238, %s240
      %p247 = scmp.eq.s32.totalorder %s41, 1
      %p248 = por %p246, %p247
      %p249 = scmp.ne.s32.totalorder %s240, %s241
      %p250 = scmp.eq.s32.totalorder %s41, 0
      %p251 = por %p249, %p250
      %p252 = scmp.ne.s32.totalorder %s240, %s241
      %p253 = scmp.eq.s32.totalorder %s42, 1
      %p254 = por %p252, %p253
      %p256 = scmp.ne.s32.totalorder %s241, %s255
      %p257 = scmp.eq.s32.totalorder %s42, 0
      %p258 = por %p256, %p257
      %s260 = sadd.s32 %s259, 1
      %p263 = scmp.eq.s32.totalorder %s36, 1
      %p264 = scmp.ne.s32.totalorder %s259, %s261
      %p265 = scmp.eq.s32.totalorder %s36, 0
      %p266 = por %p264, %p265
      %p267 = scmp.ne.s32.totalorder %s259, %s261
      %p268 = scmp.eq.s32.totalorder %s41, 1
      %p269 = por %p267, %p268
      %p270 = scmp.ne.s32.totalorder %s261, %s262
      %p271 = scmp.eq.s32.totalorder %s41, 0
      %p272 = por %p270, %p271
      %p273 = scmp.ne.s32.totalorder %s261, %s262
      %p274 = scmp.eq.s32.totalorder %s42, 1
      %p275 = por %p273, %p274
      %p277 = scmp.ne.s32.totalorder %s262, %s276
      %p278 = scmp.eq.s32.totalorder %s42, 0
      %p279 = por %p277, %p278
      %s281 = sadd.s32 %s280, 1
      %p284 = scmp.eq.s32.totalorder %s36, 1
      %p285 = scmp.ne.s32.totalorder %s280, %s282
      %p286 = scmp.eq.s32.totalorder %s36, 0
      %p287 = por %p285, %p286
      %p288 = scmp.ne.s32.totalorder %s280, %s282
      %p289 = scmp.eq.s32.totalorder %s41, 1
      %p290 = por %p288, %p289
      %p291 = scmp.ne.s32.totalorder %s282, %s283
      %p292 = scmp.eq.s32.totalorder %s41, 0
      %p293 = por %p291, %p292
      %p294 = scmp.ne.s32.totalorder %s282, %s283
      %p295 = scmp.eq.s32.totalorder %s42, 1
      %p296 = por %p294, %p295
      %p298 = scmp.ne.s32.totalorder %s283, %s297
      %p299 = scmp.eq.s32.totalorder %s42, 0
      %p300 = por %p298, %p299
      %s302 = sadd.s32 %s301, 1
      %p305 = scmp.eq.s32.totalorder %s36, 1
      %p306 = scmp.ne.s32.totalorder %s301, %s303
      %p307 = scmp.eq.s32.totalorder %s36, 0
      %p308 = por %p306, %p307
      %p309 = scmp.ne.s32.totalorder %s301, %s303
      %p310 = scmp.eq.s32.totalorder %s41, 1
      %p311 = por %p309, %p310
      %p312 = scmp.ne.s32.totalorder %s303, %s304
      %p313 = scmp.eq.s32.totalorder %s41, 0
      %p314 = por %p312, %p313
      %p315 = scmp.ne.s32.totalorder %s303, %s304
      %p316 = scmp.eq.s32.totalorder %s42, 1
      %p317 = por %p315, %p316
      %p319 = scmp.ne.s32.totalorder %s304, %s318
      %p320 = scmp.eq.s32.totalorder %s42, 0
      %p321 = por %p319, %p320
      %s323 = sadd.s32 %s322, 1
      %p326 = scmp.eq.s32.totalorder %s36, 1
      %p327 = scmp.ne.s32.totalorder %s322, %s324
      %p328 = scmp.eq.s32.totalorder %s36, 0
      %p329 = por %p327, %p328
      %p330 = scmp.ne.s32.totalorder %s322, %s324
      %p331 = scmp.eq.s32.totalorder %s41, 1
      %p332 = por %p330, %p331
      %p333 = scmp.ne.s32.totalorder %s324, %s325
      %p334 = scmp.eq.s32.totalorder %s41, 0
      %p335 = por %p333, %p334
      %p336 = scmp.ne.s32.totalorder %s324, %s325
      %p337 = scmp.eq.s32.totalorder %s42, 1
      %p338 = por %p336, %p337
      %p340 = scmp.ne.s32.totalorder %s325, %s339
      %p341 = scmp.eq.s32.totalorder %s42, 0
      %p342 = por %p340, %p341
      %s344 = sadd.s32 %s343, 1
      %p347 = scmp.eq.s32.totalorder %s36, 1
      %p348 = scmp.ne.s32.totalorder %s343, %s345
      %p349 = scmp.eq.s32.totalorder %s36, 0
      %p350 = por %p348, %p349
      %p351 = scmp.ne.s32.totalorder %s343, %s345
      %p352 = scmp.eq.s32.totalorder %s41, 1
      %p353 = por %p351, %p352
      %p354 = scmp.ne.s32.totalorder %s345, %s346
      %p355 = scmp.eq.s32.totalorder %s41, 0
      %p356 = por %p354, %p355
      %p357 = scmp.ne.s32.totalorder %s345, %s346
      %p358 = scmp.eq.s32.totalorder %s42, 1
      %p359 = por %p357, %p358
      %p361 = scmp.ne.s32.totalorder %s346, %s360
      %p362 = scmp.eq.s32.totalorder %s42, 0
      %p363 = por %p361, %p362
      %s365 = sadd.s32 %s364, 1
      %p368 = scmp.eq.s32.totalorder %s36, 1
      %p369 = scmp.ne.s32.totalorder %s364, %s366
      %p370 = scmp.eq.s32.totalorder %s36, 0
      %p371 = por %p369, %p370
      %p372 = scmp.ne.s32.totalorder %s364, %s366
      %p373 = scmp.eq.s32.totalorder %s41, 1
      %p374 = por %p372, %p373
      %p375 = scmp.ne.s32.totalorder %s366, %s367
      %p376 = scmp.eq.s32.totalorder %s41, 0
      %p377 = por %p375, %p376
      %p378 = scmp.ne.s32.totalorder %s366, %s367
      %p379 = scmp.eq.s32.totalorder %s42, 1
      %p380 = por %p378, %p379
      %p382 = scmp.ne.s32.totalorder %s367, %s381
      %p383 = scmp.eq.s32.totalorder %s42, 0
      %p384 = por %p382, %p383
      %s386 = sadd.s32 %s385, 1
      %p389 = scmp.eq.s32.totalorder %s36, 1
      %p390 = scmp.ne.s32.totalorder %s385, %s387
      %p391 = scmp.eq.s32.totalorder %s36, 0
      %p392 = por %p390, %p391
      %p393 = scmp.ne.s32.totalorder %s385, %s387
      %p394 = scmp.eq.s32.totalorder %s41, 1
      %p395 = por %p393, %p394
      %p396 = scmp.ne.s32.totalorder %s387, %s388
      %p397 = scmp.eq.s32.totalorder %s41, 0
      %p398 = por %p396, %p397
      %p399 = scmp.ne.s32.totalorder %s387, %s388
      %p400 = scmp.eq.s32.totalorder %s42, 1
      %p401 = por %p399, %p400
      %p403 = scmp.ne.s32.totalorder %s388, %s402
      %p404 = scmp.eq.s32.totalorder %s42, 0
      %p405 = por %p403, %p404
      %s407 = sadd.s32 %s406, 1
      %p410 = scmp.eq.s32.totalorder %s36, 1
      %p411 = scmp.ne.s32.totalorder %s406, %s408
      %p412 = scmp.eq.s32.totalorder %s36, 0
      %p413 = por %p411, %p412
      %p414 = scmp.ne.s32.totalorder %s406, %s408
      %p415 = scmp.eq.s32.totalorder %s41, 1
      %p416 = por %p414, %p415
      %p417 = scmp.ne.s32.totalorder %s408, %s409
      %p418 = scmp.eq.s32.totalorder %s41, 0
      %p419 = por %p417, %p418
      %p420 = scmp.ne.s32.totalorder %s408, %s409
      %p421 = scmp.eq.s32.totalorder %s42, 1
      %p422 = por %p420, %p421
      %p424 = scmp.ne.s32.totalorder %s409, %s423
      %p425 = scmp.eq.s32.totalorder %s42, 0
      %p426 = por %p424, %p425
      %s428 = sadd.s32 %s427, 1
      %p431 = scmp.eq.s32.totalorder %s36, 1
      %p432 = scmp.ne.s32.totalorder %s427, %s429
      %p433 = scmp.eq.s32.totalorder %s36, 0
      %p434 = por %p432, %p433
      %p435 = scmp.ne.s32.totalorder %s427, %s429
      %p436 = scmp.eq.s32.totalorder %s41, 1
      %p437 = por %p435, %p436
      %p438 = scmp.ne.s32.totalorder %s429, %s430
      %p439 = scmp.eq.s32.totalorder %s41, 0
      %p440 = por %p438, %p439
      %p441 = scmp.ne.s32.totalorder %s429, %s430
      %p442 = scmp.eq.s32.totalorder %s42, 1
      %p443 = por %p441, %p442
      %p445 = scmp.ne.s32.totalorder %s430, %s444
      %p446 = scmp.eq.s32.totalorder %s42, 0
      %p447 = por %p445, %p446
      %s449 = sadd.s32 %s448, 1
      %p452 = scmp.eq.s32.totalorder %s36, 1
      %p453 = scmp.ne.s32.totalorder %s448, %s450
      %p454 = scmp.eq.s32.totalorder %s36, 0
      %p455 = por %p453, %p454
      %p456 = scmp.ne.s32.totalorder %s448, %s450
      %p457 = scmp.eq.s32.totalorder %s41, 1
      %p458 = por %p456, %p457
      %p459 = scmp.ne.s32.totalorder %s450, %s451
      %p460 = scmp.eq.s32.totalorder %s41, 0
      %p461 = por %p459, %p460
      %p462 = scmp.ne.s32.totalorder %s450, %s451
      %p463 = scmp.eq.s32.totalorder %s42, 1
      %p464 = por %p462, %p463
      %p466 = scmp.ne.s32.totalorder %s451, %s465
      %p467 = scmp.eq.s32.totalorder %s42, 0
      %p468 = por %p466, %p467
      %s470 = sadd.s32 %s469, 1
      %p473 = scmp.eq.s32.totalorder %s36, 1
      %p474 = scmp.ne.s32.totalorder %s469, %s471
      %p475 = scmp.eq.s32.totalorder %s36, 0
      %p476 = por %p474, %p475
      %p477 = scmp.ne.s32.totalorder %s469, %s471
      %p478 = scmp.eq.s32.totalorder %s41, 1
      %p479 = por %p477, %p478
      %p480 = scmp.ne.s32.totalorder %s471, %s472
      %p481 = scmp.eq.s32.totalorder %s41, 0
      %p482 = por %p480, %p481
      %p483 = scmp.ne.s32.totalorder %s471, %s472
      %p484 = scmp.eq.s32.totalorder %s42, 1
      %p485 = por %p483, %p484
      %p487 = scmp.ne.s32.totalorder %s472, %s486
      %p488 = scmp.eq.s32.totalorder %s42, 0
      %p489 = por %p487, %p488
      %s490 = ssub.s32 %s36, %s43
      %p491 = scmp.eq.s32.totalorder %s490, 0
      %s493 = sadd.s32 %s492, 1
      %s494 = scalar_select %p491, %s492, %s493
      %p497 = pneg %p491
      %p498 = scmp.eq.s32.totalorder %s36, 1
      %p499 = por %p497, %p498
      %p500 = scmp.ne.s32.totalorder %s492, %s495
      %p501 = scmp.eq.s32.totalorder %s36, 0
      %p502 = por %p500, %p501
      %p503 = scmp.ne.s32.totalorder %s492, %s495
      %p504 = scmp.eq.s32.totalorder %s41, 1
      %p505 = por %p503, %p504
      %p506 = scmp.ne.s32.totalorder %s495, %s496
      %p507 = scmp.eq.s32.totalorder %s41, 0
      %p508 = por %p506, %p507
      %p509 = scmp.ne.s32.totalorder %s495, %s496
      %p510 = scmp.eq.s32.totalorder %s42, 1
      %p511 = por %p509, %p510
      %p513 = scmp.ne.s32.totalorder %s496, %s512
      %p514 = scmp.eq.s32.totalorder %s42, 0
      %p515 = por %p513, %p514
      %s516 = ssub.s32 %s36, %s43
      %p517 = scmp.eq.s32.totalorder %s516, 0
      %s519 = sadd.s32 %s518, 1
      %s520 = scalar_select %p517, %s518, %s519
      %p523 = pneg %p517
      %p524 = scmp.eq.s32.totalorder %s36, 1
      %p525 = por %p523, %p524
      %p526 = scmp.ne.s32.totalorder %s518, %s521
      %p527 = scmp.eq.s32.totalorder %s36, 0
      %p528 = por %p526, %p527
      %p529 = scmp.ne.s32.totalorder %s518, %s521
      %p530 = scmp.eq.s32.totalorder %s41, 1
      %p531 = por %p529, %p530
      %p532 = scmp.ne.s32.totalorder %s521, %s522
      %p533 = scmp.eq.s32.totalorder %s41, 0
      %p534 = por %p532, %p533
      %p535 = scmp.ne.s32.totalorder %s521, %s522
      %p536 = scmp.eq.s32.totalorder %s42, 1
      %p537 = por %p535, %p536
      %p539 = scmp.ne.s32.totalorder %s522, %s538
      %p540 = scmp.eq.s32.totalorder %s42, 0
      %p541 = por %p539, %p540
      %p542 = scmp.le.s32.totalorder 1, %s36
      %p543 = scmp.lt.s32.totalorder %s36, 3
      %p544 = pnand %p542, %p543
      %p545 = pneg %p544
      // Predicated region
      $region9: #{autoencoder_forward.1} parent=5 // pred_check
        _
      $region10: #{autoencoder_forward.1} parent=5 // pred_check_branch
        %547 = sbr.rel (%p544) target = $region12
      $region11: #{autoencoder_forward.1} parent=5 // pred_region
        %s548 = ssub.s32 %s36, 1
        // Predicated region
        $region13: #{autoencoder_forward.1} parent=11 // pred_check
          %p549 = pneg %p83
        $region14: #{autoencoder_forward.1} parent=11 // pred_check_branch
          %551 = sbr.rel (%p549) target = $region16
        $region15: #{autoencoder_forward.1} parent=11 // pred_region
          _
        $region16: #{autoencoder_forward.1} parent=11 // pred_fallthru
          _
        // Predicated region
        $region17: #{autoencoder_forward.1} parent=11 // pred_check
          %p552 = pneg %p104
        $region18: #{autoencoder_forward.1} parent=11 // pred_check_branch
          %554 = sbr.rel (%p552) target = $region20
        $region19: #{autoencoder_forward.1} parent=11 // pred_region
          %s556 = ssub.s32 16, 16
          %557 = vsyncadd [#allocation9], %s556
          %s559 = sshll.u32 [#allocation8], 4
          %s560 = int_to_ptr.vmem [resolvable:$true] %s559
          %562 = dma.hbm_to_vmem [thread:$0]  %s2, 16, %s560, [#allocation9]
        $region20: #{autoencoder_forward.1} parent=11 // pred_fallthru
          _
        // Predicated region
        $region21: #{autoencoder_forward.1} parent=11 // pred_check
          %p563 = pneg %p125
        $region22: #{autoencoder_forward.1} parent=11 // pred_check_branch
          %565 = sbr.rel (%p563) target = $region24
        $region23: #{autoencoder_forward.1} parent=11 // pred_region
          _
        $region24: #{autoencoder_forward.1} parent=11 // pred_fallthru
          _
        // Predicated region
        $region25: #{autoencoder_forward.1} parent=11 // pred_check
          %p566 = pneg %p146
        $region26: #{autoencoder_forward.1} parent=11 // pred_check_branch
          %568 = sbr.rel (%p566) target = $region28
        $region27: #{autoencoder_forward.1} parent=11 // pred_region
          %s570 = ssub.s32 16, 16
          %571 = vsyncadd [#allocation11], %s570
          %s573 = sshll.u32 [#allocation10], 4
          %s574 = int_to_ptr.vmem [resolvable:$true] %s573
          %576 = dma.hbm_to_vmem [thread:$0]  %s4, 16, %s574, [#allocation11]
        $region28: #{autoencoder_forward.1} parent=11 // pred_fallthru
          _
        // Predicated region
        $region29: #{autoencoder_forward.1} parent=11 // pred_check
          %p577 = pneg %p167
        $region30: #{autoencoder_forward.1} parent=11 // pred_check_branch
          %579 = sbr.rel (%p577) target = $region32
        $region31: #{autoencoder_forward.1} parent=11 // pred_region
          %s581 = ssub.s32 20480, 20480
          %582 = vsyncadd [#allocation11], %s581
          %s583 = sshll.u32 [#allocation12], 4
          %s584 = int_to_ptr.vmem [resolvable:$true] %s583
          %589 = dma.hbm_to_vmem [thread:$0]  %s5, 20480, %s584, [#allocation11], 64, 64, 4
        $region32: #{autoencoder_forward.1} parent=11 // pred_fallthru
          _
        // Predicated region
        $region33: #{autoencoder_forward.1} parent=11 // pred_check
          %p590 = pneg %p188
        $region34: #{autoencoder_forward.1} parent=11 // pred_check_branch
          %592 = sbr.rel (%p590) target = $region36
        $region35: #{autoencoder_forward.1} parent=11 // pred_region
          _
        $region36: #{autoencoder_forward.1} parent=11 // pred_fallthru
          _
        // Predicated region
        $region37: #{autoencoder_forward.1} parent=11 // pred_check
          %p593 = pneg %p209
        $region38: #{autoencoder_forward.1} parent=11 // pred_check_branch
          %595 = sbr.rel (%p593) target = $region40
        $region39: #{autoencoder_forward.1} parent=11 // pred_region
          _
        $region40: #{autoencoder_forward.1} parent=11 // pred_fallthru
          _
        // Predicated region
        $region41: #{autoencoder_forward.1} parent=11 // pred_check
          %p596 = pneg %p230
        $region42: #{autoencoder_forward.1} parent=11 // pred_check_branch
          %598 = sbr.rel (%p596) target = $region44
        $region43: #{autoencoder_forward.1} parent=11 // pred_region
          _
        $region44: #{autoencoder_forward.1} parent=11 // pred_fallthru
          _
        // Predicated region
        $region45: #{autoencoder_forward.1} parent=11 // pred_check
          %p599 = pneg %p251
        $region46: #{autoencoder_forward.1} parent=11 // pred_check_branch
          %601 = sbr.rel (%p599) target = $region48
        $region47: #{autoencoder_forward.1} parent=11 // pred_region
          _
        $region48: #{autoencoder_forward.1} parent=11 // pred_fallthru
          _
        // Predicated region
        $region49: #{autoencoder_forward.1} parent=11 // pred_check
          %p602 = pneg %p272
        $region50: #{autoencoder_forward.1} parent=11 // pred_check_branch
          %604 = sbr.rel (%p602) target = $region52
        $region51: #{autoencoder_forward.1} parent=11 // pred_region
          _
        $region52: #{autoencoder_forward.1} parent=11 // pred_fallthru
          _
        // Predicated region
        $region53: #{autoencoder_forward.1} parent=11 // pred_check
          %p605 = pneg %p293
        $region54: #{autoencoder_forward.1} parent=11 // pred_check_branch
          %607 = sbr.rel (%p605) target = $region56
        $region55: #{autoencoder_forward.1} parent=11 // pred_region
          _
        $region56: #{autoencoder_forward.1} parent=11 // pred_fallthru
          _
        // Predicated region
        $region57: #{autoencoder_forward.1} parent=11 // pred_check
          %p608 = pneg %p314
        $region58: #{autoencoder_forward.1} parent=11 // pred_check_branch
          %610 = sbr.rel (%p608) target = $region60
        $region59: #{autoencoder_forward.1} parent=11 // pred_region
          _
        $region60: #{autoencoder_forward.1} parent=11 // pred_fallthru
          _
        // Predicated region
        $region61: #{autoencoder_forward.1} parent=11 // pred_check
          %p611 = pneg %p335
        $region62: #{autoencoder_forward.1} parent=11 // pred_check_branch
          %613 = sbr.rel (%p611) target = $region64
        $region63: #{autoencoder_forward.1} parent=11 // pred_region
          _
        $region64: #{autoencoder_forward.1} parent=11 // pred_fallthru
          _
        // Predicated region
        $region65: #{autoencoder_forward.1} parent=11 // pred_check
          %p614 = pneg %p356
        $region66: #{autoencoder_forward.1} parent=11 // pred_check_branch
          %616 = sbr.rel (%p614) target = $region68
        $region67: #{autoencoder_forward.1} parent=11 // pred_region
          %s618 = ssub.s32 16, 16
          %619 = vsyncadd [#allocation14], %s618
          %s621 = sshll.u32 [#allocation13], 4
          %s622 = int_to_ptr.vmem [resolvable:$true] %s621
          %624 = dma.hbm_to_vmem [thread:$0]  %s14, 16, %s622, [#allocation14]
        $region68: #{autoencoder_forward.1} parent=11 // pred_fallthru
          _
        // Predicated region
        $region69: #{autoencoder_forward.1} parent=11 // pred_check
          %p625 = pneg %p377
        $region70: #{autoencoder_forward.1} parent=11 // pred_check_branch
          %627 = sbr.rel (%p625) target = $region72
        $region71: #{autoencoder_forward.1} parent=11 // pred_region
          %s629 = ssub.s32 10240, 10240
          %630 = vsyncadd [#allocation14], %s629
          %s631 = sshll.u32 [#allocation15], 4
          %s632 = int_to_ptr.vmem [resolvable:$true] %s631
          %637 = dma.hbm_to_vmem [thread:$0]  %s15, 10240, %s632, [#allocation14], 1280, 1280, 80
        $region72: #{autoencoder_forward.1} parent=11 // pred_fallthru
          _
        // Predicated region
        $region73: #{autoencoder_forward.1} parent=11 // pred_check
          %p638 = pneg %p398
        $region74: #{autoencoder_forward.1} parent=11 // pred_check_branch
          %640 = sbr.rel (%p638) target = $region76
        $region75: #{autoencoder_forward.1} parent=11 // pred_region
          _
        $region76: #{autoencoder_forward.1} parent=11 // pred_fallthru
          _
        // Predicated region
        $region77: #{autoencoder_forward.1} parent=11 // pred_check
          %p641 = pneg %p419
        $region78: #{autoencoder_forward.1} parent=11 // pred_check_branch
          %643 = sbr.rel (%p641) target = $region80
        $region79: #{autoencoder_forward.1} parent=11 // pred_region
          _
        $region80: #{autoencoder_forward.1} parent=11 // pred_fallthru
          _
        // Predicated region
        $region81: #{autoencoder_forward.1} parent=11 // pred_check
          %p644 = pneg %p440
        $region82: #{autoencoder_forward.1} parent=11 // pred_check_branch
          %646 = sbr.rel (%p644) target = $region84
        $region83: #{autoencoder_forward.1} parent=11 // pred_region
          _
        $region84: #{autoencoder_forward.1} parent=11 // pred_fallthru
          _
        // Predicated region
        $region85: #{autoencoder_forward.1} parent=11 // pred_check
          %p647 = pneg %p461
        $region86: #{autoencoder_forward.1} parent=11 // pred_check_branch
          %649 = sbr.rel (%p647) target = $region88
        $region87: #{autoencoder_forward.1} parent=11 // pred_region
          _
        $region88: #{autoencoder_forward.1} parent=11 // pred_fallthru
          _
        // Predicated region
        $region89: #{autoencoder_forward.1} parent=11 // pred_check
          %p650 = pneg %p482
        $region90: #{autoencoder_forward.1} parent=11 // pred_check_branch
          %652 = sbr.rel (%p650) target = $region92
        $region91: #{autoencoder_forward.1} parent=11 // pred_region
          _
        $region92: #{autoencoder_forward.1} parent=11 // pred_fallthru
          _
      $region12: #{autoencoder_forward.1} parent=5 // pred_fallthru
        _
      %p653 = scmp.lt.s32.totalorder %s36, 2
      // Predicated region
      $region93: #{autoencoder_forward.1} parent=5 // pred_check
        %p654 = pneg %p653
      $region94: #{autoencoder_forward.1} parent=5 // pred_check_branch
        %656 = sbr.rel (%p654) target = $region96
      $region95: #{autoencoder_forward.1} parent=5 // pred_region
        // Predicated region
        $region97: #{autoencoder_forward.1} parent=95 // pred_check
          %p657 = pneg %p56
        $region98: #{autoencoder_forward.1} parent=95 // pred_check_branch
          %659 = sbr.rel (%p657) target = $region100
        $region99: #{autoencoder_forward.1} parent=95 // pred_region
          %p660 = scmp.lt.s32.totalorder %s36, 1
          %s661 = scalar_select %p660, %s36, 1
          %s662 = smul.addr %s661, 6
          %s663 = smul.addr %s662, 8
          %s664 = scalar_lea.vmem %s0, %s663
        $region100: #{autoencoder_forward.1} parent=95 // pred_fallthru
          _
      $region96: #{autoencoder_forward.1} parent=5 // pred_fallthru
        _
      %p665 = scmp.le.s32.totalorder 1, %s36
      %p666 = scmp.lt.s32.totalorder %s36, 3
      %p667 = pnand %p665, %p666
      %p668 = pneg %p667
      // Predicated region
      $region101: #{autoencoder_forward.1} parent=5 // pred_check
        _
      $region102: #{autoencoder_forward.1} parent=5 // pred_check_branch
        %670 = sbr.rel (%p667) target = $region104
      $region103: #{autoencoder_forward.1} parent=5 // pred_region
        %s671 = ssub.s32 %s36, 1
        // Predicated region
        $region105: #{autoencoder_forward.1} parent=103 // pred_check
          %p672 = pneg %p104
        $region106: #{autoencoder_forward.1} parent=103 // pred_check_branch
          %674 = sbr.rel (%p672) target = $region108
        $region107: #{autoencoder_forward.1} parent=103 // pred_region
          %675 = dma.done [#allocation9], 16
        $region108: #{autoencoder_forward.1} parent=103 // pred_fallthru
          _
        // Predicated region
        $region109: #{autoencoder_forward.1} parent=103 // pred_check
          %p676 = pneg %p146
        $region110: #{autoencoder_forward.1} parent=103 // pred_check_branch
          %678 = sbr.rel (%p676) target = $region112
        $region111: #{autoencoder_forward.1} parent=103 // pred_region
          %679 = dma.done [#allocation11], 16
        $region112: #{autoencoder_forward.1} parent=103 // pred_fallthru
          _
        // Predicated region
        $region113: #{autoencoder_forward.1} parent=103 // pred_check
          %p680 = pneg %p167
        $region114: #{autoencoder_forward.1} parent=103 // pred_check_branch
          %682 = sbr.rel (%p680) target = $region116
        $region115: #{autoencoder_forward.1} parent=103 // pred_region
          %683 = dma.done [#allocation11], 20480
        $region116: #{autoencoder_forward.1} parent=103 // pred_fallthru
          _
        // Predicated region
        $region117: #{autoencoder_forward.1} parent=103 // pred_check
          %p684 = pneg %p356
        $region118: #{autoencoder_forward.1} parent=103 // pred_check_branch
          %686 = sbr.rel (%p684) target = $region120
        $region119: #{autoencoder_forward.1} parent=103 // pred_region
          %687 = dma.done [#allocation14], 16
        $region120: #{autoencoder_forward.1} parent=103 // pred_fallthru
          _
        // Predicated region
        $region121: #{autoencoder_forward.1} parent=103 // pred_check
          %p688 = pneg %p377
        $region122: #{autoencoder_forward.1} parent=103 // pred_check_branch
          %690 = sbr.rel (%p688) target = $region124
        $region123: #{autoencoder_forward.1} parent=103 // pred_region
          %691 = dma.done [#allocation14], 10240
        $region124: #{autoencoder_forward.1} parent=103 // pred_fallthru
          _
        %p692 = scmp.lt.s32.totalorder %s41, 1
        %s693 = scalar_select %p692, %s41, 1
        %s694 = smul.addr %s693, 6
        %s695 = smul.addr %s694, 8
        %s696 = scalar_lea.vmem %s0, %s695
        %p697 = pneg %p62
        %p698 = pneg %p59
        %p699 = pneg %p83
        %p700 = pneg %p80
        %p701 = pneg %p104
        %p702 = pneg %p101
        %p703 = pneg %p125
        %p704 = pneg %p122
        %p705 = pneg %p146
        %p706 = pneg %p143
        %p707 = pneg %p167
        %p708 = pneg %p164
        %p709 = pneg %p188
        %p710 = pneg %p185
        %p711 = pneg %p209
        %p712 = pneg %p206
        %p713 = pneg %p230
        %p714 = pneg %p227
        %p715 = pneg %p251
        %p716 = pneg %p248
        %p717 = pneg %p272
        %p718 = pneg %p269
        %p719 = pneg %p293
        %p720 = pneg %p290
        %p721 = pneg %p314
        %p722 = pneg %p311
        %p723 = pneg %p335
        %p724 = pneg %p332
        %p725 = pneg %p356
        %p726 = pneg %p353
        %p727 = pneg %p377
        %p728 = pneg %p374
        %p729 = pneg %p398
        %p730 = pneg %p395
        %p731 = pneg %p419
        %p732 = pneg %p416
        %p733 = pneg %p440
        %p734 = pneg %p437
        %p735 = pneg %p461
        %p736 = pneg %p458
        %p737 = pneg %p482
        %p738 = pneg %p479
        %p739 = pneg %p508
        %p740 = pneg %p505
        %p741 = scmp.lt.s32.totalorder %s41, 1
        %s742 = scalar_select %p741, %s41, 1
        %s743 = smul.addr %s742, 6
        %s744 = smul.addr %s743, 8
        %s745 = scalar_lea.vmem %s21, %s744
        %p746 = pneg %p534
        %p747 = pneg %p531
        %p748 = scmp.lt.s32.totalorder %s41, 1
        %s749 = scalar_select %p748, %s41, 1
        %s750 = scalar_lea.vmem %s22, %s749
        %p751 = scmp.lt.s32.totalorder %s41, 1
        %s752 = scalar_select %p751, %s41, 1
        %s753 = smul.addr %s752, 6
        %s754 = smul.addr %s753, 8
        %s755 = scalar_lea.vmem %s0, %s754
        %p756 = scmp.lt.s32.totalorder %s41, 1
        %s757 = scalar_select %p756, %s41, 1
        %s758 = smul.addr %s757, 6
        %s759 = smul.addr %s758, 8
        %s760 = scalar_lea.vmem %s21, %s759
        %p761 = scmp.lt.s32.totalorder %s41, 1
        %s762 = scalar_select %p761, %s41, 1
        %s763 = scalar_lea.vmem %s22, %s762
        %vm765 = vcmask 8192
        %766 = vst.msk [vmem:[#allocation2] sm:$0x1] %vm765, 0.0
        %v767 = vld [vmem:[%s755] sm:$0xff]
        %v768 = vld [vmem:[%s755 + $0x8] sm:$0xff]
        %v769 = vld [vmem:[%s755 + $0x10] sm:$0xff]
        %v770 = vld [vmem:[%s755 + $0x18] sm:$0xff]
        %v771 = vld [vmem:[%s755 + $0x20] sm:$0xff]
        %777 = vrot.lane.b32.xlu0 %v767, 126
        %v778 = vpop.permute.xlu0 %777
        %779 = vrot.lane.b32.xlu0 %v768, 126
        %v780 = vpop.permute.xlu0 %779
        %781 = vrot.lane.b32.xlu0 %v769, 126
        %v782 = vpop.permute.xlu0 %781
        %783 = vrot.lane.b32.xlu0 %v770, 126
        %v784 = vpop.permute.xlu0 %783
        %785 = vrot.lane.b32.xlu0 %v771, 126
        %v786 = vpop.permute.xlu0 %785
        %vm792 = vcmask 15360
        %793 = vst.msk [vmem:[#allocation2 + $0x1] sm:$0xff] %vm792, %v778
        %794 = vst.msk [vmem:[#allocation2 + $0x9] sm:$0xff] %vm792, %v780
        %795 = vst.msk [vmem:[#allocation2 + $0x11] sm:$0xff] %vm792, %v782
        %796 = vst.msk [vmem:[#allocation2 + $0x19] sm:$0xff] %vm792, %v784
        %797 = vst.msk [vmem:[#allocation2 + $0x21] sm:$0xff] %vm792, %v786
        %v798 = vld [vmem:[%s755] sm:$0xff]
        %v799 = vld [vmem:[%s755 + $0x8] sm:$0xff]
        %v800 = vld [vmem:[%s755 + $0x10] sm:$0xff]
        %v801 = vld [vmem:[%s755 + $0x18] sm:$0xff]
        %v802 = vld [vmem:[%s755 + $0x20] sm:$0xff]
        %v803 = vld [vmem:[%s755 + $0x28] sm:$0x1]
        %810 = vrot.lane.b32.xlu0 %v798, 2
        %v811 = vpop.permute.xlu0 %810
        %812 = vrot.lane.b32.xlu0 %v799, 2
        %v813 = vpop.permute.xlu0 %812
        %814 = vrot.lane.b32.xlu0 %v800, 2
        %v815 = vpop.permute.xlu0 %814
        %816 = vrot.lane.b32.xlu0 %v801, 2
        %v817 = vpop.permute.xlu0 %816
        %818 = vrot.lane.b32.xlu0 %v802, 2
        %v819 = vpop.permute.xlu0 %818
        %820 = vrot.lane.b32.xlu0 %v803, 2
        %v821 = vpop.permute.xlu0 %820
        %vm828 = vcmask 48144
        %829 = vst.msk [vmem:[#allocation2] sm:$0xff] %vm828, %v811
        %830 = vst.msk [vmem:[#allocation2 + $0x8] sm:$0xff] %vm828, %v813
        %831 = vst.msk [vmem:[#allocation2 + $0x10] sm:$0xff] %vm828, %v815
        %832 = vst.msk [vmem:[#allocation2 + $0x18] sm:$0xff] %vm828, %v817
        %833 = vst.msk [vmem:[#allocation2 + $0x20] sm:$0xff] %vm828, %v819
        %vm834 = vcmask 40976
        %835 = vst.msk [vmem:[#allocation2 + $0x28] sm:$0x1] %vm834, %v821
        %v836 = vld [vmem:[%s755 + $0x1] sm:$0xff]
        %v837 = vld [vmem:[%s755 + $0x9] sm:$0xff]
        %v838 = vld [vmem:[%s755 + $0x11] sm:$0xff]
        %v839 = vld [vmem:[%s755 + $0x19] sm:$0xff]
        %v840 = vld [vmem:[%s755 + $0x21] sm:$0xff]
        %846 = vrot.lane.b32.xlu0 %v836, 6
        %v847 = vpop.permute.xlu0 %846
        %848 = vrot.lane.b32.xlu0 %v837, 6
        %v849 = vpop.permute.xlu0 %848
        %850 = vrot.lane.b32.xlu0 %v838, 6
        %v851 = vpop.permute.xlu0 %850
        %852 = vrot.lane.b32.xlu0 %v839, 6
        %v853 = vpop.permute.xlu0 %852
        %854 = vrot.lane.b32.xlu0 %v840, 6
        %v855 = vpop.permute.xlu0 %854
        %vm861 = vcmask 64560
        %862 = vst.msk [vmem:[#allocation2] sm:$0xff] %vm861, %v847
        %863 = vst.msk [vmem:[#allocation2 + $0x8] sm:$0xff] %vm861, %v849
        %864 = vst.msk [vmem:[#allocation2 + $0x10] sm:$0xff] %vm861, %v851
        %865 = vst.msk [vmem:[#allocation2 + $0x18] sm:$0xff] %vm861, %v853
        %866 = vst.msk [vmem:[#allocation2 + $0x20] sm:$0xff] %vm861, %v855
        %vm867 = vcmask 57392
        %868 = vst.msk [vmem:[#allocation2 + $0x28] sm:$0x1] %vm867, 0.0
        %v869 = vld [vmem:[#allocation2] sm:$0xff]
        %v870 = vld [vmem:[#allocation2 + $0x8] sm:$0xff]
        %v871 = vld [vmem:[#allocation2 + $0x10] sm:$0xff]
        %v872 = vld [vmem:[#allocation2 + $0x18] sm:$0xff]
        %v873 = vld [vmem:[#allocation2 + $0x20] sm:$0xff]
        %v874 = vld [vmem:[#allocation2 + $0x28] sm:$0x1]
        %v875 = vld [vmem:[%s1] sm:$0xff]
        %vm876 = vcmask 64512
        %v878 = vsel %vm876, %v869, 0
        %v881 = vsel %vm876, %v870, 0
        %v884 = vsel %vm876, %v871, 0
        %v887 = vsel %vm876, %v872, 0
        %v890 = vsel %vm876, %v873, 0
        %v893 = vsel %vm876, %v874, 0
        %895 = vmatprep.subr.mxu0 0.0
        %896 = vmatpush1.msra.mxu0 %v875
        %897 = vmatprep.subr.mxu0 0.0
        %898 = vmatpush1.msra.mxu0 0.0
        %899 = vmatprep.subr.mxu0 0.0
        %900 = vmatpush1.msra.mxu0 0.0
        %901 = vmatprep.subr.mxu0 0.0
        %902 = vmatpush1.msra.mxu0 0.0
        %903 = vmatprep.subr.mxu0 0.0
        %904 = vmatpush1.msra.mxu0 0.0
        %905 = vmatprep.subr.mxu0 0.0
        %906 = vmatpush1.msra.mxu0 0.0
        %907 = vmatprep.subr.mxu0 0.0
        %908 = vmatpush1.msra.mxu0 0.0
        %909 = vmatprep.subr.mxu0 0.0
        %910 = vmatpush1.msra.mxu0 0.0
        %911 = vmatprep.subr.mxu0 0.0
        %912 = vmatpush1.msra.mxu0 0.0
        %913 = vmatprep.subr.mxu0 0.0
        %914 = vmatpush1.msra.mxu0 0.0
        %915 = vmatprep.subr.mxu0 0.0
        %916 = vmatpush1.msra.mxu0 0.0
        %917 = vmatprep.subr.mxu0 0.0
        %918 = vmatpush1.msra.mxu0 0.0
        %919 = vmatprep.subr.mxu0 0.0
        %920 = vmatpush1.msra.mxu0 0.0
        %921 = vmatprep.subr.mxu0 0.0
        %922 = vmatpush1.msra.mxu0 0.0
        %923 = vmatprep.subr.mxu0 0.0
        %924 = vmatpush1.msra.mxu0 0.0
        %925 = vmatprep.subr.mxu0 0.0
        %926 = vmatpush1.msra.mxu0 0.0
        %927 = vmatprep.subr.mxu0 0.0
        %928 = vmatpush1.msra.mxu0 0.0
        %929 = vmatprep.subr.mxu0 0.0
        %930 = vmatpush1.msra.mxu0 0.0
        %931 = vmatprep.subr.mxu0 0.0
        %932 = vmatpush1.msra.mxu0 0.0
        %933 = vmatprep.subr.mxu0 0.0
        %934 = vmatpush1.msra.mxu0 0.0
        %935 = vmatprep.subr.mxu0 0.0
        %936 = vmatpush1.msra.mxu0 0.0
        %937 = vmatprep.subr.mxu0 0.0
        %938 = vmatpush1.msra.mxu0 0.0
        %939 = vmatprep.subr.mxu0 0.0
        %940 = vmatpush1.msra.mxu0 0.0
        %941 = vmatprep.subr.mxu0 0.0
        %942 = vmatpush1.msra.mxu0 0.0
        %943 = vmatprep.subr.mxu0 0.0
        %944 = vmatpush1.msra.mxu0 0.0
        %945 = vmatprep.subr.mxu0 0.0
        %946 = vmatpush1.msra.mxu0 0.0
        %947 = vmatprep.subr.mxu0 0.0
        %948 = vmatpush1.msra.mxu0 0.0
        %949 = vmatprep.subr.mxu0 0.0
        %950 = vmatpush1.msra.mxu0 0.0
        %951 = vmatprep.subr.mxu0 0.0
        %952 = vmatpush1.msra.mxu0 0.0
        %953 = vmatprep.subr.mxu0 0.0
        %954 = vmatpush1.msra.mxu0 0.0
        %955 = vmatprep.subr.mxu0 0.0
        %956 = vmatpush1.msra.mxu0 0.0
        %957 = vmatprep.subr.mxu0 0.0
        %958 = vmatpush1.msra.mxu0 0.0
        %959 = vmatprep.mubr.f32.mxu0 0.0
        %960 = vmatmul.mubr.f32.gmra.mrb[0].mxu0 %v878
        %v961 = vpop.f32.mrb[0].mxu0
        %v962 = vadd.f32 0.0, %v961
        %v963 = vpop.f32.mrb[0].mxu0
        %964 = vmatprep.mubr.f32.mxu0 0.0
        %965 = vmatmul.mubr.f32.gmra.mrb[0].mxu0 %v881
        %v966 = vpop.f32.mrb[0].mxu0
        %v967 = vadd.f32 0.0, %v966
        %v968 = vpop.f32.mrb[0].mxu0
        %969 = vmatprep.mubr.f32.mxu0 0.0
        %970 = vmatmul.mubr.f32.gmra.mrb[0].mxu0 %v884
        %v971 = vpop.f32.mrb[0].mxu0
        %v972 = vadd.f32 0.0, %v971
        %v973 = vpop.f32.mrb[0].mxu0
        %974 = vmatprep.mubr.f32.mxu0 0.0
        %975 = vmatmul.mubr.f32.gmra.mrb[0].mxu0 %v887
        %v976 = vpop.f32.mrb[0].mxu0
        %v977 = vadd.f32 0.0, %v976
        %v978 = vpop.f32.mrb[0].mxu0
        %979 = vmatprep.mubr.f32.mxu0 0.0
        %980 = vmatmul.mubr.f32.gmra.mrb[0].mxu0 %v890
        %v981 = vpop.f32.mrb[0].mxu0
        %v982 = vadd.f32 0.0, %v981
        %v983 = vpop.f32.mrb[0].mxu0
        %984 = vmatprep.mubr.f32.mxu0 0.0
        %985 = vmatmul.mubr.f32.gmra.mrb[0].mxu0 %v893
        %v986 = vpop.f32.mrb[0].mxu0
        %v987 = vadd.f32 0.0, %v986
        %v988 = vpop.f32.mrb[0].mxu0
        %989 = vdwg.mxu0
        %v990 = vld [vmem:[#allocation8] sm:$0x1]
        %v992 = vlaneseq
        %v993 = vshrl.u32 %v992, 7
        %v994 = vsub.s32 0, %v993
        %v995 = vrot.slane %v990, %v994
        %v997 = vadd.f32 %v962, %v995
        %v998 = vadd.f32 %v967, %v995
        %v999 = vadd.f32 %v972, %v995
        %v1000 = vadd.f32 %v977, %v995
        %v1001 = vadd.f32 %v982, %v995
        %v1002 = vadd.f32 %v987, %v995
        %v1003 = vmax.f32 %v997, 0.0
        %v1004 = vmax.f32 %v998, 0.0
        %v1005 = vmax.f32 %v999, 0.0
        %v1006 = vmax.f32 %v1000, 0.0
        %v1007 = vmax.f32 %v1001, 0.0
        %v1008 = vmax.f32 %v1002, 0.0
        %1009 = vrot.lane.b32.xlu0 %v995, 32
        %v1010 = vpop.permute.xlu0 %1009
        %v1012 = vadd.f32 %v962, %v1010
        %v1013 = vadd.f32 %v967, %v1010
        %v1014 = vadd.f32 %v972, %v1010
        %v1015 = vadd.f32 %v977, %v1010
        %v1016 = vadd.f32 %v982, %v1010
        %v1017 = vadd.f32 %v987, %v1010
        %v1018 = vmax.f32 %v1012, 0.0
        %v1019 = vmax.f32 %v1013, 0.0
        %v1020 = vmax.f32 %v1014, 0.0
        %v1021 = vmax.f32 %v1015, 0.0
        %v1022 = vmax.f32 %v1016, 0.0
        %v1023 = vmax.f32 %v1017, 0.0
        %1024 = vrot.lane.b32.xlu0 %v995, 64
        %v1025 = vpop.permute.xlu0 %1024
        %v1027 = vadd.f32 %v962, %v1025
        %v1028 = vadd.f32 %v967, %v1025
        %v1029 = vadd.f32 %v972, %v1025
        %v1030 = vadd.f32 %v977, %v1025
        %v1031 = vadd.f32 %v982, %v1025
        %v1032 = vadd.f32 %v987, %v1025
        %v1033 = vmax.f32 %v1027, 0.0
        %v1034 = vmax.f32 %v1028, 0.0
        %v1035 = vmax.f32 %v1029, 0.0
        %v1036 = vmax.f32 %v1030, 0.0
        %v1037 = vmax.f32 %v1031, 0.0
        %v1038 = vmax.f32 %v1032, 0.0
        %1039 = vrot.lane.b32.xlu0 %v995, 96
        %v1040 = vpop.permute.xlu0 %1039
        %v1042 = vadd.f32 %v962, %v1040
        %v1043 = vadd.f32 %v967, %v1040
        %v1044 = vadd.f32 %v972, %v1040
        %v1045 = vadd.f32 %v977, %v1040
        %v1046 = vadd.f32 %v982, %v1040
        %v1047 = vadd.f32 %v987, %v1040
        %v1048 = vmax.f32 %v1042, 0.0
        %v1049 = vmax.f32 %v1043, 0.0
        %v1050 = vmax.f32 %v1044, 0.0
        %v1051 = vmax.f32 %v1045, 0.0
        %v1052 = vmax.f32 %v1046, 0.0
        %v1053 = vmax.f32 %v1047, 0.0
        %1060 = vrot.lane.b32.xlu0 %v1018, 96
        %v1061 = vpop.permute.xlu0 %1060
        %1062 = vrot.lane.b32.xlu0 %v1019, 96
        %v1063 = vpop.permute.xlu0 %1062
        %1064 = vrot.lane.b32.xlu0 %v1020, 96
        %v1065 = vpop.permute.xlu0 %1064
        %1066 = vrot.lane.b32.xlu0 %v1021, 96
        %v1067 = vpop.permute.xlu0 %1066
        %1068 = vrot.lane.b32.xlu0 %v1022, 96
        %v1069 = vpop.permute.xlu0 %1068
        %1070 = vrot.lane.b32.xlu0 %v1023, 96
        %v1071 = vpop.permute.xlu0 %1070
        %v1078 = vmax.f32 %v1003, %v1061
        %v1079 = vmax.f32 %v1004, %v1063
        %v1080 = vmax.f32 %v1005, %v1065
        %v1081 = vmax.f32 %v1006, %v1067
        %v1082 = vmax.f32 %v1007, %v1069
        %v1083 = vmax.f32 %v1008, %v1071
        %1090 = vrot.lane.b32.xlu0 %v1048, 96
        %v1091 = vpop.permute.xlu0 %1090
        %1092 = vrot.lane.b32.xlu0 %v1049, 96
        %v1093 = vpop.permute.xlu0 %1092
        %1094 = vrot.lane.b32.xlu0 %v1050, 96
        %v1095 = vpop.permute.xlu0 %1094
        %1096 = vrot.lane.b32.xlu0 %v1051, 96
        %v1097 = vpop.permute.xlu0 %1096
        %1098 = vrot.lane.b32.xlu0 %v1052, 96
        %v1099 = vpop.permute.xlu0 %1098
        %1100 = vrot.lane.b32.xlu0 %v1053, 96
        %v1101 = vpop.permute.xlu0 %1100
        %v1108 = vmax.f32 %v1033, %v1091
        %v1109 = vmax.f32 %v1034, %v1093
        %v1110 = vmax.f32 %v1035, %v1095
        %v1111 = vmax.f32 %v1036, %v1097
        %v1112 = vmax.f32 %v1037, %v1099
        %v1113 = vmax.f32 %v1038, %v1101
        %vm1114 = vcmask 253952
        %1115 = vst.msk [vmem:[#allocation3] sm:$0x1] %vm1114, 0.0
        %vm1121 = vcmask 1040384
        %v1122 = vrot.slane %v1108, 7
        %v1123 = vrot.slane %v1109, 7
        %v1124 = vsel %vm1121, %v1122, %v1123
        %v1125 = vrot.slane %v1110, 7
        %v1126 = vsel %vm1121, %v1123, %v1125
        %v1127 = vrot.slane %v1111, 7
        %v1128 = vsel %vm1121, %v1125, %v1127
        %v1129 = vrot.slane %v1112, 7
        %v1130 = vsel %vm1121, %v1127, %v1129
        %1131 = vrot.lane.b32.xlu0 %v1122, 64
        %v1132 = vpop.permute.xlu0 %1131
        %1133 = vrot.lane.b32.xlu0 %v1124, 64
        %v1134 = vpop.permute.xlu0 %1133
        %1135 = vrot.lane.b32.xlu0 %v1126, 64
        %v1136 = vpop.permute.xlu0 %1135
        %1137 = vrot.lane.b32.xlu0 %v1128, 64
        %v1138 = vpop.permute.xlu0 %1137
        %1139 = vrot.lane.b32.xlu0 %v1130, 64
        %v1140 = vpop.permute.xlu0 %1139
        %vm1146 = vcmask 261121
        %1147 = vst.msk [vmem:[#allocation3] sm:$0xfe] %vm1146, %v1132
        %vm1148 = vcmask 261120
        %1149 = vst.msk [vmem:[#allocation3 + $0x10] sm:$0xff] %vm1148, %v1134
        %1150 = vst.msk [vmem:[#allocation3 + $0x20] sm:$0xff] %vm1148, %v1136
        %1151 = vst.msk [vmem:[#allocation3 + $0x30] sm:$0xff] %vm1148, %v1138
        %1152 = vst.msk [vmem:[#allocation3 + $0x40] sm:$0xff] %vm1148, %v1140
        %1158 = vrot.lane.b32.xlu0 %v1078, 32
        %v1159 = vpop.permute.xlu0 %1158
        %1160 = vrot.lane.b32.xlu0 %v1079, 32
        %v1161 = vpop.permute.xlu0 %1160
        %1162 = vrot.lane.b32.xlu0 %v1080, 32
        %v1163 = vpop.permute.xlu0 %1162
        %1164 = vrot.lane.b32.xlu0 %v1081, 32
        %v1165 = vpop.permute.xlu0 %1164
        %1166 = vrot.lane.b32.xlu0 %v1082, 32
        %v1167 = vpop.permute.xlu0 %1166
        %vm1173 = vcmask 523520
        %1174 = vst.msk [vmem:[#allocation3] sm:$0xff] %vm1173, %v1159
        %1175 = vst.msk [vmem:[#allocation3 + $0x10] sm:$0xff] %vm1173, %v1161
        %1176 = vst.msk [vmem:[#allocation3 + $0x20] sm:$0xff] %vm1173, %v1163
        %1177 = vst.msk [vmem:[#allocation3 + $0x30] sm:$0xff] %vm1173, %v1165
        %1178 = vst.msk [vmem:[#allocation3 + $0x40] sm:$0xff] %vm1173, %v1167
        %vm1179 = vcmask 785920
        %1180 = vst.msk [vmem:[#allocation3] sm:$0xff] %vm1179, %v1108
        %1181 = vst.msk [vmem:[#allocation3 + $0x10] sm:$0xff] %vm1179, %v1109
        %1182 = vst.msk [vmem:[#allocation3 + $0x20] sm:$0xff] %vm1179, %v1110
        %1183 = vst.msk [vmem:[#allocation3 + $0x30] sm:$0xff] %vm1179, %v1111
        %1184 = vst.msk [vmem:[#allocation3 + $0x40] sm:$0xff] %vm1179, %v1112
        %vm1186 = vcmask 1046528
        %v1187 = vrot.slane %v1078, 1
        %v1188 = vrot.slane %v1079, 1
        %v1189 = vsel %vm1186, %v1187, %v1188
        %v1190 = vrot.slane %v1080, 1
        %v1191 = vsel %vm1186, %v1188, %v1190
        %v1192 = vrot.slane %v1081, 1
        %v1193 = vsel %vm1186, %v1190, %v1192
        %v1194 = vrot.slane %v1082, 1
        %v1195 = vsel %vm1186, %v1192, %v1194
        %v1196 = vrot.slane %v1083, 1
        %v1197 = vsel %vm1186, %v1194, %v1196
        %1198 = vrot.lane.b32.xlu0 %v1189, 96
        %v1199 = vpop.permute.xlu0 %1198
        %1200 = vrot.lane.b32.xlu0 %v1191, 96
        %v1201 = vpop.permute.xlu0 %1200
        %1202 = vrot.lane.b32.xlu0 %v1193, 96
        %v1203 = vpop.permute.xlu0 %1202
        %1204 = vrot.lane.b32.xlu0 %v1195, 96
        %v1205 = vpop.permute.xlu0 %1204
        %1206 = vrot.lane.b32.xlu0 %v1197, 96
        %v1207 = vpop.permute.xlu0 %1206
        %vm1213 = vcmask 1048320
        %1214 = vst.msk [vmem:[#allocation3] sm:$0xff] %vm1213, %v1199
        %1215 = vst.msk [vmem:[#allocation3 + $0x10] sm:$0xff] %vm1213, %v1201
        %1216 = vst.msk [vmem:[#allocation3 + $0x20] sm:$0xff] %vm1213, %v1203
        %1217 = vst.msk [vmem:[#allocation3 + $0x30] sm:$0xff] %vm1213, %v1205
        %1218 = vst.msk [vmem:[#allocation3 + $0x40] sm:$0xff] %vm1213, %v1207
        %v1220 = vrot.slane %v1108, 1
        %v1221 = vrot.slane %v1109, 1
        %v1222 = vsel %vm1186, %v1220, %v1221
        %v1223 = vrot.slane %v1110, 1
        %v1224 = vsel %vm1186, %v1221, %v1223
        %v1225 = vrot.slane %v1111, 1
        %v1226 = vsel %vm1186, %v1223, %v1225
        %v1227 = vrot.slane %v1112, 1
        %v1228 = vsel %vm1186, %v1225, %v1227
        %v1229 = vrot.slane %v1113, 1
        %v1230 = vsel %vm1186, %v1227, %v1229
        %1231 = vrot.lane.b32.xlu0 %v1222, 64
        %v1232 = vpop.permute.xlu0 %1231
        %1233 = vrot.lane.b32.xlu0 %v1224, 64
        %v1234 = vpop.permute.xlu0 %1233
        %1235 = vrot.lane.b32.xlu0 %v1226, 64
        %v1236 = vpop.permute.xlu0 %1235
        %1237 = vrot.lane.b32.xlu0 %v1228, 64
        %v1238 = vpop.permute.xlu0 %1237
        %1239 = vrot.lane.b32.xlu0 %v1230, 64
        %v1240 = vpop.permute.xlu0 %1239
        %1246 = vst.msk [vmem:[#allocation3 + $0x8] sm:$0xff] %vm1148, %v1232
        %1247 = vst.msk [vmem:[#allocation3 + $0x18] sm:$0xff] %vm1148, %v1234
        %1248 = vst.msk [vmem:[#allocation3 + $0x28] sm:$0xff] %vm1148, %v1236
        %1249 = vst.msk [vmem:[#allocation3 + $0x38] sm:$0xff] %vm1148, %v1238
        %1250 = vst.msk [vmem:[#allocation3 + $0x48] sm:$0xff] %vm1148, %v1240
        %vm1251 = vcmask 1045504
        %v1252 = vrot.slane %v1078, 2
        %v1253 = vrot.slane %v1079, 2
        %v1254 = vsel %vm1251, %v1252, %v1253
        %v1255 = vrot.slane %v1080, 2
        %v1256 = vsel %vm1251, %v1253, %v1255
        %v1257 = vrot.slane %v1081, 2
        %v1258 = vsel %vm1251, %v1255, %v1257
        %v1259 = vrot.slane %v1082, 2
        %v1260 = vsel %vm1251, %v1257, %v1259
        %v1261 = vrot.slane %v1083, 2
        %v1262 = vsel %vm1251, %v1259, %v1261
        %1263 = vrot.lane.b32.xlu0 %v1254, 32
        %v1264 = vpop.permute.xlu0 %1263
        %1265 = vrot.lane.b32.xlu0 %v1256, 32
        %v1266 = vpop.permute.xlu0 %1265
        %1267 = vrot.lane.b32.xlu0 %v1258, 32
        %v1268 = vpop.permute.xlu0 %1267
        %1269 = vrot.lane.b32.xlu0 %v1260, 32
        %v1270 = vpop.permute.xlu0 %1269
        %1271 = vrot.lane.b32.xlu0 %v1262, 32
        %v1272 = vpop.permute.xlu0 %1271
        %1278 = vst.msk [vmem:[#allocation3 + $0x8] sm:$0xff] %vm1173, %v1264
        %1279 = vst.msk [vmem:[#allocation3 + $0x18] sm:$0xff] %vm1173, %v1266
        %1280 = vst.msk [vmem:[#allocation3 + $0x28] sm:$0xff] %vm1173, %v1268
        %1281 = vst.msk [vmem:[#allocation3 + $0x38] sm:$0xff] %vm1173, %v1270
        %vm1282 = vcmask 522496
        %1283 = vst.msk [vmem:[#allocation3 + $0x48] sm:$0x7f] %vm1282, %v1272
        %vm1284 = vcmask 516352
        %1285 = vst.msk [vmem:[#allocation3 + $0x4f] sm:$0x1] %vm1284, 0.0
        %v1286 = vld [vmem:[#allocation3] sm:$0xff]
        %v1287 = vld [vmem:[#allocation3 + $0x8] sm:$0xff]
        %v1288 = vld [vmem:[#allocation3 + $0x10] sm:$0xff]
        %v1289 = vld [vmem:[#allocation3 + $0x18] sm:$0xff]
        %v1290 = vld [vmem:[#allocation3 + $0x20] sm:$0xff]
        %v1291 = vld [vmem:[#allocation3 + $0x28] sm:$0xff]
        %v1292 = vld [vmem:[#allocation3 + $0x30] sm:$0xff]
        %v1293 = vld [vmem:[#allocation3 + $0x38] sm:$0xff]
        %v1294 = vld [vmem:[#allocation3 + $0x40] sm:$0xff]
        %v1295 = vld [vmem:[#allocation3 + $0x48] sm:$0xff]
        %v1296 = vld [vmem:[%s3] sm:$0xff]
        %v1297 = vld [vmem:[%s3 + $0x8] sm:$0xff]
        %v1298 = vld [vmem:[%s3 + $0x10] sm:$0xff]
        %v1299 = vld [vmem:[%s3 + $0x18] sm:$0xff]
        %v1300 = vld [vmem:[%s3 + $0x20] sm:$0xff]
        %v1301 = vld [vmem:[%s3 + $0x28] sm:$0xff]
        %v1302 = vld [vmem:[%s3 + $0x30] sm:$0xff]
        %v1303 = vld [vmem:[%s3 + $0x38] sm:$0xff]
        %v1304 = vld [vmem:[%s3 + $0x40] sm:$0xff]
        %v1305 = vld [vmem:[%s3 + $0x48] sm:$0xff]
        %v1306 = vld [vmem:[%s3 + $0x50] sm:$0xff]
        %v1307 = vld [vmem:[%s3 + $0x58] sm:$0xff]
        %v1308 = vld [vmem:[%s3 + $0x60] sm:$0xff]
        %v1309 = vld [vmem:[%s3 + $0x68] sm:$0xff]
        %v1310 = vld [vmem:[%s3 + $0x70] sm:$0xff]
        %v1311 = vld [vmem:[%s3 + $0x78] sm:$0xff]
        %v1312 = vld [vmem:[%s3 + $0x80] sm:$0xff]
        %v1313 = vld [vmem:[%s3 + $0x88] sm:$0xff]
        %v1314 = vld [vmem:[%s3 + $0x90] sm:$0xff]
        %v1315 = vld [vmem:[%s3 + $0x98] sm:$0xff]
        %v1316 = vld [vmem:[%s3 + $0xa0] sm:$0xff]
        %v1317 = vld [vmem:[%s3 + $0xa8] sm:$0xff]
        %v1318 = vld [vmem:[%s3 + $0xb0] sm:$0xff]
        %v1319 = vld [vmem:[%s3 + $0xb8] sm:$0xff]
        %vm1320 = vcmask 523264
        %v1322 = vsel %vm1320, %v1287, 0
        %v1325 = vsel %vm1320, %v1289, 0
        %v1328 = vsel %vm1320, %v1291, 0
        %v1331 = vsel %vm1320, %v1293, 0
        %v1334 = vsel %vm1320, %v1295, 0
        %1336 = vmatprep.subr.mxu0 0.0
        %1337 = vmatpush1.msra.mxu0 %v1296
        %1338 = vmatprep.subr.mxu0 0.0
        %1339 = vmatpush1.msra.mxu0 %v1297
        %1340 = vmatprep.subr.mxu0 0.0
        %1341 = vmatpush1.msra.mxu0 %v1298
        %1342 = vmatprep.subr.mxu0 0.0
        %1343 = vmatpush1.msra.mxu0 %v1299
        %1344 = vmatprep.subr.mxu0 0.0
        %1345 = vmatpush1.msra.mxu0 %v1300
        %1346 = vmatprep.subr.mxu0 0.0
        %1347 = vmatpush1.msra.mxu0 %v1301
        %1348 = vmatprep.subr.mxu0 0.0
        %1349 = vmatpush1.msra.mxu0 %v1302
        %1350 = vmatprep.subr.mxu0 0.0
        %1351 = vmatpush1.msra.mxu0 %v1303
        %1352 = vmatprep.subr.mxu0 0.0
        %1353 = vmatpush1.msra.mxu0 %v1304
        %1354 = vmatprep.subr.mxu0 0.0
        %1355 = vmatpush1.msra.mxu0 %v1305
        %1356 = vmatprep.subr.mxu0 0.0
        %1357 = vmatpush1.msra.mxu0 %v1306
        %1358 = vmatprep.subr.mxu0 0.0
        %1359 = vmatpush1.msra.mxu0 %v1307
        %1360 = vmatprep.subr.mxu0 0.0
        %1361 = vmatpush1.msra.mxu0 %v1308
        %1362 = vmatprep.subr.mxu0 0.0
        %1363 = vmatpush1.msra.mxu0 %v1309
        %1364 = vmatprep.subr.mxu0 0.0
        %1365 = vmatpush1.msra.mxu0 %v1310
        %1366 = vmatprep.subr.mxu0 0.0
        %1367 = vmatpush1.msra.mxu0 %v1311
        %1368 = vmatprep.subr.mxu0 0.0
        %1369 = vmatpush1.msra.mxu0 %v1312
        %1370 = vmatprep.subr.mxu0 0.0
        %1371 = vmatpush1.msra.mxu0 %v1313
        %1372 = vmatprep.subr.mxu0 0.0
        %1373 = vmatpush1.msra.mxu0 %v1314
        %1374 = vmatprep.subr.mxu0 0.0
        %1375 = vmatpush1.msra.mxu0 %v1315
        %1376 = vmatprep.subr.mxu0 0.0
        %1377 = vmatpush1.msra.mxu0 %v1316
        %1378 = vmatprep.subr.mxu0 0.0
        %1379 = vmatpush1.msra.mxu0 %v1317
        %1380 = vmatprep.subr.mxu0 0.0
        %1381 = vmatpush1.msra.mxu0 %v1318
        %1382 = vmatprep.subr.mxu0 0.0
        %1383 = vmatpush1.msra.mxu0 %v1319
        %1384 = vmatprep.subr.mxu0 0.0
        %1385 = vmatpush1.msra.mxu0 0.0
        %1386 = vmatprep.subr.mxu0 0.0
        %1387 = vmatpush1.msra.mxu0 0.0
        %1388 = vmatprep.subr.mxu0 0.0
        %1389 = vmatpush1.msra.mxu0 0.0
        %1390 = vmatprep.subr.mxu0 0.0
        %1391 = vmatpush1.msra.mxu0 0.0
        %1392 = vmatprep.subr.mxu0 0.0
        %1393 = vmatpush1.msra.mxu0 0.0
        %1394 = vmatprep.subr.mxu0 0.0
        %1395 = vmatpush1.msra.mxu0 0.0
        %1396 = vmatprep.subr.mxu0 0.0
        %1397 = vmatpush1.msra.mxu0 0.0
        %1398 = vmatprep.subr.mxu0 0.0
        %1399 = vmatpush1.msra.mxu0 0.0
        %1400 = vmatprep.mubr.f32.mxu0 %v1322
        %1401 = vmatmul.mubr.f32.gmra.mrb[0].mxu0 %v1286
        %v1402 = vpop.f32.mrb[0].mxu0
        %v1403 = vadd.f32 0.0, %v1402
        %v1404 = vpop.f32.mrb[0].mxu0
        %1405 = vmatprep.mubr.f32.mxu0 %v1325
        %1406 = vmatmul.mubr.f32.gmra.mrb[0].mxu0 %v1288
        %v1407 = vpop.f32.mrb[0].mxu0
        %v1408 = vadd.f32 0.0, %v1407
        %v1409 = vpop.f32.mrb[0].mxu0
        %1410 = vmatprep.mubr.f32.mxu0 %v1328
        %1411 = vmatmul.mubr.f32.gmra.mrb[0].mxu0 %v1290
        %v1412 = vpop.f32.mrb[0].mxu0
        %v1413 = vadd.f32 0.0, %v1412
        %v1414 = vpop.f32.mrb[0].mxu0
        %1415 = vmatprep.mubr.f32.mxu0 %v1331
        %1416 = vmatmul.mubr.f32.gmra.mrb[0].mxu0 %v1292
        %v1417 = vpop.f32.mrb[0].mxu0
        %v1418 = vadd.f32 0.0, %v1417
        %v1419 = vpop.f32.mrb[0].mxu0
        %1420 = vmatprep.mubr.f32.mxu0 %v1334
        %1421 = vmatmul.mubr.f32.gmra.mrb[0].mxu0 %v1294
        %v1422 = vpop.f32.mrb[0].mxu0
        %v1423 = vadd.f32 0.0, %v1422
        %v1424 = vpop.f32.mrb[0].mxu0
        %1425 = vdwg.mxu0
        %v1426 = vld [vmem:[#allocation10] sm:$0x1]
        %v1428 = vlaneseq
        %v1429 = vshrl.u32 %v1428, 7
        %v1430 = vsub.s32 0, %v1429
        %v1431 = vrot.slane %v1426, %v1430
        %v1433 = vadd.f32 %v1403, %v1431
        %v1434 = vadd.f32 %v1408, %v1431
        %v1435 = vadd.f32 %v1413, %v1431
        %v1436 = vadd.f32 %v1418, %v1431
        %v1437 = vadd.f32 %v1423, %v1431
        %v1438 = vmax.f32 %v1433, 0.0
        %v1439 = vmax.f32 %v1434, 0.0
        %v1440 = vmax.f32 %v1435, 0.0
        %v1441 = vmax.f32 %v1436, 0.0
        %v1442 = vmax.f32 %v1437, 0.0
        %1443 = vrot.lane.b32.xlu0 %v1431, 64
        %v1444 = vpop.permute.xlu0 %1443
        %v1446 = vadd.f32 %v1403, %v1444
        %v1447 = vadd.f32 %v1408, %v1444
        %v1448 = vadd.f32 %v1413, %v1444
        %v1449 = vadd.f32 %v1418, %v1444
        %v1450 = vadd.f32 %v1423, %v1444
        %v1451 = vmax.f32 %v1446, 0.0
        %v1452 = vmax.f32 %v1447, 0.0
        %v1453 = vmax.f32 %v1448, 0.0
        %v1454 = vmax.f32 %v1449, 0.0
        %v1455 = vmax.f32 %v1450, 0.0
        %1461 = vrot.lane.b32.xlu0 %v1451, 64
        %v1462 = vpop.permute.xlu0 %1461
        %1463 = vrot.lane.b32.xlu0 %v1452, 64
        %v1464 = vpop.permute.xlu0 %1463
        %1465 = vrot.lane.b32.xlu0 %v1453, 64
        %v1466 = vpop.permute.xlu0 %1465
        %1467 = vrot.lane.b32.xlu0 %v1454, 64
        %v1468 = vpop.permute.xlu0 %1467
        %1469 = vrot.lane.b32.xlu0 %v1455, 64
        %v1470 = vpop.permute.xlu0 %1469
        %v1476 = vmax.f32 %v1438, %v1462
        %v1477 = vmax.f32 %v1439, %v1464
        %v1478 = vmax.f32 %v1440, %v1466
        %v1479 = vmax.f32 %v1441, %v1468
        %v1480 = vmax.f32 %v1442, %v1470
        %v1481 = vlaneseq
        %vm1482 = vcmp.ge.s32.totalorder %v1481, 0
        %vm1483 = vcmp.lt.s32.totalorder %v1481, 64
        %vm1484 = vmand %vm1482, %vm1483
        %1485 = vst.msk [vmem:[#allocation4] sm:$0x1] %vm1484, %v1476
        %v1488 = vunpack.c.l.s4 1966171168
        %v1489 = vunpack.c.0.s8 %v1488
        %v1490 = vlaneseq
        %v1491 = vshrl.u32 %v1490, 7
        %v1492 = vsub.s32 %v1489, %v1491
        %v1493 = vrot.slane %v1476, %v1492
        %v1494 = vcombine.high %v1493, %v1493
        %v1496 = vunpack.c.l.s4 1966171168
        %v1497 = vunpack.c.0.s8 %v1496
        %v1498 = vlaneseq
        %v1499 = vshrl.u32 %v1498, 7
        %v1500 = vsub.s32 %v1497, %v1499
        %v1501 = vrot.slane %v1493, %v1500
        %v1503 = vunpack.c.l.s4 1966171168
        %v1504 = vunpack.c.0.s8 %v1503
        %v1505 = vlaneseq
        %v1506 = vshrl.u32 %v1505, 7
        %v1507 = vsub.s32 %v1504, %v1506
        %v1508 = vrot.slane %v1494, %v1507
        %1509 = vrot.lane.b32.xlu0 %v1508, 64
        %v1510 = vpop.permute.xlu0 %1509
        %vm1512 = vcmp.ge.s32.totalorder %v1481, 64
        %vm1513 = vcmp.lt.s32.totalorder %v1481, 128
        %vm1514 = vmand %vm1512, %vm1513
        %1515 = vst.msk [vmem:[#allocation4] sm:$0x1] %vm1514, %v1510
        %v1516 = vcombine.high %v1501, %v1501
        %1518 = vst.msk [vmem:[#allocation4 + $0x1] sm:$0x1] %vm1484, %v1516
        %v1519 = vcombine.high %v1508, %v1508
        %1520 = vrot.lane.b32.xlu0 %v1519, 64
        %v1521 = vpop.permute.xlu0 %1520
        %1523 = vst.msk [vmem:[#allocation4 + $0x1] sm:$0x1] %vm1514, %v1521
        %v1524 = vcombine.high %v1476, %v1476
        %v1526 = vunpack.c.l.s4 1966171168
        %v1527 = vunpack.c.0.s8 %v1526
        %v1528 = vlaneseq
        %v1529 = vshrl.u32 %v1528, 7
        %v1530 = vsub.s32 %v1527, %v1529
        %v1531 = vrot.slane %v1524, %v1530
        %v1533 = vunpack.c.l.s4 1966171168
        %v1534 = vunpack.c.0.s8 %v1533
        %v1535 = vlaneseq
        %v1536 = vshrl.u32 %v1535, 7
        %v1537 = vsub.s32 %v1534, %v1536
        %v1538 = vrot.slane %v1531, %v1537
        %1540 = vst.msk [vmem:[#allocation4 + $0x2] sm:$0x1] %vm1484, %v1538
        %v1541 = vcombine.high %v1531, %v1531
        %v1543 = vunpack.c.l.s4 1966171168
        %v1544 = vunpack.c.0.s8 %v1543
        %v1545 = vlaneseq
        %v1546 = vshrl.u32 %v1545, 7
        %v1547 = vsub.s32 %v1544, %v1546
        %v1548 = vrot.slane %v1541, %v1547
        %1549 = vrot.lane.b32.xlu0 %v1548, 64
        %v1550 = vpop.permute.xlu0 %1549
        %1552 = vst.msk [vmem:[#allocation4 + $0x2] sm:$0x1] %vm1514, %v1550
        %v1553 = vcombine.high %v1538, %v1538
        %1555 = vst.msk [vmem:[#allocation4 + $0x3] sm:$0x1] %vm1484, %v1553
        %v1556 = vcombine.high %v1548, %v1548
        %1557 = vrot.lane.b32.xlu0 %v1556, 64
        %v1558 = vpop.permute.xlu0 %1557
        %1560 = vst.msk [vmem:[#allocation4 + $0x3] sm:$0x1] %vm1514, %v1558
        %1561 = vst.msk [vmem:[#allocation4 + $0x4] sm:$0x1] %vm1484, %v1477
        %v1564 = vunpack.c.l.s4 1966171168
        %v1565 = vunpack.c.0.s8 %v1564
        %v1566 = vlaneseq
        %v1567 = vshrl.u32 %v1566, 7
        %v1568 = vsub.s32 %v1565, %v1567
        %v1569 = vrot.slane %v1477, %v1568
        %v1570 = vcombine.high %v1569, %v1569
        %v1572 = vunpack.c.l.s4 1966171168
        %v1573 = vunpack.c.0.s8 %v1572
        %v1574 = vlaneseq
        %v1575 = vshrl.u32 %v1574, 7
        %v1576 = vsub.s32 %v1573, %v1575
        %v1577 = vrot.slane %v1569, %v1576
        %v1579 = vunpack.c.l.s4 1966171168
        %v1580 = vunpack.c.0.s8 %v1579
        %v1581 = vlaneseq
        %v1582 = vshrl.u32 %v1581, 7
        %v1583 = vsub.s32 %v1580, %v1582
        %v1584 = vrot.slane %v1570, %v1583
        %1585 = vrot.lane.b32.xlu0 %v1584, 64
        %v1586 = vpop.permute.xlu0 %1585
        %1588 = vst.msk [vmem:[#allocation4 + $0x4] sm:$0x1] %vm1514, %v1586
        %v1589 = vcombine.high %v1577, %v1577
        %1591 = vst.msk [vmem:[#allocation4 + $0x5] sm:$0x1] %vm1484, %v1589
        %v1592 = vcombine.high %v1584, %v1584
        %1593 = vrot.lane.b32.xlu0 %v1592, 64
        %v1594 = vpop.permute.xlu0 %1593
        %1596 = vst.msk [vmem:[#allocation4 + $0x5] sm:$0x1] %vm1514, %v1594
        %v1597 = vcombine.high %v1477, %v1477
        %v1599 = vunpack.c.l.s4 1966171168
        %v1600 = vunpack.c.0.s8 %v1599
        %v1601 = vlaneseq
        %v1602 = vshrl.u32 %v1601, 7
        %v1603 = vsub.s32 %v1600, %v1602
        %v1604 = vrot.slane %v1597, %v1603
        %v1606 = vunpack.c.l.s4 1966171168
        %v1607 = vunpack.c.0.s8 %v1606
        %v1608 = vlaneseq
        %v1609 = vshrl.u32 %v1608, 7
        %v1610 = vsub.s32 %v1607, %v1609
        %v1611 = vrot.slane %v1604, %v1610
        %1613 = vst.msk [vmem:[#allocation4 + $0x6] sm:$0x1] %vm1484, %v1611
        %v1614 = vcombine.high %v1604, %v1604
        %v1616 = vunpack.c.l.s4 1966171168
        %v1617 = vunpack.c.0.s8 %v1616
        %v1618 = vlaneseq
        %v1619 = vshrl.u32 %v1618, 7
        %v1620 = vsub.s32 %v1617, %v1619
        %v1621 = vrot.slane %v1614, %v1620
        %1622 = vrot.lane.b32.xlu0 %v1621, 64
        %v1623 = vpop.permute.xlu0 %1622
        %1625 = vst.msk [vmem:[#allocation4 + $0x6] sm:$0x1] %vm1514, %v1623
        %v1626 = vcombine.high %v1611, %v1611
        %1628 = vst.msk [vmem:[#allocation4 + $0x7] sm:$0x1] %vm1484, %v1626
        %v1629 = vcombine.high %v1621, %v1621
        %1630 = vrot.lane.b32.xlu0 %v1629, 64
        %v1631 = vpop.permute.xlu0 %1630
        %1633 = vst.msk [vmem:[#allocation4 + $0x7] sm:$0x1] %vm1514, %v1631
        %1634 = vst.msk [vmem:[#allocation4 + $0x8] sm:$0x1] %vm1484, %v1478
        %v1637 = vunpack.c.l.s4 1966171168
        %v1638 = vunpack.c.0.s8 %v1637
        %v1639 = vlaneseq
        %v1640 = vshrl.u32 %v1639, 7
        %v1641 = vsub.s32 %v1638, %v1640
        %v1642 = vrot.slane %v1478, %v1641
        %v1643 = vcombine.high %v1642, %v1642
        %v1645 = vunpack.c.l.s4 1966171168
        %v1646 = vunpack.c.0.s8 %v1645
        %v1647 = vlaneseq
        %v1648 = vshrl.u32 %v1647, 7
        %v1649 = vsub.s32 %v1646, %v1648
        %v1650 = vrot.slane %v1642, %v1649
        %v1652 = vunpack.c.l.s4 1966171168
        %v1653 = vunpack.c.0.s8 %v1652
        %v1654 = vlaneseq
        %v1655 = vshrl.u32 %v1654, 7
        %v1656 = vsub.s32 %v1653, %v1655
        %v1657 = vrot.slane %v1643, %v1656
        %1658 = vrot.lane.b32.xlu0 %v1657, 64
        %v1659 = vpop.permute.xlu0 %1658
        %1661 = vst.msk [vmem:[#allocation4 + $0x8] sm:$0x1] %vm1514, %v1659
        %v1662 = vcombine.high %v1650, %v1650
        %1664 = vst.msk [vmem:[#allocation4 + $0x9] sm:$0x1] %vm1484, %v1662
        %v1665 = vcombine.high %v1657, %v1657
        %1666 = vrot.lane.b32.xlu0 %v1665, 64
        %v1667 = vpop.permute.xlu0 %1666
        %1669 = vst.msk [vmem:[#allocation4 + $0x9] sm:$0x1] %vm1514, %v1667
        %v1670 = vcombine.high %v1478, %v1478
        %v1672 = vunpack.c.l.s4 1966171168
        %v1673 = vunpack.c.0.s8 %v1672
        %v1674 = vlaneseq
        %v1675 = vshrl.u32 %v1674, 7
        %v1676 = vsub.s32 %v1673, %v1675
        %v1677 = vrot.slane %v1670, %v1676
        %v1679 = vunpack.c.l.s4 1966171168
        %v1680 = vunpack.c.0.s8 %v1679
        %v1681 = vlaneseq
        %v1682 = vshrl.u32 %v1681, 7
        %v1683 = vsub.s32 %v1680, %v1682
        %v1684 = vrot.slane %v1677, %v1683
        %1686 = vst.msk [vmem:[#allocation4 + $0xa] sm:$0x1] %vm1484, %v1684
        %v1687 = vcombine.high %v1677, %v1677
        %v1689 = vunpack.c.l.s4 1966171168
        %v1690 = vunpack.c.0.s8 %v1689
        %v1691 = vlaneseq
        %v1692 = vshrl.u32 %v1691, 7
        %v1693 = vsub.s32 %v1690, %v1692
        %v1694 = vrot.slane %v1687, %v1693
        %1695 = vrot.lane.b32.xlu0 %v1694, 64
        %v1696 = vpop.permute.xlu0 %1695
        %1698 = vst.msk [vmem:[#allocation4 + $0xa] sm:$0x1] %vm1514, %v1696
        %v1699 = vcombine.high %v1684, %v1684
        %1701 = vst.msk [vmem:[#allocation4 + $0xb] sm:$0x1] %vm1484, %v1699
        %v1702 = vcombine.high %v1694, %v1694
        %1703 = vrot.lane.b32.xlu0 %v1702, 64
        %v1704 = vpop.permute.xlu0 %1703
        %1706 = vst.msk [vmem:[#allocation4 + $0xb] sm:$0x1] %vm1514, %v1704
        %1707 = vst.msk [vmem:[#allocation4 + $0xc] sm:$0x1] %vm1484, %v1479
        %v1710 = vunpack.c.l.s4 1966171168
        %v1711 = vunpack.c.0.s8 %v1710
        %v1712 = vlaneseq
        %v1713 = vshrl.u32 %v1712, 7
        %v1714 = vsub.s32 %v1711, %v1713
        %v1715 = vrot.slane %v1479, %v1714
        %v1716 = vcombine.high %v1715, %v1715
        %v1718 = vunpack.c.l.s4 1966171168
        %v1719 = vunpack.c.0.s8 %v1718
        %v1720 = vlaneseq
        %v1721 = vshrl.u32 %v1720, 7
        %v1722 = vsub.s32 %v1719, %v1721
        %v1723 = vrot.slane %v1715, %v1722
        %v1725 = vunpack.c.l.s4 1966171168
        %v1726 = vunpack.c.0.s8 %v1725
        %v1727 = vlaneseq
        %v1728 = vshrl.u32 %v1727, 7
        %v1729 = vsub.s32 %v1726, %v1728
        %v1730 = vrot.slane %v1716, %v1729
        %1731 = vrot.lane.b32.xlu0 %v1730, 64
        %v1732 = vpop.permute.xlu0 %1731
        %1734 = vst.msk [vmem:[#allocation4 + $0xc] sm:$0x1] %vm1514, %v1732
        %v1735 = vcombine.high %v1723, %v1723
        %1737 = vst.msk [vmem:[#allocation4 + $0xd] sm:$0x1] %vm1484, %v1735
        %v1738 = vcombine.high %v1730, %v1730
        %1739 = vrot.lane.b32.xlu0 %v1738, 64
        %v1740 = vpop.permute.xlu0 %1739
        %1742 = vst.msk [vmem:[#allocation4 + $0xd] sm:$0x1] %vm1514, %v1740
        %v1743 = vcombine.high %v1479, %v1479
        %v1745 = vunpack.c.l.s4 1966171168
        %v1746 = vunpack.c.0.s8 %v1745
        %v1747 = vlaneseq
        %v1748 = vshrl.u32 %v1747, 7
        %v1749 = vsub.s32 %v1746, %v1748
        %v1750 = vrot.slane %v1743, %v1749
        %v1752 = vunpack.c.l.s4 1966171168
        %v1753 = vunpack.c.0.s8 %v1752
        %v1754 = vlaneseq
        %v1755 = vshrl.u32 %v1754, 7
        %v1756 = vsub.s32 %v1753, %v1755
        %v1757 = vrot.slane %v1750, %v1756
        %1759 = vst.msk [vmem:[#allocation4 + $0xe] sm:$0x1] %vm1484, %v1757
        %v1760 = vcombine.high %v1750, %v1750
        %v1762 = vunpack.c.l.s4 1966171168
        %v1763 = vunpack.c.0.s8 %v1762
        %v1764 = vlaneseq
        %v1765 = vshrl.u32 %v1764, 7
        %v1766 = vsub.s32 %v1763, %v1765
        %v1767 = vrot.slane %v1760, %v1766
        %1768 = vrot.lane.b32.xlu0 %v1767, 64
        %v1769 = vpop.permute.xlu0 %1768
        %1771 = vst.msk [vmem:[#allocation4 + $0xe] sm:$0x1] %vm1514, %v1769
        %v1772 = vcombine.high %v1757, %v1757
        %1774 = vst.msk [vmem:[#allocation4 + $0xf] sm:$0x1] %vm1484, %v1772
        %v1775 = vcombine.high %v1767, %v1767
        %1776 = vrot.lane.b32.xlu0 %v1775, 64
        %v1777 = vpop.permute.xlu0 %1776
        %1779 = vst.msk [vmem:[#allocation4 + $0xf] sm:$0x1] %vm1514, %v1777
        %1780 = vst.msk [vmem:[#allocation4 + $0x10] sm:$0x1] %vm1484, %v1480
        %v1783 = vunpack.c.l.s4 1966171168
        %v1784 = vunpack.c.0.s8 %v1783
        %v1785 = vlaneseq
        %v1786 = vshrl.u32 %v1785, 7
        %v1787 = vsub.s32 %v1784, %v1786
        %v1788 = vrot.slane %v1480, %v1787
        %v1789 = vcombine.high %v1788, %v1788
        %v1791 = vunpack.c.l.s4 1966171168
        %v1792 = vunpack.c.0.s8 %v1791
        %v1793 = vlaneseq
        %v1794 = vshrl.u32 %v1793, 7
        %v1795 = vsub.s32 %v1792, %v1794
        %v1796 = vrot.slane %v1788, %v1795
        %v1798 = vunpack.c.l.s4 1966171168
        %v1799 = vunpack.c.0.s8 %v1798
        %v1800 = vlaneseq
        %v1801 = vshrl.u32 %v1800, 7
        %v1802 = vsub.s32 %v1799, %v1801
        %v1803 = vrot.slane %v1789, %v1802
        %1804 = vrot.lane.b32.xlu0 %v1803, 64
        %v1805 = vpop.permute.xlu0 %1804
        %1807 = vst.msk [vmem:[#allocation4 + $0x10] sm:$0x1] %vm1514, %v1805
        %v1808 = vcombine.high %v1796, %v1796
        %1810 = vst.msk [vmem:[#allocation4 + $0x11] sm:$0x1] %vm1484, %v1808
        %v1811 = vcombine.high %v1803, %v1803
        %1812 = vrot.lane.b32.xlu0 %v1811, 64
        %v1813 = vpop.permute.xlu0 %1812
        %1815 = vst.msk [vmem:[#allocation4 + $0x11] sm:$0x1] %vm1514, %v1813
        %v1816 = vcombine.high %v1480, %v1480
        %v1818 = vunpack.c.l.s4 1966171168
        %v1819 = vunpack.c.0.s8 %v1818
        %v1820 = vlaneseq
        %v1821 = vshrl.u32 %v1820, 7
        %v1822 = vsub.s32 %v1819, %v1821
        %v1823 = vrot.slane %v1816, %v1822
        %v1825 = vunpack.c.l.s4 1966171168
        %v1826 = vunpack.c.0.s8 %v1825
        %v1827 = vlaneseq
        %v1828 = vshrl.u32 %v1827, 7
        %v1829 = vsub.s32 %v1826, %v1828
        %v1830 = vrot.slane %v1823, %v1829
        %1832 = vst.msk [vmem:[#allocation4 + $0x12] sm:$0x1] %vm1484, %v1830
        %v1833 = vcombine.high %v1823, %v1823
        %v1835 = vunpack.c.l.s4 1966171168
        %v1836 = vunpack.c.0.s8 %v1835
        %v1837 = vlaneseq
        %v1838 = vshrl.u32 %v1837, 7
        %v1839 = vsub.s32 %v1836, %v1838
        %v1840 = vrot.slane %v1833, %v1839
        %1841 = vrot.lane.b32.xlu0 %v1840, 64
        %v1842 = vpop.permute.xlu0 %1841
        %1844 = vst.msk [vmem:[#allocation4 + $0x12] sm:$0x1] %vm1514, %v1842
        %v1845 = vcombine.high %v1830, %v1830
        %1847 = vst.msk [vmem:[#allocation4 + $0x13] sm:$0x1] %vm1484, %v1845
        %v1848 = vcombine.high %v1840, %v1840
        %1849 = vrot.lane.b32.xlu0 %v1848, 64
        %v1850 = vpop.permute.xlu0 %1849
        %1852 = vst.msk [vmem:[#allocation4 + $0x13] sm:$0x1] %vm1514, %v1850
        %v1853 = vld [vmem:[#allocation4] sm:$0xff]
        %v1854 = vld [vmem:[#allocation4 + $0x8] sm:$0xff]
        %v1855 = vld [vmem:[#allocation4 + $0x10] sm:$0xf]
        %v1859 = vlaneseq
        %v1860 = vshrl.u32 %v1859, 7
        %v1861 = vsub.s32 0, %v1860
        %v1862 = vrot.slane %v1853, %v1861
        %v1863 = vlaneseq
        %v1864 = vshrl.u32 %v1863, 7
        %v1865 = vsub.s32 1, %v1864
        %v1866 = vrot.slane %v1853, %v1865
        %v1867 = vlaneseq
        %v1868 = vshrl.u32 %v1867, 7
        %v1869 = vsub.s32 2, %v1868
        %v1870 = vrot.slane %v1853, %v1869
        %v1871 = vlaneseq
        %v1872 = vshrl.u32 %v1871, 7
        %v1873 = vsub.s32 3, %v1872
        %v1874 = vrot.slane %v1853, %v1873
        %v1875 = vlaneseq
        %v1876 = vshrl.u32 %v1875, 7
        %v1877 = vsub.s32 4, %v1876
        %v1878 = vrot.slane %v1853, %v1877
        %v1879 = vlaneseq
        %v1880 = vshrl.u32 %v1879, 7
        %v1881 = vsub.s32 5, %v1880
        %v1882 = vrot.slane %v1853, %v1881
        %v1883 = vlaneseq
        %v1884 = vshrl.u32 %v1883, 7
        %v1885 = vsub.s32 6, %v1884
        %v1886 = vrot.slane %v1853, %v1885
        %v1887 = vlaneseq
        %v1888 = vshrl.u32 %v1887, 7
        %v1889 = vsub.s32 7, %v1888
        %v1890 = vrot.slane %v1853, %v1889
        %v1891 = vlaneseq
        %v1892 = vshrl.u32 %v1891, 7
        %v1893 = vsub.s32 0, %v1892
        %v1894 = vrot.slane %v1854, %v1893
        %v1895 = vlaneseq
        %v1896 = vshrl.u32 %v1895, 7
        %v1897 = vsub.s32 1, %v1896
        %v1898 = vrot.slane %v1854, %v1897
        %v1899 = vlaneseq
        %v1900 = vshrl.u32 %v1899, 7
        %v1901 = vsub.s32 2, %v1900
        %v1902 = vrot.slane %v1854, %v1901
        %v1903 = vlaneseq
        %v1904 = vshrl.u32 %v1903, 7
        %v1905 = vsub.s32 3, %v1904
        %v1906 = vrot.slane %v1854, %v1905
        %v1907 = vlaneseq
        %v1908 = vshrl.u32 %v1907, 7
        %v1909 = vsub.s32 4, %v1908
        %v1910 = vrot.slane %v1854, %v1909
        %v1911 = vlaneseq
        %v1912 = vshrl.u32 %v1911, 7
        %v1913 = vsub.s32 5, %v1912
        %v1914 = vrot.slane %v1854, %v1913
        %v1915 = vlaneseq
        %v1916 = vshrl.u32 %v1915, 7
        %v1917 = vsub.s32 6, %v1916
        %v1918 = vrot.slane %v1854, %v1917
        %v1919 = vlaneseq
        %v1920 = vshrl.u32 %v1919, 7
        %v1921 = vsub.s32 7, %v1920
        %v1922 = vrot.slane %v1854, %v1921
        %v1923 = vlaneseq
        %v1924 = vshrl.u32 %v1923, 7
        %v1925 = vsub.s32 0, %v1924
        %v1926 = vrot.slane %v1855, %v1925
        %v1927 = vlaneseq
        %v1928 = vshrl.u32 %v1927, 7
        %v1929 = vsub.s32 1, %v1928
        %v1930 = vrot.slane %v1855, %v1929
        %v1931 = vlaneseq
        %v1932 = vshrl.u32 %v1931, 7
        %v1933 = vsub.s32 2, %v1932
        %v1934 = vrot.slane %v1855, %v1933
        %v1935 = vlaneseq
        %v1936 = vshrl.u32 %v1935, 7
        %v1937 = vsub.s32 3, %v1936
        %v1938 = vrot.slane %v1855, %v1937
        %v1959 = vpack.c.bf16 %v1862, %v1862
        %v1960 = vpack.c.bf16 %v1866, %v1866
        %v1961 = vpack.c.bf16 %v1870, %v1870
        %v1962 = vpack.c.bf16 %v1874, %v1874
        %v1963 = vpack.c.bf16 %v1878, %v1878
        %v1964 = vpack.c.bf16 %v1882, %v1882
        %v1965 = vpack.c.bf16 %v1886, %v1886
        %v1966 = vpack.c.bf16 %v1890, %v1890
        %v1967 = vpack.c.bf16 %v1894, %v1894
        %v1968 = vpack.c.bf16 %v1898, %v1898
        %v1969 = vpack.c.bf16 %v1902, %v1902
        %v1970 = vpack.c.bf16 %v1906, %v1906
        %v1971 = vpack.c.bf16 %v1910, %v1910
        %v1972 = vpack.c.bf16 %v1914, %v1914
        %v1973 = vpack.c.bf16 %v1918, %v1918
        %v1974 = vpack.c.bf16 %v1922, %v1922
        %v1975 = vpack.c.bf16 %v1926, %v1926
        %v1976 = vpack.c.bf16 %v1930, %v1930
        %v1977 = vpack.c.bf16 %v1934, %v1934
        %v1978 = vpack.c.bf16 %v1938, %v1938
        %v1979 = vld [vmem:[#allocation12] sm:$0xf]
        %v1980 = vld [vmem:[#allocation12 + $0x4] sm:$0xf]
        %v1981 = vld [vmem:[#allocation12 + $0x8] sm:$0xf]
        %v1982 = vld [vmem:[#allocation12 + $0xc] sm:$0xf]
        %v1983 = vld [vmem:[#allocation12 + $0x10] sm:$0xf]
        %v1984 = vld [vmem:[#allocation12 + $0x14] sm:$0xf]
        %v1985 = vld [vmem:[#allocation12 + $0x18] sm:$0xf]
        %v1986 = vld [vmem:[#allocation12 + $0x1c] sm:$0xf]
        %v1987 = vld [vmem:[#allocation12 + $0x20] sm:$0xf]
        %v1988 = vld [vmem:[#allocation12 + $0x24] sm:$0xf]
        %v1989 = vld [vmem:[#allocation12 + $0x28] sm:$0xf]
        %v1990 = vld [vmem:[#allocation12 + $0x2c] sm:$0xf]
        %v1991 = vld [vmem:[#allocation12 + $0x30] sm:$0xf]
        %v1992 = vld [vmem:[#allocation12 + $0x34] sm:$0xf]
        %v1993 = vld [vmem:[#allocation12 + $0x38] sm:$0xf]
        %v1994 = vld [vmem:[#allocation12 + $0x3c] sm:$0xf]
        %v1995 = vld [vmem:[#allocation12 + $0x40] sm:$0xf]
        %v1996 = vld [vmem:[#allocation12 + $0x44] sm:$0xf]
        %v1997 = vld [vmem:[#allocation12 + $0x48] sm:$0xf]
        %v1998 = vld [vmem:[#allocation12 + $0x4c] sm:$0xf]
        %v1999 = vld [vmem:[#allocation12 + $0x50] sm:$0xf]
        %v2000 = vld [vmem:[#allocation12 + $0x54] sm:$0xf]
        %v2001 = vld [vmem:[#allocation12 + $0x58] sm:$0xf]
        %v2002 = vld [vmem:[#allocation12 + $0x5c] sm:$0xf]
        %v2003 = vld [vmem:[#allocation12 + $0x60] sm:$0xf]
        %v2004 = vld [vmem:[#allocation12 + $0x64] sm:$0xf]
        %v2005 = vld [vmem:[#allocation12 + $0x68] sm:$0xf]
        %v2006 = vld [vmem:[#allocation12 + $0x6c] sm:$0xf]
        %v2007 = vld [vmem:[#allocation12 + $0x70] sm:$0xf]
        %v2008 = vld [vmem:[#allocation12 + $0x74] sm:$0xf]
        %v2009 = vld [vmem:[#allocation12 + $0x78] sm:$0xf]
        %v2010 = vld [vmem:[#allocation12 + $0x7c] sm:$0xf]
        %v2011 = vld [vmem:[#allocation12 + $0x80] sm:$0xf]
        %v2012 = vld [vmem:[#allocation12 + $0x84] sm:$0xf]
        %v2013 = vld [vmem:[#allocation12 + $0x88] sm:$0xf]
        %v2014 = vld [vmem:[#allocation12 + $0x8c] sm:$0xf]
        %v2015 = vld [vmem:[#allocation12 + $0x90] sm:$0xf]
        %v2016 = vld [vmem:[#allocation12 + $0x94] sm:$0xf]
        %v2017 = vld [vmem:[#allocation12 + $0x98] sm:$0xf]
        %v2018 = vld [vmem:[#allocation12 + $0x9c] sm:$0xf]
        %v2019 = vld [vmem:[#allocation12 + $0xa0] sm:$0xf]
        %v2020 = vld [vmem:[#allocation12 + $0xa4] sm:$0xf]
        %v2021 = vld [vmem:[#allocation12 + $0xa8] sm:$0xf]
        %v2022 = vld [vmem:[#allocation12 + $0xac] sm:$0xf]
        %v2023 = vld [vmem:[#allocation12 + $0xb0] sm:$0xf]
        %v2024 = vld [vmem:[#allocation12 + $0xb4] sm:$0xf]
        %v2025 = vld [vmem:[#allocation12 + $0xb8] sm:$0xf]
        %v2026 = vld [vmem:[#allocation12 + $0xbc] sm:$0xf]
        %v2027 = vld [vmem:[#allocation12 + $0xc0] sm:$0xf]
        %v2028 = vld [vmem:[#allocation12 + $0xc4] sm:$0xf]
        %v2029 = vld [vmem:[#allocation12 + $0xc8] sm:$0xf]
        %v2030 = vld [vmem:[#allocation12 + $0xcc] sm:$0xf]
        %v2031 = vld [vmem:[#allocation12 + $0xd0] sm:$0xf]
        %v2032 = vld [vmem:[#allocation12 + $0xd4] sm:$0xf]
        %v2033 = vld [vmem:[#allocation12 + $0xd8] sm:$0xf]
        %v2034 = vld [vmem:[#allocation12 + $0xdc] sm:$0xf]
        %v2035 = vld [vmem:[#allocation12 + $0xe0] sm:$0xf]
        %v2036 = vld [vmem:[#allocation12 + $0xe4] sm:$0xf]
        %v2037 = vld [vmem:[#allocation12 + $0xe8] sm:$0xf]
        %v2038 = vld [vmem:[#allocation12 + $0xec] sm:$0xf]
        %v2039 = vld [vmem:[#allocation12 + $0xf0] sm:$0xf]
        %v2040 = vld [vmem:[#allocation12 + $0xf4] sm:$0xf]
        %v2041 = vld [vmem:[#allocation12 + $0xf8] sm:$0xf]
        %v2042 = vld [vmem:[#allocation12 + $0xfc] sm:$0xf]
        %v2043 = vld [vmem:[#allocation12 + $0x100] sm:$0xf]
        %v2044 = vld [vmem:[#allocation12 + $0x104] sm:$0xf]
        %v2045 = vld [vmem:[#allocation12 + $0x108] sm:$0xf]
        %v2046 = vld [vmem:[#allocation12 + $0x10c] sm:$0xf]
        %v2047 = vld [vmem:[#allocation12 + $0x110] sm:$0xf]
        %v2048 = vld [vmem:[#allocation12 + $0x114] sm:$0xf]
        %v2049 = vld [vmem:[#allocation12 + $0x118] sm:$0xf]
        %v2050 = vld [vmem:[#allocation12 + $0x11c] sm:$0xf]
        %v2051 = vld [vmem:[#allocation12 + $0x120] sm:$0xf]
        %v2052 = vld [vmem:[#allocation12 + $0x124] sm:$0xf]
        %v2053 = vld [vmem:[#allocation12 + $0x128] sm:$0xf]
        %v2054 = vld [vmem:[#allocation12 + $0x12c] sm:$0xf]
        %v2055 = vld [vmem:[#allocation12 + $0x130] sm:$0xf]
        %v2056 = vld [vmem:[#allocation12 + $0x134] sm:$0xf]
        %v2057 = vld [vmem:[#allocation12 + $0x138] sm:$0xf]
        %v2058 = vld [vmem:[#allocation12 + $0x13c] sm:$0xf]
        %v2059 = vld [vmem:[#allocation12 + $0x140] sm:$0xf]
        %v2060 = vld [vmem:[#allocation12 + $0x144] sm:$0xf]
        %v2061 = vld [vmem:[#allocation12 + $0x148] sm:$0xf]
        %v2062 = vld [vmem:[#allocation12 + $0x14c] sm:$0xf]
        %v2063 = vld [vmem:[#allocation12 + $0x150] sm:$0xf]
        %v2064 = vld [vmem:[#allocation12 + $0x154] sm:$0xf]
        %v2065 = vld [vmem:[#allocation12 + $0x158] sm:$0xf]
        %v2066 = vld [vmem:[#allocation12 + $0x15c] sm:$0xf]
        %v2067 = vld [vmem:[#allocation12 + $0x160] sm:$0xf]
        %v2068 = vld [vmem:[#allocation12 + $0x164] sm:$0xf]
        %v2069 = vld [vmem:[#allocation12 + $0x168] sm:$0xf]
        %v2070 = vld [vmem:[#allocation12 + $0x16c] sm:$0xf]
        %v2071 = vld [vmem:[#allocation12 + $0x170] sm:$0xf]
        %v2072 = vld [vmem:[#allocation12 + $0x174] sm:$0xf]
        %v2073 = vld [vmem:[#allocation12 + $0x178] sm:$0xf]
        %v2074 = vld [vmem:[#allocation12 + $0x17c] sm:$0xf]
        %v2075 = vld [vmem:[#allocation12 + $0x180] sm:$0xf]
        %v2076 = vld [vmem:[#allocation12 + $0x184] sm:$0xf]
        %v2077 = vld [vmem:[#allocation12 + $0x188] sm:$0xf]
        %v2078 = vld [vmem:[#allocation12 + $0x18c] sm:$0xf]
        %v2079 = vld [vmem:[#allocation12 + $0x190] sm:$0xf]
        %v2080 = vld [vmem:[#allocation12 + $0x194] sm:$0xf]
        %v2081 = vld [vmem:[#allocation12 + $0x198] sm:$0xf]
        %v2082 = vld [vmem:[#allocation12 + $0x19c] sm:$0xf]
        %v2083 = vld [vmem:[#allocation12 + $0x1a0] sm:$0xf]
        %v2084 = vld [vmem:[#allocation12 + $0x1a4] sm:$0xf]
        %v2085 = vld [vmem:[#allocation12 + $0x1a8] sm:$0xf]
        %v2086 = vld [vmem:[#allocation12 + $0x1ac] sm:$0xf]
        %v2087 = vld [vmem:[#allocation12 + $0x1b0] sm:$0xf]
        %v2088 = vld [vmem:[#allocation12 + $0x1b4] sm:$0xf]
        %v2089 = vld [vmem:[#allocation12 + $0x1b8] sm:$0xf]
        %v2090 = vld [vmem:[#allocation12 + $0x1bc] sm:$0xf]
        %v2091 = vld [vmem:[#allocation12 + $0x1c0] sm:$0xf]
        %v2092 = vld [vmem:[#allocation12 + $0x1c4] sm:$0xf]
        %v2093 = vld [vmem:[#allocation12 + $0x1c8] sm:$0xf]
        %v2094 = vld [vmem:[#allocation12 + $0x1cc] sm:$0xf]
        %v2095 = vld [vmem:[#allocation12 + $0x1d0] sm:$0xf]
        %v2096 = vld [vmem:[#allocation12 + $0x1d4] sm:$0xf]
        %v2097 = vld [vmem:[#allocation12 + $0x1d8] sm:$0xf]
        %v2098 = vld [vmem:[#allocation12 + $0x1dc] sm:$0xf]
        %v2099 = vld [vmem:[#allocation12 + $0x1e0] sm:$0xf]
        %v2100 = vld [vmem:[#allocation12 + $0x1e4] sm:$0xf]
        %v2101 = vld [vmem:[#allocation12 + $0x1e8] sm:$0xf]
        %v2102 = vld [vmem:[#allocation12 + $0x1ec] sm:$0xf]
        %v2103 = vld [vmem:[#allocation12 + $0x1f0] sm:$0xf]
        %v2104 = vld [vmem:[#allocation12 + $0x1f4] sm:$0xf]
        %v2105 = vld [vmem:[#allocation12 + $0x1f8] sm:$0xf]
        %v2106 = vld [vmem:[#allocation12 + $0x1fc] sm:$0xf]
        %v2107 = vld [vmem:[#allocation12 + $0x200] sm:$0xf]
        %v2108 = vld [vmem:[#allocation12 + $0x204] sm:$0xf]
        %v2109 = vld [vmem:[#allocation12 + $0x208] sm:$0xf]
        %v2110 = vld [vmem:[#allocation12 + $0x20c] sm:$0xf]
        %v2111 = vld [vmem:[#allocation12 + $0x210] sm:$0xf]
        %v2112 = vld [vmem:[#allocation12 + $0x214] sm:$0xf]
        %v2113 = vld [vmem:[#allocation12 + $0x218] sm:$0xf]
        %v2114 = vld [vmem:[#allocation12 + $0x21c] sm:$0xf]
        %v2115 = vld [vmem:[#allocation12 + $0x220] sm:$0xf]
        %v2116 = vld [vmem:[#allocation12 + $0x224] sm:$0xf]
        %v2117 = vld [vmem:[#allocation12 + $0x228] sm:$0xf]
        %v2118 = vld [vmem:[#allocation12 + $0x22c] sm:$0xf]
        %v2119 = vld [vmem:[#allocation12 + $0x230] sm:$0xf]
        %v2120 = vld [vmem:[#allocation12 + $0x234] sm:$0xf]
        %v2121 = vld [vmem:[#allocation12 + $0x238] sm:$0xf]
        %v2122 = vld [vmem:[#allocation12 + $0x23c] sm:$0xf]
        %v2123 = vld [vmem:[#allocation12 + $0x240] sm:$0xf]
        %v2124 = vld [vmem:[#allocation12 + $0x244] sm:$0xf]
        %v2125 = vld [vmem:[#allocation12 + $0x248] sm:$0xf]
        %v2126 = vld [vmem:[#allocation12 + $0x24c] sm:$0xf]
        %v2127 = vld [vmem:[#allocation12 + $0x250] sm:$0xf]
        %v2128 = vld [vmem:[#allocation12 + $0x254] sm:$0xf]
        %v2129 = vld [vmem:[#allocation12 + $0x258] sm:$0xf]
        %v2130 = vld [vmem:[#allocation12 + $0x25c] sm:$0xf]
        %v2131 = vld [vmem:[#allocation12 + $0x260] sm:$0xf]
        %v2132 = vld [vmem:[#allocation12 + $0x264] sm:$0xf]
        %v2133 = vld [vmem:[#allocation12 + $0x268] sm:$0xf]
        %v2134 = vld [vmem:[#allocation12 + $0x26c] sm:$0xf]
        %v2135 = vld [vmem:[#allocation12 + $0x270] sm:$0xf]
        %v2136 = vld [vmem:[#allocation12 + $0x274] sm:$0xf]
        %v2137 = vld [vmem:[#allocation12 + $0x278] sm:$0xf]
        %v2138 = vld [vmem:[#allocation12 + $0x27c] sm:$0xf]
        %v2139 = vld [vmem:[#allocation12 + $0x280] sm:$0xf]
        %v2140 = vld [vmem:[#allocation12 + $0x284] sm:$0xf]
        %v2141 = vld [vmem:[#allocation12 + $0x288] sm:$0xf]
        %v2142 = vld [vmem:[#allocation12 + $0x28c] sm:$0xf]
        %v2143 = vld [vmem:[#allocation12 + $0x290] sm:$0xf]
        %v2144 = vld [vmem:[#allocation12 + $0x294] sm:$0xf]
        %v2145 = vld [vmem:[#allocation12 + $0x298] sm:$0xf]
        %v2146 = vld [vmem:[#allocation12 + $0x29c] sm:$0xf]
        %v2147 = vld [vmem:[#allocation12 + $0x2a0] sm:$0xf]
        %v2148 = vld [vmem:[#allocation12 + $0x2a4] sm:$0xf]
        %v2149 = vld [vmem:[#allocation12 + $0x2a8] sm:$0xf]
        %v2150 = vld [vmem:[#allocation12 + $0x2ac] sm:$0xf]
        %v2151 = vld [vmem:[#allocation12 + $0x2b0] sm:$0xf]
        %v2152 = vld [vmem:[#allocation12 + $0x2b4] sm:$0xf]
        %v2153 = vld [vmem:[#allocation12 + $0x2b8] sm:$0xf]
        %v2154 = vld [vmem:[#allocation12 + $0x2bc] sm:$0xf]
        %v2155 = vld [vmem:[#allocation12 + $0x2c0] sm:$0xf]
        %v2156 = vld [vmem:[#allocation12 + $0x2c4] sm:$0xf]
        %v2157 = vld [vmem:[#allocation12 + $0x2c8] sm:$0xf]
        %v2158 = vld [vmem:[#allocation12 + $0x2cc] sm:$0xf]
        %v2159 = vld [vmem:[#allocation12 + $0x2d0] sm:$0xf]
        %v2160 = vld [vmem:[#allocation12 + $0x2d4] sm:$0xf]
        %v2161 = vld [vmem:[#allocation12 + $0x2d8] sm:$0xf]
        %v2162 = vld [vmem:[#allocation12 + $0x2dc] sm:$0xf]
        %v2163 = vld [vmem:[#allocation12 + $0x2e0] sm:$0xf]
        %v2164 = vld [vmem:[#allocation12 + $0x2e4] sm:$0xf]
        %v2165 = vld [vmem:[#allocation12 + $0x2e8] sm:$0xf]
        %v2166 = vld [vmem:[#allocation12 + $0x2ec] sm:$0xf]
        %v2167 = vld [vmem:[#allocation12 + $0x2f0] sm:$0xf]
        %v2168 = vld [vmem:[#allocation12 + $0x2f4] sm:$0xf]
        %v2169 = vld [vmem:[#allocation12 + $0x2f8] sm:$0xf]
        %v2170 = vld [vmem:[#allocation12 + $0x2fc] sm:$0xf]
        %v2171 = vld [vmem:[#allocation12 + $0x300] sm:$0xf]
        %v2172 = vld [vmem:[#allocation12 + $0x304] sm:$0xf]
        %v2173 = vld [vmem:[#allocation12 + $0x308] sm:$0xf]
        %v2174 = vld [vmem:[#allocation12 + $0x30c] sm:$0xf]
        %v2175 = vld [vmem:[#allocation12 + $0x310] sm:$0xf]
        %v2176 = vld [vmem:[#allocation12 + $0x314] sm:$0xf]
        %v2177 = vld [vmem:[#allocation12 + $0x318] sm:$0xf]
        %v2178 = vld [vmem:[#allocation12 + $0x31c] sm:$0xf]
        %v2179 = vld [vmem:[#allocation12 + $0x320] sm:$0xf]
        %v2180 = vld [vmem:[#allocation12 + $0x324] sm:$0xf]
        %v2181 = vld [vmem:[#allocation12 + $0x328] sm:$0xf]
        %v2182 = vld [vmem:[#allocation12 + $0x32c] sm:$0xf]
        %v2183 = vld [vmem:[#allocation12 + $0x330] sm:$0xf]
        %v2184 = vld [vmem:[#allocation12 + $0x334] sm:$0xf]
        %v2185 = vld [vmem:[#allocation12 + $0x338] sm:$0xf]
        %v2186 = vld [vmem:[#allocation12 + $0x33c] sm:$0xf]
        %v2187 = vld [vmem:[#allocation12 + $0x340] sm:$0xf]
        %v2188 = vld [vmem:[#allocation12 + $0x344] sm:$0xf]
        %v2189 = vld [vmem:[#allocation12 + $0x348] sm:$0xf]
        %v2190 = vld [vmem:[#allocation12 + $0x34c] sm:$0xf]
        %v2191 = vld [vmem:[#allocation12 + $0x350] sm:$0xf]
        %v2192 = vld [vmem:[#allocation12 + $0x354] sm:$0xf]
        %v2193 = vld [vmem:[#allocation12 + $0x358] sm:$0xf]
        %v2194 = vld [vmem:[#allocation12 + $0x35c] sm:$0xf]
        %v2195 = vld [vmem:[#allocation12 + $0x360] sm:$0xf]
        %v2196 = vld [vmem:[#allocation12 + $0x364] sm:$0xf]
        %v2197 = vld [vmem:[#allocation12 + $0x368] sm:$0xf]
        %v2198 = vld [vmem:[#allocation12 + $0x36c] sm:$0xf]
        %v2199 = vld [vmem:[#allocation12 + $0x370] sm:$0xf]
        %v2200 = vld [vmem:[#allocation12 + $0x374] sm:$0xf]
        %v2201 = vld [vmem:[#allocation12 + $0x378] sm:$0xf]
        %v2202 = vld [vmem:[#allocation12 + $0x37c] sm:$0xf]
        %v2203 = vld [vmem:[#allocation12 + $0x380] sm:$0xf]
        %v2204 = vld [vmem:[#allocation12 + $0x384] sm:$0xf]
        %v2205 = vld [vmem:[#allocation12 + $0x388] sm:$0xf]
        %v2206 = vld [vmem:[#allocation12 + $0x38c] sm:$0xf]
        %v2207 = vld [vmem:[#allocation12 + $0x390] sm:$0xf]
        %v2208 = vld [vmem:[#allocation12 + $0x394] sm:$0xf]
        %v2209 = vld [vmem:[#allocation12 + $0x398] sm:$0xf]
        %v2210 = vld [vmem:[#allocation12 + $0x39c] sm:$0xf]
        %v2211 = vld [vmem:[#allocation12 + $0x3a0] sm:$0xf]
        %v2212 = vld [vmem:[#allocation12 + $0x3a4] sm:$0xf]
        %v2213 = vld [vmem:[#allocation12 + $0x3a8] sm:$0xf]
        %v2214 = vld [vmem:[#allocation12 + $0x3ac] sm:$0xf]
        %v2215 = vld [vmem:[#allocation12 + $0x3b0] sm:$0xf]
        %v2216 = vld [vmem:[#allocation12 + $0x3b4] sm:$0xf]
        %v2217 = vld [vmem:[#allocation12 + $0x3b8] sm:$0xf]
        %v2218 = vld [vmem:[#allocation12 + $0x3bc] sm:$0xf]
        %v2219 = vld [vmem:[#allocation12 + $0x3c0] sm:$0xf]
        %v2220 = vld [vmem:[#allocation12 + $0x3c4] sm:$0xf]
        %v2221 = vld [vmem:[#allocation12 + $0x3c8] sm:$0xf]
        %v2222 = vld [vmem:[#allocation12 + $0x3cc] sm:$0xf]
        %v2223 = vld [vmem:[#allocation12 + $0x3d0] sm:$0xf]
        %v2224 = vld [vmem:[#allocation12 + $0x3d4] sm:$0xf]
        %v2225 = vld [vmem:[#allocation12 + $0x3d8] sm:$0xf]
        %v2226 = vld [vmem:[#allocation12 + $0x3dc] sm:$0xf]
        %v2227 = vld [vmem:[#allocation12 + $0x3e0] sm:$0xf]
        %v2228 = vld [vmem:[#allocation12 + $0x3e4] sm:$0xf]
        %v2229 = vld [vmem:[#allocation12 + $0x3e8] sm:$0xf]
        %v2230 = vld [vmem:[#allocation12 + $0x3ec] sm:$0xf]
        %v2231 = vld [vmem:[#allocation12 + $0x3f0] sm:$0xf]
        %v2232 = vld [vmem:[#allocation12 + $0x3f4] sm:$0xf]
        %v2233 = vld [vmem:[#allocation12 + $0x3f8] sm:$0xf]
        %v2234 = vld [vmem:[#allocation12 + $0x3fc] sm:$0xf]
        %v2235 = vld [vmem:[#allocation12 + $0x400] sm:$0xf]
        %v2236 = vld [vmem:[#allocation12 + $0x404] sm:$0xf]
        %v2237 = vld [vmem:[#allocation12 + $0x408] sm:$0xf]
        %v2238 = vld [vmem:[#allocation12 + $0x40c] sm:$0xf]
        %v2239 = vld [vmem:[#allocation12 + $0x410] sm:$0xf]
        %v2240 = vld [vmem:[#allocation12 + $0x414] sm:$0xf]
        %v2241 = vld [vmem:[#allocation12 + $0x418] sm:$0xf]
        %v2242 = vld [vmem:[#allocation12 + $0x41c] sm:$0xf]
        %v2243 = vld [vmem:[#allocation12 + $0x420] sm:$0xf]
        %v2244 = vld [vmem:[#allocation12 + $0x424] sm:$0xf]
        %v2245 = vld [vmem:[#allocation12 + $0x428] sm:$0xf]
        %v2246 = vld [vmem:[#allocation12 + $0x42c] sm:$0xf]
        %v2247 = vld [vmem:[#allocation12 + $0x430] sm:$0xf]
        %v2248 = vld [vmem:[#allocation12 + $0x434] sm:$0xf]
        %v2249 = vld [vmem:[#allocation12 + $0x438] sm:$0xf]
        %v2250 = vld [vmem:[#allocation12 + $0x43c] sm:$0xf]
        %v2251 = vld [vmem:[#allocation12 + $0x440] sm:$0xf]
        %v2252 = vld [vmem:[#allocation12 + $0x444] sm:$0xf]
        %v2253 = vld [vmem:[#allocation12 + $0x448] sm:$0xf]
        %v2254 = vld [vmem:[#allocation12 + $0x44c] sm:$0xf]
        %v2255 = vld [vmem:[#allocation12 + $0x450] sm:$0xf]
        %v2256 = vld [vmem:[#allocation12 + $0x454] sm:$0xf]
        %v2257 = vld [vmem:[#allocation12 + $0x458] sm:$0xf]
        %v2258 = vld [vmem:[#allocation12 + $0x45c] sm:$0xf]
        %v2259 = vld [vmem:[#allocation12 + $0x460] sm:$0xf]
        %v2260 = vld [vmem:[#allocation12 + $0x464] sm:$0xf]
        %v2261 = vld [vmem:[#allocation12 + $0x468] sm:$0xf]
        %v2262 = vld [vmem:[#allocation12 + $0x46c] sm:$0xf]
        %v2263 = vld [vmem:[#allocation12 + $0x470] sm:$0xf]
        %v2264 = vld [vmem:[#allocation12 + $0x474] sm:$0xf]
        %v2265 = vld [vmem:[#allocation12 + $0x478] sm:$0xf]
        %v2266 = vld [vmem:[#allocation12 + $0x47c] sm:$0xf]
        %v2267 = vld [vmem:[#allocation12 + $0x480] sm:$0xf]
        %v2268 = vld [vmem:[#allocation12 + $0x484] sm:$0xf]
        %v2269 = vld [vmem:[#allocation12 + $0x488] sm:$0xf]
        %v2270 = vld [vmem:[#allocation12 + $0x48c] sm:$0xf]
        %v2271 = vld [vmem:[#allocation12 + $0x490] sm:$0xf]
        %v2272 = vld [vmem:[#allocation12 + $0x494] sm:$0xf]
        %v2273 = vld [vmem:[#allocation12 + $0x498] sm:$0xf]
        %v2274 = vld [vmem:[#allocation12 + $0x49c] sm:$0xf]
        %v2275 = vld [vmem:[#allocation12 + $0x4a0] sm:$0xf]
        %v2276 = vld [vmem:[#allocation12 + $0x4a4] sm:$0xf]
        %v2277 = vld [vmem:[#allocation12 + $0x4a8] sm:$0xf]
        %v2278 = vld [vmem:[#allocation12 + $0x4ac] sm:$0xf]
        %v2279 = vld [vmem:[#allocation12 + $0x4b0] sm:$0xf]
        %v2280 = vld [vmem:[#allocation12 + $0x4b4] sm:$0xf]
        %v2281 = vld [vmem:[#allocation12 + $0x4b8] sm:$0xf]
        %v2282 = vld [vmem:[#allocation12 + $0x4bc] sm:$0xf]
        %v2283 = vld [vmem:[#allocation12 + $0x4c0] sm:$0xf]
        %v2284 = vld [vmem:[#allocation12 + $0x4c4] sm:$0xf]
        %v2285 = vld [vmem:[#allocation12 + $0x4c8] sm:$0xf]
        %v2286 = vld [vmem:[#allocation12 + $0x4cc] sm:$0xf]
        %v2287 = vld [vmem:[#allocation12 + $0x4d0] sm:$0xf]
        %v2288 = vld [vmem:[#allocation12 + $0x4d4] sm:$0xf]
        %v2289 = vld [vmem:[#allocation12 + $0x4d8] sm:$0xf]
        %v2290 = vld [vmem:[#allocation12 + $0x4dc] sm:$0xf]
        %v2291 = vld [vmem:[#allocation12 + $0x4e0] sm:$0xf]
        %v2292 = vld [vmem:[#allocation12 + $0x4e4] sm:$0xf]
        %v2293 = vld [vmem:[#allocation12 + $0x4e8] sm:$0xf]
        %v2294 = vld [vmem:[#allocation12 + $0x4ec] sm:$0xf]
        %v2295 = vld [vmem:[#allocation12 + $0x4f0] sm:$0xf]
        %v2296 = vld [vmem:[#allocation12 + $0x4f4] sm:$0xf]
        %v2297 = vld [vmem:[#allocation12 + $0x4f8] sm:$0xf]
        %v2298 = vld [vmem:[#allocation12 + $0x4fc] sm:$0xf]
        %v2299 = vld [vmem:[%s6] sm:$0x1]
        %v2620 = vunpack.c.l.b16 %v1979
        %v2621 = vunpack.c.l.b16 %v1980
        %v2622 = vunpack.c.l.b16 %v1981
        %v2623 = vunpack.c.l.b16 %v1982
        %v2624 = vunpack.c.l.b16 %v1983
        %v2625 = vunpack.c.l.b16 %v1984
        %v2626 = vunpack.c.l.b16 %v1985
        %v2627 = vunpack.c.l.b16 %v1986
        %v2628 = vunpack.c.l.b16 %v1987
        %v2629 = vunpack.c.l.b16 %v1988
        %v2630 = vunpack.c.l.b16 %v1989
        %v2631 = vunpack.c.l.b16 %v1990
        %v2632 = vunpack.c.l.b16 %v1991
        %v2633 = vunpack.c.l.b16 %v1992
        %v2634 = vunpack.c.l.b16 %v1993
        %v2635 = vunpack.c.l.b16 %v1994
        %v2636 = vunpack.c.l.b16 %v1995
        %v2637 = vunpack.c.l.b16 %v1996
        %v2638 = vunpack.c.l.b16 %v1997
        %v2639 = vunpack.c.l.b16 %v1998
        %v2640 = vunpack.c.l.b16 %v1999
        %v2641 = vunpack.c.l.b16 %v2000
        %v2642 = vunpack.c.l.b16 %v2001
        %v2643 = vunpack.c.l.b16 %v2002
        %v2644 = vunpack.c.l.b16 %v2003
        %v2645 = vunpack.c.l.b16 %v2004
        %v2646 = vunpack.c.l.b16 %v2005
        %v2647 = vunpack.c.l.b16 %v2006
        %v2648 = vunpack.c.l.b16 %v2007
        %v2649 = vunpack.c.l.b16 %v2008
        %v2650 = vunpack.c.l.b16 %v2009
        %v2651 = vunpack.c.l.b16 %v2010
        %v2652 = vunpack.c.l.b16 %v2011
        %v2653 = vunpack.c.l.b16 %v2012
        %v2654 = vunpack.c.l.b16 %v2013
        %v2655 = vunpack.c.l.b16 %v2014
        %v2656 = vunpack.c.l.b16 %v2015
        %v2657 = vunpack.c.l.b16 %v2016
        %v2658 = vunpack.c.l.b16 %v2017
        %v2659 = vunpack.c.l.b16 %v2018
        %v2660 = vunpack.c.l.b16 %v2019
        %v2661 = vunpack.c.l.b16 %v2020
        %v2662 = vunpack.c.l.b16 %v2021
        %v2663 = vunpack.c.l.b16 %v2022
        %v2664 = vunpack.c.l.b16 %v2023
        %v2665 = vunpack.c.l.b16 %v2024
        %v2666 = vunpack.c.l.b16 %v2025
        %v2667 = vunpack.c.l.b16 %v2026
        %v2668 = vunpack.c.l.b16 %v2027
        %v2669 = vunpack.c.l.b16 %v2028
        %v2670 = vunpack.c.l.b16 %v2029
        %v2671 = vunpack.c.l.b16 %v2030
        %v2672 = vunpack.c.l.b16 %v2031
        %v2673 = vunpack.c.l.b16 %v2032
        %v2674 = vunpack.c.l.b16 %v2033
        %v2675 = vunpack.c.l.b16 %v2034
        %v2676 = vunpack.c.l.b16 %v2035
        %v2677 = vunpack.c.l.b16 %v2036
        %v2678 = vunpack.c.l.b16 %v2037
        %v2679 = vunpack.c.l.b16 %v2038
        %v2680 = vunpack.c.l.b16 %v2039
        %v2681 = vunpack.c.l.b16 %v2040
        %v2682 = vunpack.c.l.b16 %v2041
        %v2683 = vunpack.c.l.b16 %v2042
        %v2684 = vunpack.c.l.b16 %v2043
        %v2685 = vunpack.c.l.b16 %v2044
        %v2686 = vunpack.c.l.b16 %v2045
        %v2687 = vunpack.c.l.b16 %v2046
        %v2688 = vunpack.c.l.b16 %v2047
        %v2689 = vunpack.c.l.b16 %v2048
        %v2690 = vunpack.c.l.b16 %v2049
        %v2691 = vunpack.c.l.b16 %v2050
        %v2692 = vunpack.c.l.b16 %v2051
        %v2693 = vunpack.c.l.b16 %v2052
        %v2694 = vunpack.c.l.b16 %v2053
        %v2695 = vunpack.c.l.b16 %v2054
        %v2696 = vunpack.c.l.b16 %v2055
        %v2697 = vunpack.c.l.b16 %v2056
        %v2698 = vunpack.c.l.b16 %v2057
        %v2699 = vunpack.c.l.b16 %v2058
        %v2700 = vunpack.c.l.b16 %v2059
        %v2701 = vunpack.c.l.b16 %v2060
        %v2702 = vunpack.c.l.b16 %v2061
        %v2703 = vunpack.c.l.b16 %v2062
        %v2704 = vunpack.c.l.b16 %v2063
        %v2705 = vunpack.c.l.b16 %v2064
        %v2706 = vunpack.c.l.b16 %v2065
        %v2707 = vunpack.c.l.b16 %v2066
        %v2708 = vunpack.c.l.b16 %v2067
        %v2709 = vunpack.c.l.b16 %v2068
        %v2710 = vunpack.c.l.b16 %v2069
        %v2711 = vunpack.c.l.b16 %v2070
        %v2712 = vunpack.c.l.b16 %v2071
        %v2713 = vunpack.c.l.b16 %v2072
        %v2714 = vunpack.c.l.b16 %v2073
        %v2715 = vunpack.c.l.b16 %v2074
        %v2716 = vunpack.c.l.b16 %v2075
        %v2717 = vunpack.c.l.b16 %v2076
        %v2718 = vunpack.c.l.b16 %v2077
        %v2719 = vunpack.c.l.b16 %v2078
        %v2720 = vunpack.c.l.b16 %v2079
        %v2721 = vunpack.c.l.b16 %v2080
        %v2722 = vunpack.c.l.b16 %v2081
        %v2723 = vunpack.c.l.b16 %v2082
        %v2724 = vunpack.c.l.b16 %v2083
        %v2725 = vunpack.c.l.b16 %v2084
        %v2726 = vunpack.c.l.b16 %v2085
        %v2727 = vunpack.c.l.b16 %v2086
        %v2728 = vunpack.c.l.b16 %v2087
        %v2729 = vunpack.c.l.b16 %v2088
        %v2730 = vunpack.c.l.b16 %v2089
        %v2731 = vunpack.c.l.b16 %v2090
        %v2732 = vunpack.c.l.b16 %v2091
        %v2733 = vunpack.c.l.b16 %v2092
        %v2734 = vunpack.c.l.b16 %v2093
        %v2735 = vunpack.c.l.b16 %v2094
        %v2736 = vunpack.c.l.b16 %v2095
        %v2737 = vunpack.c.l.b16 %v2096
        %v2738 = vunpack.c.l.b16 %v2097
        %v2739 = vunpack.c.l.b16 %v2098
        %v2740 = vunpack.c.l.b16 %v2099
        %v2741 = vunpack.c.l.b16 %v2100
        %v2742 = vunpack.c.l.b16 %v2101
        %v2743 = vunpack.c.l.b16 %v2102
        %v2744 = vunpack.c.l.b16 %v2103
        %v2745 = vunpack.c.l.b16 %v2104
        %v2746 = vunpack.c.l.b16 %v2105
        %v2747 = vunpack.c.l.b16 %v2106
        %v2748 = vunpack.c.l.b16 %v2107
        %v2749 = vunpack.c.l.b16 %v2108
        %v2750 = vunpack.c.l.b16 %v2109
        %v2751 = vunpack.c.l.b16 %v2110
        %v2752 = vunpack.c.l.b16 %v2111
        %v2753 = vunpack.c.l.b16 %v2112
        %v2754 = vunpack.c.l.b16 %v2113
        %v2755 = vunpack.c.l.b16 %v2114
        %v2756 = vunpack.c.l.b16 %v2115
        %v2757 = vunpack.c.l.b16 %v2116
        %v2758 = vunpack.c.l.b16 %v2117
        %v2759 = vunpack.c.l.b16 %v2118
        %v2760 = vunpack.c.l.b16 %v2119
        %v2761 = vunpack.c.l.b16 %v2120
        %v2762 = vunpack.c.l.b16 %v2121
        %v2763 = vunpack.c.l.b16 %v2122
        %v2764 = vunpack.c.l.b16 %v2123
        %v2765 = vunpack.c.l.b16 %v2124
        %v2766 = vunpack.c.l.b16 %v2125
        %v2767 = vunpack.c.l.b16 %v2126
        %v2768 = vunpack.c.l.b16 %v2127
        %v2769 = vunpack.c.l.b16 %v2128
        %v2770 = vunpack.c.l.b16 %v2129
        %v2771 = vunpack.c.l.b16 %v2130
        %v2772 = vunpack.c.l.b16 %v2131
        %v2773 = vunpack.c.l.b16 %v2132
        %v2774 = vunpack.c.l.b16 %v2133
        %v2775 = vunpack.c.l.b16 %v2134
        %v2776 = vunpack.c.l.b16 %v2135
        %v2777 = vunpack.c.l.b16 %v2136
        %v2778 = vunpack.c.l.b16 %v2137
        %v2779 = vunpack.c.l.b16 %v2138
        %v2780 = vunpack.c.l.b16 %v2139
        %v2781 = vunpack.c.l.b16 %v2140
        %v2782 = vunpack.c.l.b16 %v2141
        %v2783 = vunpack.c.l.b16 %v2142
        %v2784 = vunpack.c.l.b16 %v2143
        %v2785 = vunpack.c.l.b16 %v2144
        %v2786 = vunpack.c.l.b16 %v2145
        %v2787 = vunpack.c.l.b16 %v2146
        %v2788 = vunpack.c.l.b16 %v2147
        %v2789 = vunpack.c.l.b16 %v2148
        %v2790 = vunpack.c.l.b16 %v2149
        %v2791 = vunpack.c.l.b16 %v2150
        %v2792 = vunpack.c.l.b16 %v2151
        %v2793 = vunpack.c.l.b16 %v2152
        %v2794 = vunpack.c.l.b16 %v2153
        %v2795 = vunpack.c.l.b16 %v2154
        %v2796 = vunpack.c.l.b16 %v2155
        %v2797 = vunpack.c.l.b16 %v2156
        %v2798 = vunpack.c.l.b16 %v2157
        %v2799 = vunpack.c.l.b16 %v2158
        %v2800 = vunpack.c.l.b16 %v2159
        %v2801 = vunpack.c.l.b16 %v2160
        %v2802 = vunpack.c.l.b16 %v2161
        %v2803 = vunpack.c.l.b16 %v2162
        %v2804 = vunpack.c.l.b16 %v2163
        %v2805 = vunpack.c.l.b16 %v2164
        %v2806 = vunpack.c.l.b16 %v2165
        %v2807 = vunpack.c.l.b16 %v2166
        %v2808 = vunpack.c.l.b16 %v2167
        %v2809 = vunpack.c.l.b16 %v2168
        %v2810 = vunpack.c.l.b16 %v2169
        %v2811 = vunpack.c.l.b16 %v2170
        %v2812 = vunpack.c.l.b16 %v2171
        %v2813 = vunpack.c.l.b16 %v2172
        %v2814 = vunpack.c.l.b16 %v2173
        %v2815 = vunpack.c.l.b16 %v2174
        %v2816 = vunpack.c.l.b16 %v2175
        %v2817 = vunpack.c.l.b16 %v2176
        %v2818 = vunpack.c.l.b16 %v2177
        %v2819 = vunpack.c.l.b16 %v2178
        %v2820 = vunpack.c.l.b16 %v2179
        %v2821 = vunpack.c.l.b16 %v2180
        %v2822 = vunpack.c.l.b16 %v2181
        %v2823 = vunpack.c.l.b16 %v2182
        %v2824 = vunpack.c.l.b16 %v2183
        %v2825 = vunpack.c.l.b16 %v2184
        %v2826 = vunpack.c.l.b16 %v2185
        %v2827 = vunpack.c.l.b16 %v2186
        %v2828 = vunpack.c.l.b16 %v2187
        %v2829 = vunpack.c.l.b16 %v2188
        %v2830 = vunpack.c.l.b16 %v2189
        %v2831 = vunpack.c.l.b16 %v2190
        %v2832 = vunpack.c.l.b16 %v2191
        %v2833 = vunpack.c.l.b16 %v2192
        %v2834 = vunpack.c.l.b16 %v2193
        %v2835 = vunpack.c.l.b16 %v2194
        %v2836 = vunpack.c.l.b16 %v2195
        %v2837 = vunpack.c.l.b16 %v2196
        %v2838 = vunpack.c.l.b16 %v2197
        %v2839 = vunpack.c.l.b16 %v2198
        %v2840 = vunpack.c.l.b16 %v2199
        %v2841 = vunpack.c.l.b16 %v2200
        %v2842 = vunpack.c.l.b16 %v2201
        %v2843 = vunpack.c.l.b16 %v2202
        %v2844 = vunpack.c.l.b16 %v2203
        %v2845 = vunpack.c.l.b16 %v2204
        %v2846 = vunpack.c.l.b16 %v2205
        %v2847 = vunpack.c.l.b16 %v2206
        %v2848 = vunpack.c.l.b16 %v2207
        %v2849 = vunpack.c.l.b16 %v2208
        %v2850 = vunpack.c.l.b16 %v2209
        %v2851 = vunpack.c.l.b16 %v2210
        %v2852 = vunpack.c.l.b16 %v2211
        %v2853 = vunpack.c.l.b16 %v2212
        %v2854 = vunpack.c.l.b16 %v2213
        %v2855 = vunpack.c.l.b16 %v2214
        %v2856 = vunpack.c.l.b16 %v2215
        %v2857 = vunpack.c.l.b16 %v2216
        %v2858 = vunpack.c.l.b16 %v2217
        %v2859 = vunpack.c.l.b16 %v2218
        %v2860 = vunpack.c.l.b16 %v2219
        %v2861 = vunpack.c.l.b16 %v2220
        %v2862 = vunpack.c.l.b16 %v2221
        %v2863 = vunpack.c.l.b16 %v2222
        %v2864 = vunpack.c.l.b16 %v2223
        %v2865 = vunpack.c.l.b16 %v2224
        %v2866 = vunpack.c.l.b16 %v2225
        %v2867 = vunpack.c.l.b16 %v2226
        %v2868 = vunpack.c.l.b16 %v2227
        %v2869 = vunpack.c.l.b16 %v2228
        %v2870 = vunpack.c.l.b16 %v2229
        %v2871 = vunpack.c.l.b16 %v2230
        %v2872 = vunpack.c.l.b16 %v2231
        %v2873 = vunpack.c.l.b16 %v2232
        %v2874 = vunpack.c.l.b16 %v2233
        %v2875 = vunpack.c.l.b16 %v2234
        %v2876 = vunpack.c.l.b16 %v2235
        %v2877 = vunpack.c.l.b16 %v2236
        %v2878 = vunpack.c.l.b16 %v2237
        %v2879 = vunpack.c.l.b16 %v2238
        %v2880 = vunpack.c.l.b16 %v2239
        %v2881 = vunpack.c.l.b16 %v2240
        %v2882 = vunpack.c.l.b16 %v2241
        %v2883 = vunpack.c.l.b16 %v2242
        %v2884 = vunpack.c.l.b16 %v2243
        %v2885 = vunpack.c.l.b16 %v2244
        %v2886 = vunpack.c.l.b16 %v2245
        %v2887 = vunpack.c.l.b16 %v2246
        %v2888 = vunpack.c.l.b16 %v2247
        %v2889 = vunpack.c.l.b16 %v2248
        %v2890 = vunpack.c.l.b16 %v2249
        %v2891 = vunpack.c.l.b16 %v2250
        %v2892 = vunpack.c.l.b16 %v2251
        %v2893 = vunpack.c.l.b16 %v2252
        %v2894 = vunpack.c.l.b16 %v2253
        %v2895 = vunpack.c.l.b16 %v2254
        %v2896 = vunpack.c.l.b16 %v2255
        %v2897 = vunpack.c.l.b16 %v2256
        %v2898 = vunpack.c.l.b16 %v2257
        %v2899 = vunpack.c.l.b16 %v2258
        %v2900 = vunpack.c.l.b16 %v2259
        %v2901 = vunpack.c.l.b16 %v2260
        %v2902 = vunpack.c.l.b16 %v2261
        %v2903 = vunpack.c.l.b16 %v2262
        %v2904 = vunpack.c.l.b16 %v2263
        %v2905 = vunpack.c.l.b16 %v2264
        %v2906 = vunpack.c.l.b16 %v2265
        %v2907 = vunpack.c.l.b16 %v2266
        %v2908 = vunpack.c.l.b16 %v2267
        %v2909 = vunpack.c.l.b16 %v2268
        %v2910 = vunpack.c.l.b16 %v2269
        %v2911 = vunpack.c.l.b16 %v2270
        %v2912 = vunpack.c.l.b16 %v2271
        %v2913 = vunpack.c.l.b16 %v2272
        %v2914 = vunpack.c.l.b16 %v2273
        %v2915 = vunpack.c.l.b16 %v2274
        %v2916 = vunpack.c.l.b16 %v2275
        %v2917 = vunpack.c.l.b16 %v2276
        %v2918 = vunpack.c.l.b16 %v2277
        %v2919 = vunpack.c.l.b16 %v2278
        %v2920 = vunpack.c.l.b16 %v2279
        %v2921 = vunpack.c.l.b16 %v2280
        %v2922 = vunpack.c.l.b16 %v2281
        %v2923 = vunpack.c.l.b16 %v2282
        %v2924 = vunpack.c.l.b16 %v2283
        %v2925 = vunpack.c.l.b16 %v2284
        %v2926 = vunpack.c.l.b16 %v2285
        %v2927 = vunpack.c.l.b16 %v2286
        %v2928 = vunpack.c.l.b16 %v2287
        %v2929 = vunpack.c.l.b16 %v2288
        %v2930 = vunpack.c.l.b16 %v2289
        %v2931 = vunpack.c.l.b16 %v2290
        %v2932 = vunpack.c.l.b16 %v2291
        %v2933 = vunpack.c.l.b16 %v2292
        %v2934 = vunpack.c.l.b16 %v2293
        %v2935 = vunpack.c.l.b16 %v2294
        %v2936 = vunpack.c.l.b16 %v2295
        %v2937 = vunpack.c.l.b16 %v2296
        %v2938 = vunpack.c.l.b16 %v2297
        %v2939 = vunpack.c.l.b16 %v2298
        %v2940 = vpack.c.b16 %v2621, %v2620
        %v2941 = vpack.c.b16 %v2623, %v2622
        %v2942 = vpack.c.b16 %v2625, %v2624
        %v2943 = vpack.c.b16 %v2627, %v2626
        %v2944 = vpack.c.b16 %v2629, %v2628
        %v2945 = vpack.c.b16 %v2631, %v2630
        %v2946 = vpack.c.b16 %v2633, %v2632
        %v2947 = vpack.c.b16 %v2635, %v2634
        %v2948 = vpack.c.b16 %v2637, %v2636
        %v2949 = vpack.c.b16 %v2639, %v2638
        %v2950 = vpack.c.b16 %v2641, %v2640
        %v2951 = vpack.c.b16 %v2643, %v2642
        %v2952 = vpack.c.b16 %v2645, %v2644
        %v2953 = vpack.c.b16 %v2647, %v2646
        %v2954 = vpack.c.b16 %v2649, %v2648
        %v2955 = vpack.c.b16 %v2651, %v2650
        %v2956 = vpack.c.b16 %v2653, %v2652
        %v2957 = vpack.c.b16 %v2655, %v2654
        %v2958 = vpack.c.b16 %v2657, %v2656
        %v2959 = vpack.c.b16 %v2659, %v2658
        %v2960 = vpack.c.b16 %v2661, %v2660
        %v2961 = vpack.c.b16 %v2663, %v2662
        %v2962 = vpack.c.b16 %v2665, %v2664
        %v2963 = vpack.c.b16 %v2667, %v2666
        %v2964 = vpack.c.b16 %v2669, %v2668
        %v2965 = vpack.c.b16 %v2671, %v2670
        %v2966 = vpack.c.b16 %v2673, %v2672
        %v2967 = vpack.c.b16 %v2675, %v2674
        %v2968 = vpack.c.b16 %v2677, %v2676
        %v2969 = vpack.c.b16 %v2679, %v2678
        %v2970 = vpack.c.b16 %v2681, %v2680
        %v2971 = vpack.c.b16 %v2683, %v2682
        %v2972 = vpack.c.b16 %v2685, %v2684
        %v2973 = vpack.c.b16 %v2687, %v2686
        %v2974 = vpack.c.b16 %v2689, %v2688
        %v2975 = vpack.c.b16 %v2691, %v2690
        %v2976 = vpack.c.b16 %v2693, %v2692
        %v2977 = vpack.c.b16 %v2695, %v2694
        %v2978 = vpack.c.b16 %v2697, %v2696
        %v2979 = vpack.c.b16 %v2699, %v2698
        %v2980 = vpack.c.b16 %v2701, %v2700
        %v2981 = vpack.c.b16 %v2703, %v2702
        %v2982 = vpack.c.b16 %v2705, %v2704
        %v2983 = vpack.c.b16 %v2707, %v2706
        %v2984 = vpack.c.b16 %v2709, %v2708
        %v2985 = vpack.c.b16 %v2711, %v2710
        %v2986 = vpack.c.b16 %v2713, %v2712
        %v2987 = vpack.c.b16 %v2715, %v2714
        %v2988 = vpack.c.b16 %v2717, %v2716
        %v2989 = vpack.c.b16 %v2719, %v2718
        %v2990 = vpack.c.b16 %v2721, %v2720
        %v2991 = vpack.c.b16 %v2723, %v2722
        %v2992 = vpack.c.b16 %v2725, %v2724
        %v2993 = vpack.c.b16 %v2727, %v2726
        %v2994 = vpack.c.b16 %v2729, %v2728
        %v2995 = vpack.c.b16 %v2731, %v2730
        %v2996 = vpack.c.b16 %v2733, %v2732
        %v2997 = vpack.c.b16 %v2735, %v2734
        %v2998 = vpack.c.b16 %v2737, %v2736
        %v2999 = vpack.c.b16 %v2739, %v2738
        %v3000 = vpack.c.b16 %v2741, %v2740
        %v3001 = vpack.c.b16 %v2743, %v2742
        %v3002 = vpack.c.b16 %v2745, %v2744
        %v3003 = vpack.c.b16 %v2747, %v2746
        %v3004 = vpack.c.b16 %v2749, %v2748
        %v3005 = vpack.c.b16 %v2751, %v2750
        %v3006 = vpack.c.b16 %v2753, %v2752
        %v3007 = vpack.c.b16 %v2755, %v2754
        %v3008 = vpack.c.b16 %v2757, %v2756
        %v3009 = vpack.c.b16 %v2759, %v2758
        %v3010 = vpack.c.b16 %v2761, %v2760
        %v3011 = vpack.c.b16 %v2763, %v2762
        %v3012 = vpack.c.b16 %v2765, %v2764
        %v3013 = vpack.c.b16 %v2767, %v2766
        %v3014 = vpack.c.b16 %v2769, %v2768
        %v3015 = vpack.c.b16 %v2771, %v2770
        %v3016 = vpack.c.b16 %v2773, %v2772
        %v3017 = vpack.c.b16 %v2775, %v2774
        %v3018 = vpack.c.b16 %v2777, %v2776
        %v3019 = vpack.c.b16 %v2779, %v2778
        %v3020 = vpack.c.b16 %v2781, %v2780
        %v3021 = vpack.c.b16 %v2783, %v2782
        %v3022 = vpack.c.b16 %v2785, %v2784
        %v3023 = vpack.c.b16 %v2787, %v2786
        %v3024 = vpack.c.b16 %v2789, %v2788
        %v3025 = vpack.c.b16 %v2791, %v2790
        %v3026 = vpack.c.b16 %v2793, %v2792
        %v3027 = vpack.c.b16 %v2795, %v2794
        %v3028 = vpack.c.b16 %v2797, %v2796
        %v3029 = vpack.c.b16 %v2799, %v2798
        %v3030 = vpack.c.b16 %v2801, %v2800
        %v3031 = vpack.c.b16 %v2803, %v2802
        %v3032 = vpack.c.b16 %v2805, %v2804
        %v3033 = vpack.c.b16 %v2807, %v2806
        %v3034 = vpack.c.b16 %v2809, %v2808
        %v3035 = vpack.c.b16 %v2811, %v2810
        %v3036 = vpack.c.b16 %v2813, %v2812
        %v3037 = vpack.c.b16 %v2815, %v2814
        %v3038 = vpack.c.b16 %v2817, %v2816
        %v3039 = vpack.c.b16 %v2819, %v2818
        %v3040 = vpack.c.b16 %v2821, %v2820
        %v3041 = vpack.c.b16 %v2823, %v2822
        %v3042 = vpack.c.b16 %v2825, %v2824
        %v3043 = vpack.c.b16 %v2827, %v2826
        %v3044 = vpack.c.b16 %v2829, %v2828
        %v3045 = vpack.c.b16 %v2831, %v2830
        %v3046 = vpack.c.b16 %v2833, %v2832
        %v3047 = vpack.c.b16 %v2835, %v2834
        %v3048 = vpack.c.b16 %v2837, %v2836
        %v3049 = vpack.c.b16 %v2839, %v2838
        %v3050 = vpack.c.b16 %v2841, %v2840
        %v3051 = vpack.c.b16 %v2843, %v2842
        %v3052 = vpack.c.b16 %v2845, %v2844
        %v3053 = vpack.c.b16 %v2847, %v2846
        %v3054 = vpack.c.b16 %v2849, %v2848
        %v3055 = vpack.c.b16 %v2851, %v2850
        %v3056 = vpack.c.b16 %v2853, %v2852
        %v3057 = vpack.c.b16 %v2855, %v2854
        %v3058 = vpack.c.b16 %v2857, %v2856
        %v3059 = vpack.c.b16 %v2859, %v2858
        %v3060 = vpack.c.b16 %v2861, %v2860
        %v3061 = vpack.c.b16 %v2863, %v2862
        %v3062 = vpack.c.b16 %v2865, %v2864
        %v3063 = vpack.c.b16 %v2867, %v2866
        %v3064 = vpack.c.b16 %v2869, %v2868
        %v3065 = vpack.c.b16 %v2871, %v2870
        %v3066 = vpack.c.b16 %v2873, %v2872
        %v3067 = vpack.c.b16 %v2875, %v2874
        %v3068 = vpack.c.b16 %v2877, %v2876
        %v3069 = vpack.c.b16 %v2879, %v2878
        %v3070 = vpack.c.b16 %v2881, %v2880
        %v3071 = vpack.c.b16 %v2883, %v2882
        %v3072 = vpack.c.b16 %v2885, %v2884
        %v3073 = vpack.c.b16 %v2887, %v2886
        %v3074 = vpack.c.b16 %v2889, %v2888
        %v3075 = vpack.c.b16 %v2891, %v2890
        %v3076 = vpack.c.b16 %v2893, %v2892
        %v3077 = vpack.c.b16 %v2895, %v2894
        %v3078 = vpack.c.b16 %v2897, %v2896
        %v3079 = vpack.c.b16 %v2899, %v2898
        %v3080 = vpack.c.b16 %v2901, %v2900
        %v3081 = vpack.c.b16 %v2903, %v2902
        %v3082 = vpack.c.b16 %v2905, %v2904
        %v3083 = vpack.c.b16 %v2907, %v2906
        %v3084 = vpack.c.b16 %v2909, %v2908
        %v3085 = vpack.c.b16 %v2911, %v2910
        %v3086 = vpack.c.b16 %v2913, %v2912
        %v3087 = vpack.c.b16 %v2915, %v2914
        %v3088 = vpack.c.b16 %v2917, %v2916
        %v3089 = vpack.c.b16 %v2919, %v2918
        %v3090 = vpack.c.b16 %v2921, %v2920
        %v3091 = vpack.c.b16 %v2923, %v2922
        %v3092 = vpack.c.b16 %v2925, %v2924
        %v3093 = vpack.c.b16 %v2927, %v2926
        %v3094 = vpack.c.b16 %v2929, %v2928
        %v3095 = vpack.c.b16 %v2931, %v2930
        %v3096 = vpack.c.b16 %v2933, %v2932
        %v3097 = vpack.c.b16 %v2935, %v2934
        %v3098 = vpack.c.b16 %v2937, %v2936
        %v3099 = vpack.c.b16 %v2939, %v2938
        %3260 = vmatprep.subr.bf16.mxu0 0
        %3261 = vmatpush1.bf16.msra.mxu0 %v2940
        %3262 = vmatprep.subr.bf16.mxu0 0
        %3263 = vmatpush1.bf16.msra.mxu0 %v2941
        %3264 = vmatprep.subr.bf16.mxu0 0
        %3265 = vmatpush1.bf16.msra.mxu0 %v2942
        %3266 = vmatprep.subr.bf16.mxu0 0
        %3267 = vmatpush1.bf16.msra.mxu0 %v2943
        %3268 = vmatprep.subr.bf16.mxu0 0
        %3269 = vmatpush1.bf16.msra.mxu0 %v2944
        %3270 = vmatprep.subr.bf16.mxu0 0
        %3271 = vmatpush1.bf16.msra.mxu0 %v2945
        %3272 = vmatprep.subr.bf16.mxu0 0
        %3273 = vmatpush1.bf16.msra.mxu0 %v2946
        %3274 = vmatprep.subr.bf16.mxu0 0
        %3275 = vmatpush1.bf16.msra.mxu0 %v2947
        %3276 = vmatprep.subr.bf16.mxu0 0
        %3277 = vmatpush1.bf16.msra.mxu0 %v2948
        %3278 = vmatprep.subr.bf16.mxu0 0
        %3279 = vmatpush1.bf16.msra.mxu0 %v2949
        %3280 = vmatprep.subr.bf16.mxu0 0
        %3281 = vmatpush1.bf16.msra.mxu0 %v2950
        %3282 = vmatprep.subr.bf16.mxu0 0
        %3283 = vmatpush1.bf16.msra.mxu0 %v2951
        %3284 = vmatprep.subr.bf16.mxu0 0
        %3285 = vmatpush1.bf16.msra.mxu0 %v2952
        %3286 = vmatprep.subr.bf16.mxu0 0
        %3287 = vmatpush1.bf16.msra.mxu0 %v2953
        %3288 = vmatprep.subr.bf16.mxu0 0
        %3289 = vmatpush1.bf16.msra.mxu0 %v2954
        %3290 = vmatprep.subr.bf16.mxu0 0
        %3291 = vmatpush1.bf16.msra.mxu0 %v2955
        %3292 = vmatprep.mubr.bf16.mxu0 %v1960
        %3293 = vmatmul.mubr.bf16.gmra.mrb[0].mxu0 %v1959
        %v3294 = vpop.f32.mrb[0].mxu0
        %v3295 = vadd.f32 %v2299, %v3294
        %v3296 = vpop.f32.mrb[0].mxu0
        %v3297 = vpop.f32.mrb[0].mxu0
        %v3298 = vpop.f32.mrb[0].mxu0
        %3299 = vdwg.mxu0
        %3300 = vmatprep.subr.bf16.mxu0 0
        %3301 = vmatpush1.bf16.msra.mxu0 %v2956
        %3302 = vmatprep.subr.bf16.mxu0 0
        %3303 = vmatpush1.bf16.msra.mxu0 %v2957
        %3304 = vmatprep.subr.bf16.mxu0 0
        %3305 = vmatpush1.bf16.msra.mxu0 %v2958
        %3306 = vmatprep.subr.bf16.mxu0 0
        %3307 = vmatpush1.bf16.msra.mxu0 %v2959
        %3308 = vmatprep.subr.bf16.mxu0 0
        %3309 = vmatpush1.bf16.msra.mxu0 %v2960
        %3310 = vmatprep.subr.bf16.mxu0 0
        %3311 = vmatpush1.bf16.msra.mxu0 %v2961
        %3312 = vmatprep.subr.bf16.mxu0 0
        %3313 = vmatpush1.bf16.msra.mxu0 %v2962
        %3314 = vmatprep.subr.bf16.mxu0 0
        %3315 = vmatpush1.bf16.msra.mxu0 %v2963
        %3316 = vmatprep.subr.bf16.mxu0 0
        %3317 = vmatpush1.bf16.msra.mxu0 %v2964
        %3318 = vmatprep.subr.bf16.mxu0 0
        %3319 = vmatpush1.bf16.msra.mxu0 %v2965
        %3320 = vmatprep.subr.bf16.mxu0 0
        %3321 = vmatpush1.bf16.msra.mxu0 %v2966
        %3322 = vmatprep.subr.bf16.mxu0 0
        %3323 = vmatpush1.bf16.msra.mxu0 %v2967
        %3324 = vmatprep.subr.bf16.mxu0 0
        %3325 = vmatpush1.bf16.msra.mxu0 %v2968
        %3326 = vmatprep.subr.bf16.mxu0 0
        %3327 = vmatpush1.bf16.msra.mxu0 %v2969
        %3328 = vmatprep.subr.bf16.mxu0 0
        %3329 = vmatpush1.bf16.msra.mxu0 %v2970
        %3330 = vmatprep.subr.bf16.mxu0 0
        %3331 = vmatpush1.bf16.msra.mxu0 %v2971
        %3332 = vmatprep.mubr.bf16.mxu0 %v1962
        %3333 = vmatmul.mubr.bf16.gmra.mrb[0].mxu0 %v1961
        %v3334 = vpop.f32.mrb[0].mxu0
        %v3335 = vadd.f32 %v3295, %v3334
        %v3336 = vpop.f32.mrb[0].mxu0
        %v3337 = vpop.f32.mrb[0].mxu0
        %v3338 = vpop.f32.mrb[0].mxu0
        %3339 = vdwg.mxu0
        %3340 = vmatprep.subr.bf16.mxu0 0
        %3341 = vmatpush1.bf16.msra.mxu0 %v2972
        %3342 = vmatprep.subr.bf16.mxu0 0
        %3343 = vmatpush1.bf16.msra.mxu0 %v2973
        %3344 = vmatprep.subr.bf16.mxu0 0
        %3345 = vmatpush1.bf16.msra.mxu0 %v2974
        %3346 = vmatprep.subr.bf16.mxu0 0
        %3347 = vmatpush1.bf16.msra.mxu0 %v2975
        %3348 = vmatprep.subr.bf16.mxu0 0
        %3349 = vmatpush1.bf16.msra.mxu0 %v2976
        %3350 = vmatprep.subr.bf16.mxu0 0
        %3351 = vmatpush1.bf16.msra.mxu0 %v2977
        %3352 = vmatprep.subr.bf16.mxu0 0
        %3353 = vmatpush1.bf16.msra.mxu0 %v2978
        %3354 = vmatprep.subr.bf16.mxu0 0
        %3355 = vmatpush1.bf16.msra.mxu0 %v2979
        %3356 = vmatprep.subr.bf16.mxu0 0
        %3357 = vmatpush1.bf16.msra.mxu0 %v2980
        %3358 = vmatprep.subr.bf16.mxu0 0
        %3359 = vmatpush1.bf16.msra.mxu0 %v2981
        %3360 = vmatprep.subr.bf16.mxu0 0
        %3361 = vmatpush1.bf16.msra.mxu0 %v2982
        %3362 = vmatprep.subr.bf16.mxu0 0
        %3363 = vmatpush1.bf16.msra.mxu0 %v2983
        %3364 = vmatprep.subr.bf16.mxu0 0
        %3365 = vmatpush1.bf16.msra.mxu0 %v2984
        %3366 = vmatprep.subr.bf16.mxu0 0
        %3367 = vmatpush1.bf16.msra.mxu0 %v2985
        %3368 = vmatprep.subr.bf16.mxu0 0
        %3369 = vmatpush1.bf16.msra.mxu0 %v2986
        %3370 = vmatprep.subr.bf16.mxu0 0
        %3371 = vmatpush1.bf16.msra.mxu0 %v2987
        %3372 = vmatprep.mubr.bf16.mxu0 %v1964
        %3373 = vmatmul.mubr.bf16.gmra.mrb[0].mxu0 %v1963
        %v3374 = vpop.f32.mrb[0].mxu0
        %v3375 = vadd.f32 %v3335, %v3374
        %v3376 = vpop.f32.mrb[0].mxu0
        %v3377 = vpop.f32.mrb[0].mxu0
        %v3378 = vpop.f32.mrb[0].mxu0
        %3379 = vdwg.mxu0
        %3380 = vmatprep.subr.bf16.mxu0 0
        %3381 = vmatpush1.bf16.msra.mxu0 %v2988
        %3382 = vmatprep.subr.bf16.mxu0 0
        %3383 = vmatpush1.bf16.msra.mxu0 %v2989
        %3384 = vmatprep.subr.bf16.mxu0 0
        %3385 = vmatpush1.bf16.msra.mxu0 %v2990
        %3386 = vmatprep.subr.bf16.mxu0 0
        %3387 = vmatpush1.bf16.msra.mxu0 %v2991
        %3388 = vmatprep.subr.bf16.mxu0 0
        %3389 = vmatpush1.bf16.msra.mxu0 %v2992
        %3390 = vmatprep.subr.bf16.mxu0 0
        %3391 = vmatpush1.bf16.msra.mxu0 %v2993
        %3392 = vmatprep.subr.bf16.mxu0 0
        %3393 = vmatpush1.bf16.msra.mxu0 %v2994
        %3394 = vmatprep.subr.bf16.mxu0 0
        %3395 = vmatpush1.bf16.msra.mxu0 %v2995
        %3396 = vmatprep.subr.bf16.mxu0 0
        %3397 = vmatpush1.bf16.msra.mxu0 %v2996
        %3398 = vmatprep.subr.bf16.mxu0 0
        %3399 = vmatpush1.bf16.msra.mxu0 %v2997
        %3400 = vmatprep.subr.bf16.mxu0 0
        %3401 = vmatpush1.bf16.msra.mxu0 %v2998
        %3402 = vmatprep.subr.bf16.mxu0 0
        %3403 = vmatpush1.bf16.msra.mxu0 %v2999
        %3404 = vmatprep.subr.bf16.mxu0 0
        %3405 = vmatpush1.bf16.msra.mxu0 %v3000
        %3406 = vmatprep.subr.bf16.mxu0 0
        %3407 = vmatpush1.bf16.msra.mxu0 %v3001
        %3408 = vmatprep.subr.bf16.mxu0 0
        %3409 = vmatpush1.bf16.msra.mxu0 %v3002
        %3410 = vmatprep.subr.bf16.mxu0 0
        %3411 = vmatpush1.bf16.msra.mxu0 %v3003
        %3412 = vmatprep.mubr.bf16.mxu0 %v1966
        %3413 = vmatmul.mubr.bf16.gmra.mrb[0].mxu0 %v1965
        %v3414 = vpop.f32.mrb[0].mxu0
        %v3415 = vadd.f32 %v3375, %v3414
        %v3416 = vpop.f32.mrb[0].mxu0
        %v3417 = vpop.f32.mrb[0].mxu0
        %v3418 = vpop.f32.mrb[0].mxu0
        %3419 = vdwg.mxu0
        %3420 = vmatprep.subr.bf16.mxu0 0
        %3421 = vmatpush1.bf16.msra.mxu0 %v3004
        %3422 = vmatprep.subr.bf16.mxu0 0
        %3423 = vmatpush1.bf16.msra.mxu0 %v3005
        %3424 = vmatprep.subr.bf16.mxu0 0
        %3425 = vmatpush1.bf16.msra.mxu0 %v3006
        %3426 = vmatprep.subr.bf16.mxu0 0
        %3427 = vmatpush1.bf16.msra.mxu0 %v3007
        %3428 = vmatprep.subr.bf16.mxu0 0
        %3429 = vmatpush1.bf16.msra.mxu0 %v3008
        %3430 = vmatprep.subr.bf16.mxu0 0
        %3431 = vmatpush1.bf16.msra.mxu0 %v3009
        %3432 = vmatprep.subr.bf16.mxu0 0
        %3433 = vmatpush1.bf16.msra.mxu0 %v3010
        %3434 = vmatprep.subr.bf16.mxu0 0
        %3435 = vmatpush1.bf16.msra.mxu0 %v3011
        %3436 = vmatprep.subr.bf16.mxu0 0
        %3437 = vmatpush1.bf16.msra.mxu0 %v3012
        %3438 = vmatprep.subr.bf16.mxu0 0
        %3439 = vmatpush1.bf16.msra.mxu0 %v3013
        %3440 = vmatprep.subr.bf16.mxu0 0
        %3441 = vmatpush1.bf16.msra.mxu0 %v3014
        %3442 = vmatprep.subr.bf16.mxu0 0
        %3443 = vmatpush1.bf16.msra.mxu0 %v3015
        %3444 = vmatprep.subr.bf16.mxu0 0
        %3445 = vmatpush1.bf16.msra.mxu0 %v3016
        %3446 = vmatprep.subr.bf16.mxu0 0
        %3447 = vmatpush1.bf16.msra.mxu0 %v3017
        %3448 = vmatprep.subr.bf16.mxu0 0
        %3449 = vmatpush1.bf16.msra.mxu0 %v3018
        %3450 = vmatprep.subr.bf16.mxu0 0
        %3451 = vmatpush1.bf16.msra.mxu0 %v3019
        %3452 = vmatprep.mubr.bf16.mxu0 %v1968
        %3453 = vmatmul.mubr.bf16.gmra.mrb[0].mxu0 %v1967
        %v3454 = vpop.f32.mrb[0].mxu0
        %v3455 = vadd.f32 %v3415, %v3454
        %v3456 = vpop.f32.mrb[0].mxu0
        %v3457 = vpop.f32.mrb[0].mxu0
        %v3458 = vpop.f32.mrb[0].mxu0
        %3459 = vdwg.mxu0
        %3460 = vmatprep.subr.bf16.mxu0 0
        %3461 = vmatpush1.bf16.msra.mxu0 %v3020
        %3462 = vmatprep.subr.bf16.mxu0 0
        %3463 = vmatpush1.bf16.msra.mxu0 %v3021
        %3464 = vmatprep.subr.bf16.mxu0 0
        %3465 = vmatpush1.bf16.msra.mxu0 %v3022
        %3466 = vmatprep.subr.bf16.mxu0 0
        %3467 = vmatpush1.bf16.msra.mxu0 %v3023
        %3468 = vmatprep.subr.bf16.mxu0 0
        %3469 = vmatpush1.bf16.msra.mxu0 %v3024
        %3470 = vmatprep.subr.bf16.mxu0 0
        %3471 = vmatpush1.bf16.msra.mxu0 %v3025
        %3472 = vmatprep.subr.bf16.mxu0 0
        %3473 = vmatpush1.bf16.msra.mxu0 %v3026
        %3474 = vmatprep.subr.bf16.mxu0 0
        %3475 = vmatpush1.bf16.msra.mxu0 %v3027
        %3476 = vmatprep.subr.bf16.mxu0 0
        %3477 = vmatpush1.bf16.msra.mxu0 %v3028
        %3478 = vmatprep.subr.bf16.mxu0 0
        %3479 = vmatpush1.bf16.msra.mxu0 %v3029
        %3480 = vmatprep.subr.bf16.mxu0 0
        %3481 = vmatpush1.bf16.msra.mxu0 %v3030
        %3482 = vmatprep.subr.bf16.mxu0 0
        %3483 = vmatpush1.bf16.msra.mxu0 %v3031
        %3484 = vmatprep.subr.bf16.mxu0 0
        %3485 = vmatpush1.bf16.msra.mxu0 %v3032
        %3486 = vmatprep.subr.bf16.mxu0 0
        %3487 = vmatpush1.bf16.msra.mxu0 %v3033
        %3488 = vmatprep.subr.bf16.mxu0 0
        %3489 = vmatpush1.bf16.msra.mxu0 %v3034
        %3490 = vmatprep.subr.bf16.mxu0 0
        %3491 = vmatpush1.bf16.msra.mxu0 %v3035
        %3492 = vmatprep.mubr.bf16.mxu0 %v1970
        %3493 = vmatmul.mubr.bf16.gmra.mrb[0].mxu0 %v1969
        %v3494 = vpop.f32.mrb[0].mxu0
        %v3495 = vadd.f32 %v3455, %v3494
        %v3496 = vpop.f32.mrb[0].mxu0
        %v3497 = vpop.f32.mrb[0].mxu0
        %v3498 = vpop.f32.mrb[0].mxu0
        %3499 = vdwg.mxu0
        %3500 = vmatprep.subr.bf16.mxu0 0
        %3501 = vmatpush1.bf16.msra.mxu0 %v3036
        %3502 = vmatprep.subr.bf16.mxu0 0
        %3503 = vmatpush1.bf16.msra.mxu0 %v3037
        %3504 = vmatprep.subr.bf16.mxu0 0
        %3505 = vmatpush1.bf16.msra.mxu0 %v3038
        %3506 = vmatprep.subr.bf16.mxu0 0
        %3507 = vmatpush1.bf16.msra.mxu0 %v3039
        %3508 = vmatprep.subr.bf16.mxu0 0
        %3509 = vmatpush1.bf16.msra.mxu0 %v3040
        %3510 = vmatprep.subr.bf16.mxu0 0
        %3511 = vmatpush1.bf16.msra.mxu0 %v3041
        %3512 = vmatprep.subr.bf16.mxu0 0
        %3513 = vmatpush1.bf16.msra.mxu0 %v3042
        %3514 = vmatprep.subr.bf16.mxu0 0
        %3515 = vmatpush1.bf16.msra.mxu0 %v3043
        %3516 = vmatprep.subr.bf16.mxu0 0
        %3517 = vmatpush1.bf16.msra.mxu0 %v3044
        %3518 = vmatprep.subr.bf16.mxu0 0
        %3519 = vmatpush1.bf16.msra.mxu0 %v3045
        %3520 = vmatprep.subr.bf16.mxu0 0
        %3521 = vmatpush1.bf16.msra.mxu0 %v3046
        %3522 = vmatprep.subr.bf16.mxu0 0
        %3523 = vmatpush1.bf16.msra.mxu0 %v3047
        %3524 = vmatprep.subr.bf16.mxu0 0
        %3525 = vmatpush1.bf16.msra.mxu0 %v3048
        %3526 = vmatprep.subr.bf16.mxu0 0
        %3527 = vmatpush1.bf16.msra.mxu0 %v3049
        %3528 = vmatprep.subr.bf16.mxu0 0
        %3529 = vmatpush1.bf16.msra.mxu0 %v3050
        %3530 = vmatprep.subr.bf16.mxu0 0
        %3531 = vmatpush1.bf16.msra.mxu0 %v3051
        %3532 = vmatprep.mubr.bf16.mxu0 %v1972
        %3533 = vmatmul.mubr.bf16.gmra.mrb[0].mxu0 %v1971
        %v3534 = vpop.f32.mrb[0].mxu0
        %v3535 = vadd.f32 %v3495, %v3534
        %v3536 = vpop.f32.mrb[0].mxu0
        %v3537 = vpop.f32.mrb[0].mxu0
        %v3538 = vpop.f32.mrb[0].mxu0
        %3539 = vdwg.mxu0
        %3540 = vmatprep.subr.bf16.mxu0 0
        %3541 = vmatpush1.bf16.msra.mxu0 %v3052
        %3542 = vmatprep.subr.bf16.mxu0 0
        %3543 = vmatpush1.bf16.msra.mxu0 %v3053
        %3544 = vmatprep.subr.bf16.mxu0 0
        %3545 = vmatpush1.bf16.msra.mxu0 %v3054
        %3546 = vmatprep.subr.bf16.mxu0 0
        %3547 = vmatpush1.bf16.msra.mxu0 %v3055
        %3548 = vmatprep.subr.bf16.mxu0 0
        %3549 = vmatpush1.bf16.msra.mxu0 %v3056
        %3550 = vmatprep.subr.bf16.mxu0 0
        %3551 = vmatpush1.bf16.msra.mxu0 %v3057
        %3552 = vmatprep.subr.bf16.mxu0 0
        %3553 = vmatpush1.bf16.msra.mxu0 %v3058
        %3554 = vmatprep.subr.bf16.mxu0 0
        %3555 = vmatpush1.bf16.msra.mxu0 %v3059
        %3556 = vmatprep.subr.bf16.mxu0 0
        %3557 = vmatpush1.bf16.msra.mxu0 %v3060
        %3558 = vmatprep.subr.bf16.mxu0 0
        %3559 = vmatpush1.bf16.msra.mxu0 %v3061
        %3560 = vmatprep.subr.bf16.mxu0 0
        %3561 = vmatpush1.bf16.msra.mxu0 %v3062
        %3562 = vmatprep.subr.bf16.mxu0 0
        %3563 = vmatpush1.bf16.msra.mxu0 %v3063
        %3564 = vmatprep.subr.bf16.mxu0 0
        %3565 = vmatpush1.bf16.msra.mxu0 %v3064
        %3566 = vmatprep.subr.bf16.mxu0 0
        %3567 = vmatpush1.bf16.msra.mxu0 %v3065
        %3568 = vmatprep.subr.bf16.mxu0 0
        %3569 = vmatpush1.bf16.msra.mxu0 %v3066
        %3570 = vmatprep.subr.bf16.mxu0 0
        %3571 = vmatpush1.bf16.msra.mxu0 %v3067
        %3572 = vmatprep.mubr.bf16.mxu0 %v1974
        %3573 = vmatmul.mubr.bf16.gmra.mrb[0].mxu0 %v1973
        %v3574 = vpop.f32.mrb[0].mxu0
        %v3575 = vadd.f32 %v3535, %v3574
        %v3576 = vpop.f32.mrb[0].mxu0
        %v3577 = vpop.f32.mrb[0].mxu0
        %v3578 = vpop.f32.mrb[0].mxu0
        %3579 = vdwg.mxu0
        %3580 = vmatprep.subr.bf16.mxu0 0
        %3581 = vmatpush1.bf16.msra.mxu0 %v3068
        %3582 = vmatprep.subr.bf16.mxu0 0
        %3583 = vmatpush1.bf16.msra.mxu0 %v3069
        %3584 = vmatprep.subr.bf16.mxu0 0
        %3585 = vmatpush1.bf16.msra.mxu0 %v3070
        %3586 = vmatprep.subr.bf16.mxu0 0
        %3587 = vmatpush1.bf16.msra.mxu0 %v3071
        %3588 = vmatprep.subr.bf16.mxu0 0
        %3589 = vmatpush1.bf16.msra.mxu0 %v3072
        %3590 = vmatprep.subr.bf16.mxu0 0
        %3591 = vmatpush1.bf16.msra.mxu0 %v3073
        %3592 = vmatprep.subr.bf16.mxu0 0
        %3593 = vmatpush1.bf16.msra.mxu0 %v3074
        %3594 = vmatprep.subr.bf16.mxu0 0
        %3595 = vmatpush1.bf16.msra.mxu0 %v3075
        %3596 = vmatprep.subr.bf16.mxu0 0
        %3597 = vmatpush1.bf16.msra.mxu0 %v3076
        %3598 = vmatprep.subr.bf16.mxu0 0
        %3599 = vmatpush1.bf16.msra.mxu0 %v3077
        %3600 = vmatprep.subr.bf16.mxu0 0
        %3601 = vmatpush1.bf16.msra.mxu0 %v3078
        %3602 = vmatprep.subr.bf16.mxu0 0
        %3603 = vmatpush1.bf16.msra.mxu0 %v3079
        %3604 = vmatprep.subr.bf16.mxu0 0
        %3605 = vmatpush1.bf16.msra.mxu0 %v3080
        %3606 = vmatprep.subr.bf16.mxu0 0
        %3607 = vmatpush1.bf16.msra.mxu0 %v3081
        %3608 = vmatprep.subr.bf16.mxu0 0
        %3609 = vmatpush1.bf16.msra.mxu0 %v3082
        %3610 = vmatprep.subr.bf16.mxu0 0
        %3611 = vmatpush1.bf16.msra.mxu0 %v3083
        %3612 = vmatprep.mubr.bf16.mxu0 %v1976
        %3613 = vmatmul.mubr.bf16.gmra.mrb[0].mxu0 %v1975
        %v3614 = vpop.f32.mrb[0].mxu0
        %v3615 = vadd.f32 %v3575, %v3614
        %v3616 = vpop.f32.mrb[0].mxu0
        %v3617 = vpop.f32.mrb[0].mxu0
        %v3618 = vpop.f32.mrb[0].mxu0
        %3619 = vdwg.mxu0
        %3620 = vmatprep.subr.bf16.mxu0 0
        %3621 = vmatpush1.bf16.msra.mxu0 %v3084
        %3622 = vmatprep.subr.bf16.mxu0 0
        %3623 = vmatpush1.bf16.msra.mxu0 %v3085
        %3624 = vmatprep.subr.bf16.mxu0 0
        %3625 = vmatpush1.bf16.msra.mxu0 %v3086
        %3626 = vmatprep.subr.bf16.mxu0 0
        %3627 = vmatpush1.bf16.msra.mxu0 %v3087
        %3628 = vmatprep.subr.bf16.mxu0 0
        %3629 = vmatpush1.bf16.msra.mxu0 %v3088
        %3630 = vmatprep.subr.bf16.mxu0 0
        %3631 = vmatpush1.bf16.msra.mxu0 %v3089
        %3632 = vmatprep.subr.bf16.mxu0 0
        %3633 = vmatpush1.bf16.msra.mxu0 %v3090
        %3634 = vmatprep.subr.bf16.mxu0 0
        %3635 = vmatpush1.bf16.msra.mxu0 %v3091
        %3636 = vmatprep.subr.bf16.mxu0 0
        %3637 = vmatpush1.bf16.msra.mxu0 %v3092
        %3638 = vmatprep.subr.bf16.mxu0 0
        %3639 = vmatpush1.bf16.msra.mxu0 %v3093
        %3640 = vmatprep.subr.bf16.mxu0 0
        %3641 = vmatpush1.bf16.msra.mxu0 %v3094
        %3642 = vmatprep.subr.bf16.mxu0 0
        %3643 = vmatpush1.bf16.msra.mxu0 %v3095
        %3644 = vmatprep.subr.bf16.mxu0 0
        %3645 = vmatpush1.bf16.msra.mxu0 %v3096
        %3646 = vmatprep.subr.bf16.mxu0 0
        %3647 = vmatpush1.bf16.msra.mxu0 %v3097
        %3648 = vmatprep.subr.bf16.mxu0 0
        %3649 = vmatpush1.bf16.msra.mxu0 %v3098
        %3650 = vmatprep.subr.bf16.mxu0 0
        %3651 = vmatpush1.bf16.msra.mxu0 %v3099
        %3652 = vmatprep.mubr.bf16.mxu0 %v1978
        %3653 = vmatmul.mubr.bf16.gmra.mrb[0].mxu0 %v1977
        %v3654 = vpop.f32.mrb[0].mxu0
        %v3655 = vadd.f32 %v3615, %v3654
        %v3656 = vpop.f32.mrb[0].mxu0
        %v3657 = vpop.f32.mrb[0].mxu0
        %v3658 = vpop.f32.mrb[0].mxu0
        %3659 = vdwg.mxu0
        %v3660 = vmax.f32 %v3655, 0.0
        %v3661 = vld [vmem:[%s7] sm:$0xff]
        %v3662 = vld [vmem:[%s7 + $0x8] sm:$0xff]
        %v3663 = vld [vmem:[%s7 + $0x10] sm:$0xff]
        %v3664 = vld [vmem:[%s7 + $0x18] sm:$0xff]
        %v3665 = vld [vmem:[%s7 + $0x20] sm:$0xff]
        %v3666 = vld [vmem:[%s7 + $0x28] sm:$0xff]
        %v3667 = vld [vmem:[%s7 + $0x30] sm:$0xff]
        %v3668 = vld [vmem:[%s7 + $0x38] sm:$0xff]
        %v3669 = vld [vmem:[%s7 + $0x40] sm:$0xff]
        %v3670 = vld [vmem:[%s7 + $0x48] sm:$0xff]
        %v3671 = vld [vmem:[%s7 + $0x50] sm:$0xff]
        %v3672 = vld [vmem:[%s7 + $0x58] sm:$0xff]
        %v3673 = vld [vmem:[%s7 + $0x60] sm:$0xff]
        %v3674 = vld [vmem:[%s7 + $0x68] sm:$0xff]
        %v3675 = vld [vmem:[%s7 + $0x70] sm:$0xff]
        %v3676 = vld [vmem:[%s7 + $0x78] sm:$0xff]
        %v3677 = vld [vmem:[%s8] sm:$0x1]
        %3678 = vmatprep.subr.mxu0 0.0
        %3679 = vmatpush1.msra.mxu0 %v3661
        %3680 = vmatprep.subr.mxu0 0.0
        %3681 = vmatpush1.msra.mxu0 %v3662
        %3682 = vmatprep.subr.mxu0 0.0
        %3683 = vmatpush1.msra.mxu0 %v3663
        %3684 = vmatprep.subr.mxu0 0.0
        %3685 = vmatpush1.msra.mxu0 %v3664
        %3686 = vmatprep.subr.mxu0 0.0
        %3687 = vmatpush1.msra.mxu0 %v3665
        %3688 = vmatprep.subr.mxu0 0.0
        %3689 = vmatpush1.msra.mxu0 %v3666
        %3690 = vmatprep.subr.mxu0 0.0
        %3691 = vmatpush1.msra.mxu0 %v3667
        %3692 = vmatprep.subr.mxu0 0.0
        %3693 = vmatpush1.msra.mxu0 %v3668
        %3694 = vmatprep.subr.mxu0 0.0
        %3695 = vmatpush1.msra.mxu0 %v3669
        %3696 = vmatprep.subr.mxu0 0.0
        %3697 = vmatpush1.msra.mxu0 %v3670
        %3698 = vmatprep.subr.mxu0 0.0
        %3699 = vmatpush1.msra.mxu0 %v3671
        %3700 = vmatprep.subr.mxu0 0.0
        %3701 = vmatpush1.msra.mxu0 %v3672
        %3702 = vmatprep.subr.mxu0 0.0
        %3703 = vmatpush1.msra.mxu0 %v3673
        %3704 = vmatprep.subr.mxu0 0.0
        %3705 = vmatpush1.msra.mxu0 %v3674
        %3706 = vmatprep.subr.mxu0 0.0
        %3707 = vmatpush1.msra.mxu0 %v3675
        %3708 = vmatprep.subr.mxu0 0.0
        %3709 = vmatpush1.msra.mxu0 %v3676
        %3710 = vmatprep.subr.mxu0 0.0
        %3711 = vmatpush1.msra.mxu0 0.0
        %3712 = vmatprep.subr.mxu0 0.0
        %3713 = vmatpush1.msra.mxu0 0.0
        %3714 = vmatprep.subr.mxu0 0.0
        %3715 = vmatpush1.msra.mxu0 0.0
        %3716 = vmatprep.subr.mxu0 0.0
        %3717 = vmatpush1.msra.mxu0 0.0
        %3718 = vmatprep.subr.mxu0 0.0
        %3719 = vmatpush1.msra.mxu0 0.0
        %3720 = vmatprep.subr.mxu0 0.0
        %3721 = vmatpush1.msra.mxu0 0.0
        %3722 = vmatprep.subr.mxu0 0.0
        %3723 = vmatpush1.msra.mxu0 0.0
        %3724 = vmatprep.subr.mxu0 0.0
        %3725 = vmatpush1.msra.mxu0 0.0
        %3726 = vmatprep.subr.mxu0 0.0
        %3727 = vmatpush1.msra.mxu0 0.0
        %3728 = vmatprep.subr.mxu0 0.0
        %3729 = vmatpush1.msra.mxu0 0.0
        %3730 = vmatprep.subr.mxu0 0.0
        %3731 = vmatpush1.msra.mxu0 0.0
        %3732 = vmatprep.subr.mxu0 0.0
        %3733 = vmatpush1.msra.mxu0 0.0
        %3734 = vmatprep.subr.mxu0 0.0
        %3735 = vmatpush1.msra.mxu0 0.0
        %3736 = vmatprep.subr.mxu0 0.0
        %3737 = vmatpush1.msra.mxu0 0.0
        %3738 = vmatprep.subr.mxu0 0.0
        %3739 = vmatpush1.msra.mxu0 0.0
        %3740 = vmatprep.subr.mxu0 0.0
        %3741 = vmatpush1.msra.mxu0 0.0
        %3742 = vmatprep.mubr.f32.mxu0 0.0
        %3743 = vmatmul.mubr.f32.gmra.mrb[0].mxu0 %v3660
        %v3744 = vpop.f32.mrb[0].mxu0
        %v3745 = vadd.f32 %v3677, %v3744
        %v3746 = vpop.f32.mrb[0].mxu0
        %3747 = vdwg.mxu0
        %v3748 = vld [vmem:[%s9] sm:$0xff]
        %v3749 = vld [vmem:[%s9 + $0x8] sm:$0xff]
        %v3750 = vld [vmem:[%s9 + $0x10] sm:$0xff]
        %v3751 = vld [vmem:[%s9 + $0x18] sm:$0xff]
        %v3752 = vld [vmem:[%s9 + $0x20] sm:$0xff]
        %v3753 = vld [vmem:[%s9 + $0x28] sm:$0xff]
        %v3754 = vld [vmem:[%s9 + $0x30] sm:$0xff]
        %v3755 = vld [vmem:[%s9 + $0x38] sm:$0xff]
        %v3756 = vld [vmem:[%s10] sm:$0x1]
        %v3758 = vsel %vm1320, %v3745, 0
        %3760 = vmatprep.subr.mxu0 0.0
        %3761 = vmatpush1.msra.mxu0 %v3748
        %3762 = vmatprep.subr.mxu0 0.0
        %3763 = vmatpush1.msra.mxu0 %v3749
        %3764 = vmatprep.subr.mxu0 0.0
        %3765 = vmatpush1.msra.mxu0 %v3750
        %3766 = vmatprep.subr.mxu0 0.0
        %3767 = vmatpush1.msra.mxu0 %v3751
        %3768 = vmatprep.subr.mxu0 0.0
        %3769 = vmatpush1.msra.mxu0 %v3752
        %3770 = vmatprep.subr.mxu0 0.0
        %3771 = vmatpush1.msra.mxu0 %v3753
        %3772 = vmatprep.subr.mxu0 0.0
        %3773 = vmatpush1.msra.mxu0 %v3754
        %3774 = vmatprep.subr.mxu0 0.0
        %3775 = vmatpush1.msra.mxu0 %v3755
        %3776 = vmatprep.subr.mxu0 0.0
        %3777 = vmatpush1.msra.mxu0 0.0
        %3778 = vmatprep.subr.mxu0 0.0
        %3779 = vmatpush1.msra.mxu0 0.0
        %3780 = vmatprep.subr.mxu0 0.0
        %3781 = vmatpush1.msra.mxu0 0.0
        %3782 = vmatprep.subr.mxu0 0.0
        %3783 = vmatpush1.msra.mxu0 0.0
        %3784 = vmatprep.subr.mxu0 0.0
        %3785 = vmatpush1.msra.mxu0 0.0
        %3786 = vmatprep.subr.mxu0 0.0
        %3787 = vmatpush1.msra.mxu0 0.0
        %3788 = vmatprep.subr.mxu0 0.0
        %3789 = vmatpush1.msra.mxu0 0.0
        %3790 = vmatprep.subr.mxu0 0.0
        %3791 = vmatpush1.msra.mxu0 0.0
        %3792 = vmatprep.subr.mxu0 0.0
        %3793 = vmatpush1.msra.mxu0 0.0
        %3794 = vmatprep.subr.mxu0 0.0
        %3795 = vmatpush1.msra.mxu0 0.0
        %3796 = vmatprep.subr.mxu0 0.0
        %3797 = vmatpush1.msra.mxu0 0.0
        %3798 = vmatprep.subr.mxu0 0.0
        %3799 = vmatpush1.msra.mxu0 0.0
        %3800 = vmatprep.subr.mxu0 0.0
        %3801 = vmatpush1.msra.mxu0 0.0
        %3802 = vmatprep.subr.mxu0 0.0
        %3803 = vmatpush1.msra.mxu0 0.0
        %3804 = vmatprep.subr.mxu0 0.0
        %3805 = vmatpush1.msra.mxu0 0.0
        %3806 = vmatprep.subr.mxu0 0.0
        %3807 = vmatpush1.msra.mxu0 0.0
        %3808 = vmatprep.subr.mxu0 0.0
        %3809 = vmatpush1.msra.mxu0 0.0
        %3810 = vmatprep.subr.mxu0 0.0
        %3811 = vmatpush1.msra.mxu0 0.0
        %3812 = vmatprep.subr.mxu0 0.0
        %3813 = vmatpush1.msra.mxu0 0.0
        %3814 = vmatprep.subr.mxu0 0.0
        %3815 = vmatpush1.msra.mxu0 0.0
        %3816 = vmatprep.subr.mxu0 0.0
        %3817 = vmatpush1.msra.mxu0 0.0
        %3818 = vmatprep.subr.mxu0 0.0
        %3819 = vmatpush1.msra.mxu0 0.0
        %3820 = vmatprep.subr.mxu0 0.0
        %3821 = vmatpush1.msra.mxu0 0.0
        %3822 = vmatprep.subr.mxu0 0.0
        %3823 = vmatpush1.msra.mxu0 0.0
        %3824 = vmatprep.mubr.f32.mxu0 0.0
        %3825 = vmatmul.mubr.f32.gmra.mrb[0].mxu0 %v3758
        %v3826 = vpop.f32.mrb[0].mxu0
        %v3827 = vadd.f32 %v3756, %v3826
        %v3828 = vpop.f32.mrb[0].mxu0
        %3829 = vdwg.mxu0
        %v3830 = vtanh.pop %v3827
        %v3831 = vld [vmem:[%s11] sm:$0xff]
        %v3832 = vld [vmem:[#allocation6] sm:$0x1]
        %v3834 = vsel %vm876, %v3830, 0
        %3836 = vmatprep.subr.mxu0 0.0
        %3837 = vmatpush1.msra.mxu0 %v3831
        %3838 = vmatprep.subr.mxu0 0.0
        %3839 = vmatpush1.msra.mxu0 0.0
        %3840 = vmatprep.subr.mxu0 0.0
        %3841 = vmatpush1.msra.mxu0 0.0
        %3842 = vmatprep.subr.mxu0 0.0
        %3843 = vmatpush1.msra.mxu0 0.0
        %3844 = vmatprep.subr.mxu0 0.0
        %3845 = vmatpush1.msra.mxu0 0.0
        %3846 = vmatprep.subr.mxu0 0.0
        %3847 = vmatpush1.msra.mxu0 0.0
        %3848 = vmatprep.subr.mxu0 0.0
        %3849 = vmatpush1.msra.mxu0 0.0
        %3850 = vmatprep.subr.mxu0 0.0
        %3851 = vmatpush1.msra.mxu0 0.0
        %3852 = vmatprep.subr.mxu0 0.0
        %3853 = vmatpush1.msra.mxu0 0.0
        %3854 = vmatprep.subr.mxu0 0.0
        %3855 = vmatpush1.msra.mxu0 0.0
        %3856 = vmatprep.subr.mxu0 0.0
        %3857 = vmatpush1.msra.mxu0 0.0
        %3858 = vmatprep.subr.mxu0 0.0
        %3859 = vmatpush1.msra.mxu0 0.0
        %3860 = vmatprep.subr.mxu0 0.0
        %3861 = vmatpush1.msra.mxu0 0.0
        %3862 = vmatprep.subr.mxu0 0.0
        %3863 = vmatpush1.msra.mxu0 0.0
        %3864 = vmatprep.subr.mxu0 0.0
        %3865 = vmatpush1.msra.mxu0 0.0
        %3866 = vmatprep.subr.mxu0 0.0
        %3867 = vmatpush1.msra.mxu0 0.0
        %3868 = vmatprep.subr.mxu0 0.0
        %3869 = vmatpush1.msra.mxu0 0.0
        %3870 = vmatprep.subr.mxu0 0.0
        %3871 = vmatpush1.msra.mxu0 0.0
        %3872 = vmatprep.subr.mxu0 0.0
        %3873 = vmatpush1.msra.mxu0 0.0
        %3874 = vmatprep.subr.mxu0 0.0
        %3875 = vmatpush1.msra.mxu0 0.0
        %3876 = vmatprep.subr.mxu0 0.0
        %3877 = vmatpush1.msra.mxu0 0.0
        %3878 = vmatprep.subr.mxu0 0.0
        %3879 = vmatpush1.msra.mxu0 0.0
        %3880 = vmatprep.subr.mxu0 0.0
        %3881 = vmatpush1.msra.mxu0 0.0
        %3882 = vmatprep.subr.mxu0 0.0
        %3883 = vmatpush1.msra.mxu0 0.0
        %3884 = vmatprep.subr.mxu0 0.0
        %3885 = vmatpush1.msra.mxu0 0.0
        %3886 = vmatprep.subr.mxu0 0.0
        %3887 = vmatpush1.msra.mxu0 0.0
        %3888 = vmatprep.subr.mxu0 0.0
        %3889 = vmatpush1.msra.mxu0 0.0
        %3890 = vmatprep.subr.mxu0 0.0
        %3891 = vmatpush1.msra.mxu0 0.0
        %3892 = vmatprep.subr.mxu0 0.0
        %3893 = vmatpush1.msra.mxu0 0.0
        %3894 = vmatprep.subr.mxu0 0.0
        %3895 = vmatpush1.msra.mxu0 0.0
        %3896 = vmatprep.subr.mxu0 0.0
        %3897 = vmatpush1.msra.mxu0 0.0
        %3898 = vmatprep.subr.mxu0 0.0
        %3899 = vmatpush1.msra.mxu0 0.0
        %3900 = vmatprep.mubr.f32.mxu0 0.0
        %3901 = vmatmul.mubr.f32.gmra.mrb[0].mxu0 %v3834
        %v3902 = vpop.f32.mrb[0].mxu0
        %v3903 = vadd.f32 %v3832, %v3902
        %v3904 = vpop.f32.mrb[0].mxu0
        %3905 = vdwg.mxu0
        %v3906 = vsub.f32 0.0, %v3903
        %v3907 = vmul.f32 %v3906, 1.442695
        %v3908 = vpow.pop %v3907
        %v3909 = vadd.f32 %v3908, 1.0
        %v3910 = vrcp.pop %v3909
        %vm3911 = vcmask 0
        %3912 = vst.msk [vmem:[%s763] sm:$0x1] %vm3911, %v3910
        %v3913 = vld [vmem:[%s13] sm:$0xff]
        %v3914 = vld [vmem:[%s13 + $0x8] sm:$0xff]
        %v3915 = vld [vmem:[%s13 + $0x10] sm:$0xff]
        %v3916 = vld [vmem:[%s13 + $0x18] sm:$0xff]
        %v3917 = vld [vmem:[%s13 + $0x20] sm:$0xff]
        %v3918 = vld [vmem:[%s13 + $0x28] sm:$0xff]
        %v3919 = vld [vmem:[%s13 + $0x30] sm:$0xff]
        %v3920 = vld [vmem:[%s13 + $0x38] sm:$0xff]
        %v3921 = vld [vmem:[#allocation13] sm:$0x1]
        %3922 = vmatprep.subr.mxu0 0.0
        %3923 = vmatpush1.msra.mxu0 %v3913
        %3924 = vmatprep.subr.mxu0 0.0
        %3925 = vmatpush1.msra.mxu0 %v3914
        %3926 = vmatprep.subr.mxu0 0.0
        %3927 = vmatpush1.msra.mxu0 %v3915
        %3928 = vmatprep.subr.mxu0 0.0
        %3929 = vmatpush1.msra.mxu0 %v3916
        %3930 = vmatprep.subr.mxu0 0.0
        %3931 = vmatpush1.msra.mxu0 %v3917
        %3932 = vmatprep.subr.mxu0 0.0
        %3933 = vmatpush1.msra.mxu0 %v3918
        %3934 = vmatprep.subr.mxu0 0.0
        %3935 = vmatpush1.msra.mxu0 %v3919
        %3936 = vmatprep.subr.mxu0 0.0
        %3937 = vmatpush1.msra.mxu0 %v3920
        %3938 = vmatprep.subr.mxu0 0.0
        %3939 = vmatpush1.msra.mxu0 0.0
        %3940 = vmatprep.subr.mxu0 0.0
        %3941 = vmatpush1.msra.mxu0 0.0
        %3942 = vmatprep.subr.mxu0 0.0
        %3943 = vmatpush1.msra.mxu0 0.0
        %3944 = vmatprep.subr.mxu0 0.0
        %3945 = vmatpush1.msra.mxu0 0.0
        %3946 = vmatprep.subr.mxu0 0.0
        %3947 = vmatpush1.msra.mxu0 0.0
        %3948 = vmatprep.subr.mxu0 0.0
        %3949 = vmatpush1.msra.mxu0 0.0
        %3950 = vmatprep.subr.mxu0 0.0
        %3951 = vmatpush1.msra.mxu0 0.0
        %3952 = vmatprep.subr.mxu0 0.0
        %3953 = vmatpush1.msra.mxu0 0.0
        %3954 = vmatprep.subr.mxu0 0.0
        %3955 = vmatpush1.msra.mxu0 0.0
        %3956 = vmatprep.subr.mxu0 0.0
        %3957 = vmatpush1.msra.mxu0 0.0
        %3958 = vmatprep.subr.mxu0 0.0
        %3959 = vmatpush1.msra.mxu0 0.0
        %3960 = vmatprep.subr.mxu0 0.0
        %3961 = vmatpush1.msra.mxu0 0.0
        %3962 = vmatprep.subr.mxu0 0.0
        %3963 = vmatpush1.msra.mxu0 0.0
        %3964 = vmatprep.subr.mxu0 0.0
        %3965 = vmatpush1.msra.mxu0 0.0
        %3966 = vmatprep.subr.mxu0 0.0
        %3967 = vmatpush1.msra.mxu0 0.0
        %3968 = vmatprep.subr.mxu0 0.0
        %3969 = vmatpush1.msra.mxu0 0.0
        %3970 = vmatprep.subr.mxu0 0.0
        %3971 = vmatpush1.msra.mxu0 0.0
        %3972 = vmatprep.subr.mxu0 0.0
        %3973 = vmatpush1.msra.mxu0 0.0
        %3974 = vmatprep.subr.mxu0 0.0
        %3975 = vmatpush1.msra.mxu0 0.0
        %3976 = vmatprep.subr.mxu0 0.0
        %3977 = vmatpush1.msra.mxu0 0.0
        %3978 = vmatprep.subr.mxu0 0.0
        %3979 = vmatpush1.msra.mxu0 0.0
        %3980 = vmatprep.subr.mxu0 0.0
        %3981 = vmatpush1.msra.mxu0 0.0
        %3982 = vmatprep.subr.mxu0 0.0
        %3983 = vmatpush1.msra.mxu0 0.0
        %3984 = vmatprep.subr.mxu0 0.0
        %3985 = vmatpush1.msra.mxu0 0.0
        %3986 = vmatprep.mubr.f32.mxu0 0.0
        %3987 = vmatmul.mubr.f32.gmra.mrb[0].mxu0 %v3758
        %v3988 = vpop.f32.mrb[0].mxu0
        %v3989 = vadd.f32 %v3921, %v3988
        %v3990 = vpop.f32.mrb[0].mxu0
        %3991 = vdwg.mxu0
        %v3992 = vmax.f32 %v3989, 0.0
        %v3993 = vpack.c.bf16 %v3992, %v3992
        %v3994 = vld [vmem:[#allocation15] sm:$0xff]
        %v3995 = vld [vmem:[#allocation15 + $0x8] sm:$0xff]
        %v3996 = vld [vmem:[#allocation15 + $0x10] sm:$0xff]
        %v3997 = vld [vmem:[#allocation15 + $0x18] sm:$0xff]
        %v3998 = vld [vmem:[#allocation15 + $0x20] sm:$0xff]
        %v3999 = vld [vmem:[#allocation15 + $0x28] sm:$0xff]
        %v4000 = vld [vmem:[#allocation15 + $0x30] sm:$0xff]
        %v4001 = vld [vmem:[#allocation15 + $0x38] sm:$0xff]
        %v4002 = vld [vmem:[#allocation15 + $0x40] sm:$0xff]
        %v4003 = vld [vmem:[#allocation15 + $0x48] sm:$0xff]
        %v4004 = vld [vmem:[#allocation15 + $0x50] sm:$0xff]
        %v4005 = vld [vmem:[#allocation15 + $0x58] sm:$0xff]
        %v4006 = vld [vmem:[#allocation15 + $0x60] sm:$0xff]
        %v4007 = vld [vmem:[#allocation15 + $0x68] sm:$0xff]
        %v4008 = vld [vmem:[#allocation15 + $0x70] sm:$0xff]
        %v4009 = vld [vmem:[#allocation15 + $0x78] sm:$0xff]
        %v4010 = vld [vmem:[#allocation15 + $0x80] sm:$0xff]
        %v4011 = vld [vmem:[#allocation15 + $0x88] sm:$0xff]
        %v4012 = vld [vmem:[#allocation15 + $0x90] sm:$0xff]
        %v4013 = vld [vmem:[#allocation15 + $0x98] sm:$0xff]
        %v4014 = vld [vmem:[#allocation15 + $0xa0] sm:$0xff]
        %v4015 = vld [vmem:[#allocation15 + $0xa8] sm:$0xff]
        %v4016 = vld [vmem:[#allocation15 + $0xb0] sm:$0xff]
        %v4017 = vld [vmem:[#allocation15 + $0xb8] sm:$0xff]
        %v4018 = vld [vmem:[#allocation15 + $0xc0] sm:$0xff]
        %v4019 = vld [vmem:[#allocation15 + $0xc8] sm:$0xff]
        %v4020 = vld [vmem:[#allocation15 + $0xd0] sm:$0xff]
        %v4021 = vld [vmem:[#allocation15 + $0xd8] sm:$0xff]
        %v4022 = vld [vmem:[#allocation15 + $0xe0] sm:$0xff]
        %v4023 = vld [vmem:[#allocation15 + $0xe8] sm:$0xff]
        %v4024 = vld [vmem:[#allocation15 + $0xf0] sm:$0xff]
        %v4025 = vld [vmem:[#allocation15 + $0xf8] sm:$0xff]
        %v4026 = vld [vmem:[#allocation15 + $0x100] sm:$0xff]
        %v4027 = vld [vmem:[#allocation15 + $0x108] sm:$0xff]
        %v4028 = vld [vmem:[#allocation15 + $0x110] sm:$0xff]
        %v4029 = vld [vmem:[#allocation15 + $0x118] sm:$0xff]
        %v4030 = vld [vmem:[#allocation15 + $0x120] sm:$0xff]
        %v4031 = vld [vmem:[#allocation15 + $0x128] sm:$0xff]
        %v4032 = vld [vmem:[#allocation15 + $0x130] sm:$0xff]
        %v4033 = vld [vmem:[#allocation15 + $0x138] sm:$0xff]
        %v4034 = vld [vmem:[#allocation15 + $0x140] sm:$0xff]
        %v4035 = vld [vmem:[#allocation15 + $0x148] sm:$0xff]
        %v4036 = vld [vmem:[#allocation15 + $0x150] sm:$0xff]
        %v4037 = vld [vmem:[#allocation15 + $0x158] sm:$0xff]
        %v4038 = vld [vmem:[#allocation15 + $0x160] sm:$0xff]
        %v4039 = vld [vmem:[#allocation15 + $0x168] sm:$0xff]
        %v4040 = vld [vmem:[#allocation15 + $0x170] sm:$0xff]
        %v4041 = vld [vmem:[#allocation15 + $0x178] sm:$0xff]
        %v4042 = vld [vmem:[#allocation15 + $0x180] sm:$0xff]
        %v4043 = vld [vmem:[#allocation15 + $0x188] sm:$0xff]
        %v4044 = vld [vmem:[#allocation15 + $0x190] sm:$0xff]
        %v4045 = vld [vmem:[#allocation15 + $0x198] sm:$0xff]
        %v4046 = vld [vmem:[#allocation15 + $0x1a0] sm:$0xff]
        %v4047 = vld [vmem:[#allocation15 + $0x1a8] sm:$0xff]
        %v4048 = vld [vmem:[#allocation15 + $0x1b0] sm:$0xff]
        %v4049 = vld [vmem:[#allocation15 + $0x1b8] sm:$0xff]
        %v4050 = vld [vmem:[#allocation15 + $0x1c0] sm:$0xff]
        %v4051 = vld [vmem:[#allocation15 + $0x1c8] sm:$0xff]
        %v4052 = vld [vmem:[#allocation15 + $0x1d0] sm:$0xff]
        %v4053 = vld [vmem:[#allocation15 + $0x1d8] sm:$0xff]
        %v4054 = vld [vmem:[#allocation15 + $0x1e0] sm:$0xff]
        %v4055 = vld [vmem:[#allocation15 + $0x1e8] sm:$0xff]
        %v4056 = vld [vmem:[#allocation15 + $0x1f0] sm:$0xff]
        %v4057 = vld [vmem:[#allocation15 + $0x1f8] sm:$0xff]
        %v4058 = vld [vmem:[#allocation15 + $0x200] sm:$0xff]
        %v4059 = vld [vmem:[#allocation15 + $0x208] sm:$0xff]
        %v4060 = vld [vmem:[#allocation15 + $0x210] sm:$0xff]
        %v4061 = vld [vmem:[#allocation15 + $0x218] sm:$0xff]
        %v4062 = vld [vmem:[#allocation15 + $0x220] sm:$0xff]
        %v4063 = vld [vmem:[#allocation15 + $0x228] sm:$0xff]
        %v4064 = vld [vmem:[#allocation15 + $0x230] sm:$0xff]
        %v4065 = vld [vmem:[#allocation15 + $0x238] sm:$0xff]
        %v4066 = vld [vmem:[#allocation15 + $0x240] sm:$0xff]
        %v4067 = vld [vmem:[#allocation15 + $0x248] sm:$0xff]
        %v4068 = vld [vmem:[#allocation15 + $0x250] sm:$0xff]
        %v4069 = vld [vmem:[#allocation15 + $0x258] sm:$0xff]
        %v4070 = vld [vmem:[#allocation15 + $0x260] sm:$0xff]
        %v4071 = vld [vmem:[#allocation15 + $0x268] sm:$0xff]
        %v4072 = vld [vmem:[#allocation15 + $0x270] sm:$0xff]
        %v4073 = vld [vmem:[#allocation15 + $0x278] sm:$0xff]
        %v4074 = vld [vmem:[%s16] sm:$0xff]
        %v4075 = vld [vmem:[%s16 + $0x8] sm:$0xff]
        %v4076 = vld [vmem:[%s16 + $0x10] sm:$0xf]
        %v4157 = vunpack.c.l.b16 %v3994
        %v4158 = vunpack.c.h.b16 %v3994
        %v4159 = vunpack.c.l.b16 %v3995
        %v4160 = vunpack.c.h.b16 %v3995
        %v4161 = vunpack.c.l.b16 %v3996
        %v4162 = vunpack.c.h.b16 %v3996
        %v4163 = vunpack.c.l.b16 %v3997
        %v4164 = vunpack.c.h.b16 %v3997
        %v4165 = vunpack.c.l.b16 %v3998
        %v4166 = vunpack.c.h.b16 %v3998
        %v4167 = vunpack.c.l.b16 %v3999
        %v4168 = vunpack.c.h.b16 %v3999
        %v4169 = vunpack.c.l.b16 %v4000
        %v4170 = vunpack.c.h.b16 %v4000
        %v4171 = vunpack.c.l.b16 %v4001
        %v4172 = vunpack.c.h.b16 %v4001
        %v4173 = vunpack.c.l.b16 %v4002
        %v4174 = vunpack.c.h.b16 %v4002
        %v4175 = vunpack.c.l.b16 %v4003
        %v4176 = vunpack.c.h.b16 %v4003
        %v4177 = vunpack.c.l.b16 %v4004
        %v4178 = vunpack.c.h.b16 %v4004
        %v4179 = vunpack.c.l.b16 %v4005
        %v4180 = vunpack.c.h.b16 %v4005
        %v4181 = vunpack.c.l.b16 %v4006
        %v4182 = vunpack.c.h.b16 %v4006
        %v4183 = vunpack.c.l.b16 %v4007
        %v4184 = vunpack.c.h.b16 %v4007
        %v4185 = vunpack.c.l.b16 %v4008
        %v4186 = vunpack.c.h.b16 %v4008
        %v4187 = vunpack.c.l.b16 %v4009
        %v4188 = vunpack.c.h.b16 %v4009
        %v4189 = vunpack.c.l.b16 %v4010
        %v4190 = vunpack.c.h.b16 %v4010
        %v4191 = vunpack.c.l.b16 %v4011
        %v4192 = vunpack.c.h.b16 %v4011
        %v4193 = vunpack.c.l.b16 %v4012
        %v4194 = vunpack.c.h.b16 %v4012
        %v4195 = vunpack.c.l.b16 %v4013
        %v4196 = vunpack.c.h.b16 %v4013
        %v4197 = vunpack.c.l.b16 %v4014
        %v4198 = vunpack.c.h.b16 %v4014
        %v4199 = vunpack.c.l.b16 %v4015
        %v4200 = vunpack.c.h.b16 %v4015
        %v4201 = vunpack.c.l.b16 %v4016
        %v4202 = vunpack.c.h.b16 %v4016
        %v4203 = vunpack.c.l.b16 %v4017
        %v4204 = vunpack.c.h.b16 %v4017
        %v4205 = vunpack.c.l.b16 %v4018
        %v4206 = vunpack.c.h.b16 %v4018
        %v4207 = vunpack.c.l.b16 %v4019
        %v4208 = vunpack.c.h.b16 %v4019
        %v4209 = vunpack.c.l.b16 %v4020
        %v4210 = vunpack.c.h.b16 %v4020
        %v4211 = vunpack.c.l.b16 %v4021
        %v4212 = vunpack.c.h.b16 %v4021
        %v4213 = vunpack.c.l.b16 %v4022
        %v4214 = vunpack.c.h.b16 %v4022
        %v4215 = vunpack.c.l.b16 %v4023
        %v4216 = vunpack.c.h.b16 %v4023
        %v4217 = vunpack.c.l.b16 %v4024
        %v4218 = vunpack.c.h.b16 %v4024
        %v4219 = vunpack.c.l.b16 %v4025
        %v4220 = vunpack.c.h.b16 %v4025
        %v4221 = vunpack.c.l.b16 %v4026
        %v4222 = vunpack.c.h.b16 %v4026
        %v4223 = vunpack.c.l.b16 %v4027
        %v4224 = vunpack.c.h.b16 %v4027
        %v4225 = vunpack.c.l.b16 %v4028
        %v4226 = vunpack.c.h.b16 %v4028
        %v4227 = vunpack.c.l.b16 %v4029
        %v4228 = vunpack.c.h.b16 %v4029
        %v4229 = vunpack.c.l.b16 %v4030
        %v4230 = vunpack.c.h.b16 %v4030
        %v4231 = vunpack.c.l.b16 %v4031
        %v4232 = vunpack.c.h.b16 %v4031
        %v4233 = vunpack.c.l.b16 %v4032
        %v4234 = vunpack.c.h.b16 %v4032
        %v4235 = vunpack.c.l.b16 %v4033
        %v4236 = vunpack.c.h.b16 %v4033
        %v4237 = vunpack.c.l.b16 %v4034
        %v4238 = vunpack.c.h.b16 %v4034
        %v4239 = vunpack.c.l.b16 %v4035
        %v4240 = vunpack.c.h.b16 %v4035
        %v4241 = vunpack.c.l.b16 %v4036
        %v4242 = vunpack.c.h.b16 %v4036
        %v4243 = vunpack.c.l.b16 %v4037
        %v4244 = vunpack.c.h.b16 %v4037
        %v4245 = vunpack.c.l.b16 %v4038
        %v4246 = vunpack.c.h.b16 %v4038
        %v4247 = vunpack.c.l.b16 %v4039
        %v4248 = vunpack.c.h.b16 %v4039
        %v4249 = vunpack.c.l.b16 %v4040
        %v4250 = vunpack.c.h.b16 %v4040
        %v4251 = vunpack.c.l.b16 %v4041
        %v4252 = vunpack.c.h.b16 %v4041
        %v4253 = vunpack.c.l.b16 %v4042
        %v4254 = vunpack.c.h.b16 %v4042
        %v4255 = vunpack.c.l.b16 %v4043
        %v4256 = vunpack.c.h.b16 %v4043
        %v4257 = vunpack.c.l.b16 %v4044
        %v4258 = vunpack.c.h.b16 %v4044
        %v4259 = vunpack.c.l.b16 %v4045
        %v4260 = vunpack.c.h.b16 %v4045
        %v4261 = vunpack.c.l.b16 %v4046
        %v4262 = vunpack.c.h.b16 %v4046
        %v4263 = vunpack.c.l.b16 %v4047
        %v4264 = vunpack.c.h.b16 %v4047
        %v4265 = vunpack.c.l.b16 %v4048
        %v4266 = vunpack.c.h.b16 %v4048
        %v4267 = vunpack.c.l.b16 %v4049
        %v4268 = vunpack.c.h.b16 %v4049
        %v4269 = vunpack.c.l.b16 %v4050
        %v4270 = vunpack.c.h.b16 %v4050
        %v4271 = vunpack.c.l.b16 %v4051
        %v4272 = vunpack.c.h.b16 %v4051
        %v4273 = vunpack.c.l.b16 %v4052
        %v4274 = vunpack.c.h.b16 %v4052
        %v4275 = vunpack.c.l.b16 %v4053
        %v4276 = vunpack.c.h.b16 %v4053
        %v4277 = vunpack.c.l.b16 %v4054
        %v4278 = vunpack.c.h.b16 %v4054
        %v4279 = vunpack.c.l.b16 %v4055
        %v4280 = vunpack.c.h.b16 %v4055
        %v4281 = vunpack.c.l.b16 %v4056
        %v4282 = vunpack.c.h.b16 %v4056
        %v4283 = vunpack.c.l.b16 %v4057
        %v4284 = vunpack.c.h.b16 %v4057
        %v4285 = vunpack.c.l.b16 %v4058
        %v4286 = vunpack.c.h.b16 %v4058
        %v4287 = vunpack.c.l.b16 %v4059
        %v4288 = vunpack.c.h.b16 %v4059
        %v4289 = vunpack.c.l.b16 %v4060
        %v4290 = vunpack.c.h.b16 %v4060
        %v4291 = vunpack.c.l.b16 %v4061
        %v4292 = vunpack.c.h.b16 %v4061
        %v4293 = vunpack.c.l.b16 %v4062
        %v4294 = vunpack.c.h.b16 %v4062
        %v4295 = vunpack.c.l.b16 %v4063
        %v4296 = vunpack.c.h.b16 %v4063
        %v4297 = vunpack.c.l.b16 %v4064
        %v4298 = vunpack.c.h.b16 %v4064
        %v4299 = vunpack.c.l.b16 %v4065
        %v4300 = vunpack.c.h.b16 %v4065
        %v4301 = vunpack.c.l.b16 %v4066
        %v4302 = vunpack.c.h.b16 %v4066
        %v4303 = vunpack.c.l.b16 %v4067
        %v4304 = vunpack.c.h.b16 %v4067
        %v4305 = vunpack.c.l.b16 %v4068
        %v4306 = vunpack.c.h.b16 %v4068
        %v4307 = vunpack.c.l.b16 %v4069
        %v4308 = vunpack.c.h.b16 %v4069
        %v4309 = vunpack.c.l.b16 %v4070
        %v4310 = vunpack.c.h.b16 %v4070
        %v4311 = vunpack.c.l.b16 %v4071
        %v4312 = vunpack.c.h.b16 %v4071
        %v4313 = vunpack.c.l.b16 %v4072
        %v4314 = vunpack.c.h.b16 %v4072
        %v4315 = vunpack.c.l.b16 %v4073
        %v4316 = vunpack.c.h.b16 %v4073
        %v4317 = vpack.c.b16 %v4177, %v4157
        %v4318 = vpack.c.b16 %v4178, %v4158
        %v4319 = vpack.c.b16 %v4179, %v4159
        %v4320 = vpack.c.b16 %v4180, %v4160
        %v4321 = vpack.c.b16 %v4181, %v4161
        %v4322 = vpack.c.b16 %v4182, %v4162
        %v4323 = vpack.c.b16 %v4183, %v4163
        %v4324 = vpack.c.b16 %v4184, %v4164
        %v4325 = vpack.c.b16 %v4185, %v4165
        %v4326 = vpack.c.b16 %v4186, %v4166
        %v4327 = vpack.c.b16 %v4187, %v4167
        %v4328 = vpack.c.b16 %v4188, %v4168
        %v4329 = vpack.c.b16 %v4189, %v4169
        %v4330 = vpack.c.b16 %v4190, %v4170
        %v4331 = vpack.c.b16 %v4191, %v4171
        %v4332 = vpack.c.b16 %v4192, %v4172
        %v4333 = vpack.c.b16 %v4193, %v4173
        %v4334 = vpack.c.b16 %v4194, %v4174
        %v4335 = vpack.c.b16 %v4195, %v4175
        %v4336 = vpack.c.b16 %v4196, %v4176
        %v4337 = vpack.c.b16 %v4217, %v4197
        %v4338 = vpack.c.b16 %v4218, %v4198
        %v4339 = vpack.c.b16 %v4219, %v4199
        %v4340 = vpack.c.b16 %v4220, %v4200
        %v4341 = vpack.c.b16 %v4221, %v4201
        %v4342 = vpack.c.b16 %v4222, %v4202
        %v4343 = vpack.c.b16 %v4223, %v4203
        %v4344 = vpack.c.b16 %v4224, %v4204
        %v4345 = vpack.c.b16 %v4225, %v4205
        %v4346 = vpack.c.b16 %v4226, %v4206
        %v4347 = vpack.c.b16 %v4227, %v4207
        %v4348 = vpack.c.b16 %v4228, %v4208
        %v4349 = vpack.c.b16 %v4229, %v4209
        %v4350 = vpack.c.b16 %v4230, %v4210
        %v4351 = vpack.c.b16 %v4231, %v4211
        %v4352 = vpack.c.b16 %v4232, %v4212
        %v4353 = vpack.c.b16 %v4233, %v4213
        %v4354 = vpack.c.b16 %v4234, %v4214
        %v4355 = vpack.c.b16 %v4235, %v4215
        %v4356 = vpack.c.b16 %v4236, %v4216
        %v4357 = vpack.c.b16 %v4257, %v4237
        %v4358 = vpack.c.b16 %v4258, %v4238
        %v4359 = vpack.c.b16 %v4259, %v4239
        %v4360 = vpack.c.b16 %v4260, %v4240
        %v4361 = vpack.c.b16 %v4261, %v4241
        %v4362 = vpack.c.b16 %v4262, %v4242
        %v4363 = vpack.c.b16 %v4263, %v4243
        %v4364 = vpack.c.b16 %v4264, %v4244
        %v4365 = vpack.c.b16 %v4265, %v4245
        %v4366 = vpack.c.b16 %v4266, %v4246
        %v4367 = vpack.c.b16 %v4267, %v4247
        %v4368 = vpack.c.b16 %v4268, %v4248
        %v4369 = vpack.c.b16 %v4269, %v4249
        %v4370 = vpack.c.b16 %v4270, %v4250
        %v4371 = vpack.c.b16 %v4271, %v4251
        %v4372 = vpack.c.b16 %v4272, %v4252
        %v4373 = vpack.c.b16 %v4273, %v4253
        %v4374 = vpack.c.b16 %v4274, %v4254
        %v4375 = vpack.c.b16 %v4275, %v4255
        %v4376 = vpack.c.b16 %v4276, %v4256
        %v4377 = vpack.c.b16 %v4297, %v4277
        %v4378 = vpack.c.b16 %v4298, %v4278
        %v4379 = vpack.c.b16 %v4299, %v4279
        %v4380 = vpack.c.b16 %v4300, %v4280
        %v4381 = vpack.c.b16 %v4301, %v4281
        %v4382 = vpack.c.b16 %v4302, %v4282
        %v4383 = vpack.c.b16 %v4303, %v4283
        %v4384 = vpack.c.b16 %v4304, %v4284
        %v4385 = vpack.c.b16 %v4305, %v4285
        %v4386 = vpack.c.b16 %v4306, %v4286
        %v4387 = vpack.c.b16 %v4307, %v4287
        %v4388 = vpack.c.b16 %v4308, %v4288
        %v4389 = vpack.c.b16 %v4309, %v4289
        %v4390 = vpack.c.b16 %v4310, %v4290
        %v4391 = vpack.c.b16 %v4311, %v4291
        %v4392 = vpack.c.b16 %v4312, %v4292
        %v4393 = vpack.c.b16 %v4313, %v4293
        %v4394 = vpack.c.b16 %v4314, %v4294
        %v4395 = vpack.c.b16 %v4315, %v4295
        %v4396 = vpack.c.b16 %v4316, %v4296
        %v4480 = vlaneseq
        %v4481 = vshrl.u32 %v4480, 7
        %v4482 = vsub.s32 0, %v4481
        %v4483 = vrot.slane %v4074, %v4482
        %v4484 = vlaneseq
        %v4485 = vshrl.u32 %v4484, 7
        %v4486 = vsub.s32 1, %v4485
        %v4487 = vrot.slane %v4074, %v4486
        %v4488 = vlaneseq
        %v4489 = vshrl.u32 %v4488, 7
        %v4490 = vsub.s32 2, %v4489
        %v4491 = vrot.slane %v4074, %v4490
        %v4492 = vlaneseq
        %v4493 = vshrl.u32 %v4492, 7
        %v4494 = vsub.s32 3, %v4493
        %v4495 = vrot.slane %v4074, %v4494
        %v4496 = vlaneseq
        %v4497 = vshrl.u32 %v4496, 7
        %v4498 = vsub.s32 4, %v4497
        %v4499 = vrot.slane %v4074, %v4498
        %v4500 = vlaneseq
        %v4501 = vshrl.u32 %v4500, 7
        %v4502 = vsub.s32 5, %v4501
        %v4503 = vrot.slane %v4074, %v4502
        %v4504 = vlaneseq
        %v4505 = vshrl.u32 %v4504, 7
        %v4506 = vsub.s32 6, %v4505
        %v4507 = vrot.slane %v4074, %v4506
        %v4508 = vlaneseq
        %v4509 = vshrl.u32 %v4508, 7
        %v4510 = vsub.s32 7, %v4509
        %v4511 = vrot.slane %v4074, %v4510
        %v4512 = vlaneseq
        %v4513 = vshrl.u32 %v4512, 7
        %v4514 = vsub.s32 0, %v4513
        %v4515 = vrot.slane %v4075, %v4514
        %v4516 = vlaneseq
        %v4517 = vshrl.u32 %v4516, 7
        %v4518 = vsub.s32 1, %v4517
        %v4519 = vrot.slane %v4075, %v4518
        %v4520 = vlaneseq
        %v4521 = vshrl.u32 %v4520, 7
        %v4522 = vsub.s32 2, %v4521
        %v4523 = vrot.slane %v4075, %v4522
        %v4524 = vlaneseq
        %v4525 = vshrl.u32 %v4524, 7
        %v4526 = vsub.s32 3, %v4525
        %v4527 = vrot.slane %v4075, %v4526
        %v4528 = vlaneseq
        %v4529 = vshrl.u32 %v4528, 7
        %v4530 = vsub.s32 4, %v4529
        %v4531 = vrot.slane %v4075, %v4530
        %v4532 = vlaneseq
        %v4533 = vshrl.u32 %v4532, 7
        %v4534 = vsub.s32 5, %v4533
        %v4535 = vrot.slane %v4075, %v4534
        %v4536 = vlaneseq
        %v4537 = vshrl.u32 %v4536, 7
        %v4538 = vsub.s32 6, %v4537
        %v4539 = vrot.slane %v4075, %v4538
        %v4540 = vlaneseq
        %v4541 = vshrl.u32 %v4540, 7
        %v4542 = vsub.s32 7, %v4541
        %v4543 = vrot.slane %v4075, %v4542
        %v4544 = vlaneseq
        %v4545 = vshrl.u32 %v4544, 7
        %v4546 = vsub.s32 0, %v4545
        %v4547 = vrot.slane %v4076, %v4546
        %v4548 = vlaneseq
        %v4549 = vshrl.u32 %v4548, 7
        %v4550 = vsub.s32 1, %v4549
        %v4551 = vrot.slane %v4076, %v4550
        %v4552 = vlaneseq
        %v4553 = vshrl.u32 %v4552, 7
        %v4554 = vsub.s32 2, %v4553
        %v4555 = vrot.slane %v4076, %v4554
        %v4556 = vlaneseq
        %v4557 = vshrl.u32 %v4556, 7
        %v4558 = vsub.s32 3, %v4557
        %v4559 = vrot.slane %v4076, %v4558
        %v4581 = vsel %vm1320, %v3993, 0
        %4583 = vmatprep.subr.bf16.mxu0 %v4318
        %4584 = vmatpush1.bf16.msra.mxu0 %v4317
        %4585 = vmatprep.subr.bf16.mxu0 %v4338
        %4586 = vmatpush1.bf16.msra.mxu0 %v4337
        %4587 = vmatprep.subr.bf16.mxu0 %v4358
        %4588 = vmatpush1.bf16.msra.mxu0 %v4357
        %4589 = vmatprep.subr.bf16.mxu0 %v4378
        %4590 = vmatpush1.bf16.msra.mxu0 %v4377
        %4591 = vmatprep.subr.bf16.mxu0 0
        %4592 = vmatpush1.bf16.msra.mxu0 0
        %4593 = vmatprep.subr.bf16.mxu0 0
        %4594 = vmatpush1.bf16.msra.mxu0 0
        %4595 = vmatprep.subr.bf16.mxu0 0
        %4596 = vmatpush1.bf16.msra.mxu0 0
        %4597 = vmatprep.subr.bf16.mxu0 0
        %4598 = vmatpush1.bf16.msra.mxu0 0
        %4599 = vmatprep.subr.bf16.mxu0 0
        %4600 = vmatpush1.bf16.msra.mxu0 0
        %4601 = vmatprep.subr.bf16.mxu0 0
        %4602 = vmatpush1.bf16.msra.mxu0 0
        %4603 = vmatprep.subr.bf16.mxu0 0
        %4604 = vmatpush1.bf16.msra.mxu0 0
        %4605 = vmatprep.subr.bf16.mxu0 0
        %4606 = vmatpush1.bf16.msra.mxu0 0
        %4607 = vmatprep.subr.bf16.mxu0 0
        %4608 = vmatpush1.bf16.msra.mxu0 0
        %4609 = vmatprep.subr.bf16.mxu0 0
        %4610 = vmatpush1.bf16.msra.mxu0 0
        %4611 = vmatprep.subr.bf16.mxu0 0
        %4612 = vmatpush1.bf16.msra.mxu0 0
        %4613 = vmatprep.subr.bf16.mxu0 0
        %4614 = vmatpush1.bf16.msra.mxu0 0
        %4615 = vmatprep.mubr.bf16.mxu0 0
        %4616 = vmatmul.mubr.bf16.gmra.mrb[0].mxu0 %v4581
        %v4617 = vpop.f32.mrb[0].mxu0
        %v4618 = vadd.f32 %v4483, %v4617
        %v4619 = vpop.f32.mrb[0].mxu0
        %v4620 = vadd.f32 %v4487, %v4619
        %v4621 = vpop.f32.mrb[0].mxu0
        %v4622 = vpop.f32.mrb[0].mxu0
        %4623 = vdwg.mxu0
        %4624 = vmatprep.subr.bf16.mxu0 %v4320
        %4625 = vmatpush1.bf16.msra.mxu0 %v4319
        %4626 = vmatprep.subr.bf16.mxu0 %v4340
        %4627 = vmatpush1.bf16.msra.mxu0 %v4339
        %4628 = vmatprep.subr.bf16.mxu0 %v4360
        %4629 = vmatpush1.bf16.msra.mxu0 %v4359
        %4630 = vmatprep.subr.bf16.mxu0 %v4380
        %4631 = vmatpush1.bf16.msra.mxu0 %v4379
        %4632 = vmatprep.subr.bf16.mxu0 0
        %4633 = vmatpush1.bf16.msra.mxu0 0
        %4634 = vmatprep.subr.bf16.mxu0 0
        %4635 = vmatpush1.bf16.msra.mxu0 0
        %4636 = vmatprep.subr.bf16.mxu0 0
        %4637 = vmatpush1.bf16.msra.mxu0 0
        %4638 = vmatprep.subr.bf16.mxu0 0
        %4639 = vmatpush1.bf16.msra.mxu0 0
        %4640 = vmatprep.subr.bf16.mxu0 0
        %4641 = vmatpush1.bf16.msra.mxu0 0
        %4642 = vmatprep.subr.bf16.mxu0 0
        %4643 = vmatpush1.bf16.msra.mxu0 0
        %4644 = vmatprep.subr.bf16.mxu0 0
        %4645 = vmatpush1.bf16.msra.mxu0 0
        %4646 = vmatprep.subr.bf16.mxu0 0
        %4647 = vmatpush1.bf16.msra.mxu0 0
        %4648 = vmatprep.subr.bf16.mxu0 0
        %4649 = vmatpush1.bf16.msra.mxu0 0
        %4650 = vmatprep.subr.bf16.mxu0 0
        %4651 = vmatpush1.bf16.msra.mxu0 0
        %4652 = vmatprep.subr.bf16.mxu0 0
        %4653 = vmatpush1.bf16.msra.mxu0 0
        %4654 = vmatprep.subr.bf16.mxu0 0
        %4655 = vmatpush1.bf16.msra.mxu0 0
        %4656 = vmatprep.mubr.bf16.mxu0 0
        %4657 = vmatmul.mubr.bf16.gmra.mrb[0].mxu0 %v4581
        %v4658 = vpop.f32.mrb[0].mxu0
        %v4659 = vadd.f32 %v4491, %v4658
        %v4660 = vpop.f32.mrb[0].mxu0
        %v4661 = vadd.f32 %v4495, %v4660
        %v4662 = vpop.f32.mrb[0].mxu0
        %v4663 = vpop.f32.mrb[0].mxu0
        %4664 = vdwg.mxu0
        %4665 = vmatprep.subr.bf16.mxu0 %v4322
        %4666 = vmatpush1.bf16.msra.mxu0 %v4321
        %4667 = vmatprep.subr.bf16.mxu0 %v4342
        %4668 = vmatpush1.bf16.msra.mxu0 %v4341
        %4669 = vmatprep.subr.bf16.mxu0 %v4362
        %4670 = vmatpush1.bf16.msra.mxu0 %v4361
        %4671 = vmatprep.subr.bf16.mxu0 %v4382
        %4672 = vmatpush1.bf16.msra.mxu0 %v4381
        %4673 = vmatprep.subr.bf16.mxu0 0
        %4674 = vmatpush1.bf16.msra.mxu0 0
        %4675 = vmatprep.subr.bf16.mxu0 0
        %4676 = vmatpush1.bf16.msra.mxu0 0
        %4677 = vmatprep.subr.bf16.mxu0 0
        %4678 = vmatpush1.bf16.msra.mxu0 0
        %4679 = vmatprep.subr.bf16.mxu0 0
        %4680 = vmatpush1.bf16.msra.mxu0 0
        %4681 = vmatprep.subr.bf16.mxu0 0
        %4682 = vmatpush1.bf16.msra.mxu0 0
        %4683 = vmatprep.subr.bf16.mxu0 0
        %4684 = vmatpush1.bf16.msra.mxu0 0
        %4685 = vmatprep.subr.bf16.mxu0 0
        %4686 = vmatpush1.bf16.msra.mxu0 0
        %4687 = vmatprep.subr.bf16.mxu0 0
        %4688 = vmatpush1.bf16.msra.mxu0 0
        %4689 = vmatprep.subr.bf16.mxu0 0
        %4690 = vmatpush1.bf16.msra.mxu0 0
        %4691 = vmatprep.subr.bf16.mxu0 0
        %4692 = vmatpush1.bf16.msra.mxu0 0
        %4693 = vmatprep.subr.bf16.mxu0 0
        %4694 = vmatpush1.bf16.msra.mxu0 0
        %4695 = vmatprep.subr.bf16.mxu0 0
        %4696 = vmatpush1.bf16.msra.mxu0 0
        %4697 = vmatprep.mubr.bf16.mxu0 0
        %4698 = vmatmul.mubr.bf16.gmra.mrb[0].mxu0 %v4581
        %v4699 = vpop.f32.mrb[0].mxu0
        %v4700 = vadd.f32 %v4499, %v4699
        %v4701 = vpop.f32.mrb[0].mxu0
        %v4702 = vadd.f32 %v4503, %v4701
        %v4703 = vpop.f32.mrb[0].mxu0
        %v4704 = vpop.f32.mrb[0].mxu0
        %4705 = vdwg.mxu0
        %4706 = vmatprep.subr.bf16.mxu0 %v4324
        %4707 = vmatpush1.bf16.msra.mxu0 %v4323
        %4708 = vmatprep.subr.bf16.mxu0 %v4344
        %4709 = vmatpush1.bf16.msra.mxu0 %v4343
        %4710 = vmatprep.subr.bf16.mxu0 %v4364
        %4711 = vmatpush1.bf16.msra.mxu0 %v4363
        %4712 = vmatprep.subr.bf16.mxu0 %v4384
        %4713 = vmatpush1.bf16.msra.mxu0 %v4383
        %4714 = vmatprep.subr.bf16.mxu0 0
        %4715 = vmatpush1.bf16.msra.mxu0 0
        %4716 = vmatprep.subr.bf16.mxu0 0
        %4717 = vmatpush1.bf16.msra.mxu0 0
        %4718 = vmatprep.subr.bf16.mxu0 0
        %4719 = vmatpush1.bf16.msra.mxu0 0
        %4720 = vmatprep.subr.bf16.mxu0 0
        %4721 = vmatpush1.bf16.msra.mxu0 0
        %4722 = vmatprep.subr.bf16.mxu0 0
        %4723 = vmatpush1.bf16.msra.mxu0 0
        %4724 = vmatprep.subr.bf16.mxu0 0
        %4725 = vmatpush1.bf16.msra.mxu0 0
        %4726 = vmatprep.subr.bf16.mxu0 0
        %4727 = vmatpush1.bf16.msra.mxu0 0
        %4728 = vmatprep.subr.bf16.mxu0 0
        %4729 = vmatpush1.bf16.msra.mxu0 0
        %4730 = vmatprep.subr.bf16.mxu0 0
        %4731 = vmatpush1.bf16.msra.mxu0 0
        %4732 = vmatprep.subr.bf16.mxu0 0
        %4733 = vmatpush1.bf16.msra.mxu0 0
        %4734 = vmatprep.subr.bf16.mxu0 0
        %4735 = vmatpush1.bf16.msra.mxu0 0
        %4736 = vmatprep.subr.bf16.mxu0 0
        %4737 = vmatpush1.bf16.msra.mxu0 0
        %4738 = vmatprep.mubr.bf16.mxu0 0
        %4739 = vmatmul.mubr.bf16.gmra.mrb[0].mxu0 %v4581
        %v4740 = vpop.f32.mrb[0].mxu0
        %v4741 = vadd.f32 %v4507, %v4740
        %v4742 = vpop.f32.mrb[0].mxu0
        %v4743 = vadd.f32 %v4511, %v4742
        %v4744 = vpop.f32.mrb[0].mxu0
        %v4745 = vpop.f32.mrb[0].mxu0
        %4746 = vdwg.mxu0
        %4747 = vmatprep.subr.bf16.mxu0 %v4326
        %4748 = vmatpush1.bf16.msra.mxu0 %v4325
        %4749 = vmatprep.subr.bf16.mxu0 %v4346
        %4750 = vmatpush1.bf16.msra.mxu0 %v4345
        %4751 = vmatprep.subr.bf16.mxu0 %v4366
        %4752 = vmatpush1.bf16.msra.mxu0 %v4365
        %4753 = vmatprep.subr.bf16.mxu0 %v4386
        %4754 = vmatpush1.bf16.msra.mxu0 %v4385
        %4755 = vmatprep.subr.bf16.mxu0 0
        %4756 = vmatpush1.bf16.msra.mxu0 0
        %4757 = vmatprep.subr.bf16.mxu0 0
        %4758 = vmatpush1.bf16.msra.mxu0 0
        %4759 = vmatprep.subr.bf16.mxu0 0
        %4760 = vmatpush1.bf16.msra.mxu0 0
        %4761 = vmatprep.subr.bf16.mxu0 0
        %4762 = vmatpush1.bf16.msra.mxu0 0
        %4763 = vmatprep.subr.bf16.mxu0 0
        %4764 = vmatpush1.bf16.msra.mxu0 0
        %4765 = vmatprep.subr.bf16.mxu0 0
        %4766 = vmatpush1.bf16.msra.mxu0 0
        %4767 = vmatprep.subr.bf16.mxu0 0
        %4768 = vmatpush1.bf16.msra.mxu0 0
        %4769 = vmatprep.subr.bf16.mxu0 0
        %4770 = vmatpush1.bf16.msra.mxu0 0
        %4771 = vmatprep.subr.bf16.mxu0 0
        %4772 = vmatpush1.bf16.msra.mxu0 0
        %4773 = vmatprep.subr.bf16.mxu0 0
        %4774 = vmatpush1.bf16.msra.mxu0 0
        %4775 = vmatprep.subr.bf16.mxu0 0
        %4776 = vmatpush1.bf16.msra.mxu0 0
        %4777 = vmatprep.subr.bf16.mxu0 0
        %4778 = vmatpush1.bf16.msra.mxu0 0
        %4779 = vmatprep.mubr.bf16.mxu0 0
        %4780 = vmatmul.mubr.bf16.gmra.mrb[0].mxu0 %v4581
        %v4781 = vpop.f32.mrb[0].mxu0
        %v4782 = vadd.f32 %v4515, %v4781
        %v4783 = vpop.f32.mrb[0].mxu0
        %v4784 = vadd.f32 %v4519, %v4783
        %v4785 = vpop.f32.mrb[0].mxu0
        %v4786 = vpop.f32.mrb[0].mxu0
        %4787 = vdwg.mxu0
        %4788 = vmatprep.subr.bf16.mxu0 %v4328
        %4789 = vmatpush1.bf16.msra.mxu0 %v4327
        %4790 = vmatprep.subr.bf16.mxu0 %v4348
        %4791 = vmatpush1.bf16.msra.mxu0 %v4347
        %4792 = vmatprep.subr.bf16.mxu0 %v4368
        %4793 = vmatpush1.bf16.msra.mxu0 %v4367
        %4794 = vmatprep.subr.bf16.mxu0 %v4388
        %4795 = vmatpush1.bf16.msra.mxu0 %v4387
        %4796 = vmatprep.subr.bf16.mxu0 0
        %4797 = vmatpush1.bf16.msra.mxu0 0
        %4798 = vmatprep.subr.bf16.mxu0 0
        %4799 = vmatpush1.bf16.msra.mxu0 0
        %4800 = vmatprep.subr.bf16.mxu0 0
        %4801 = vmatpush1.bf16.msra.mxu0 0
        %4802 = vmatprep.subr.bf16.mxu0 0
        %4803 = vmatpush1.bf16.msra.mxu0 0
        %4804 = vmatprep.subr.bf16.mxu0 0
        %4805 = vmatpush1.bf16.msra.mxu0 0
        %4806 = vmatprep.subr.bf16.mxu0 0
        %4807 = vmatpush1.bf16.msra.mxu0 0
        %4808 = vmatprep.subr.bf16.mxu0 0
        %4809 = vmatpush1.bf16.msra.mxu0 0
        %4810 = vmatprep.subr.bf16.mxu0 0
        %4811 = vmatpush1.bf16.msra.mxu0 0
        %4812 = vmatprep.subr.bf16.mxu0 0
        %4813 = vmatpush1.bf16.msra.mxu0 0
        %4814 = vmatprep.subr.bf16.mxu0 0
        %4815 = vmatpush1.bf16.msra.mxu0 0
        %4816 = vmatprep.subr.bf16.mxu0 0
        %4817 = vmatpush1.bf16.msra.mxu0 0
        %4818 = vmatprep.subr.bf16.mxu0 0
        %4819 = vmatpush1.bf16.msra.mxu0 0
        %4820 = vmatprep.mubr.bf16.mxu0 0
        %4821 = vmatmul.mubr.bf16.gmra.mrb[0].mxu0 %v4581
        %v4822 = vpop.f32.mrb[0].mxu0
        %v4823 = vadd.f32 %v4523, %v4822
        %v4824 = vpop.f32.mrb[0].mxu0
        %v4825 = vadd.f32 %v4527, %v4824
        %v4826 = vpop.f32.mrb[0].mxu0
        %v4827 = vpop.f32.mrb[0].mxu0
        %4828 = vdwg.mxu0
        %4829 = vmatprep.subr.bf16.mxu0 %v4330
        %4830 = vmatpush1.bf16.msra.mxu0 %v4329
        %4831 = vmatprep.subr.bf16.mxu0 %v4350
        %4832 = vmatpush1.bf16.msra.mxu0 %v4349
        %4833 = vmatprep.subr.bf16.mxu0 %v4370
        %4834 = vmatpush1.bf16.msra.mxu0 %v4369
        %4835 = vmatprep.subr.bf16.mxu0 %v4390
        %4836 = vmatpush1.bf16.msra.mxu0 %v4389
        %4837 = vmatprep.subr.bf16.mxu0 0
        %4838 = vmatpush1.bf16.msra.mxu0 0
        %4839 = vmatprep.subr.bf16.mxu0 0
        %4840 = vmatpush1.bf16.msra.mxu0 0
        %4841 = vmatprep.subr.bf16.mxu0 0
        %4842 = vmatpush1.bf16.msra.mxu0 0
        %4843 = vmatprep.subr.bf16.mxu0 0
        %4844 = vmatpush1.bf16.msra.mxu0 0
        %4845 = vmatprep.subr.bf16.mxu0 0
        %4846 = vmatpush1.bf16.msra.mxu0 0
        %4847 = vmatprep.subr.bf16.mxu0 0
        %4848 = vmatpush1.bf16.msra.mxu0 0
        %4849 = vmatprep.subr.bf16.mxu0 0
        %4850 = vmatpush1.bf16.msra.mxu0 0
        %4851 = vmatprep.subr.bf16.mxu0 0
        %4852 = vmatpush1.bf16.msra.mxu0 0
        %4853 = vmatprep.subr.bf16.mxu0 0
        %4854 = vmatpush1.bf16.msra.mxu0 0
        %4855 = vmatprep.subr.bf16.mxu0 0
        %4856 = vmatpush1.bf16.msra.mxu0 0
        %4857 = vmatprep.subr.bf16.mxu0 0
        %4858 = vmatpush1.bf16.msra.mxu0 0
        %4859 = vmatprep.subr.bf16.mxu0 0
        %4860 = vmatpush1.bf16.msra.mxu0 0
        %4861 = vmatprep.mubr.bf16.mxu0 0
        %4862 = vmatmul.mubr.bf16.gmra.mrb[0].mxu0 %v4581
        %v4863 = vpop.f32.mrb[0].mxu0
        %v4864 = vadd.f32 %v4531, %v4863
        %v4865 = vpop.f32.mrb[0].mxu0
        %v4866 = vadd.f32 %v4535, %v4865
        %v4867 = vpop.f32.mrb[0].mxu0
        %v4868 = vpop.f32.mrb[0].mxu0
        %4869 = vdwg.mxu0
        %4870 = vmatprep.subr.bf16.mxu0 %v4332
        %4871 = vmatpush1.bf16.msra.mxu0 %v4331
        %4872 = vmatprep.subr.bf16.mxu0 %v4352
        %4873 = vmatpush1.bf16.msra.mxu0 %v4351
        %4874 = vmatprep.subr.bf16.mxu0 %v4372
        %4875 = vmatpush1.bf16.msra.mxu0 %v4371
        %4876 = vmatprep.subr.bf16.mxu0 %v4392
        %4877 = vmatpush1.bf16.msra.mxu0 %v4391
        %4878 = vmatprep.subr.bf16.mxu0 0
        %4879 = vmatpush1.bf16.msra.mxu0 0
        %4880 = vmatprep.subr.bf16.mxu0 0
        %4881 = vmatpush1.bf16.msra.mxu0 0
        %4882 = vmatprep.subr.bf16.mxu0 0
        %4883 = vmatpush1.bf16.msra.mxu0 0
        %4884 = vmatprep.subr.bf16.mxu0 0
        %4885 = vmatpush1.bf16.msra.mxu0 0
        %4886 = vmatprep.subr.bf16.mxu0 0
        %4887 = vmatpush1.bf16.msra.mxu0 0
        %4888 = vmatprep.subr.bf16.mxu0 0
        %4889 = vmatpush1.bf16.msra.mxu0 0
        %4890 = vmatprep.subr.bf16.mxu0 0
        %4891 = vmatpush1.bf16.msra.mxu0 0
        %4892 = vmatprep.subr.bf16.mxu0 0
        %4893 = vmatpush1.bf16.msra.mxu0 0
        %4894 = vmatprep.subr.bf16.mxu0 0
        %4895 = vmatpush1.bf16.msra.mxu0 0
        %4896 = vmatprep.subr.bf16.mxu0 0
        %4897 = vmatpush1.bf16.msra.mxu0 0
        %4898 = vmatprep.subr.bf16.mxu0 0
        %4899 = vmatpush1.bf16.msra.mxu0 0
        %4900 = vmatprep.subr.bf16.mxu0 0
        %4901 = vmatpush1.bf16.msra.mxu0 0
        %4902 = vmatprep.mubr.bf16.mxu0 0
        %4903 = vmatmul.mubr.bf16.gmra.mrb[0].mxu0 %v4581
        %v4904 = vpop.f32.mrb[0].mxu0
        %v4905 = vadd.f32 %v4539, %v4904
        %v4906 = vpop.f32.mrb[0].mxu0
        %v4907 = vadd.f32 %v4543, %v4906
        %v4908 = vpop.f32.mrb[0].mxu0
        %v4909 = vpop.f32.mrb[0].mxu0
        %4910 = vdwg.mxu0
        %4911 = vmatprep.subr.bf16.mxu0 %v4334
        %4912 = vmatpush1.bf16.msra.mxu0 %v4333
        %4913 = vmatprep.subr.bf16.mxu0 %v4354
        %4914 = vmatpush1.bf16.msra.mxu0 %v4353
        %4915 = vmatprep.subr.bf16.mxu0 %v4374
        %4916 = vmatpush1.bf16.msra.mxu0 %v4373
        %4917 = vmatprep.subr.bf16.mxu0 %v4394
        %4918 = vmatpush1.bf16.msra.mxu0 %v4393
        %4919 = vmatprep.subr.bf16.mxu0 0
        %4920 = vmatpush1.bf16.msra.mxu0 0
        %4921 = vmatprep.subr.bf16.mxu0 0
        %4922 = vmatpush1.bf16.msra.mxu0 0
        %4923 = vmatprep.subr.bf16.mxu0 0
        %4924 = vmatpush1.bf16.msra.mxu0 0
        %4925 = vmatprep.subr.bf16.mxu0 0
        %4926 = vmatpush1.bf16.msra.mxu0 0
        %4927 = vmatprep.subr.bf16.mxu0 0
        %4928 = vmatpush1.bf16.msra.mxu0 0
        %4929 = vmatprep.subr.bf16.mxu0 0
        %4930 = vmatpush1.bf16.msra.mxu0 0
        %4931 = vmatprep.subr.bf16.mxu0 0
        %4932 = vmatpush1.bf16.msra.mxu0 0
        %4933 = vmatprep.subr.bf16.mxu0 0
        %4934 = vmatpush1.bf16.msra.mxu0 0
        %4935 = vmatprep.subr.bf16.mxu0 0
        %4936 = vmatpush1.bf16.msra.mxu0 0
        %4937 = vmatprep.subr.bf16.mxu0 0
        %4938 = vmatpush1.bf16.msra.mxu0 0
        %4939 = vmatprep.subr.bf16.mxu0 0
        %4940 = vmatpush1.bf16.msra.mxu0 0
        %4941 = vmatprep.subr.bf16.mxu0 0
        %4942 = vmatpush1.bf16.msra.mxu0 0
        %4943 = vmatprep.mubr.bf16.mxu0 0
        %4944 = vmatmul.mubr.bf16.gmra.mrb[0].mxu0 %v4581
        %v4945 = vpop.f32.mrb[0].mxu0
        %v4946 = vadd.f32 %v4547, %v4945
        %v4947 = vpop.f32.mrb[0].mxu0
        %v4948 = vadd.f32 %v4551, %v4947
        %v4949 = vpop.f32.mrb[0].mxu0
        %v4950 = vpop.f32.mrb[0].mxu0
        %4951 = vdwg.mxu0
        %4952 = vmatprep.subr.bf16.mxu0 %v4336
        %4953 = vmatpush1.bf16.msra.mxu0 %v4335
        %4954 = vmatprep.subr.bf16.mxu0 %v4356
        %4955 = vmatpush1.bf16.msra.mxu0 %v4355
        %4956 = vmatprep.subr.bf16.mxu0 %v4376
        %4957 = vmatpush1.bf16.msra.mxu0 %v4375
        %4958 = vmatprep.subr.bf16.mxu0 %v4396
        %4959 = vmatpush1.bf16.msra.mxu0 %v4395
        %4960 = vmatprep.subr.bf16.mxu0 0
        %4961 = vmatpush1.bf16.msra.mxu0 0
        %4962 = vmatprep.subr.bf16.mxu0 0
        %4963 = vmatpush1.bf16.msra.mxu0 0
        %4964 = vmatprep.subr.bf16.mxu0 0
        %4965 = vmatpush1.bf16.msra.mxu0 0
        %4966 = vmatprep.subr.bf16.mxu0 0
        %4967 = vmatpush1.bf16.msra.mxu0 0
        %4968 = vmatprep.subr.bf16.mxu0 0
        %4969 = vmatpush1.bf16.msra.mxu0 0
        %4970 = vmatprep.subr.bf16.mxu0 0
        %4971 = vmatpush1.bf16.msra.mxu0 0
        %4972 = vmatprep.subr.bf16.mxu0 0
        %4973 = vmatpush1.bf16.msra.mxu0 0
        %4974 = vmatprep.subr.bf16.mxu0 0
        %4975 = vmatpush1.bf16.msra.mxu0 0
        %4976 = vmatprep.subr.bf16.mxu0 0
        %4977 = vmatpush1.bf16.msra.mxu0 0
        %4978 = vmatprep.subr.bf16.mxu0 0
        %4979 = vmatpush1.bf16.msra.mxu0 0
        %4980 = vmatprep.subr.bf16.mxu0 0
        %4981 = vmatpush1.bf16.msra.mxu0 0
        %4982 = vmatprep.subr.bf16.mxu0 0
        %4983 = vmatpush1.bf16.msra.mxu0 0
        %4984 = vmatprep.mubr.bf16.mxu0 0
        %4985 = vmatmul.mubr.bf16.gmra.mrb[0].mxu0 %v4581
        %v4986 = vpop.f32.mrb[0].mxu0
        %v4987 = vadd.f32 %v4555, %v4986
        %v4988 = vpop.f32.mrb[0].mxu0
        %v4989 = vadd.f32 %v4559, %v4988
        %v4990 = vpop.f32.mrb[0].mxu0
        %v4991 = vpop.f32.mrb[0].mxu0
        %4992 = vdwg.mxu0
        %v4993 = vmax.f32 %v4618, 0.0
        %v4994 = vmax.f32 %v4620, 0.0
        %v4995 = vmax.f32 %v4659, 0.0
        %v4996 = vmax.f32 %v4661, 0.0
        %v4997 = vmax.f32 %v4700, 0.0
        %v4998 = vmax.f32 %v4702, 0.0
        %v4999 = vmax.f32 %v4741, 0.0
        %v5000 = vmax.f32 %v4743, 0.0
        %v5001 = vmax.f32 %v4782, 0.0
        %v5002 = vmax.f32 %v4784, 0.0
        %v5003 = vmax.f32 %v4823, 0.0
        %v5004 = vmax.f32 %v4825, 0.0
        %v5005 = vmax.f32 %v4864, 0.0
        %v5006 = vmax.f32 %v4866, 0.0
        %v5007 = vmax.f32 %v4905, 0.0
        %v5008 = vmax.f32 %v4907, 0.0
        %v5009 = vmax.f32 %v4946, 0.0
        %v5010 = vmax.f32 %v4948, 0.0
        %v5011 = vmax.f32 %v4987, 0.0
        %v5012 = vmax.f32 %v4989, 0.0
        %vm5013 = vcmask 516096
        %5014 = vst.msk [vmem:[#allocation5] sm:$0x1] %vm5013, 0.0
        %5015 = vst.msk [vmem:[#allocation5 + $0x29] sm:$0x1] %vm5013, 0.0
        %5016 = vst.msk [vmem:[#allocation5 + $0x1] sm:$0x1] %vm5013, %v4993
        %5018 = vrot.lane.b32.xlu0 %v4993, 64
        %v5019 = vpop.permute.xlu0 %5018
        %5021 = vst.msk [vmem:[#allocation5 + $0x2] sm:$0x1] %vm5013, %v5019
        %5022 = vst.msk [vmem:[#allocation5 + $0x3] sm:$0x1] %vm5013, %v4994
        %5024 = vrot.lane.b32.xlu0 %v4994, 64
        %v5025 = vpop.permute.xlu0 %5024
        %5027 = vst.msk [vmem:[#allocation5 + $0x4] sm:$0x1] %vm5013, %v5025
        %5028 = vst.msk [vmem:[#allocation5 + $0x5] sm:$0x1] %vm5013, %v4995
        %5030 = vrot.lane.b32.xlu0 %v4995, 64
        %v5031 = vpop.permute.xlu0 %5030
        %5033 = vst.msk [vmem:[#allocation5 + $0x6] sm:$0x1] %vm5013, %v5031
        %5034 = vst.msk [vmem:[#allocation5 + $0x7] sm:$0x1] %vm5013, %v4996
        %5036 = vrot.lane.b32.xlu0 %v4996, 64
        %v5037 = vpop.permute.xlu0 %5036
        %5039 = vst.msk [vmem:[#allocation5 + $0x8] sm:$0x1] %vm5013, %v5037
        %5040 = vst.msk [vmem:[#allocation5 + $0x9] sm:$0x1] %vm5013, %v4997
        %5042 = vrot.lane.b32.xlu0 %v4997, 64
        %v5043 = vpop.permute.xlu0 %5042
        %5045 = vst.msk [vmem:[#allocation5 + $0xa] sm:$0x1] %vm5013, %v5043
        %5046 = vst.msk [vmem:[#allocation5 + $0xb] sm:$0x1] %vm5013, %v4998
        %5048 = vrot.lane.b32.xlu0 %v4998, 64
        %v5049 = vpop.permute.xlu0 %5048
        %5051 = vst.msk [vmem:[#allocation5 + $0xc] sm:$0x1] %vm5013, %v5049
        %5052 = vst.msk [vmem:[#allocation5 + $0xd] sm:$0x1] %vm5013, %v4999
        %5054 = vrot.lane.b32.xlu0 %v4999, 64
        %v5055 = vpop.permute.xlu0 %5054
        %5057 = vst.msk [vmem:[#allocation5 + $0xe] sm:$0x1] %vm5013, %v5055
        %5058 = vst.msk [vmem:[#allocation5 + $0xf] sm:$0x1] %vm5013, %v5000
        %5060 = vrot.lane.b32.xlu0 %v5000, 64
        %v5061 = vpop.permute.xlu0 %5060
        %5063 = vst.msk [vmem:[#allocation5 + $0x10] sm:$0x1] %vm5013, %v5061
        %5064 = vst.msk [vmem:[#allocation5 + $0x11] sm:$0x1] %vm5013, %v5001
        %5066 = vrot.lane.b32.xlu0 %v5001, 64
        %v5067 = vpop.permute.xlu0 %5066
        %5069 = vst.msk [vmem:[#allocation5 + $0x12] sm:$0x1] %vm5013, %v5067
        %5070 = vst.msk [vmem:[#allocation5 + $0x13] sm:$0x1] %vm5013, %v5002
        %5072 = vrot.lane.b32.xlu0 %v5002, 64
        %v5073 = vpop.permute.xlu0 %5072
        %5075 = vst.msk [vmem:[#allocation5 + $0x14] sm:$0x1] %vm5013, %v5073
        %5076 = vst.msk [vmem:[#allocation5 + $0x15] sm:$0x1] %vm5013, %v5003
        %5078 = vrot.lane.b32.xlu0 %v5003, 64
        %v5079 = vpop.permute.xlu0 %5078
        %5081 = vst.msk [vmem:[#allocation5 + $0x16] sm:$0x1] %vm5013, %v5079
        %5082 = vst.msk [vmem:[#allocation5 + $0x17] sm:$0x1] %vm5013, %v5004
        %5084 = vrot.lane.b32.xlu0 %v5004, 64
        %v5085 = vpop.permute.xlu0 %5084
        %5087 = vst.msk [vmem:[#allocation5 + $0x18] sm:$0x1] %vm5013, %v5085
        %5088 = vst.msk [vmem:[#allocation5 + $0x19] sm:$0x1] %vm5013, %v5005
        %5090 = vrot.lane.b32.xlu0 %v5005, 64
        %v5091 = vpop.permute.xlu0 %5090
        %5093 = vst.msk [vmem:[#allocation5 + $0x1a] sm:$0x1] %vm5013, %v5091
        %5094 = vst.msk [vmem:[#allocation5 + $0x1b] sm:$0x1] %vm5013, %v5006
        %5096 = vrot.lane.b32.xlu0 %v5006, 64
        %v5097 = vpop.permute.xlu0 %5096
        %5099 = vst.msk [vmem:[#allocation5 + $0x1c] sm:$0x1] %vm5013, %v5097
        %5100 = vst.msk [vmem:[#allocation5 + $0x1d] sm:$0x1] %vm5013, %v5007
        %5102 = vrot.lane.b32.xlu0 %v5007, 64
        %v5103 = vpop.permute.xlu0 %5102
        %5105 = vst.msk [vmem:[#allocation5 + $0x1e] sm:$0x1] %vm5013, %v5103
        %5106 = vst.msk [vmem:[#allocation5 + $0x1f] sm:$0x1] %vm5013, %v5008
        %5108 = vrot.lane.b32.xlu0 %v5008, 64
        %v5109 = vpop.permute.xlu0 %5108
        %5111 = vst.msk [vmem:[#allocation5 + $0x20] sm:$0x1] %vm5013, %v5109
        %5112 = vst.msk [vmem:[#allocation5 + $0x21] sm:$0x1] %vm5013, %v5009
        %5114 = vrot.lane.b32.xlu0 %v5009, 64
        %v5115 = vpop.permute.xlu0 %5114
        %5117 = vst.msk [vmem:[#allocation5 + $0x22] sm:$0x1] %vm5013, %v5115
        %5118 = vst.msk [vmem:[#allocation5 + $0x23] sm:$0x1] %vm5013, %v5010
        %5120 = vrot.lane.b32.xlu0 %v5010, 64
        %v5121 = vpop.permute.xlu0 %5120
        %5123 = vst.msk [vmem:[#allocation5 + $0x24] sm:$0x1] %vm5013, %v5121
        %5124 = vst.msk [vmem:[#allocation5 + $0x25] sm:$0x1] %vm5013, %v5011
        %5126 = vrot.lane.b32.xlu0 %v5011, 64
        %v5127 = vpop.permute.xlu0 %5126
        %5129 = vst.msk [vmem:[#allocation5 + $0x26] sm:$0x1] %vm5013, %v5127
        %5130 = vst.msk [vmem:[#allocation5 + $0x27] sm:$0x1] %vm5013, %v5012
        %5132 = vrot.lane.b32.xlu0 %v5012, 64
        %v5133 = vpop.permute.xlu0 %5132
        %5135 = vst.msk [vmem:[#allocation5 + $0x28] sm:$0x1] %vm5013, %v5133
        %v5136 = vld [vmem:[#allocation5 + $0x1] sm:$0xff]
        %v5137 = vld [vmem:[#allocation5 + $0x9] sm:$0xff]
        %v5138 = vld [vmem:[#allocation5 + $0x11] sm:$0xff]
        %v5139 = vld [vmem:[#allocation5 + $0x19] sm:$0xff]
        %v5140 = vld [vmem:[#allocation5 + $0x21] sm:$0xff]
        %v5141 = vld [vmem:[#allocation5 + $0x29] sm:$0x1]
        %v5142 = vld [vmem:[#allocation5] sm:$0xff]
        %v5143 = vld [vmem:[#allocation5 + $0x8] sm:$0xff]
        %v5144 = vld [vmem:[#allocation5 + $0x10] sm:$0xff]
        %v5145 = vld [vmem:[#allocation5 + $0x18] sm:$0xff]
        %v5146 = vld [vmem:[#allocation5 + $0x20] sm:$0xff]
        %v5147 = vld [vmem:[#allocation5 + $0x28] sm:$0x1]
        %v5148 = vld [vmem:[%s17] sm:$0xff]
        %v5149 = vld [vmem:[%s17 + $0x8] sm:$0xff]
        %v5150 = vld [vmem:[%s17 + $0x10] sm:$0xff]
        %v5151 = vld [vmem:[%s17 + $0x18] sm:$0xff]
        %v5152 = vld [vmem:[%s17 + $0x20] sm:$0xff]
        %v5153 = vld [vmem:[%s17 + $0x28] sm:$0xff]
        %v5154 = vld [vmem:[%s17 + $0x30] sm:$0xff]
        %v5155 = vld [vmem:[%s17 + $0x38] sm:$0xff]
        %v5157 = vsel %vm1320, %v5136, 0
        %v5160 = vsel %vm1320, %v5137, 0
        %v5163 = vsel %vm1320, %v5138, 0
        %v5166 = vsel %vm1320, %v5139, 0
        %v5169 = vsel %vm1320, %v5140, 0
        %v5172 = vsel %vm1320, %v5141, 0
        %5174 = vmatprep.subr.mxu0 0.0
        %5175 = vmatpush1.msra.mxu0 %v5148
        %5176 = vmatprep.subr.mxu0 0.0
        %5177 = vmatpush1.msra.mxu0 %v5149
        %5178 = vmatprep.subr.mxu0 0.0
        %5179 = vmatpush1.msra.mxu0 %v5150
        %5180 = vmatprep.subr.mxu0 0.0
        %5181 = vmatpush1.msra.mxu0 %v5151
        %5182 = vmatprep.subr.mxu0 0.0
        %5183 = vmatpush1.msra.mxu0 %v5152
        %5184 = vmatprep.subr.mxu0 0.0
        %5185 = vmatpush1.msra.mxu0 %v5153
        %5186 = vmatprep.subr.mxu0 0.0
        %5187 = vmatpush1.msra.mxu0 %v5154
        %5188 = vmatprep.subr.mxu0 0.0
        %5189 = vmatpush1.msra.mxu0 %v5155
        %5190 = vmatprep.subr.mxu0 0.0
        %5191 = vmatpush1.msra.mxu0 0.0
        %5192 = vmatprep.subr.mxu0 0.0
        %5193 = vmatpush1.msra.mxu0 0.0
        %5194 = vmatprep.subr.mxu0 0.0
        %5195 = vmatpush1.msra.mxu0 0.0
        %5196 = vmatprep.subr.mxu0 0.0
        %5197 = vmatpush1.msra.mxu0 0.0
        %5198 = vmatprep.subr.mxu0 0.0
        %5199 = vmatpush1.msra.mxu0 0.0
        %5200 = vmatprep.subr.mxu0 0.0
        %5201 = vmatpush1.msra.mxu0 0.0
        %5202 = vmatprep.subr.mxu0 0.0
        %5203 = vmatpush1.msra.mxu0 0.0
        %5204 = vmatprep.subr.mxu0 0.0
        %5205 = vmatpush1.msra.mxu0 0.0
        %5206 = vmatprep.subr.mxu0 0.0
        %5207 = vmatpush1.msra.mxu0 0.0
        %5208 = vmatprep.subr.mxu0 0.0
        %5209 = vmatpush1.msra.mxu0 0.0
        %5210 = vmatprep.subr.mxu0 0.0
        %5211 = vmatpush1.msra.mxu0 0.0
        %5212 = vmatprep.subr.mxu0 0.0
        %5213 = vmatpush1.msra.mxu0 0.0
        %5214 = vmatprep.subr.mxu0 0.0
        %5215 = vmatpush1.msra.mxu0 0.0
        %5216 = vmatprep.subr.mxu0 0.0
        %5217 = vmatpush1.msra.mxu0 0.0
        %5218 = vmatprep.subr.mxu0 0.0
        %5219 = vmatpush1.msra.mxu0 0.0
        %5220 = vmatprep.subr.mxu0 0.0
        %5221 = vmatpush1.msra.mxu0 0.0
        %5222 = vmatprep.subr.mxu0 0.0
        %5223 = vmatpush1.msra.mxu0 0.0
        %5224 = vmatprep.subr.mxu0 0.0
        %5225 = vmatpush1.msra.mxu0 0.0
        %5226 = vmatprep.subr.mxu0 0.0
        %5227 = vmatpush1.msra.mxu0 0.0
        %5228 = vmatprep.subr.mxu0 0.0
        %5229 = vmatpush1.msra.mxu0 0.0
        %5230 = vmatprep.subr.mxu0 0.0
        %5231 = vmatpush1.msra.mxu0 0.0
        %5232 = vmatprep.subr.mxu0 0.0
        %5233 = vmatpush1.msra.mxu0 0.0
        %5234 = vmatprep.subr.mxu0 0.0
        %5235 = vmatpush1.msra.mxu0 0.0
        %5236 = vmatprep.subr.mxu0 0.0
        %5237 = vmatpush1.msra.mxu0 0.0
        %5238 = vmatprep.mubr.f32.mxu0 0.0
        %5239 = vmatmul.mubr.f32.gmra.mrb[0].mxu0 %v5157
        %v5240 = vpop.f32.mrb[0].mxu0
        %v5241 = vadd.f32 0.0, %v5240
        %v5242 = vpop.f32.mrb[0].mxu0
        %5243 = vmatprep.mubr.f32.mxu0 0.0
        %5244 = vmatmul.mubr.f32.gmra.mrb[0].mxu0 %v5160
        %v5245 = vpop.f32.mrb[0].mxu0
        %v5246 = vadd.f32 0.0, %v5245
        %v5247 = vpop.f32.mrb[0].mxu0
        %5248 = vmatprep.mubr.f32.mxu0 0.0
        %5249 = vmatmul.mubr.f32.gmra.mrb[0].mxu0 %v5163
        %v5250 = vpop.f32.mrb[0].mxu0
        %v5251 = vadd.f32 0.0, %v5250
        %v5252 = vpop.f32.mrb[0].mxu0
        %5253 = vmatprep.mubr.f32.mxu0 0.0
        %5254 = vmatmul.mubr.f32.gmra.mrb[0].mxu0 %v5166
        %v5255 = vpop.f32.mrb[0].mxu0
        %v5256 = vadd.f32 0.0, %v5255
        %v5257 = vpop.f32.mrb[0].mxu0
        %5258 = vmatprep.mubr.f32.mxu0 0.0
        %5259 = vmatmul.mubr.f32.gmra.mrb[0].mxu0 %v5169
        %v5260 = vpop.f32.mrb[0].mxu0
        %v5261 = vadd.f32 0.0, %v5260
        %v5262 = vpop.f32.mrb[0].mxu0
        %5263 = vmatprep.mubr.f32.mxu0 0.0
        %5264 = vmatmul.mubr.f32.gmra.mrb[0].mxu0 %v5172
        %v5265 = vpop.f32.mrb[0].mxu0
        %v5266 = vadd.f32 0.0, %v5265
        %v5267 = vpop.f32.mrb[0].mxu0
        %5268 = vdwg.mxu0
        %5277 = vrot.lane.b32.xlu0 %v5148, 64
        %v5278 = vpop.permute.xlu0 %5277
        %5279 = vrot.lane.b32.xlu0 %v5149, 64
        %v5280 = vpop.permute.xlu0 %5279
        %5281 = vrot.lane.b32.xlu0 %v5150, 64
        %v5282 = vpop.permute.xlu0 %5281
        %5283 = vrot.lane.b32.xlu0 %v5151, 64
        %v5284 = vpop.permute.xlu0 %5283
        %5285 = vrot.lane.b32.xlu0 %v5152, 64
        %v5286 = vpop.permute.xlu0 %5285
        %5287 = vrot.lane.b32.xlu0 %v5153, 64
        %v5288 = vpop.permute.xlu0 %5287
        %5289 = vrot.lane.b32.xlu0 %v5154, 64
        %v5290 = vpop.permute.xlu0 %5289
        %5291 = vrot.lane.b32.xlu0 %v5155, 64
        %v5292 = vpop.permute.xlu0 %5291
        %v5302 = vsel %vm1320, %v5142, 0
        %v5305 = vsel %vm1320, %v5143, 0
        %v5308 = vsel %vm1320, %v5144, 0
        %v5311 = vsel %vm1320, %v5145, 0
        %v5314 = vsel %vm1320, %v5146, 0
        %v5317 = vsel %vm1320, %v5147, 0
        %5319 = vmatprep.subr.mxu0 0.0
        %5320 = vmatpush1.msra.mxu0 %v5278
        %5321 = vmatprep.subr.mxu0 0.0
        %5322 = vmatpush1.msra.mxu0 %v5280
        %5323 = vmatprep.subr.mxu0 0.0
        %5324 = vmatpush1.msra.mxu0 %v5282
        %5325 = vmatprep.subr.mxu0 0.0
        %5326 = vmatpush1.msra.mxu0 %v5284
        %5327 = vmatprep.subr.mxu0 0.0
        %5328 = vmatpush1.msra.mxu0 %v5286
        %5329 = vmatprep.subr.mxu0 0.0
        %5330 = vmatpush1.msra.mxu0 %v5288
        %5331 = vmatprep.subr.mxu0 0.0
        %5332 = vmatpush1.msra.mxu0 %v5290
        %5333 = vmatprep.subr.mxu0 0.0
        %5334 = vmatpush1.msra.mxu0 %v5292
        %5335 = vmatprep.subr.mxu0 0.0
        %5336 = vmatpush1.msra.mxu0 0.0
        %5337 = vmatprep.subr.mxu0 0.0
        %5338 = vmatpush1.msra.mxu0 0.0
        %5339 = vmatprep.subr.mxu0 0.0
        %5340 = vmatpush1.msra.mxu0 0.0
        %5341 = vmatprep.subr.mxu0 0.0
        %5342 = vmatpush1.msra.mxu0 0.0
        %5343 = vmatprep.subr.mxu0 0.0
        %5344 = vmatpush1.msra.mxu0 0.0
        %5345 = vmatprep.subr.mxu0 0.0
        %5346 = vmatpush1.msra.mxu0 0.0
        %5347 = vmatprep.subr.mxu0 0.0
        %5348 = vmatpush1.msra.mxu0 0.0
        %5349 = vmatprep.subr.mxu0 0.0
        %5350 = vmatpush1.msra.mxu0 0.0
        %5351 = vmatprep.subr.mxu0 0.0
        %5352 = vmatpush1.msra.mxu0 0.0
        %5353 = vmatprep.subr.mxu0 0.0
        %5354 = vmatpush1.msra.mxu0 0.0
        %5355 = vmatprep.subr.mxu0 0.0
        %5356 = vmatpush1.msra.mxu0 0.0
        %5357 = vmatprep.subr.mxu0 0.0
        %5358 = vmatpush1.msra.mxu0 0.0
        %5359 = vmatprep.subr.mxu0 0.0
        %5360 = vmatpush1.msra.mxu0 0.0
        %5361 = vmatprep.subr.mxu0 0.0
        %5362 = vmatpush1.msra.mxu0 0.0
        %5363 = vmatprep.subr.mxu0 0.0
        %5364 = vmatpush1.msra.mxu0 0.0
        %5365 = vmatprep.subr.mxu0 0.0
        %5366 = vmatpush1.msra.mxu0 0.0
        %5367 = vmatprep.subr.mxu0 0.0
        %5368 = vmatpush1.msra.mxu0 0.0
        %5369 = vmatprep.subr.mxu0 0.0
        %5370 = vmatpush1.msra.mxu0 0.0
        %5371 = vmatprep.subr.mxu0 0.0
        %5372 = vmatpush1.msra.mxu0 0.0
        %5373 = vmatprep.subr.mxu0 0.0
        %5374 = vmatpush1.msra.mxu0 0.0
        %5375 = vmatprep.subr.mxu0 0.0
        %5376 = vmatpush1.msra.mxu0 0.0
        %5377 = vmatprep.subr.mxu0 0.0
        %5378 = vmatpush1.msra.mxu0 0.0
        %5379 = vmatprep.subr.mxu0 0.0
        %5380 = vmatpush1.msra.mxu0 0.0
        %5381 = vmatprep.subr.mxu0 0.0
        %5382 = vmatpush1.msra.mxu0 0.0
        %5383 = vmatprep.mubr.f32.mxu0 0.0
        %5384 = vmatmul.mubr.f32.gmra.mrb[0].mxu0 %v5302
        %v5385 = vpop.f32.mrb[0].mxu0
        %v5386 = vadd.f32 0.0, %v5385
        %v5387 = vpop.f32.mrb[0].mxu0
        %5388 = vmatprep.mubr.f32.mxu0 0.0
        %5389 = vmatmul.mubr.f32.gmra.mrb[0].mxu0 %v5305
        %v5390 = vpop.f32.mrb[0].mxu0
        %v5391 = vadd.f32 0.0, %v5390
        %v5392 = vpop.f32.mrb[0].mxu0
        %5393 = vmatprep.mubr.f32.mxu0 0.0
        %5394 = vmatmul.mubr.f32.gmra.mrb[0].mxu0 %v5308
        %v5395 = vpop.f32.mrb[0].mxu0
        %v5396 = vadd.f32 0.0, %v5395
        %v5397 = vpop.f32.mrb[0].mxu0
        %5398 = vmatprep.mubr.f32.mxu0 0.0
        %5399 = vmatmul.mubr.f32.gmra.mrb[0].mxu0 %v5311
        %v5400 = vpop.f32.mrb[0].mxu0
        %v5401 = vadd.f32 0.0, %v5400
        %v5402 = vpop.f32.mrb[0].mxu0
        %5403 = vmatprep.mubr.f32.mxu0 0.0
        %5404 = vmatmul.mubr.f32.gmra.mrb[0].mxu0 %v5314
        %v5405 = vpop.f32.mrb[0].mxu0
        %v5406 = vadd.f32 0.0, %v5405
        %v5407 = vpop.f32.mrb[0].mxu0
        %5408 = vmatprep.mubr.f32.mxu0 0.0
        %5409 = vmatmul.mubr.f32.gmra.mrb[0].mxu0 %v5317
        %v5410 = vpop.f32.mrb[0].mxu0
        %v5411 = vadd.f32 0.0, %v5410
        %v5412 = vpop.f32.mrb[0].mxu0
        %5413 = vdwg.mxu0
        %v5414 = vld [vmem:[%s18] sm:$0x1]
        %v5416 = vlaneseq
        %v5417 = vshrl.u32 %v5416, 7
        %v5418 = vsub.s32 0, %v5417
        %v5419 = vrot.slane %v5414, %v5418
        %v5421 = vadd.f32 %v5419, %v5241
        %v5422 = vadd.f32 %v5419, %v5246
        %v5423 = vadd.f32 %v5419, %v5251
        %v5424 = vadd.f32 %v5419, %v5256
        %v5425 = vadd.f32 %v5419, %v5261
        %v5426 = vadd.f32 %v5419, %v5266
        %v5427 = vadd.f32 %v5421, %v5386
        %v5428 = vadd.f32 %v5422, %v5391
        %v5429 = vadd.f32 %v5423, %v5396
        %v5430 = vadd.f32 %v5424, %v5401
        %v5431 = vadd.f32 %v5425, %v5406
        %v5432 = vadd.f32 %v5426, %v5411
        %v5433 = vmax.f32 %v5427, 0.0
        %v5434 = vmax.f32 %v5428, 0.0
        %v5435 = vmax.f32 %v5429, 0.0
        %v5436 = vmax.f32 %v5430, 0.0
        %v5437 = vmax.f32 %v5431, 0.0
        %v5438 = vmax.f32 %v5432, 0.0
        %5445 = vrot.lane.b32.xlu0 %v5241, 96
        %v5446 = vpop.permute.xlu0 %5445
        %5447 = vrot.lane.b32.xlu0 %v5246, 96
        %v5448 = vpop.permute.xlu0 %5447
        %5449 = vrot.lane.b32.xlu0 %v5251, 96
        %v5450 = vpop.permute.xlu0 %5449
        %5451 = vrot.lane.b32.xlu0 %v5256, 96
        %v5452 = vpop.permute.xlu0 %5451
        %5453 = vrot.lane.b32.xlu0 %v5261, 96
        %v5454 = vpop.permute.xlu0 %5453
        %5455 = vrot.lane.b32.xlu0 %v5266, 96
        %v5456 = vpop.permute.xlu0 %5455
        %v5463 = vadd.f32 %v5419, %v5446
        %v5464 = vadd.f32 %v5419, %v5448
        %v5465 = vadd.f32 %v5419, %v5450
        %v5466 = vadd.f32 %v5419, %v5452
        %v5467 = vadd.f32 %v5419, %v5454
        %v5468 = vadd.f32 %v5419, %v5456
        %v5469 = vmax.f32 %v5463, 0.0
        %v5470 = vmax.f32 %v5464, 0.0
        %v5471 = vmax.f32 %v5465, 0.0
        %v5472 = vmax.f32 %v5466, 0.0
        %v5473 = vmax.f32 %v5467, 0.0
        %v5474 = vmax.f32 %v5468, 0.0
        %v5475 = vld [vmem:[%s19] sm:$0xff]
        %v5476 = vld [vmem:[%s19 + $0x8] sm:$0xff]
        %v5477 = vld [vmem:[%s19 + $0x10] sm:$0xff]
        %v5478 = vld [vmem:[%s19 + $0x18] sm:$0xff]
        %v5480 = vsel %vm1148, %v5433, 0
        %v5483 = vsel %vm1148, %v5434, 0
        %v5486 = vsel %vm1148, %v5435, 0
        %v5489 = vsel %vm1148, %v5436, 0
        %v5492 = vsel %vm1148, %v5437, 0
        %v5495 = vsel %vm1148, %v5438, 0
        %5497 = vmatprep.subr.mxu0 0.0
        %5498 = vmatpush1.msra.mxu0 %v5475
        %5499 = vmatprep.subr.mxu0 0.0
        %5500 = vmatpush1.msra.mxu0 %v5476
        %5501 = vmatprep.subr.mxu0 0.0
        %5502 = vmatpush1.msra.mxu0 %v5477
        %5503 = vmatprep.subr.mxu0 0.0
        %5504 = vmatpush1.msra.mxu0 %v5478
        %5505 = vmatprep.subr.mxu0 0.0
        %5506 = vmatpush1.msra.mxu0 0.0
        %5507 = vmatprep.subr.mxu0 0.0
        %5508 = vmatpush1.msra.mxu0 0.0
        %5509 = vmatprep.subr.mxu0 0.0
        %5510 = vmatpush1.msra.mxu0 0.0
        %5511 = vmatprep.subr.mxu0 0.0
        %5512 = vmatpush1.msra.mxu0 0.0
        %5513 = vmatprep.subr.mxu0 0.0
        %5514 = vmatpush1.msra.mxu0 0.0
        %5515 = vmatprep.subr.mxu0 0.0
        %5516 = vmatpush1.msra.mxu0 0.0
        %5517 = vmatprep.subr.mxu0 0.0
        %5518 = vmatpush1.msra.mxu0 0.0
        %5519 = vmatprep.subr.mxu0 0.0
        %5520 = vmatpush1.msra.mxu0 0.0
        %5521 = vmatprep.subr.mxu0 0.0
        %5522 = vmatpush1.msra.mxu0 0.0
        %5523 = vmatprep.subr.mxu0 0.0
        %5524 = vmatpush1.msra.mxu0 0.0
        %5525 = vmatprep.subr.mxu0 0.0
        %5526 = vmatpush1.msra.mxu0 0.0
        %5527 = vmatprep.subr.mxu0 0.0
        %5528 = vmatpush1.msra.mxu0 0.0
        %5529 = vmatprep.subr.mxu0 0.0
        %5530 = vmatpush1.msra.mxu0 0.0
        %5531 = vmatprep.subr.mxu0 0.0
        %5532 = vmatpush1.msra.mxu0 0.0
        %5533 = vmatprep.subr.mxu0 0.0
        %5534 = vmatpush1.msra.mxu0 0.0
        %5535 = vmatprep.subr.mxu0 0.0
        %5536 = vmatpush1.msra.mxu0 0.0
        %5537 = vmatprep.subr.mxu0 0.0
        %5538 = vmatpush1.msra.mxu0 0.0
        %5539 = vmatprep.subr.mxu0 0.0
        %5540 = vmatpush1.msra.mxu0 0.0
        %5541 = vmatprep.subr.mxu0 0.0
        %5542 = vmatpush1.msra.mxu0 0.0
        %5543 = vmatprep.subr.mxu0 0.0
        %5544 = vmatpush1.msra.mxu0 0.0
        %5545 = vmatprep.subr.mxu0 0.0
        %5546 = vmatpush1.msra.mxu0 0.0
        %5547 = vmatprep.subr.mxu0 0.0
        %5548 = vmatpush1.msra.mxu0 0.0
        %5549 = vmatprep.subr.mxu0 0.0
        %5550 = vmatpush1.msra.mxu0 0.0
        %5551 = vmatprep.subr.mxu0 0.0
        %5552 = vmatpush1.msra.mxu0 0.0
        %5553 = vmatprep.subr.mxu0 0.0
        %5554 = vmatpush1.msra.mxu0 0.0
        %5555 = vmatprep.subr.mxu0 0.0
        %5556 = vmatpush1.msra.mxu0 0.0
        %5557 = vmatprep.subr.mxu0 0.0
        %5558 = vmatpush1.msra.mxu0 0.0
        %5559 = vmatprep.subr.mxu0 0.0
        %5560 = vmatpush1.msra.mxu0 0.0
        %5561 = vmatprep.mubr.f32.mxu0 0.0
        %5562 = vmatmul.mubr.f32.gmra.mrb[0].mxu0 %v5480
        %v5563 = vpop.f32.mrb[0].mxu0
        %v5564 = vadd.f32 0.0, %v5563
        %v5565 = vpop.f32.mrb[0].mxu0
        %5566 = vmatprep.mubr.f32.mxu0 0.0
        %5567 = vmatmul.mubr.f32.gmra.mrb[0].mxu0 %v5483
        %v5568 = vpop.f32.mrb[0].mxu0
        %v5569 = vadd.f32 0.0, %v5568
        %v5570 = vpop.f32.mrb[0].mxu0
        %5571 = vmatprep.mubr.f32.mxu0 0.0
        %5572 = vmatmul.mubr.f32.gmra.mrb[0].mxu0 %v5486
        %v5573 = vpop.f32.mrb[0].mxu0
        %v5574 = vadd.f32 0.0, %v5573
        %v5575 = vpop.f32.mrb[0].mxu0
        %5576 = vmatprep.mubr.f32.mxu0 0.0
        %5577 = vmatmul.mubr.f32.gmra.mrb[0].mxu0 %v5489
        %v5578 = vpop.f32.mrb[0].mxu0
        %v5579 = vadd.f32 0.0, %v5578
        %v5580 = vpop.f32.mrb[0].mxu0
        %5581 = vmatprep.mubr.f32.mxu0 0.0
        %5582 = vmatmul.mubr.f32.gmra.mrb[0].mxu0 %v5492
        %v5583 = vpop.f32.mrb[0].mxu0
        %v5584 = vadd.f32 0.0, %v5583
        %v5585 = vpop.f32.mrb[0].mxu0
        %5586 = vmatprep.mubr.f32.mxu0 0.0
        %5587 = vmatmul.mubr.f32.gmra.mrb[0].mxu0 %v5495
        %v5588 = vpop.f32.mrb[0].mxu0
        %v5589 = vadd.f32 0.0, %v5588
        %v5590 = vpop.f32.mrb[0].mxu0
        %5591 = vdwg.mxu0
        %v5593 = vsel %vm1148, %v5469, 0
        %v5596 = vsel %vm1148, %v5470, 0
        %v5599 = vsel %vm1148, %v5471, 0
        %v5602 = vsel %vm1148, %v5472, 0
        %v5605 = vsel %vm1148, %v5473, 0
        %v5608 = vsel %vm1148, %v5474, 0
        %5610 = vmatprep.subr.mxu0 0.0
        %5611 = vmatpush1.msra.mxu0 %v5475
        %5612 = vmatprep.subr.mxu0 0.0
        %5613 = vmatpush1.msra.mxu0 %v5476
        %5614 = vmatprep.subr.mxu0 0.0
        %5615 = vmatpush1.msra.mxu0 %v5477
        %5616 = vmatprep.subr.mxu0 0.0
        %5617 = vmatpush1.msra.mxu0 %v5478
        %5618 = vmatprep.subr.mxu0 0.0
        %5619 = vmatpush1.msra.mxu0 0.0
        %5620 = vmatprep.subr.mxu0 0.0
        %5621 = vmatpush1.msra.mxu0 0.0
        %5622 = vmatprep.subr.mxu0 0.0
        %5623 = vmatpush1.msra.mxu0 0.0
        %5624 = vmatprep.subr.mxu0 0.0
        %5625 = vmatpush1.msra.mxu0 0.0
        %5626 = vmatprep.subr.mxu0 0.0
        %5627 = vmatpush1.msra.mxu0 0.0
        %5628 = vmatprep.subr.mxu0 0.0
        %5629 = vmatpush1.msra.mxu0 0.0
        %5630 = vmatprep.subr.mxu0 0.0
        %5631 = vmatpush1.msra.mxu0 0.0
        %5632 = vmatprep.subr.mxu0 0.0
        %5633 = vmatpush1.msra.mxu0 0.0
        %5634 = vmatprep.subr.mxu0 0.0
        %5635 = vmatpush1.msra.mxu0 0.0
        %5636 = vmatprep.subr.mxu0 0.0
        %5637 = vmatpush1.msra.mxu0 0.0
        %5638 = vmatprep.subr.mxu0 0.0
        %5639 = vmatpush1.msra.mxu0 0.0
        %5640 = vmatprep.subr.mxu0 0.0
        %5641 = vmatpush1.msra.mxu0 0.0
        %5642 = vmatprep.subr.mxu0 0.0
        %5643 = vmatpush1.msra.mxu0 0.0
        %5644 = vmatprep.subr.mxu0 0.0
        %5645 = vmatpush1.msra.mxu0 0.0
        %5646 = vmatprep.subr.mxu0 0.0
        %5647 = vmatpush1.msra.mxu0 0.0
        %5648 = vmatprep.subr.mxu0 0.0
        %5649 = vmatpush1.msra.mxu0 0.0
        %5650 = vmatprep.subr.mxu0 0.0
        %5651 = vmatpush1.msra.mxu0 0.0
        %5652 = vmatprep.subr.mxu0 0.0
        %5653 = vmatpush1.msra.mxu0 0.0
        %5654 = vmatprep.subr.mxu0 0.0
        %5655 = vmatpush1.msra.mxu0 0.0
        %5656 = vmatprep.subr.mxu0 0.0
        %5657 = vmatpush1.msra.mxu0 0.0
        %5658 = vmatprep.subr.mxu0 0.0
        %5659 = vmatpush1.msra.mxu0 0.0
        %5660 = vmatprep.subr.mxu0 0.0
        %5661 = vmatpush1.msra.mxu0 0.0
        %5662 = vmatprep.subr.mxu0 0.0
        %5663 = vmatpush1.msra.mxu0 0.0
        %5664 = vmatprep.subr.mxu0 0.0
        %5665 = vmatpush1.msra.mxu0 0.0
        %5666 = vmatprep.subr.mxu0 0.0
        %5667 = vmatpush1.msra.mxu0 0.0
        %5668 = vmatprep.subr.mxu0 0.0
        %5669 = vmatpush1.msra.mxu0 0.0
        %5670 = vmatprep.subr.mxu0 0.0
        %5671 = vmatpush1.msra.mxu0 0.0
        %5672 = vmatprep.subr.mxu0 0.0
        %5673 = vmatpush1.msra.mxu0 0.0
        %5674 = vmatprep.mubr.f32.mxu0 0.0
        %5675 = vmatmul.mubr.f32.gmra.mrb[0].mxu0 %v5593
        %v5676 = vpop.f32.mrb[0].mxu0
        %v5677 = vadd.f32 0.0, %v5676
        %v5678 = vpop.f32.mrb[0].mxu0
        %5679 = vmatprep.mubr.f32.mxu0 0.0
        %5680 = vmatmul.mubr.f32.gmra.mrb[0].mxu0 %v5596
        %v5681 = vpop.f32.mrb[0].mxu0
        %v5682 = vadd.f32 0.0, %v5681
        %v5683 = vpop.f32.mrb[0].mxu0
        %5684 = vmatprep.mubr.f32.mxu0 0.0
        %5685 = vmatmul.mubr.f32.gmra.mrb[0].mxu0 %v5599
        %v5686 = vpop.f32.mrb[0].mxu0
        %v5687 = vadd.f32 0.0, %v5686
        %v5688 = vpop.f32.mrb[0].mxu0
        %5689 = vmatprep.mubr.f32.mxu0 0.0
        %5690 = vmatmul.mubr.f32.gmra.mrb[0].mxu0 %v5602
        %v5691 = vpop.f32.mrb[0].mxu0
        %v5692 = vadd.f32 0.0, %v5691
        %v5693 = vpop.f32.mrb[0].mxu0
        %5694 = vmatprep.mubr.f32.mxu0 0.0
        %5695 = vmatmul.mubr.f32.gmra.mrb[0].mxu0 %v5605
        %v5696 = vpop.f32.mrb[0].mxu0
        %v5697 = vadd.f32 0.0, %v5696
        %v5698 = vpop.f32.mrb[0].mxu0
        %5699 = vmatprep.mubr.f32.mxu0 0.0
        %5700 = vmatmul.mubr.f32.gmra.mrb[0].mxu0 %v5608
        %v5701 = vpop.f32.mrb[0].mxu0
        %v5702 = vadd.f32 0.0, %v5701
        %v5703 = vpop.f32.mrb[0].mxu0
        %5704 = vdwg.mxu0
        %v5705 = vld [vmem:[#allocation7] sm:$0x1]
        %v5706 = vadd.f32 %v5705, %v5564
        %5707 = vst.msk [vmem:[%s760] sm:$0x1] %vm3911, %v5706
        %v5709 = vlaneseq
        %v5710 = vshrl.u32 %v5709, 7
        %v5711 = vsub.s32 0, %v5710
        %v5712 = vrot.slane %v5705, %v5711
        %v5714 = vadd.f32 %v5712, %v5564
        %v5715 = vadd.f32 %v5712, %v5569
        %v5716 = vadd.f32 %v5712, %v5574
        %v5717 = vadd.f32 %v5712, %v5579
        %v5718 = vadd.f32 %v5712, %v5584
        %v5719 = vadd.f32 %v5712, %v5589
        %v5725 = vrot.slane %v5677, 7
        %v5726 = vrot.slane %v5682, 7
        %v5727 = vsel %vm1121, %v5725, %v5726
        %v5728 = vrot.slane %v5687, 7
        %v5729 = vsel %vm1121, %v5726, %v5728
        %v5730 = vrot.slane %v5692, 7
        %v5731 = vsel %vm1121, %v5728, %v5730
        %v5732 = vrot.slane %v5697, 7
        %v5733 = vsel %vm1121, %v5730, %v5732
        %5734 = vrot.lane.b32.xlu0 %v5725, 126
        %v5735 = vpop.permute.xlu0 %5734
        %5736 = vrot.lane.b32.xlu0 %v5727, 126
        %v5737 = vpop.permute.xlu0 %5736
        %5738 = vrot.lane.b32.xlu0 %v5729, 126
        %v5739 = vpop.permute.xlu0 %5738
        %5740 = vrot.lane.b32.xlu0 %v5731, 126
        %v5741 = vpop.permute.xlu0 %5740
        %5742 = vrot.lane.b32.xlu0 %v5733, 126
        %v5743 = vpop.permute.xlu0 %5742
        %5744 = vrot.lane.b32.xlu0 %v5732, 126
        %v5745 = vpop.permute.xlu0 %5744
        %v5752 = vadd.f32 %v5714, %v5735
        %v5753 = vadd.f32 %v5715, %v5737
        %v5754 = vadd.f32 %v5716, %v5739
        %v5755 = vadd.f32 %v5717, %v5741
        %v5756 = vadd.f32 %v5718, %v5743
        %v5757 = vadd.f32 %v5719, %v5745
        %vm5758 = vcmask 7169
        %5759 = vst.msk [vmem:[%s760] sm:$0xfe] %vm5758, %v5752
        %vm5760 = vcmask 7168
        %5761 = vst.msk [vmem:[%s760 + $0x8] sm:$0xff] %vm5760, %v5753
        %5762 = vst.msk [vmem:[%s760 + $0x10] sm:$0xff] %vm5760, %v5754
        %5763 = vst.msk [vmem:[%s760 + $0x18] sm:$0xff] %vm5760, %v5755
        %5764 = vst.msk [vmem:[%s760 + $0x20] sm:$0xff] %vm5760, %v5756
        %5765 = vst.msk [vmem:[%s760 + $0x28] sm:$0x1] %vm3911, %v5757
        %v5768 = vunpack.c.l.s4 1966171168
        %v5769 = vunpack.c.0.s8 %v5768
        %v5770 = vlaneseq
        %v5771 = vshrl.u32 %v5770, 7
        %v5772 = vsub.s32 %v5769, %v5771
        %v5773 = vrot.slane %v5702, %v5772
        %v5775 = vunpack.c.l.s4 1966171168
        %v5776 = vunpack.c.0.s8 %v5775
        %v5777 = vlaneseq
        %v5778 = vshrl.u32 %v5777, 7
        %v5779 = vsub.s32 %v5776, %v5778
        %v5780 = vrot.slane %v5773, %v5779
        %5781 = vrot.lane.b32.xlu0 %v5780, 126
        %v5782 = vpop.permute.xlu0 %5781
        %v5784 = vadd.f32 %v5705, %v5782
        %5785 = vst.msk [vmem:[%s760 + $0x29] sm:$0x1] %vm3911, %v5784
        %5792 = vrot.lane.b32.xlu0 %v5564, 127
        %v5793 = vpop.permute.xlu0 %5792
        %5794 = vrot.lane.b32.xlu0 %v5569, 127
        %v5795 = vpop.permute.xlu0 %5794
        %5796 = vrot.lane.b32.xlu0 %v5574, 127
        %v5797 = vpop.permute.xlu0 %5796
        %5798 = vrot.lane.b32.xlu0 %v5579, 127
        %v5799 = vpop.permute.xlu0 %5798
        %5800 = vrot.lane.b32.xlu0 %v5584, 127
        %v5801 = vpop.permute.xlu0 %5800
        %5802 = vrot.lane.b32.xlu0 %v5589, 127
        %v5803 = vpop.permute.xlu0 %5802
        %v5810 = vadd.f32 %v5712, %v5793
        %v5811 = vadd.f32 %v5712, %v5795
        %v5812 = vadd.f32 %v5712, %v5797
        %v5813 = vadd.f32 %v5712, %v5799
        %v5814 = vadd.f32 %v5712, %v5801
        %v5815 = vadd.f32 %v5712, %v5803
        %5822 = vrot.lane.b32.xlu0 %v5810, 1
        %v5823 = vpop.permute.xlu0 %5822
        %5824 = vrot.lane.b32.xlu0 %v5811, 1
        %v5825 = vpop.permute.xlu0 %5824
        %5826 = vrot.lane.b32.xlu0 %v5812, 1
        %v5827 = vpop.permute.xlu0 %5826
        %5828 = vrot.lane.b32.xlu0 %v5813, 1
        %v5829 = vpop.permute.xlu0 %5828
        %5830 = vrot.lane.b32.xlu0 %v5814, 1
        %v5831 = vpop.permute.xlu0 %5830
        %5832 = vrot.lane.b32.xlu0 %v5815, 1
        %v5833 = vpop.permute.xlu0 %5832
        %vm5840 = vcmask 15368
        %5841 = vst.msk [vmem:[%s760] sm:$0xff] %vm5840, %v5823
        %5842 = vst.msk [vmem:[%s760 + $0x8] sm:$0xff] %vm5840, %v5825
        %5843 = vst.msk [vmem:[%s760 + $0x10] sm:$0xff] %vm5840, %v5827
        %5844 = vst.msk [vmem:[%s760 + $0x18] sm:$0xff] %vm5840, %v5829
        %5845 = vst.msk [vmem:[%s760 + $0x20] sm:$0xff] %vm5840, %v5831
        %vm5846 = vcmask 8200
        %5847 = vst.msk [vmem:[%s760 + $0x28] sm:$0x1] %vm5846, %v5833
        %5848 = vrot.lane.b32.xlu0 %v5712, 1
        %v5849 = vpop.permute.xlu0 %5848
        %5851 = vst.msk [vmem:[%s760 + $0x29] sm:$0x1] %vm5846, %v5849
        %v5852 = vadd.f32 %v5712, %v5677
        %v5853 = vadd.f32 %v5712, %v5682
        %v5854 = vadd.f32 %v5712, %v5687
        %v5855 = vadd.f32 %v5712, %v5692
        %v5856 = vadd.f32 %v5712, %v5697
        %v5857 = vadd.f32 %v5712, %v5702
        %5858 = vrot.lane.b32.xlu0 %v5564, 126
        %v5859 = vpop.permute.xlu0 %5858
        %5860 = vrot.lane.b32.xlu0 %v5569, 126
        %v5861 = vpop.permute.xlu0 %5860
        %5862 = vrot.lane.b32.xlu0 %v5574, 126
        %v5863 = vpop.permute.xlu0 %5862
        %5864 = vrot.lane.b32.xlu0 %v5579, 126
        %v5865 = vpop.permute.xlu0 %5864
        %5866 = vrot.lane.b32.xlu0 %v5584, 126
        %v5867 = vpop.permute.xlu0 %5866
        %5868 = vrot.lane.b32.xlu0 %v5589, 126
        %v5869 = vpop.permute.xlu0 %5868
        %v5876 = vadd.f32 %v5852, %v5859
        %v5877 = vadd.f32 %v5853, %v5861
        %v5878 = vadd.f32 %v5854, %v5863
        %v5879 = vadd.f32 %v5855, %v5865
        %v5880 = vadd.f32 %v5856, %v5867
        %v5881 = vadd.f32 %v5857, %v5869
        %5888 = vrot.lane.b32.xlu0 %v5876, 2
        %v5889 = vpop.permute.xlu0 %5888
        %5890 = vrot.lane.b32.xlu0 %v5877, 2
        %v5891 = vpop.permute.xlu0 %5890
        %5892 = vrot.lane.b32.xlu0 %v5878, 2
        %v5893 = vpop.permute.xlu0 %5892
        %5894 = vrot.lane.b32.xlu0 %v5879, 2
        %v5895 = vpop.permute.xlu0 %5894
        %5896 = vrot.lane.b32.xlu0 %v5880, 2
        %v5897 = vpop.permute.xlu0 %5896
        %5898 = vrot.lane.b32.xlu0 %v5881, 2
        %v5899 = vpop.permute.xlu0 %5898
        %vm5906 = vcmask 23568
        %5907 = vst.msk [vmem:[%s760] sm:$0xff] %vm5906, %v5889
        %5908 = vst.msk [vmem:[%s760 + $0x8] sm:$0xff] %vm5906, %v5891
        %5909 = vst.msk [vmem:[%s760 + $0x10] sm:$0xff] %vm5906, %v5893
        %5910 = vst.msk [vmem:[%s760 + $0x18] sm:$0xff] %vm5906, %v5895
        %5911 = vst.msk [vmem:[%s760 + $0x20] sm:$0xff] %vm5906, %v5897
        %vm5912 = vcmask 16400
        %5913 = vst.msk [vmem:[%s760 + $0x28] sm:$0x1] %vm5912, %v5899
        %5914 = vrot.lane.b32.xlu0 %v5677, 127
        %v5915 = vpop.permute.xlu0 %5914
        %5916 = vrot.lane.b32.xlu0 %v5682, 127
        %v5917 = vpop.permute.xlu0 %5916
        %5918 = vrot.lane.b32.xlu0 %v5687, 127
        %v5919 = vpop.permute.xlu0 %5918
        %5920 = vrot.lane.b32.xlu0 %v5692, 127
        %v5921 = vpop.permute.xlu0 %5920
        %5922 = vrot.lane.b32.xlu0 %v5697, 127
        %v5923 = vpop.permute.xlu0 %5922
        %5924 = vrot.lane.b32.xlu0 %v5702, 127
        %v5925 = vpop.permute.xlu0 %5924
        %v5932 = vadd.f32 %v5712, %v5915
        %v5933 = vadd.f32 %v5712, %v5917
        %v5934 = vadd.f32 %v5712, %v5919
        %v5935 = vadd.f32 %v5712, %v5921
        %v5936 = vadd.f32 %v5712, %v5923
        %v5937 = vadd.f32 %v5712, %v5925
        %5944 = vrot.lane.b32.xlu0 %v5932, 3
        %v5945 = vpop.permute.xlu0 %5944
        %5946 = vrot.lane.b32.xlu0 %v5933, 3
        %v5947 = vpop.permute.xlu0 %5946
        %5948 = vrot.lane.b32.xlu0 %v5934, 3
        %v5949 = vpop.permute.xlu0 %5948
        %5950 = vrot.lane.b32.xlu0 %v5935, 3
        %v5951 = vpop.permute.xlu0 %5950
        %5952 = vrot.lane.b32.xlu0 %v5936, 3
        %v5953 = vpop.permute.xlu0 %5952
        %5954 = vrot.lane.b32.xlu0 %v5937, 3
        %v5955 = vpop.permute.xlu0 %5954
        %vm5962 = vcmask 31768
        %5963 = vst.msk [vmem:[%s760] sm:$0xff] %vm5962, %v5945
        %5964 = vst.msk [vmem:[%s760 + $0x8] sm:$0xff] %vm5962, %v5947
        %5965 = vst.msk [vmem:[%s760 + $0x10] sm:$0xff] %vm5962, %v5949
        %5966 = vst.msk [vmem:[%s760 + $0x18] sm:$0xff] %vm5962, %v5951
        %5967 = vst.msk [vmem:[%s760 + $0x20] sm:$0xff] %vm5962, %v5953
        %vm5968 = vcmask 24600
        %5969 = vst.msk [vmem:[%s760 + $0x28] sm:$0x1] %vm5968, %v5955
        %vm5970 = vcmask 24592
        %5971 = vst.msk [vmem:[%s760 + $0x29] sm:$0x1] %vm5970, 0.0
        %p5972 = scmp.lt.s32.totalorder %s41, 1
        %s5973 = scalar_select %p5972, %s41, 1
        %s5974 = smul.addr %s5973, 6
        %s5975 = smul.addr %s5974, 8
        %s5976 = scalar_lea.vmem %s21, %s5975
        %p5977 = scmp.lt.s32.totalorder %s41, 1
        %s5978 = scalar_select %p5977, %s41, 1
        %s5979 = scalar_lea.vmem %s22, %s5978
        // Predicated region
        $region125: #{autoencoder_forward.1} parent=103 // pred_check
          %p5980 = pneg %p505
        $region126: #{autoencoder_forward.1} parent=103 // pred_check_branch
          %5982 = sbr.rel (%p5980) target = $region128
        $region127: #{autoencoder_forward.1} parent=103 // pred_region
          _
        $region128: #{autoencoder_forward.1} parent=103 // pred_fallthru
          _
        // Predicated region
        $region129: #{autoencoder_forward.1} parent=103 // pred_check
          %p5983 = pneg %p531
        $region130: #{autoencoder_forward.1} parent=103 // pred_check_branch
          %5985 = sbr.rel (%p5983) target = $region132
        $region131: #{autoencoder_forward.1} parent=103 // pred_region
          _
        $region132: #{autoencoder_forward.1} parent=103 // pred_fallthru
          _
      $region104: #{autoencoder_forward.1} parent=5 // pred_fallthru
        _
      %p5986 = scmp.le.s32.totalorder 2, %s36
      // Predicated region
      $region133: #{autoencoder_forward.1} parent=5 // pred_check
        %p5987 = pneg %p5986
      $region134: #{autoencoder_forward.1} parent=5 // pred_check_branch
        %5989 = sbr.rel (%p5987) target = $region136
      $region135: #{autoencoder_forward.1} parent=5 // pred_region
        %s5990 = ssub.s32 %s36, 2
        // Predicated region
        $region137: #{autoencoder_forward.1} parent=135 // pred_check
          %p5991 = pneg %p511
        $region138: #{autoencoder_forward.1} parent=135 // pred_check_branch
          %5993 = sbr.rel (%p5991) target = $region140
        $region139: #{autoencoder_forward.1} parent=135 // pred_region
          %p5994 = scmp.lt.s32.totalorder %s42, 1
          %s5995 = scalar_select %p5994, %s42, 1
          %s5996 = smul.addr %s5995, 6
          %s5997 = smul.addr %s5996, 8
          %s5998 = scalar_lea.vmem %s21, %s5997
        $region140: #{autoencoder_forward.1} parent=135 // pred_fallthru
          _
        // Predicated region
        $region141: #{autoencoder_forward.1} parent=135 // pred_check
          %p5999 = pneg %p537
        $region142: #{autoencoder_forward.1} parent=135 // pred_check_branch
          %6001 = sbr.rel (%p5999) target = $region144
        $region143: #{autoencoder_forward.1} parent=135 // pred_region
          %p6002 = scmp.lt.s32.totalorder %s42, 1
          %s6003 = scalar_select %p6002, %s42, 1
          %s6004 = scalar_lea.vmem %s22, %s6003
        $region144: #{autoencoder_forward.1} parent=135 // pred_fallthru
          _
      $region136: #{autoencoder_forward.1} parent=5 // pred_fallthru
        _
    $region6: #{autoencoder_forward.1} parent=1 // loop_footer
      %s40 = sadd.s32 1, %s36
    $region7: #{autoencoder_forward.1} parent=1 // loop_footer_branch
      %35 = sbr.rel target = $region3
    $region8: #{autoencoder_forward.1} parent=1 // loop_exit
      _
    %6005 = vsyncpa [#allocation9], 1
    %s6006 = scalar_lea.sflag [#allocation9], 1
    %6007 = vsyncpa %s6006, 1
    %6008 = vsyncpa [#allocation11], 1
    %6009 = vsyncpa [#allocation14], 1

</llo_original>
